<compile_context>
chip_gen: v7x
topology: tpu7x:2x2x1
jax: 0.10.0
libtpu: 0.0.40
codegen_flags: <defaults>
</compile_context>

<pallas_src>
import functools

import jax
import jax.numpy as jnp
from jax.experimental import pallas as pl
from jax.experimental.pallas import tpu as pltpu


# ----------------------------------------------------------------------------
# Kernel 1: 3x3 conv on one (TR-row x W) tile of an UNPADDED NHWC image.
#   * the 1-px zero halo is built in a VMEM staging buffer (apad) from the
#     tile rows plus one halo row above / below (zeroed at image borders),
#     with zero strip stores for the left/right columns.
#   * optionally applies the PREVIOUS stage's BatchNorm+ReLU (scale/shift) to
#     the loaded rows (fused pre-activation); the halo stays exactly zero,
#     matching Conv2d zero-padding of the activation.
#   * emits the raw (un-normalized) conv tile plus per-tile sum / sum-of-squares
#     partials for THIS stage's BatchNorm statistics.
# ----------------------------------------------------------------------------
def _conv3x3_kernel(top_ref, mid_ref, bot_ref, w_ref, *rest,
                    TR, W, Cin, Cout, fuse_bn):
    if fuse_bn:
        scale_ref, shift_ref, y_ref, sum_ref, sq_ref, apad_ref, patch_ref = rest
    else:
        y_ref, sum_ref, sq_ref, apad_ref, patch_ref = rest

    r = pl.program_id(1)
    n_row_tiles = pl.num_programs(1)

    def act(v):
        # previous stage's BatchNorm (folded to scale/shift) + ReLU, in f32.
        if fuse_bn:
            a = v.astype(jnp.float32) * scale_ref[0] + shift_ref[0]
            return jnp.maximum(a, 0.0).astype(jnp.bfloat16)
        return v.astype(jnp.bfloat16)

    # --- assemble the zero-padded, (pre-)activated tile in VMEM -------------
    # Zero halo rows / columns with direct strip stores (no iota masking).
    apad_ref[0:1, :, :] = jnp.zeros((1, W + 2, Cin), jnp.bfloat16)
    apad_ref[TR + 1:TR + 2, :, :] = jnp.zeros((1, W + 2, Cin), jnp.bfloat16)
    apad_ref[:, 0:1, :] = jnp.zeros((TR + 2, 1, Cin), jnp.bfloat16)
    apad_ref[:, W + 1:W + 2, :] = jnp.zeros((TR + 2, 1, Cin), jnp.bfloat16)

    # Interior rows of this tile.
    apad_ref[1:TR + 1, 1:W + 1, :] = act(mid_ref[0])

    # Halo row above (real data unless this is the first row tile).
    @pl.when(r > 0)
    def _():
        apad_ref[0:1, 1:W + 1, :] = act(top_ref[0])

    # Halo row below (real data unless this is the last row tile).
    @pl.when(r < n_row_tiles - 1)
    def _():
        apad_ref[TR + 1:TR + 2, 1:W + 1, :] = act(bot_ref[0])

    # --- conv: (TR*W, 3*Cin) im2col slabs, 3 accumulating MXU dots ----------
    acc = jnp.zeros((TR * W, Cout), jnp.float32)
    for dh in range(3):
        for dw in range(3):
            patch_ref[:, dw * Cin:(dw + 1) * Cin] = (
                apad_ref[dh:dh + TR, dw:dw + W, :].reshape(TR * W, Cin))
        acc = acc + jnp.dot(patch_ref[...], w_ref[dh],
                            preferred_element_type=jnp.float32)

    # NOTE: conv bias is intentionally omitted — it cancels exactly under
    # train-mode BatchNorm (it only shifts the batch mean).
    y_ref[0] = acc.reshape(TR, W, Cout).astype(y_ref.dtype)
    sum_ref[0, 0] = acc.sum(axis=0, keepdims=True)          # per-tile partials
    sq_ref[0, 0] = (acc * acc).sum(axis=0, keepdims=True)


# ----------------------------------------------------------------------------
# Kernel 2: fused (x * scale + shift) + ReLU, only for the FINAL stage.
# ----------------------------------------------------------------------------
def _bn_relu_kernel(y_ref, scale_ref, shift_ref, o_ref):
    y = y_ref[0].astype(jnp.float32)                         # (TR, W, C)
    o_ref[0] = jnp.maximum(y * scale_ref[0] + shift_ref[0], 0.0).astype(o_ref.dtype)


# ----------------------------------------------------------------------------
# Stage wrappers
# ----------------------------------------------------------------------------
def _pick_row_tile(H, target=64):
    """Largest divisor of H that is <= target (amortizes per-step overhead)."""
    for t in range(min(H, target), 0, -1):
        if H % t == 0:
            return t
    return H


def _conv3x3_stage(x, w_hwio, scale_shift=None, *, row_tile=None):
    """3x3 'same' conv over an unpadded NHWC bf16 tensor, row-tiled.

    If `scale_shift` is given, the previous stage's BN+ReLU is applied to the
    loaded rows inside the kernel (fused). Returns the raw bf16 conv output and
    per-tile (sum, sum_of_squares) f32 partials for this stage's BatchNorm.
    """
    N, H, W, Cin = x.shape
    Cout = w_hwio.shape[-1]
    TR = _pick_row_tile(H) if row_tile is None else row_tile
    assert H % TR == 0, "row_tile must divide H"
    nR = H // TR
    fuse_bn = scale_shift is not None

    # (3, 3, Cin, Cout) -> (3, 3*Cin, Cout): one (3*Cin, Cout) slab per kernel row.
    w3 = w_hwio.reshape(3, 3 * Cin, Cout).astype(jnp.bfloat16)

    kern = functools.partial(_conv3x3_kernel, TR=TR, W=W, Cin=Cin, Cout=Cout,
                             fuse_bn=fuse_bn)

    in_specs = [
        # halo row above (clamped at the top edge; zeroed in-kernel when r==0)
        pl.BlockSpec((1, 1, W, Cin),
                     lambda n, r: (n, jnp.maximum(r * TR - 1, 0), 0, 0)),
        # the TR tile rows
        pl.BlockSpec((1, TR, W, Cin), lambda n, r: (n, r, 0, 0)),
        # halo row below (clamped at the bottom edge; zeroed when r==nR-1)
        pl.BlockSpec((1, 1, W, Cin),
                     lambda n, r: (n, jnp.minimum((r + 1) * TR, H - 1), 0, 0)),
        # weights (resident)
        pl.BlockSpec((3, 3 * Cin, Cout), lambda n, r: (0, 0, 0)),
    ]
    args = [x, x, x, w3]
    if fuse_bn:
        scale, shift = scale_shift
        in_specs += [pl.BlockSpec((1, Cin), lambda n, r: (0, 0)),
                     pl.BlockSpec((1, Cin), lambda n, r: (0, 0))]
        args += [scale.reshape(1, Cin), shift.reshape(1, Cin)]

    y, s, q = pl.pallas_call(
        kern,
        out_shape=(
            jax.ShapeDtypeStruct((N, H, W, Cout), jnp.bfloat16),   # raw conv out
            jax.ShapeDtypeStruct((N, nR, 1, Cout), jnp.float32),   # per-tile sums
            jax.ShapeDtypeStruct((N, nR, 1, Cout), jnp.float32),   # per-tile sq-sums
        ),
        grid_spec=pltpu.PrefetchScalarGridSpec(
            num_scalar_prefetch=0,
            grid=(N, nR),
            in_specs=in_specs,
            out_specs=(
                pl.BlockSpec((1, TR, W, Cout), lambda n, r: (n, r, 0, 0)),
                pl.BlockSpec((1, 1, 1, Cout), lambda n, r: (n, r, 0, 0)),
                pl.BlockSpec((1, 1, 1, Cout), lambda n, r: (n, r, 0, 0)),
            ),
            scratch_shapes=[
                pltpu.VMEM((TR + 2, W + 2, Cin), jnp.bfloat16),    # padded tile
                pltpu.VMEM((TR * W, 3 * Cin), jnp.bfloat16),       # im2col slab
            ],
        ),
        compiler_params=pltpu.CompilerParams(
            dimension_semantics=("parallel", "parallel"),   # both axes independent
            vmem_limit_bytes=64 * 1024 * 1024),
    )(*args)
    return y, s, q


def _bn_scale_shift(s, q, gamma, beta, count, eps=1e-5):
    """Fold training-mode BatchNorm (biased batch stats) into scale/shift."""
    mean = s.sum(axis=(0, 1, 2)) / count
    var = q.sum(axis=(0, 1, 2)) / count - mean * mean
    var = jnp.maximum(var, 0.0)           # guard E[x^2]-E[x]^2 cancellation
    inv_std = jax.lax.rsqrt(var + eps)
    scale = gamma * inv_std
    shift = beta - mean * scale
    return scale, shift
    # TODO(synk): running_mean / running_var buffer updates (stateful side
    # effect of nn.BatchNorm2d in train mode) are not replicated.


def _bn_relu_stage(y, scale, shift, *, row_tile):
    N, H, W, C = y.shape
    TR = row_tile
    nR = H // TR
    return pl.pallas_call(
        _bn_relu_kernel,
        out_shape=jax.ShapeDtypeStruct((N, H, W, C), jnp.bfloat16),
        grid_spec=pltpu.PrefetchScalarGridSpec(
            num_scalar_prefetch=0,
            grid=(N, nR),
            in_specs=[
                pl.BlockSpec((1, TR, W, C), lambda n, r: (n, r, 0, 0)),
                pl.BlockSpec((1, C), lambda n, r: (0, 0)),
                pl.BlockSpec((1, C), lambda n, r: (0, 0)),
            ],
            out_specs=pl.BlockSpec((1, TR, W, C), lambda n, r: (n, r, 0, 0)),
        ),
        compiler_params=pltpu.CompilerParams(
            dimension_semantics=("parallel", "parallel"),
            vmem_limit_bytes=64 * 1024 * 1024),
    )(y, scale.reshape(1, C), shift.reshape(1, C))


# ----------------------------------------------------------------------------
# VGGBlock wrapper (NCHW in / NCHW out, like the PyTorch module)
# ----------------------------------------------------------------------------
def init_vgg_block_params(key, in_channels, middle_channels, out_channels):
    ks = jax.random.split(key, 6)
    return {
        # conv biases are kept as parameters for interface parity but are NOT
        # used by the kernels: under train-mode BN they cancel exactly.
        "w1": 0.1 * jax.random.normal(ks[0], (3, 3, in_channels, middle_channels), jnp.float32),
        "b1": 0.1 * jax.random.normal(ks[1], (middle_channels,), jnp.float32),
        "gamma1": 1.0 + 0.1 * jax.random.normal(ks[2], (middle_channels,), jnp.float32),
        "beta1": 0.1 * jax.random.normal(ks[3], (middle_channels,), jnp.float32),
        "w2": 0.1 * jax.random.normal(ks[4], (3, 3, middle_channels, out_channels), jnp.float32),
        "b2": 0.1 * jax.random.normal(ks[5], (out_channels,), jnp.float32),
        "gamma2": jnp.ones((out_channels,), jnp.float32),
        "beta2": jnp.zeros((out_channels,), jnp.float32),
    }


def vgg_block(x_nchw, params, eps=1e-5, row_tile=None):
    N, _, H, W = x_nchw.shape
    cnt = jnp.float32(N * H * W)
    TR = _pick_row_tile(H) if row_tile is None else row_tile

    # NCHW f32 -> NHWC bf16 (single fused XLA pass). No padding copies: the
    # 1-px halo is handled inside the conv kernels.
    x = jnp.transpose(x_nchw, (0, 2, 3, 1)).astype(jnp.bfloat16)

    # Stage 1: conv only (its BN+ReLU is fused into stage 2's kernel).
    y1, s1, q1 = _conv3x3_stage(x, params["w1"], row_tile=TR)
    scale1, shift1 = _bn_scale_shift(s1, q1, params["gamma1"], params["beta1"], cnt, eps)

    # Stage 2: conv with stage-1 BN+ReLU fused into the input load (no y1 pad).
    y2, s2, q2 = _conv3x3_stage(y1, params["w2"], scale_shift=(scale1, shift1),
                                row_tile=TR)
    scale2, shift2 = _bn_scale_shift(s2, q2, params["gamma2"], params["beta2"], cnt, eps)

    # Final stage's BN+ReLU (no following conv to fuse into), bf16 output.
    out = _bn_relu_stage(y2, scale2, shift2, row_tile=TR)

    # TODO(synk): fold the NHWC->NCHW layout change into the final kernel's
    # out_specs (in-kernel transpose) to drop this XLA pass entirely.
    return jnp.transpose(out, (0, 3, 1, 2)).astype(jnp.float32)   # NCHW f32


# ----------------------------------------------------------------------------
# Pure-JAX f32 reference (same semantics, bias included — it cancels under BN).
# ----------------------------------------------------------------------------
def _ref_stage(x_nchw, w_hwio, bias, gamma, beta, eps=1e-5):
    w_oihw = jnp.transpose(w_hwio, (3, 2, 0, 1))
    y = jax.lax.conv_general_dilated(
        x_nchw, w_oihw, window_strides=(1, 1), padding=((1, 1), (1, 1)),
        dimension_numbers=("NCHW", "OIHW", "NCHW"))
    y = y + bias[None, :, None, None]
    mean = y.mean(axis=(0, 2, 3))
    var = y.var(axis=(0, 2, 3))
    y = (y - mean[None, :, None, None]) * jax.lax.rsqrt(var + eps)[None, :, None, None]
    y = y * gamma[None, :, None, None] + beta[None, :, None, None]
    return jnp.maximum(y, 0.0)


def vgg_block_ref(x_nchw, params):
    y = _ref_stage(x_nchw, params["w1"], params["b1"], params["gamma1"], params["beta1"])
    y = _ref_stage(y, params["w2"], params["b2"], params["gamma2"], params["beta2"])
    return y


if __name__ == "__main__":
    key = jax.random.PRNGKey(0)
    k_x, k_p = jax.random.split(key)

    N, Cin, H, W = 2, 4, 16, 16
    Cmid, Cout = 8, 8
    x = jax.random.normal(k_x, (N, Cin, H, W), jnp.float32)
    params = init_vgg_block_params(k_p, Cin, Cmid, Cout)

    # row_tile=8 -> 2 row tiles per image: exercises the cross-tile halo fetch
    # and both border-clamp paths.
    fwd = jax.jit(lambda xx, pp: vgg_block(xx, pp, row_tile=8))
    out = jax.block_until_ready(fwd(x, params))
    ref = jax.block_until_ready(vgg_block_ref(x, params))

    assert out.shape == (N, Cout, H, W)
    # bf16 MXU operands + bf16 intermediates/final store -> relaxed tolerance.
    assert jnp.max(jnp.abs(out - ref)) < 5e-2
    print("KERNEL_OK")
</pallas_src>

<mosaic_0001>
module attributes {stable_mosaic.version = 11 : i64} {
  func.func @_bn_relu_kernel(%arg0: i32, %arg1: i32, %arg2: memref<1x8x16x8xbf16, #tpu.memory_space<vmem>>, %arg3: memref<1x8xf32, #tpu.memory_space<vmem>>, %arg4: memref<1x8xf32, #tpu.memory_space<vmem>>, %arg5: memref<1x8x16x8xbf16, #tpu.memory_space<vmem>>) attributes {dimension_semantics = [#tpu.dimension_semantics<parallel>, #tpu.dimension_semantics<parallel>], iteration_bounds = array<i64: 2, 2>, scalar_prefetch = 0 : i64, scratch_operands = 0 : i64, tpu.core_type = #tpu.core_type<tc>, window_params = [{transform_indices = @transform_0, window_bounds = array<i64: 1, 8, 16, 8>}, {pipeline_mode = #tpu.pipeline_mode<synchronous>, transform_indices = @transform_1, window_bounds = array<i64: 1, 8>}, {pipeline_mode = #tpu.pipeline_mode<synchronous>, transform_indices = @transform_2, window_bounds = array<i64: 1, 8>}, {transform_indices = @transform_3, window_bounds = array<i64: 1, 8, 16, 8>}]} {
    %c0 = arith.constant 0 : index
    %c0_0 = arith.constant 0 : index
    %c0_1 = arith.constant 0 : index
    %c0_2 = arith.constant 0 : index
    %0 = vector.load %arg2[%c0, %c0_0, %c0_1, %c0_2] : memref<1x8x16x8xbf16, #tpu.memory_space<vmem>>, vector<1x8x16x8xbf16>
    %1 = vector.shape_cast %0 : vector<1x8x16x8xbf16> to vector<8x16x8xbf16>
    %2 = arith.extf %1 : vector<8x16x8xbf16> to vector<8x16x8xf32>
    %c0_3 = arith.constant 0 : index
    %c0_4 = arith.constant 0 : index
    %3 = vector.load %arg3[%c0_3, %c0_4] : memref<1x8xf32, #tpu.memory_space<vmem>>, vector<1x8xf32>
    %4 = vector.shape_cast %3 : vector<1x8xf32> to vector<8xf32>
    %5 = vector.shape_cast %4 : vector<8xf32> to vector<1x1x8xf32>
    %6 = vector.broadcast %5 : vector<1x1x8xf32> to vector<8x16x8xf32>
    %7 = arith.mulf %2, %6 : vector<8x16x8xf32>
    %c0_5 = arith.constant 0 : index
    %c0_6 = arith.constant 0 : index
    %8 = vector.load %arg4[%c0_5, %c0_6] : memref<1x8xf32, #tpu.memory_space<vmem>>, vector<1x8xf32>
    %9 = vector.shape_cast %8 : vector<1x8xf32> to vector<8xf32>
    %10 = vector.shape_cast %9 : vector<8xf32> to vector<1x1x8xf32>
    %11 = vector.broadcast %10 : vector<1x1x8xf32> to vector<8x16x8xf32>
    %12 = arith.addf %7, %11 : vector<8x16x8xf32>
    %cst = arith.constant 0.000000e+00 : f32
    %13 = vector.broadcast %cst : f32 to vector<8x16x8xf32>
    %14 = arith.maximumf %12, %13 : vector<8x16x8xf32>
    %15 = arith.truncf %14 : vector<8x16x8xf32> to vector<8x16x8xbf16>
    %c0_7 = arith.constant 0 : index
    %c0_8 = arith.constant 0 : index
    %c0_9 = arith.constant 0 : index
    %c0_10 = arith.constant 0 : index
    %16 = vector.load %arg5[%c0_7, %c0_8, %c0_9, %c0_10] : memref<1x8x16x8xbf16, #tpu.memory_space<vmem>>, vector<1x8x16x8xbf16>
    %17 = vector.shape_cast %16 : vector<1x8x16x8xbf16> to vector<8x16x8xbf16>
    %18 = vector.shape_cast %15 : vector<8x16x8xbf16> to vector<1x8x16x8xbf16>
    tpu.vector_store %arg5[%c0_7, %c0_8, %c0_9, %c0_10], %18 {strides = array<i32>} : memref<1x8x16x8xbf16, #tpu.memory_space<vmem>>, vector<1x8x16x8xbf16>,
    return
  }
  func.func @transform_0(%arg0: i32, %arg1: i32) -> (i32, i32, i32, i32) {
    %c0_i32 = arith.constant 0 : i32
    %c0_i32_0 = arith.constant 0 : i32
    %c0_i32_1 = arith.constant 0 : i32
    return %arg0, %arg1, %c0_i32, %c0_i32_0 : i32, i32, i32, i32
  }
  func.func @transform_1(%arg0: i32, %arg1: i32) -> (i32, i32) {
    %c0_i32 = arith.constant 0 : i32
    %c0_i32_0 = arith.constant 0 : i32
    %c0_i32_1 = arith.constant 0 : i32
    return %c0_i32, %c0_i32_0 : i32, i32
  }
  func.func @transform_2(%arg0: i32, %arg1: i32) -> (i32, i32) {
    %c0_i32 = arith.constant 0 : i32
    %c0_i32_0 = arith.constant 0 : i32
    %c0_i32_1 = arith.constant 0 : i32
    return %c0_i32, %c0_i32_0 : i32, i32
  }
  func.func @transform_3(%arg0: i32, %arg1: i32) -> (i32, i32, i32, i32) {
    %c0_i32 = arith.constant 0 : i32
    %c0_i32_0 = arith.constant 0 : i32
    %c0_i32_1 = arith.constant 0 : i32
    return %arg0, %arg1, %c0_i32, %c0_i32_0 : i32, i32, i32, i32
  }
}

module attributes {stable_mosaic.version = 11 : i64} {
  func.func @_conv3x3_kernel(%arg0: i32, %arg1: i32, %arg2: memref<1x1x16x4xbf16, #tpu.memory_space<vmem>>, %arg3: memref<1x8x16x4xbf16, #tpu.memory_space<vmem>>, %arg4: memref<1x1x16x4xbf16, #tpu.memory_space<vmem>>, %arg5: memref<3x12x8xbf16, #tpu.memory_space<vmem>>, %arg6: memref<1x8x16x8xbf16, #tpu.memory_space<vmem>>, %arg7: memref<1x1x1x8xf32, #tpu.memory_space<vmem>>, %arg8: memref<1x1x1x8xf32, #tpu.memory_space<vmem>>, %arg9: memref<10x18x4xbf16, #tpu.memory_space<vmem>>, %arg10: memref<128x12xbf16, #tpu.memory_space<vmem>>) attributes {dimension_semantics = [#tpu.dimension_semantics<parallel>, #tpu.dimension_semantics<parallel>], iteration_bounds = array<i64: 2, 2>, scalar_prefetch = 0 : i64, scratch_operands = 2 : i64, tpu.core_type = #tpu.core_type<tc>, window_params = [{transform_indices = @transform_0, window_bounds = array<i64: 1, 1, 16, 4>}, {transform_indices = @transform_1, window_bounds = array<i64: 1, 8, 16, 4>}, {transform_indices = @transform_2, window_bounds = array<i64: 1, 1, 16, 4>}, {pipeline_mode = #tpu.pipeline_mode<synchronous>, transform_indices = @transform_3, window_bounds = array<i64: 3, 12, 8>}, {transform_indices = @transform_4, window_bounds = array<i64: 1, 8, 16, 8>}, {transform_indices = @transform_5, window_bounds = array<i64: 1, 1, 1, 8>}, {transform_indices = @transform_6, window_bounds = array<i64: 1, 1, 1, 8>}]} {
    %cst = arith.constant 0.000000e+00 : bf16
    %0 = vector.broadcast %cst : bf16 to vector<1x18x4xbf16>
    %c0 = arith.constant 0 : index
    %c0_0 = arith.constant 0 : index
    %c0_1 = arith.constant 0 : index
    %1 = vector.load %arg9[%c0, %c0_0, %c0_1] : memref<10x18x4xbf16, #tpu.memory_space<vmem>>, vector<1x18x4xbf16>
    tpu.vector_store %arg9[%c0, %c0_0, %c0_1], %0 {strides = array<i32>} : memref<10x18x4xbf16, #tpu.memory_space<vmem>>, vector<1x18x4xbf16>,
    %cst_2 = arith.constant 0.000000e+00 : bf16
    %2 = vector.broadcast %cst_2 : bf16 to vector<1x18x4xbf16>
    %c9 = arith.constant 9 : index
    %c0_3 = arith.constant 0 : index
    %c0_4 = arith.constant 0 : index
    %3 = vector.load %arg9[%c9, %c0_3, %c0_4] : memref<10x18x4xbf16, #tpu.memory_space<vmem>>, vector<1x18x4xbf16>
    tpu.vector_store %arg9[%c9, %c0_3, %c0_4], %2 {strides = array<i32>} : memref<10x18x4xbf16, #tpu.memory_space<vmem>>, vector<1x18x4xbf16>,
    %cst_5 = arith.constant 0.000000e+00 : bf16
    %4 = vector.broadcast %cst_5 : bf16 to vector<10x1x4xbf16>
    %c0_6 = arith.constant 0 : index
    %c0_7 = arith.constant 0 : index
    %c0_8 = arith.constant 0 : index
    %5 = vector.load %arg9[%c0_6, %c0_7, %c0_8] : memref<10x18x4xbf16, #tpu.memory_space<vmem>>, vector<10x1x4xbf16>
    tpu.vector_store %arg9[%c0_6, %c0_7, %c0_8], %4 {strides = array<i32>} : memref<10x18x4xbf16, #tpu.memory_space<vmem>>, vector<10x1x4xbf16>,
    %cst_9 = arith.constant 0.000000e+00 : bf16
    %6 = vector.broadcast %cst_9 : bf16 to vector<10x1x4xbf16>
    %c0_10 = arith.constant 0 : index
    %c17 = arith.constant 17 : index
    %c0_11 = arith.constant 0 : index
    %7 = vector.load %arg9[%c0_10, %c17, %c0_11] : memref<10x18x4xbf16, #tpu.memory_space<vmem>>, vector<10x1x4xbf16>
    tpu.vector_store %arg9[%c0_10, %c17, %c0_11], %6 {strides = array<i32>} : memref<10x18x4xbf16, #tpu.memory_space<vmem>>, vector<10x1x4xbf16>,
    %c0_12 = arith.constant 0 : index
    %c0_13 = arith.constant 0 : index
    %c0_14 = arith.constant 0 : index
    %c0_15 = arith.constant 0 : index
    %8 = vector.load %arg3[%c0_12, %c0_13, %c0_14, %c0_15] : memref<1x8x16x4xbf16, #tpu.memory_space<vmem>>, vector<1x8x16x4xbf16>
    %9 = vector.shape_cast %8 : vector<1x8x16x4xbf16> to vector<8x16x4xbf16>
    %c1 = arith.constant 1 : index
    %c1_16 = arith.constant 1 : index
    %c0_17 = arith.constant 0 : index
    %10 = vector.load %arg9[%c1, %c1_16, %c0_17] : memref<10x18x4xbf16, #tpu.memory_space<vmem>>, vector<8x16x4xbf16>
    tpu.vector_store %arg9[%c1, %c1_16, %c0_17], %9 {strides = array<i32>} : memref<10x18x4xbf16, #tpu.memory_space<vmem>>, vector<8x16x4xbf16>,
    %c0_i32 = arith.constant 0 : i32
    %11 = arith.cmpi sgt, %arg1, %c0_i32 : i32
    %12 = arith.extui %11 : i1 to i32
    %c0_i32_18 = arith.constant 0 : i32
    %13 = arith.cmpi ne, %12, %c0_i32_18 : i32
    scf.if %13 {
      %c0_95 = arith.constant 0 : index
      %c0_96 = arith.constant 0 : index
      %c0_97 = arith.constant 0 : index
      %c0_98 = arith.constant 0 : index
      %76 = vector.load %arg2[%c0_95, %c0_96, %c0_97, %c0_98] : memref<1x1x16x4xbf16, #tpu.memory_space<vmem>>, vector<1x1x16x4xbf16>
      %77 = vector.shape_cast %76 : vector<1x1x16x4xbf16> to vector<1x16x4xbf16>
      %c0_99 = arith.constant 0 : index
      %c1_100 = arith.constant 1 : index
      %c0_101 = arith.constant 0 : index
      %78 = vector.load %arg9[%c0_99, %c1_100, %c0_101] : memref<10x18x4xbf16, #tpu.memory_space<vmem>>, vector<1x16x4xbf16>
      tpu.vector_store %arg9[%c0_99, %c1_100, %c0_101], %77 {strides = array<i32>} : memref<10x18x4xbf16, #tpu.memory_space<vmem>>, vector<1x16x4xbf16>,
    } else {
    }
    %c1_i32 = arith.constant 1 : i32
    %14 = arith.cmpi slt, %arg1, %c1_i32 : i32
    %15 = arith.extui %14 : i1 to i32
    %c0_i32_19 = arith.constant 0 : i32
    %16 = arith.cmpi ne, %15, %c0_i32_19 : i32
    scf.if %16 {
      %c0_95 = arith.constant 0 : index
      %c0_96 = arith.constant 0 : index
      %c0_97 = arith.constant 0 : index
      %c0_98 = arith.constant 0 : index
      %76 = vector.load %arg4[%c0_95, %c0_96, %c0_97, %c0_98] : memref<1x1x16x4xbf16, #tpu.memory_space<vmem>>, vector<1x1x16x4xbf16>
      %77 = vector.shape_cast %76 : vector<1x1x16x4xbf16> to vector<1x16x4xbf16>
      %c9_99 = arith.constant 9 : index
      %c1_100 = arith.constant 1 : index
      %c0_101 = arith.constant 0 : index
      %78 = vector.load %arg9[%c9_99, %c1_100, %c0_101] : memref<10x18x4xbf16, #tpu.memory_space<vmem>>, vector<1x16x4xbf16>
      tpu.vector_store %arg9[%c9_99, %c1_100, %c0_101], %77 {strides = array<i32>} : memref<10x18x4xbf16, #tpu.memory_space<vmem>>, vector<1x16x4xbf16>,
    } else {
    }
    %cst_20 = arith.constant 0.000000e+00 : f32
    %17 = vector.broadcast %cst_20 : f32 to vector<128x8xf32>
    %c0_21 = arith.constant 0 : index
    %c0_22 = arith.constant 0 : index
    %c0_23 = arith.constant 0 : index
    %18 = vector.load %arg9[%c0_21, %c0_22, %c0_23] : memref<10x18x4xbf16, #tpu.memory_space<vmem>>, vector<8x16x4xbf16>
    %19 = vector.shape_cast %18 : vector<8x16x4xbf16> to vector<128x4xbf16>
    %c0_24 = arith.constant 0 : index
    %c0_25 = arith.constant 0 : index
    %20 = vector.load %arg10[%c0_24, %c0_25] : memref<128x12xbf16, #tpu.memory_space<vmem>>, vector<128x4xbf16>
    tpu.vector_store %arg10[%c0_24, %c0_25], %19 {strides = array<i32>} : memref<128x12xbf16, #tpu.memory_space<vmem>>, vector<128x4xbf16>,
    %c0_26 = arith.constant 0 : index
    %c1_27 = arith.constant 1 : index
    %c0_28 = arith.constant 0 : index
    %21 = vector.load %arg9[%c0_26, %c1_27, %c0_28] : memref<10x18x4xbf16, #tpu.memory_space<vmem>>, vector<8x16x4xbf16>
    %22 = vector.shape_cast %21 : vector<8x16x4xbf16> to vector<128x4xbf16>
    %c0_29 = arith.constant 0 : index
    %c4 = arith.constant 4 : index
    %23 = vector.load %arg10[%c0_29, %c4] : memref<128x12xbf16, #tpu.memory_space<vmem>>, vector<128x4xbf16>
    tpu.vector_store %arg10[%c0_29, %c4], %22 {strides = array<i32>} : memref<128x12xbf16, #tpu.memory_space<vmem>>, vector<128x4xbf16>,
    %c0_30 = arith.constant 0 : index
    %c2 = arith.constant 2 : index
    %c0_31 = arith.constant 0 : index
    %24 = vector.load %arg9[%c0_30, %c2, %c0_31] : memref<10x18x4xbf16, #tpu.memory_space<vmem>>, vector<8x16x4xbf16>
    %25 = vector.shape_cast %24 : vector<8x16x4xbf16> to vector<128x4xbf16>
    %c0_32 = arith.constant 0 : index
    %c8 = arith.constant 8 : index
    %26 = vector.load %arg10[%c0_32, %c8] : memref<128x12xbf16, #tpu.memory_space<vmem>>, vector<128x4xbf16>
    tpu.vector_store %arg10[%c0_32, %c8], %25 {strides = array<i32>} : memref<128x12xbf16, #tpu.memory_space<vmem>>, vector<128x4xbf16>,
    %c0_33 = arith.constant 0 : index
    %c0_34 = arith.constant 0 : index
    %27 = vector.load %arg10[%c0_33, %c0_34] : memref<128x12xbf16, #tpu.memory_space<vmem>>, vector<128x12xbf16>
    %c0_35 = arith.constant 0 : index
    %c0_36 = arith.constant 0 : index
    %c0_37 = arith.constant 0 : index
    %28 = vector.load %arg5[%c0_35, %c0_36, %c0_37] : memref<3x12x8xbf16, #tpu.memory_space<vmem>>, vector<1x12x8xbf16>
    %29 = vector.shape_cast %28 : vector<1x12x8xbf16> to vector<12x8xbf16>
    %cst_38 = arith.constant dense<0.000000e+00> : vector<128x8xf32>
    %30 = tpu.matmul %27, %29, %cst_38 {dimension_numbers = #tpu.dot_dimension_numbers<[1], [0], [0], [1], [0, 0, 1, 1], [], []>} : vector<128x12xbf16>, vector<12x8xbf16>, vector<128x8xf32> -> vector<128x8xf32>
    %31 = arith.addf %17, %30 : vector<128x8xf32>
    %c1_39 = arith.constant 1 : index
    %c0_40 = arith.constant 0 : index
    %c0_41 = arith.constant 0 : index
    %32 = vector.load %arg9[%c1_39, %c0_40, %c0_41] : memref<10x18x4xbf16, #tpu.memory_space<vmem>>, vector<8x16x4xbf16>
    %33 = vector.shape_cast %32 : vector<8x16x4xbf16> to vector<128x4xbf16>
    %c0_42 = arith.constant 0 : index
    %c0_43 = arith.constant 0 : index
    %34 = vector.load %arg10[%c0_42, %c0_43] : memref<128x12xbf16, #tpu.memory_space<vmem>>, vector<128x4xbf16>
    tpu.vector_store %arg10[%c0_42, %c0_43], %33 {strides = array<i32>} : memref<128x12xbf16, #tpu.memory_space<vmem>>, vector<128x4xbf16>,
    %c1_44 = arith.constant 1 : index
    %c1_45 = arith.constant 1 : index
    %c0_46 = arith.constant 0 : index
    %35 = vector.load %arg9[%c1_44, %c1_45, %c0_46] : memref<10x18x4xbf16, #tpu.memory_space<vmem>>, vector<8x16x4xbf16>
    %36 = vector.shape_cast %35 : vector<8x16x4xbf16> to vector<128x4xbf16>
    %c0_47 = arith.constant 0 : index
    %c4_48 = arith.constant 4 : index
    %37 = vector.load %arg10[%c0_47, %c4_48] : memref<128x12xbf16, #tpu.memory_space<vmem>>, vector<128x4xbf16>
    tpu.vector_store %arg10[%c0_47, %c4_48], %36 {strides = array<i32>} : memref<128x12xbf16, #tpu.memory_space<vmem>>, vector<128x4xbf16>,
    %c1_49 = arith.constant 1 : index
    %c2_50 = arith.constant 2 : index
    %c0_51 = arith.constant 0 : index
    %38 = vector.load %arg9[%c1_49, %c2_50, %c0_51] : memref<10x18x4xbf16, #tpu.memory_space<vmem>>, vector<8x16x4xbf16>
    %39 = vector.shape_cast %38 : vector<8x16x4xbf16> to vector<128x4xbf16>
    %c0_52 = arith.constant 0 : index
    %c8_53 = arith.constant 8 : index
    %40 = vector.load %arg10[%c0_52, %c8_53] : memref<128x12xbf16, #tpu.memory_space<vmem>>, vector<128x4xbf16>
    tpu.vector_store %arg10[%c0_52, %c8_53], %39 {strides = array<i32>} : memref<128x12xbf16, #tpu.memory_space<vmem>>, vector<128x4xbf16>,
    %c0_54 = arith.constant 0 : index
    %c0_55 = arith.constant 0 : index
    %41 = vector.load %arg10[%c0_54, %c0_55] : memref<128x12xbf16, #tpu.memory_space<vmem>>, vector<128x12xbf16>
    %c1_56 = arith.constant 1 : index
    %c0_57 = arith.constant 0 : index
    %c0_58 = arith.constant 0 : index
    %42 = vector.load %arg5[%c1_56, %c0_57, %c0_58] : memref<3x12x8xbf16, #tpu.memory_space<vmem>>, vector<1x12x8xbf16>
    %43 = vector.shape_cast %42 : vector<1x12x8xbf16> to vector<12x8xbf16>
    %cst_59 = arith.constant dense<0.000000e+00> : vector<128x8xf32>
    %44 = tpu.matmul %41, %43, %cst_59 {dimension_numbers = #tpu.dot_dimension_numbers<[1], [0], [0], [1], [0, 0, 1, 1], [], []>} : vector<128x12xbf16>, vector<12x8xbf16>, vector<128x8xf32> -> vector<128x8xf32>
    %45 = arith.addf %31, %44 : vector<128x8xf32>
    %c2_60 = arith.constant 2 : index
    %c0_61 = arith.constant 0 : index
    %c0_62 = arith.constant 0 : index
    %46 = vector.load %arg9[%c2_60, %c0_61, %c0_62] : memref<10x18x4xbf16, #tpu.memory_space<vmem>>, vector<8x16x4xbf16>
    %47 = vector.shape_cast %46 : vector<8x16x4xbf16> to vector<128x4xbf16>
    %c0_63 = arith.constant 0 : index
    %c0_64 = arith.constant 0 : index
    %48 = vector.load %arg10[%c0_63, %c0_64] : memref<128x12xbf16, #tpu.memory_space<vmem>>, vector<128x4xbf16>
    tpu.vector_store %arg10[%c0_63, %c0_64], %47 {strides = array<i32>} : memref<128x12xbf16, #tpu.memory_space<vmem>>, vector<128x4xbf16>,
    %c2_65 = arith.constant 2 : index
    %c1_66 = arith.constant 1 : index
    %c0_67 = arith.constant 0 : index
    %49 = vector.load %arg9[%c2_65, %c1_66, %c0_67] : memref<10x18x4xbf16, #tpu.memory_space<vmem>>, vector<8x16x4xbf16>
    %50 = vector.shape_cast %49 : vector<8x16x4xbf16> to vector<128x4xbf16>
    %c0_68 = arith.constant 0 : index
    %c4_69 = arith.constant 4 : index
    %51 = vector.load %arg10[%c0_68, %c4_69] : memref<128x12xbf16, #tpu.memory_space<vmem>>, vector<128x4xbf16>
    tpu.vector_store %arg10[%c0_68, %c4_69], %50 {strides = array<i32>} : memref<128x12xbf16, #tpu.memory_space<vmem>>, vector<128x4xbf16>,
    %c2_70 = arith.constant 2 : index
    %c2_71 = arith.constant 2 : index
    %c0_72 = arith.constant 0 : index
    %52 = vector.load %arg9[%c2_70, %c2_71, %c0_72] : memref<10x18x4xbf16, #tpu.memory_space<vmem>>, vector<8x16x4xbf16>
    %53 = vector.shape_cast %52 : vector<8x16x4xbf16> to vector<128x4xbf16>
    %c0_73 = arith.constant 0 : index
    %c8_74 = arith.constant 8 : index
    %54 = vector.load %arg10[%c0_73, %c8_74] : memref<128x12xbf16, #tpu.memory_space<vmem>>, vector<128x4xbf16>
    tpu.vector_store %arg10[%c0_73, %c8_74], %53 {strides = array<i32>} : memref<128x12xbf16, #tpu.memory_space<vmem>>, vector<128x4xbf16>,
    %c0_75 = arith.constant 0 : index
    %c0_76 = arith.constant 0 : index
    %55 = vector.load %arg10[%c0_75, %c0_76] : memref<128x12xbf16, #tpu.memory_space<vmem>>, vector<128x12xbf16>
    %c2_77 = arith.constant 2 : index
    %c0_78 = arith.constant 0 : index
    %c0_79 = arith.constant 0 : index
    %56 = vector.load %arg5[%c2_77, %c0_78, %c0_79] : memref<3x12x8xbf16, #tpu.memory_space<vmem>>, vector<1x12x8xbf16>
    %57 = vector.shape_cast %56 : vector<1x12x8xbf16> to vector<12x8xbf16>
    %cst_80 = arith.constant dense<0.000000e+00> : vector<128x8xf32>
    %58 = tpu.matmul %55, %57, %cst_80 {dimension_numbers = #tpu.dot_dimension_numbers<[1], [0], [0], [1], [0, 0, 1, 1], [], []>} : vector<128x12xbf16>, vector<12x8xbf16>, vector<128x8xf32> -> vector<128x8xf32>
    %59 = arith.addf %45, %58 : vector<128x8xf32>
    %60 = vector.shape_cast %59 : vector<128x8xf32> to vector<8x16x8xf32>
    %61 = arith.truncf %60 : vector<8x16x8xf32> to vector<8x16x8xbf16>
    %c0_81 = arith.constant 0 : index
    %c0_82 = arith.constant 0 : index
    %c0_83 = arith.constant 0 : index
    %c0_84 = arith.constant 0 : index
    %62 = vector.load %arg6[%c0_81, %c0_82, %c0_83, %c0_84] : memref<1x8x16x8xbf16, #tpu.memory_space<vmem>>, vector<1x8x16x8xbf16>
    %63 = vector.shape_cast %62 : vector<1x8x16x8xbf16> to vector<8x16x8xbf16>
    %64 = vector.shape_cast %61 : vector<8x16x8xbf16> to vector<1x8x16x8xbf16>
    tpu.vector_store %arg6[%c0_81, %c0_82, %c0_83, %c0_84], %64 {strides = array<i32>} : memref<1x8x16x8xbf16, #tpu.memory_space<vmem>>, vector<1x8x16x8xbf16>,
    %cst_85 = arith.constant dense<0.000000e+00> : vector<8xf32>
    %65 = vector.multi_reduction <add>, %59, %cst_85 [0] : vector<128x8xf32> to vector<8xf32>
    %66 = vector.shape_cast %65 : vector<8xf32> to vector<1x8xf32>
    %c0_86 = arith.constant 0 : index
    %c0_87 = arith.constant 0 : index
    %c0_88 = arith.constant 0 : index
    %c0_89 = arith.constant 0 : index
    %67 = vector.load %arg7[%c0_86, %c0_87, %c0_88, %c0_89] : memref<1x1x1x8xf32, #tpu.memory_space<vmem>>, vector<1x1x1x8xf32>
    %68 = vector.shape_cast %67 : vector<1x1x1x8xf32> to vector<1x8xf32>
    %69 = vector.shape_cast %66 : vector<1x8xf32> to vector<1x1x1x8xf32>
    tpu.vector_store %arg7[%c0_86, %c0_87, %c0_88, %c0_89], %69 {strides = array<i32>} : memref<1x1x1x8xf32, #tpu.memory_space<vmem>>, vector<1x1x1x8xf32>,
    %70 = arith.mulf %59, %59 : vector<128x8xf32>
    %cst_90 = arith.constant dense<0.000000e+00> : vector<8xf32>
    %71 = vector.multi_reduction <add>, %70, %cst_90 [0] : vector<128x8xf32> to vector<8xf32>
    %72 = vector.shape_cast %71 : vector<8xf32> to vector<1x8xf32>
    %c0_91 = arith.constant 0 : index
    %c0_92 = arith.constant 0 : index
    %c0_93 = arith.constant 0 : index
    %c0_94 = arith.constant 0 : index
    %73 = vector.load %arg8[%c0_91, %c0_92, %c0_93, %c0_94] : memref<1x1x1x8xf32, #tpu.memory_space<vmem>>, vector<1x1x1x8xf32>
    %74 = vector.shape_cast %73 : vector<1x1x1x8xf32> to vector<1x8xf32>
    %75 = vector.shape_cast %72 : vector<1x8xf32> to vector<1x1x1x8xf32>
    tpu.vector_store %arg8[%c0_91, %c0_92, %c0_93, %c0_94], %75 {strides = array<i32>} : memref<1x1x1x8xf32, #tpu.memory_space<vmem>>, vector<1x1x1x8xf32>,
    return
  }
  func.func @transform_0(%arg0: i32, %arg1: i32) -> (i32, i32, i32, i32) {
    %c8_i32 = arith.constant 8 : i32
    %0 = arith.muli %arg1, %c8_i32 : i32
    %c1_i32 = arith.constant 1 : i32
    %1 = arith.subi %0, %c1_i32 : i32
    %c0_i32 = arith.constant 0 : i32
    %2 = arith.maxsi %1, %c0_i32 : i32
    %c0_i32_0 = arith.constant 0 : i32
    %c0_i32_1 = arith.constant 0 : i32
    %c0_i32_2 = arith.constant 0 : i32
    return %arg0, %2, %c0_i32_0, %c0_i32_1 : i32, i32, i32, i32
  }
  func.func @transform_1(%arg0: i32, %arg1: i32) -> (i32, i32, i32, i32) {
    %c0_i32 = arith.constant 0 : i32
    %c0_i32_0 = arith.constant 0 : i32
    %c0_i32_1 = arith.constant 0 : i32
    return %arg0, %arg1, %c0_i32, %c0_i32_0 : i32, i32, i32, i32
  }
  func.func @transform_2(%arg0: i32, %arg1: i32) -> (i32, i32, i32, i32) {
    %c1_i32 = arith.constant 1 : i32
    %0 = arith.addi %arg1, %c1_i32 : i32
    %c8_i32 = arith.constant 8 : i32
    %1 = arith.muli %0, %c8_i32 : i32
    %c15_i32 = arith.constant 15 : i32
    %2 = arith.minsi %1, %c15_i32 : i32
    %c0_i32 = arith.constant 0 : i32
    %c0_i32_0 = arith.constant 0 : i32
    %c0_i32_1 = arith.constant 0 : i32
    return %arg0, %2, %c0_i32, %c0_i32_0 : i32, i32, i32, i32
  }
  func.func @transform_3(%arg0: i32, %arg1: i32) -> (i32, i32, i32) {
    %c0_i32 = arith.constant 0 : i32
    %c0_i32_0 = arith.constant 0 : i32
    %c0_i32_1 = arith.constant 0 : i32
    %c0_i32_2 = arith.constant 0 : i32
    return %c0_i32, %c0_i32_0, %c0_i32_1 : i32, i32, i32
  }
  func.func @transform_4(%arg0: i32, %arg1: i32) -> (i32, i32, i32, i32) {
    %c0_i32 = arith.constant 0 : i32
    %c0_i32_0 = arith.constant 0 : i32
    %c0_i32_1 = arith.constant 0 : i32
    return %arg0, %arg1, %c0_i32, %c0_i32_0 : i32, i32, i32, i32
  }
  func.func @transform_5(%arg0: i32, %arg1: i32) -> (i32, i32, i32, i32) {
    %c0_i32 = arith.constant 0 : i32
    %c0_i32_0 = arith.constant 0 : i32
    %c0_i32_1 = arith.constant 0 : i32
    return %arg0, %arg1, %c0_i32, %c0_i32_0 : i32, i32, i32, i32
  }
  func.func @transform_6(%arg0: i32, %arg1: i32) -> (i32, i32, i32, i32) {
    %c0_i32 = arith.constant 0 : i32
    %c0_i32_0 = arith.constant 0 : i32
    %c0_i32_1 = arith.constant 0 : i32
    return %arg0, %arg1, %c0_i32, %c0_i32_0 : i32, i32, i32, i32
  }
}

module attributes {stable_mosaic.version = 11 : i64} {
  func.func @_conv3x3_kernel(%arg0: i32, %arg1: i32, %arg2: memref<1x1x16x8xbf16, #tpu.memory_space<vmem>>, %arg3: memref<1x8x16x8xbf16, #tpu.memory_space<vmem>>, %arg4: memref<1x1x16x8xbf16, #tpu.memory_space<vmem>>, %arg5: memref<3x24x8xbf16, #tpu.memory_space<vmem>>, %arg6: memref<1x8xf32, #tpu.memory_space<vmem>>, %arg7: memref<1x8xf32, #tpu.memory_space<vmem>>, %arg8: memref<1x8x16x8xbf16, #tpu.memory_space<vmem>>, %arg9: memref<1x1x1x8xf32, #tpu.memory_space<vmem>>, %arg10: memref<1x1x1x8xf32, #tpu.memory_space<vmem>>, %arg11: memref<10x18x8xbf16, #tpu.memory_space<vmem>>, %arg12: memref<128x24xbf16, #tpu.memory_space<vmem>>) attributes {dimension_semantics = [#tpu.dimension_semantics<parallel>, #tpu.dimension_semantics<parallel>], iteration_bounds = array<i64: 2, 2>, scalar_prefetch = 0 : i64, scratch_operands = 2 : i64, tpu.core_type = #tpu.core_type<tc>, window_params = [{transform_indices = @transform_0, window_bounds = array<i64: 1, 1, 16, 8>}, {transform_indices = @transform_1, window_bounds = array<i64: 1, 8, 16, 8>}, {transform_indices = @transform_2, window_bounds = array<i64: 1, 1, 16, 8>}, {pipeline_mode = #tpu.pipeline_mode<synchronous>, transform_indices = @transform_3, window_bounds = array<i64: 3, 24, 8>}, {pipeline_mode = #tpu.pipeline_mode<synchronous>, transform_indices = @transform_4, window_bounds = array<i64: 1, 8>}, {pipeline_mode = #tpu.pipeline_mode<synchronous>, transform_indices = @transform_5, window_bounds = array<i64: 1, 8>}, {transform_indices = @transform_6, window_bounds = array<i64: 1, 8, 16, 8>}, {transform_indices = @transform_7, window_bounds = array<i64: 1, 1, 1, 8>}, {transform_indices = @transform_8, window_bounds = array<i64: 1, 1, 1, 8>}]} {
    %cst = arith.constant 0.000000e+00 : bf16
    %0 = vector.broadcast %cst : bf16 to vector<1x18x8xbf16>
    %c0 = arith.constant 0 : index
    %c0_0 = arith.constant 0 : index
    %c0_1 = arith.constant 0 : index
    %1 = vector.load %arg11[%c0, %c0_0, %c0_1] : memref<10x18x8xbf16, #tpu.memory_space<vmem>>, vector<1x18x8xbf16>
    tpu.vector_store %arg11[%c0, %c0_0, %c0_1], %0 {strides = array<i32>} : memref<10x18x8xbf16, #tpu.memory_space<vmem>>, vector<1x18x8xbf16>,
    %cst_2 = arith.constant 0.000000e+00 : bf16
    %2 = vector.broadcast %cst_2 : bf16 to vector<1x18x8xbf16>
    %c9 = arith.constant 9 : index
    %c0_3 = arith.constant 0 : index
    %c0_4 = arith.constant 0 : index
    %3 = vector.load %arg11[%c9, %c0_3, %c0_4] : memref<10x18x8xbf16, #tpu.memory_space<vmem>>, vector<1x18x8xbf16>
    tpu.vector_store %arg11[%c9, %c0_3, %c0_4], %2 {strides = array<i32>} : memref<10x18x8xbf16, #tpu.memory_space<vmem>>, vector<1x18x8xbf16>,
    %cst_5 = arith.constant 0.000000e+00 : bf16
    %4 = vector.broadcast %cst_5 : bf16 to vector<10x1x8xbf16>
    %c0_6 = arith.constant 0 : index
    %c0_7 = arith.constant 0 : index
    %c0_8 = arith.constant 0 : index
    %5 = vector.load %arg11[%c0_6, %c0_7, %c0_8] : memref<10x18x8xbf16, #tpu.memory_space<vmem>>, vector<10x1x8xbf16>
    tpu.vector_store %arg11[%c0_6, %c0_7, %c0_8], %4 {strides = array<i32>} : memref<10x18x8xbf16, #tpu.memory_space<vmem>>, vector<10x1x8xbf16>,
    %cst_9 = arith.constant 0.000000e+00 : bf16
    %6 = vector.broadcast %cst_9 : bf16 to vector<10x1x8xbf16>
    %c0_10 = arith.constant 0 : index
    %c17 = arith.constant 17 : index
    %c0_11 = arith.constant 0 : index
    %7 = vector.load %arg11[%c0_10, %c17, %c0_11] : memref<10x18x8xbf16, #tpu.memory_space<vmem>>, vector<10x1x8xbf16>
    tpu.vector_store %arg11[%c0_10, %c17, %c0_11], %6 {strides = array<i32>} : memref<10x18x8xbf16, #tpu.memory_space<vmem>>, vector<10x1x8xbf16>,
    %c0_12 = arith.constant 0 : index
    %c0_13 = arith.constant 0 : index
    %c0_14 = arith.constant 0 : index
    %c0_15 = arith.constant 0 : index
    %8 = vector.load %arg3[%c0_12, %c0_13, %c0_14, %c0_15] : memref<1x8x16x8xbf16, #tpu.memory_space<vmem>>, vector<1x8x16x8xbf16>
    %9 = vector.shape_cast %8 : vector<1x8x16x8xbf16> to vector<8x16x8xbf16>
    %10 = arith.extf %9 : vector<8x16x8xbf16> to vector<8x16x8xf32>
    %c0_16 = arith.constant 0 : index
    %c0_17 = arith.constant 0 : index
    %11 = vector.load %arg6[%c0_16, %c0_17] : memref<1x8xf32, #tpu.memory_space<vmem>>, vector<1x8xf32>
    %12 = vector.shape_cast %11 : vector<1x8xf32> to vector<8xf32>
    %13 = vector.shape_cast %12 : vector<8xf32> to vector<1x1x8xf32>
    %14 = vector.broadcast %13 : vector<1x1x8xf32> to vector<8x16x8xf32>
    %15 = arith.mulf %10, %14 : vector<8x16x8xf32>
    %c0_18 = arith.constant 0 : index
    %c0_19 = arith.constant 0 : index
    %16 = vector.load %arg7[%c0_18, %c0_19] : memref<1x8xf32, #tpu.memory_space<vmem>>, vector<1x8xf32>
    %17 = vector.shape_cast %16 : vector<1x8xf32> to vector<8xf32>
    %18 = vector.shape_cast %17 : vector<8xf32> to vector<1x1x8xf32>
    %19 = vector.broadcast %18 : vector<1x1x8xf32> to vector<8x16x8xf32>
    %20 = arith.addf %15, %19 : vector<8x16x8xf32>
    %cst_20 = arith.constant 0.000000e+00 : f32
    %21 = vector.broadcast %cst_20 : f32 to vector<8x16x8xf32>
    %22 = arith.maximumf %20, %21 : vector<8x16x8xf32>
    %23 = arith.truncf %22 : vector<8x16x8xf32> to vector<8x16x8xbf16>
    %c1 = arith.constant 1 : index
    %c1_21 = arith.constant 1 : index
    %c0_22 = arith.constant 0 : index
    %24 = vector.load %arg11[%c1, %c1_21, %c0_22] : memref<10x18x8xbf16, #tpu.memory_space<vmem>>, vector<8x16x8xbf16>
    tpu.vector_store %arg11[%c1, %c1_21, %c0_22], %23 {strides = array<i32>} : memref<10x18x8xbf16, #tpu.memory_space<vmem>>, vector<8x16x8xbf16>,
    %c0_i32 = arith.constant 0 : i32
    %25 = arith.cmpi sgt, %arg1, %c0_i32 : i32
    %26 = arith.extui %25 : i1 to i32
    %c0_i32_23 = arith.constant 0 : i32
    %27 = arith.cmpi ne, %26, %c0_i32_23 : i32
    scf.if %27 {
      %c0_100 = arith.constant 0 : index
      %c0_101 = arith.constant 0 : index
      %c0_102 = arith.constant 0 : index
      %c0_103 = arith.constant 0 : index
      %90 = vector.load %arg2[%c0_100, %c0_101, %c0_102, %c0_103] : memref<1x1x16x8xbf16, #tpu.memory_space<vmem>>, vector<1x1x16x8xbf16>
      %91 = vector.shape_cast %90 : vector<1x1x16x8xbf16> to vector<1x16x8xbf16>
      %92 = arith.extf %91 : vector<1x16x8xbf16> to vector<1x16x8xf32>
      %c0_104 = arith.constant 0 : index
      %c0_105 = arith.constant 0 : index
      %93 = vector.load %arg6[%c0_104, %c0_105] : memref<1x8xf32, #tpu.memory_space<vmem>>, vector<1x8xf32>
      %94 = vector.shape_cast %93 : vector<1x8xf32> to vector<8xf32>
      %95 = vector.shape_cast %94 : vector<8xf32> to vector<1x1x8xf32>
      %96 = vector.broadcast %95 : vector<1x1x8xf32> to vector<1x16x8xf32>
      %97 = arith.mulf %92, %96 : vector<1x16x8xf32>
      %c0_106 = arith.constant 0 : index
      %c0_107 = arith.constant 0 : index
      %98 = vector.load %arg7[%c0_106, %c0_107] : memref<1x8xf32, #tpu.memory_space<vmem>>, vector<1x8xf32>
      %99 = vector.shape_cast %98 : vector<1x8xf32> to vector<8xf32>
      %100 = vector.shape_cast %99 : vector<8xf32> to vector<1x1x8xf32>
      %101 = vector.broadcast %100 : vector<1x1x8xf32> to vector<1x16x8xf32>
      %102 = arith.addf %97, %101 : vector<1x16x8xf32>
      %cst_108 = arith.constant 0.000000e+00 : f32
      %103 = vector.broadcast %cst_108 : f32 to vector<1x16x8xf32>
      %104 = arith.maximumf %102, %103 : vector<1x16x8xf32>
      %105 = arith.truncf %104 : vector<1x16x8xf32> to vector<1x16x8xbf16>
      %c0_109 = arith.constant 0 : index
      %c1_110 = arith.constant 1 : index
      %c0_111 = arith.constant 0 : index
      %106 = vector.load %arg11[%c0_109, %c1_110, %c0_111] : memref<10x18x8xbf16, #tpu.memory_space<vmem>>, vector<1x16x8xbf16>
      tpu.vector_store %arg11[%c0_109, %c1_110, %c0_111], %105 {strides = array<i32>} : memref<10x18x8xbf16, #tpu.memory_space<vmem>>, vector<1x16x8xbf16>,
    } else {
    }
    %c1_i32 = arith.constant 1 : i32
    %28 = arith.cmpi slt, %arg1, %c1_i32 : i32
    %29 = arith.extui %28 : i1 to i32
    %c0_i32_24 = arith.constant 0 : i32
    %30 = arith.cmpi ne, %29, %c0_i32_24 : i32
    scf.if %30 {
      %c0_100 = arith.constant 0 : index
      %c0_101 = arith.constant 0 : index
      %c0_102 = arith.constant 0 : index
      %c0_103 = arith.constant 0 : index
      %90 = vector.load %arg4[%c0_100, %c0_101, %c0_102, %c0_103] : memref<1x1x16x8xbf16, #tpu.memory_space<vmem>>, vector<1x1x16x8xbf16>
      %91 = vector.shape_cast %90 : vector<1x1x16x8xbf16> to vector<1x16x8xbf16>
      %92 = arith.extf %91 : vector<1x16x8xbf16> to vector<1x16x8xf32>
      %c0_104 = arith.constant 0 : index
      %c0_105 = arith.constant 0 : index
      %93 = vector.load %arg6[%c0_104, %c0_105] : memref<1x8xf32, #tpu.memory_space<vmem>>, vector<1x8xf32>
      %94 = vector.shape_cast %93 : vector<1x8xf32> to vector<8xf32>
      %95 = vector.shape_cast %94 : vector<8xf32> to vector<1x1x8xf32>
      %96 = vector.broadcast %95 : vector<1x1x8xf32> to vector<1x16x8xf32>
      %97 = arith.mulf %92, %96 : vector<1x16x8xf32>
      %c0_106 = arith.constant 0 : index
      %c0_107 = arith.constant 0 : index
      %98 = vector.load %arg7[%c0_106, %c0_107] : memref<1x8xf32, #tpu.memory_space<vmem>>, vector<1x8xf32>
      %99 = vector.shape_cast %98 : vector<1x8xf32> to vector<8xf32>
      %100 = vector.shape_cast %99 : vector<8xf32> to vector<1x1x8xf32>
      %101 = vector.broadcast %100 : vector<1x1x8xf32> to vector<1x16x8xf32>
      %102 = arith.addf %97, %101 : vector<1x16x8xf32>
      %cst_108 = arith.constant 0.000000e+00 : f32
      %103 = vector.broadcast %cst_108 : f32 to vector<1x16x8xf32>
      %104 = arith.maximumf %102, %103 : vector<1x16x8xf32>
      %105 = arith.truncf %104 : vector<1x16x8xf32> to vector<1x16x8xbf16>
      %c9_109 = arith.constant 9 : index
      %c1_110 = arith.constant 1 : index
      %c0_111 = arith.constant 0 : index
      %106 = vector.load %arg11[%c9_109, %c1_110, %c0_111] : memref<10x18x8xbf16, #tpu.memory_space<vmem>>, vector<1x16x8xbf16>
      tpu.vector_store %arg11[%c9_109, %c1_110, %c0_111], %105 {strides = array<i32>} : memref<10x18x8xbf16, #tpu.memory_space<vmem>>, vector<1x16x8xbf16>,
    } else {
    }
    %cst_25 = arith.constant 0.000000e+00 : f32
    %31 = vector.broadcast %cst_25 : f32 to vector<128x8xf32>
    %c0_26 = arith.constant 0 : index
    %c0_27 = arith.constant 0 : index
    %c0_28 = arith.constant 0 : index
    %32 = vector.load %arg11[%c0_26, %c0_27, %c0_28] : memref<10x18x8xbf16, #tpu.memory_space<vmem>>, vector<8x16x8xbf16>
    %33 = vector.shape_cast %32 : vector<8x16x8xbf16> to vector<128x8xbf16>
    %c0_29 = arith.constant 0 : index
    %c0_30 = arith.constant 0 : index
    %34 = vector.load %arg12[%c0_29, %c0_30] : memref<128x24xbf16, #tpu.memory_space<vmem>>, vector<128x8xbf16>
    tpu.vector_store %arg12[%c0_29, %c0_30], %33 {strides = array<i32>} : memref<128x24xbf16, #tpu.memory_space<vmem>>, vector<128x8xbf16>,
    %c0_31 = arith.constant 0 : index
    %c1_32 = arith.constant 1 : index
    %c0_33 = arith.constant 0 : index
    %35 = vector.load %arg11[%c0_31, %c1_32, %c0_33] : memref<10x18x8xbf16, #tpu.memory_space<vmem>>, vector<8x16x8xbf16>
    %36 = vector.shape_cast %35 : vector<8x16x8xbf16> to vector<128x8xbf16>
    %c0_34 = arith.constant 0 : index
    %c8 = arith.constant 8 : index
    %37 = vector.load %arg12[%c0_34, %c8] : memref<128x24xbf16, #tpu.memory_space<vmem>>, vector<128x8xbf16>
    tpu.vector_store %arg12[%c0_34, %c8], %36 {strides = array<i32>} : memref<128x24xbf16, #tpu.memory_space<vmem>>, vector<128x8xbf16>,
    %c0_35 = arith.constant 0 : index
    %c2 = arith.constant 2 : index
    %c0_36 = arith.constant 0 : index
    %38 = vector.load %arg11[%c0_35, %c2, %c0_36] : memref<10x18x8xbf16, #tpu.memory_space<vmem>>, vector<8x16x8xbf16>
    %39 = vector.shape_cast %38 : vector<8x16x8xbf16> to vector<128x8xbf16>
    %c0_37 = arith.constant 0 : index
    %c16 = arith.constant 16 : index
    %40 = vector.load %arg12[%c0_37, %c16] : memref<128x24xbf16, #tpu.memory_space<vmem>>, vector<128x8xbf16>
    tpu.vector_store %arg12[%c0_37, %c16], %39 {strides = array<i32>} : memref<128x24xbf16, #tpu.memory_space<vmem>>, vector<128x8xbf16>,
    %c0_38 = arith.constant 0 : index
    %c0_39 = arith.constant 0 : index
    %41 = vector.load %arg12[%c0_38, %c0_39] : memref<128x24xbf16, #tpu.memory_space<vmem>>, vector<128x24xbf16>
    %c0_40 = arith.constant 0 : index
    %c0_41 = arith.constant 0 : index
    %c0_42 = arith.constant 0 : index
    %42 = vector.load %arg5[%c0_40, %c0_41, %c0_42] : memref<3x24x8xbf16, #tpu.memory_space<vmem>>, vector<1x24x8xbf16>
    %43 = vector.shape_cast %42 : vector<1x24x8xbf16> to vector<24x8xbf16>
    %cst_43 = arith.constant dense<0.000000e+00> : vector<128x8xf32>
    %44 = tpu.matmul %41, %43, %cst_43 {dimension_numbers = #tpu.dot_dimension_numbers<[1], [0], [0], [1], [0, 0, 1, 1], [], []>} : vector<128x24xbf16>, vector<24x8xbf16>, vector<128x8xf32> -> vector<128x8xf32>
    %45 = arith.addf %31, %44 : vector<128x8xf32>
    %c1_44 = arith.constant 1 : index
    %c0_45 = arith.constant 0 : index
    %c0_46 = arith.constant 0 : index
    %46 = vector.load %arg11[%c1_44, %c0_45, %c0_46] : memref<10x18x8xbf16, #tpu.memory_space<vmem>>, vector<8x16x8xbf16>
    %47 = vector.shape_cast %46 : vector<8x16x8xbf16> to vector<128x8xbf16>
    %c0_47 = arith.constant 0 : index
    %c0_48 = arith.constant 0 : index
    %48 = vector.load %arg12[%c0_47, %c0_48] : memref<128x24xbf16, #tpu.memory_space<vmem>>, vector<128x8xbf16>
    tpu.vector_store %arg12[%c0_47, %c0_48], %47 {strides = array<i32>} : memref<128x24xbf16, #tpu.memory_space<vmem>>, vector<128x8xbf16>,
    %c1_49 = arith.constant 1 : index
    %c1_50 = arith.constant 1 : index
    %c0_51 = arith.constant 0 : index
    %49 = vector.load %arg11[%c1_49, %c1_50, %c0_51] : memref<10x18x8xbf16, #tpu.memory_space<vmem>>, vector<8x16x8xbf16>
    %50 = vector.shape_cast %49 : vector<8x16x8xbf16> to vector<128x8xbf16>
    %c0_52 = arith.constant 0 : index
    %c8_53 = arith.constant 8 : index
    %51 = vector.load %arg12[%c0_52, %c8_53] : memref<128x24xbf16, #tpu.memory_space<vmem>>, vector<128x8xbf16>
    tpu.vector_store %arg12[%c0_52, %c8_53], %50 {strides = array<i32>} : memref<128x24xbf16, #tpu.memory_space<vmem>>, vector<128x8xbf16>,
    %c1_54 = arith.constant 1 : index
    %c2_55 = arith.constant 2 : index
    %c0_56 = arith.constant 0 : index
    %52 = vector.load %arg11[%c1_54, %c2_55, %c0_56] : memref<10x18x8xbf16, #tpu.memory_space<vmem>>, vector<8x16x8xbf16>
    %53 = vector.shape_cast %52 : vector<8x16x8xbf16> to vector<128x8xbf16>
    %c0_57 = arith.constant 0 : index
    %c16_58 = arith.constant 16 : index
    %54 = vector.load %arg12[%c0_57, %c16_58] : memref<128x24xbf16, #tpu.memory_space<vmem>>, vector<128x8xbf16>
    tpu.vector_store %arg12[%c0_57, %c16_58], %53 {strides = array<i32>} : memref<128x24xbf16, #tpu.memory_space<vmem>>, vector<128x8xbf16>,
    %c0_59 = arith.constant 0 : index
    %c0_60 = arith.constant 0 : index
    %55 = vector.load %arg12[%c0_59, %c0_60] : memref<128x24xbf16, #tpu.memory_space<vmem>>, vector<128x24xbf16>
    %c1_61 = arith.constant 1 : index
    %c0_62 = arith.constant 0 : index
    %c0_63 = arith.constant 0 : index
    %56 = vector.load %arg5[%c1_61, %c0_62, %c0_63] : memref<3x24x8xbf16, #tpu.memory_space<vmem>>, vector<1x24x8xbf16>
    %57 = vector.shape_cast %56 : vector<1x24x8xbf16> to vector<24x8xbf16>
    %cst_64 = arith.constant dense<0.000000e+00> : vector<128x8xf32>
    %58 = tpu.matmul %55, %57, %cst_64 {dimension_numbers = #tpu.dot_dimension_numbers<[1], [0], [0], [1], [0, 0, 1, 1], [], []>} : vector<128x24xbf16>, vector<24x8xbf16>, vector<128x8xf32> -> vector<128x8xf32>
    %59 = arith.addf %45, %58 : vector<128x8xf32>
    %c2_65 = arith.constant 2 : index
    %c0_66 = arith.constant 0 : index
    %c0_67 = arith.constant 0 : index
    %60 = vector.load %arg11[%c2_65, %c0_66, %c0_67] : memref<10x18x8xbf16, #tpu.memory_space<vmem>>, vector<8x16x8xbf16>
    %61 = vector.shape_cast %60 : vector<8x16x8xbf16> to vector<128x8xbf16>
    %c0_68 = arith.constant 0 : index
    %c0_69 = arith.constant 0 : index
    %62 = vector.load %arg12[%c0_68, %c0_69] : memref<128x24xbf16, #tpu.memory_space<vmem>>, vector<128x8xbf16>
    tpu.vector_store %arg12[%c0_68, %c0_69], %61 {strides = array<i32>} : memref<128x24xbf16, #tpu.memory_space<vmem>>, vector<128x8xbf16>,
    %c2_70 = arith.constant 2 : index
    %c1_71 = arith.constant 1 : index
    %c0_72 = arith.constant 0 : index
    %63 = vector.load %arg11[%c2_70, %c1_71, %c0_72] : memref<10x18x8xbf16, #tpu.memory_space<vmem>>, vector<8x16x8xbf16>
    %64 = vector.shape_cast %63 : vector<8x16x8xbf16> to vector<128x8xbf16>
    %c0_73 = arith.constant 0 : index
    %c8_74 = arith.constant 8 : index
    %65 = vector.load %arg12[%c0_73, %c8_74] : memref<128x24xbf16, #tpu.memory_space<vmem>>, vector<128x8xbf16>
    tpu.vector_store %arg12[%c0_73, %c8_74], %64 {strides = array<i32>} : memref<128x24xbf16, #tpu.memory_space<vmem>>, vector<128x8xbf16>,
    %c2_75 = arith.constant 2 : index
    %c2_76 = arith.constant 2 : index
    %c0_77 = arith.constant 0 : index
    %66 = vector.load %arg11[%c2_75, %c2_76, %c0_77] : memref<10x18x8xbf16, #tpu.memory_space<vmem>>, vector<8x16x8xbf16>
    %67 = vector.shape_cast %66 : vector<8x16x8xbf16> to vector<128x8xbf16>
    %c0_78 = arith.constant 0 : index
    %c16_79 = arith.constant 16 : index
    %68 = vector.load %arg12[%c0_78, %c16_79] : memref<128x24xbf16, #tpu.memory_space<vmem>>, vector<128x8xbf16>
    tpu.vector_store %arg12[%c0_78, %c16_79], %67 {strides = array<i32>} : memref<128x24xbf16, #tpu.memory_space<vmem>>, vector<128x8xbf16>,
    %c0_80 = arith.constant 0 : index
    %c0_81 = arith.constant 0 : index
    %69 = vector.load %arg12[%c0_80, %c0_81] : memref<128x24xbf16, #tpu.memory_space<vmem>>, vector<128x24xbf16>
    %c2_82 = arith.constant 2 : index
    %c0_83 = arith.constant 0 : index
    %c0_84 = arith.constant 0 : index
    %70 = vector.load %arg5[%c2_82, %c0_83, %c0_84] : memref<3x24x8xbf16, #tpu.memory_space<vmem>>, vector<1x24x8xbf16>
    %71 = vector.shape_cast %70 : vector<1x24x8xbf16> to vector<24x8xbf16>
    %cst_85 = arith.constant dense<0.000000e+00> : vector<128x8xf32>
    %72 = tpu.matmul %69, %71, %cst_85 {dimension_numbers = #tpu.dot_dimension_numbers<[1], [0], [0], [1], [0, 0, 1, 1], [], []>} : vector<128x24xbf16>, vector<24x8xbf16>, vector<128x8xf32> -> vector<128x8xf32>
    %73 = arith.addf %59, %72 : vector<128x8xf32>
    %74 = vector.shape_cast %73 : vector<128x8xf32> to vector<8x16x8xf32>
    %75 = arith.truncf %74 : vector<8x16x8xf32> to vector<8x16x8xbf16>
    %c0_86 = arith.constant 0 : index
    %c0_87 = arith.constant 0 : index
    %c0_88 = arith.constant 0 : index
    %c0_89 = arith.constant 0 : index
    %76 = vector.load %arg8[%c0_86, %c0_87, %c0_88, %c0_89] : memref<1x8x16x8xbf16, #tpu.memory_space<vmem>>, vector<1x8x16x8xbf16>
    %77 = vector.shape_cast %76 : vector<1x8x16x8xbf16> to vector<8x16x8xbf16>
    %78 = vector.shape_cast %75 : vector<8x16x8xbf16> to vector<1x8x16x8xbf16>
    tpu.vector_store %arg8[%c0_86, %c0_87, %c0_88, %c0_89], %78 {strides = array<i32>} : memref<1x8x16x8xbf16, #tpu.memory_space<vmem>>, vector<1x8x16x8xbf16>,
    %cst_90 = arith.constant dense<0.000000e+00> : vector<8xf32>
    %79 = vector.multi_reduction <add>, %73, %cst_90 [0] : vector<128x8xf32> to vector<8xf32>
    %80 = vector.shape_cast %79 : vector<8xf32> to vector<1x8xf32>
    %c0_91 = arith.constant 0 : index
    %c0_92 = arith.constant 0 : index
    %c0_93 = arith.constant 0 : index
    %c0_94 = arith.constant 0 : index
    %81 = vector.load %arg9[%c0_91, %c0_92, %c0_93, %c0_94] : memref<1x1x1x8xf32, #tpu.memory_space<vmem>>, vector<1x1x1x8xf32>
    %82 = vector.shape_cast %81 : vector<1x1x1x8xf32> to vector<1x8xf32>
    %83 = vector.shape_cast %80 : vector<1x8xf32> to vector<1x1x1x8xf32>
    tpu.vector_store %arg9[%c0_91, %c0_92, %c0_93, %c0_94], %83 {strides = array<i32>} : memref<1x1x1x8xf32, #tpu.memory_space<vmem>>, vector<1x1x1x8xf32>,
    %84 = arith.mulf %73, %73 : vector<128x8xf32>
    %cst_95 = arith.constant dense<0.000000e+00> : vector<8xf32>
    %85 = vector.multi_reduction <add>, %84, %cst_95 [0] : vector<128x8xf32> to vector<8xf32>
    %86 = vector.shape_cast %85 : vector<8xf32> to vector<1x8xf32>
    %c0_96 = arith.constant 0 : index
    %c0_97 = arith.constant 0 : index
    %c0_98 = arith.constant 0 : index
    %c0_99 = arith.constant 0 : index
    %87 = vector.load %arg10[%c0_96, %c0_97, %c0_98, %c0_99] : memref<1x1x1x8xf32, #tpu.memory_space<vmem>>, vector<1x1x1x8xf32>
    %88 = vector.shape_cast %87 : vector<1x1x1x8xf32> to vector<1x8xf32>
    %89 = vector.shape_cast %86 : vector<1x8xf32> to vector<1x1x1x8xf32>
    tpu.vector_store %arg10[%c0_96, %c0_97, %c0_98, %c0_99], %89 {strides = array<i32>} : memref<1x1x1x8xf32, #tpu.memory_space<vmem>>, vector<1x1x1x8xf32>,
    return
  }
  func.func @transform_0(%arg0: i32, %arg1: i32) -> (i32, i32, i32, i32) {
    %c8_i32 = arith.constant 8 : i32
    %0 = arith.muli %arg1, %c8_i32 : i32
    %c1_i32 = arith.constant 1 : i32
    %1 = arith.subi %0, %c1_i32 : i32
    %c0_i32 = arith.constant 0 : i32
    %2 = arith.maxsi %1, %c0_i32 : i32
    %c0_i32_0 = arith.constant 0 : i32
    %c0_i32_1 = arith.constant 0 : i32
    %c0_i32_2 = arith.constant 0 : i32
    return %arg0, %2, %c0_i32_0, %c0_i32_1 : i32, i32, i32, i32
  }
  func.func @transform_1(%arg0: i32, %arg1: i32) -> (i32, i32, i32, i32) {
    %c0_i32 = arith.constant 0 : i32
    %c0_i32_0 = arith.constant 0 : i32
    %c0_i32_1 = arith.constant 0 : i32
    return %arg0, %arg1, %c0_i32, %c0_i32_0 : i32, i32, i32, i32
  }
  func.func @transform_2(%arg0: i32, %arg1: i32) -> (i32, i32, i32, i32) {
    %c1_i32 = arith.constant 1 : i32
    %0 = arith.addi %arg1, %c1_i32 : i32
    %c8_i32 = arith.constant 8 : i32
    %1 = arith.muli %0, %c8_i32 : i32
    %c15_i32 = arith.constant 15 : i32
    %2 = arith.minsi %1, %c15_i32 : i32
    %c0_i32 = arith.constant 0 : i32
    %c0_i32_0 = arith.constant 0 : i32
    %c0_i32_1 = arith.constant 0 : i32
    return %arg0, %2, %c0_i32, %c0_i32_0 : i32, i32, i32, i32
  }
  func.func @transform_3(%arg0: i32, %arg1: i32) -> (i32, i32, i32) {
    %c0_i32 = arith.constant 0 : i32
    %c0_i32_0 = arith.constant 0 : i32
    %c0_i32_1 = arith.constant 0 : i32
    %c0_i32_2 = arith.constant 0 : i32
    return %c0_i32, %c0_i32_0, %c0_i32_1 : i32, i32, i32
  }
  func.func @transform_4(%arg0: i32, %arg1: i32) -> (i32, i32) {
    %c0_i32 = arith.constant 0 : i32
    %c0_i32_0 = arith.constant 0 : i32
    %c0_i32_1 = arith.constant 0 : i32
    return %c0_i32, %c0_i32_0 : i32, i32
  }
  func.func @transform_5(%arg0: i32, %arg1: i32) -> (i32, i32) {
    %c0_i32 = arith.constant 0 : i32
    %c0_i32_0 = arith.constant 0 : i32
    %c0_i32_1 = arith.constant 0 : i32
    return %c0_i32, %c0_i32_0 : i32, i32
  }
  func.func @transform_6(%arg0: i32, %arg1: i32) -> (i32, i32, i32, i32) {
    %c0_i32 = arith.constant 0 : i32
    %c0_i32_0 = arith.constant 0 : i32
    %c0_i32_1 = arith.constant 0 : i32
    return %arg0, %arg1, %c0_i32, %c0_i32_0 : i32, i32, i32, i32
  }
  func.func @transform_7(%arg0: i32, %arg1: i32) -> (i32, i32, i32, i32) {
    %c0_i32 = arith.constant 0 : i32
    %c0_i32_0 = arith.constant 0 : i32
    %c0_i32_1 = arith.constant 0 : i32
    return %arg0, %arg1, %c0_i32, %c0_i32_0 : i32, i32, i32, i32
  }
  func.func @transform_8(%arg0: i32, %arg1: i32) -> (i32, i32, i32, i32) {
    %c0_i32 = arith.constant 0 : i32
    %c0_i32_0 = arith.constant 0 : i32
    %c0_i32_1 = arith.constant 0 : i32
    return %arg0, %arg1, %c0_i32, %c0_i32_0 : i32, i32, i32, i32
  }
}

</mosaic_0001>

<llo_original>
// kernel: _lambda_.5
$region0: #{_lambda_.5}
  #allocation0 [shape = 'u32[]', space=smem, size = 0x4, offset = 0x4, fixed_abs, tag = 'smem constant byte address 0x4 - core index']
  #allocation1 [shape = 'u32[144,128]{1,0:T(1,128)}', space=vmem, size = 0x12000, scoped, tag = 'internal scratch']
  %s0 = inlined_call_operand.hbm [shape: bf16[2,16,16,8], index: 0, kind: input, shape index: {}]
  %s1 = inlined_call_operand.hbm [shape: f32[1,8], index: 1, kind: input, shape index: {}]
  %s2 = inlined_call_operand.hbm [shape: f32[1,8], index: 2, kind: input, shape index: {}]
  %s3 = inlined_call_operand.hbm [shape: bf16[2,16,16,8], index: 3, kind: output, shape index: {}]
  %s4 = sld [smem:[#allocation0]]
  $region57: #{_lambda_.5} parent=0
    _
  %s6 = ssub.s32 1, %s4
  %s7 = scalar_select 0, %s6, %s4
  $region1: #{_lambda_.5} parent=0
    #allocation2 [shape = 'u8[65536]{0}', space=vmem, size = 0x10000, scoped, tag = 'input window, operand 0']
    #allocation3 [shape = 's32[2]{0}', space=sflag, size = 0x8, scoped, tag = 'scoped memory for _lambda_.5']
    #allocation4 [shape = 's32[2]{0}', space=sflag, size = 0x8, scoped, tag = 'scoped memory for _lambda_.5']
    #allocation5 [shape = 'u8[512]{0}', space=vmem, size = 0x400, scoped, tag = 'input window, operand 1, single buffered']
    #allocation6 [shape = 's32[1]{0}', space=sflag, size = 0x4, scoped, tag = 'scoped memory for _lambda_.5']
    #allocation7 [shape = 'u8[512]{0}', space=vmem, size = 0x400, scoped, tag = 'input window, operand 2, single buffered']
    #allocation8 [shape = 'u8[65536]{0}', space=vmem, size = 0x10000, scoped, tag = 'output window, operand 0']
    %8 = vsyncpa [#allocation3], 0
    %s9 = scalar_lea.sflag [#allocation3], 1
    %10 = vsyncpa %s9, 0
    %11 = vsyncpa [#allocation6], 0
    %12 = vsyncpa [#allocation4], 0
    %s13 = scalar_lea.sflag [#allocation4], 1
    %14 = vsyncpa %s13, 0
    loop: start=0, step=1, limit=6
    $region2: #{_lambda_.5} parent=1 // loop_pre_header
      _
    $region3: #{_lambda_.5} parent=1 // loop_header
      %s16 = sphi 0, %s20
      %p17 = scmp.ge.s32.totalorder %s16, 6
      %s23 = sphi 0, %s35
      %s24 = sphi 0, %s31
      %s25 = sphi 0, %s23
      %s26 = sphi 0, %s24
      %s27 = sphi 0, %s25
      %s28 = sphi 0, %s26
      %s40 = sphi 0, %s42
      %s43 = sphi 0, %s40
      %s44 = sphi 0, %s43
      %s60 = sphi 0, %s44
      %s64 = sphi 0, %s64
      %s66 = sphi 0, %s64
      %s67 = sphi 0, %s66
      %s81 = sphi 0, %s67
      %s85 = sphi 0, %s85
      %s87 = sphi 0, %s85
      %s88 = sphi 0, %s87
      %s102 = sphi 0, %s88
      %s110 = sphi 0, %s112
      %s113 = sphi 0, %s110
      %s114 = sphi 0, %s113
      %s130 = sphi 0, %s114
    $region4: #{_lambda_.5} parent=1 // loop_header_branch
      %19 = sbr.rel (%p17) target = $region8
    $region5: #{_lambda_.5} parent=1 // loop_body
      %s21 = ssub.s32 %s16, 1
      %s22 = ssub.s32 %s16, 2
      %s29 = sadd.s32 1, %s24
      %p30 = scmp.ge.s32.totalorder %s29, 2
      %s31 = scalar_select %p30, 0, %s29
      %s32 = sadd.s32 1, %s23
      %s33 = scalar_select %p30, %s32, %s23
      %p34 = scmp.ge.s32.totalorder %s33, 2
      %s35 = scalar_select %p34, 0, %s33
      %s36 = ssub.s32 %s23, %s35
      %s37 = ssub.s32 %s24, %s31
      %s38 = sor.u32 %s36, %s37
      %p39 = scmp.eq.s32.totalorder %s38, 0
      %s41 = sadd.s32 %s40, 1
      %s42 = scalar_select %p39, %s40, %s41
      %p45 = pneg %p39
      %p46 = scmp.eq.s32.totalorder %s16, 3
      %p47 = por %p45, %p46
      %p48 = scmp.ne.s32.totalorder %s40, %s43
      %p49 = scmp.eq.s32.totalorder %s16, 0
      %p50 = por %p48, %p49
      %p51 = scmp.ne.s32.totalorder %s40, %s43
      %p52 = scmp.eq.s32.totalorder %s21, 3
      %p53 = por %p51, %p52
      %p54 = scmp.ne.s32.totalorder %s43, %s44
      %p55 = scmp.eq.s32.totalorder %s21, 0
      %p56 = por %p54, %p55
      %p57 = scmp.ne.s32.totalorder %s43, %s44
      %p58 = scmp.eq.s32.totalorder %s22, 3
      %p59 = por %p57, %p58
      %p61 = scmp.ne.s32.totalorder %s44, %s60
      %p62 = scmp.eq.s32.totalorder %s22, 0
      %p63 = por %p61, %p62
      %s65 = sadd.s32 %s64, 1
      %p68 = scmp.eq.s32.totalorder %s16, 3
      %p69 = scmp.ne.s32.totalorder %s64, %s66
      %p70 = scmp.eq.s32.totalorder %s16, 0
      %p71 = por %p69, %p70
      %p72 = scmp.ne.s32.totalorder %s64, %s66
      %p73 = scmp.eq.s32.totalorder %s21, 3
      %p74 = por %p72, %p73
      %p75 = scmp.ne.s32.totalorder %s66, %s67
      %p76 = scmp.eq.s32.totalorder %s21, 0
      %p77 = por %p75, %p76
      %p78 = scmp.ne.s32.totalorder %s66, %s67
      %p79 = scmp.eq.s32.totalorder %s22, 3
      %p80 = por %p78, %p79
      %p82 = scmp.ne.s32.totalorder %s67, %s81
      %p83 = scmp.eq.s32.totalorder %s22, 0
      %p84 = por %p82, %p83
      %s86 = sadd.s32 %s85, 1
      %p89 = scmp.eq.s32.totalorder %s16, 3
      %p90 = scmp.ne.s32.totalorder %s85, %s87
      %p91 = scmp.eq.s32.totalorder %s16, 0
      %p92 = por %p90, %p91
      %p93 = scmp.ne.s32.totalorder %s85, %s87
      %p94 = scmp.eq.s32.totalorder %s21, 3
      %p95 = por %p93, %p94
      %p96 = scmp.ne.s32.totalorder %s87, %s88
      %p97 = scmp.eq.s32.totalorder %s21, 0
      %p98 = por %p96, %p97
      %p99 = scmp.ne.s32.totalorder %s87, %s88
      %p100 = scmp.eq.s32.totalorder %s22, 3
      %p101 = por %p99, %p100
      %p103 = scmp.ne.s32.totalorder %s88, %s102
      %p104 = scmp.eq.s32.totalorder %s22, 0
      %p105 = por %p103, %p104
      %s106 = ssub.s32 %s23, %s35
      %s107 = ssub.s32 %s24, %s31
      %s108 = sor.u32 %s106, %s107
      %p109 = scmp.eq.s32.totalorder %s108, 0
      %s111 = sadd.s32 %s110, 1
      %s112 = scalar_select %p109, %s110, %s111
      %p115 = pneg %p109
      %p116 = scmp.eq.s32.totalorder %s16, 3
      %p117 = por %p115, %p116
      %p118 = scmp.ne.s32.totalorder %s110, %s113
      %p119 = scmp.eq.s32.totalorder %s16, 0
      %p120 = por %p118, %p119
      %p121 = scmp.ne.s32.totalorder %s110, %s113
      %p122 = scmp.eq.s32.totalorder %s21, 3
      %p123 = por %p121, %p122
      %p124 = scmp.ne.s32.totalorder %s113, %s114
      %p125 = scmp.eq.s32.totalorder %s21, 0
      %p126 = por %p124, %p125
      %p127 = scmp.ne.s32.totalorder %s113, %s114
      %p128 = scmp.eq.s32.totalorder %s22, 3
      %p129 = por %p127, %p128
      %p131 = scmp.ne.s32.totalorder %s114, %s130
      %p132 = scmp.eq.s32.totalorder %s22, 0
      %p133 = por %p131, %p132
      %p134 = scmp.le.s32.totalorder 1, %s16
      %p135 = scmp.lt.s32.totalorder %s16, 5
      %p136 = pnand %p134, %p135
      %p137 = pneg %p136
      // Predicated region
      $region9: #{_lambda_.5} parent=5 // pred_check
        _
      $region10: #{_lambda_.5} parent=5 // pred_check_branch
        %139 = sbr.rel (%p136) target = $region12
      $region11: #{_lambda_.5} parent=5 // pred_region
        %s140 = ssub.s32 %s16, 1
        // Predicated region
        $region13: #{_lambda_.5} parent=11 // pred_check
          %p141 = pneg %p77
        $region14: #{_lambda_.5} parent=11 // pred_check_branch
          %143 = sbr.rel (%p141) target = $region16
        $region15: #{_lambda_.5} parent=11 // pred_region
          %s145 = ssub.s32 16, 16
          %146 = vsyncadd [#allocation6], %s145
          %s148 = sshll.u32 [#allocation5], 4
          %s149 = int_to_ptr.vmem [resolvable:$true] %s148
          %151 = dma.hbm_to_vmem [thread:$0]  %s1, 16, %s149, [#allocation6]
        $region16: #{_lambda_.5} parent=11 // pred_fallthru
          _
        // Predicated region
        $region17: #{_lambda_.5} parent=11 // pred_check
          %p152 = pneg %p98
        $region18: #{_lambda_.5} parent=11 // pred_check_branch
          %154 = sbr.rel (%p152) target = $region20
        $region19: #{_lambda_.5} parent=11 // pred_region
          %s156 = ssub.s32 16, 16
          %157 = vsyncadd [#allocation6], %s156
          %s159 = sshll.u32 [#allocation7], 4
          %s160 = int_to_ptr.vmem [resolvable:$true] %s159
          %162 = dma.hbm_to_vmem [thread:$0]  %s2, 16, %s160, [#allocation6]
        $region20: #{_lambda_.5} parent=11 // pred_fallthru
          _
      $region12: #{_lambda_.5} parent=5 // pred_fallthru
        _
      %p163 = scmp.lt.s32.totalorder %s16, 4
      // Predicated region
      $region21: #{_lambda_.5} parent=5 // pred_check
        %p164 = pneg %p163
      $region22: #{_lambda_.5} parent=5 // pred_check_branch
        %166 = sbr.rel (%p164) target = $region24
      $region23: #{_lambda_.5} parent=5 // pred_region
        // Predicated region
        $region25: #{_lambda_.5} parent=23 // pred_check
          %p167 = pneg %p50
        $region26: #{_lambda_.5} parent=23 // pred_check_branch
          %169 = sbr.rel (%p167) target = $region28
        $region27: #{_lambda_.5} parent=23 // pred_region
          %s170 = sand.u32 %s40, 1
          %s171 = scalar_lea.sflag [#allocation3], %s170
          %s172 = sand.u32 %s40, 1
          %s173 = smul.addr %s172, 64
          %s174 = scalar_lea.vmem [#allocation2], %s173
          %s175 = smul.u32 8, %s24
          %s177 = ssub.s32 1024, 1024
          %178 = vsyncadd %s171, %s177
          %s179 = smul.addr %s175, 2
          %s180 = smul.addr %s23, 32
          %s181 = sadd.s32 %s179, %s180
          %s182 = smul.addr %s181, 64
          %s183 = scalar_lea.hbm %s0, %s182
          %s184 = sshll.u32 %s174, 4
          %s185 = int_to_ptr.vmem [resolvable:$true] %s184
          %190 = dma.hbm_to_vmem [thread:$0]  %s183, 1024, %s185, %s171, 64, 64, 4
        $region28: #{_lambda_.5} parent=23 // pred_fallthru
          _
      $region24: #{_lambda_.5} parent=5 // pred_fallthru
        _
      %p191 = scmp.le.s32.totalorder 1, %s16
      %p192 = scmp.lt.s32.totalorder %s16, 5
      %p193 = pnand %p191, %p192
      %p194 = pneg %p193
      // Predicated region
      $region29: #{_lambda_.5} parent=5 // pred_check
        _
      $region30: #{_lambda_.5} parent=5 // pred_check_branch
        %196 = sbr.rel (%p193) target = $region32
      $region31: #{_lambda_.5} parent=5 // pred_region
        %s197 = ssub.s32 %s16, 1
        %s198 = sand.u32 %s43, 1
        %s199 = scalar_lea.sflag [#allocation3], %s198
        %s200 = sand.u32 %s43, 1
        %s201 = smul.addr %s200, 64
        %s202 = scalar_lea.vmem [#allocation2], %s201
        // Predicated region
        $region33: #{_lambda_.5} parent=31 // pred_check
          %p203 = pneg %p56
        $region34: #{_lambda_.5} parent=31 // pred_check_branch
          %205 = sbr.rel (%p203) target = $region36
        $region35: #{_lambda_.5} parent=31 // pred_region
          %206 = dma.done %s199, 1024
        $region36: #{_lambda_.5} parent=31 // pred_fallthru
          _
        // Predicated region
        $region37: #{_lambda_.5} parent=31 // pred_check
          %p207 = pneg %p77
        $region38: #{_lambda_.5} parent=31 // pred_check_branch
          %209 = sbr.rel (%p207) target = $region40
        $region39: #{_lambda_.5} parent=31 // pred_region
          %210 = dma.done [#allocation6], 16
        $region40: #{_lambda_.5} parent=31 // pred_fallthru
          _
        // Predicated region
        $region41: #{_lambda_.5} parent=31 // pred_check
          %p211 = pneg %p98
        $region42: #{_lambda_.5} parent=31 // pred_check_branch
          %213 = sbr.rel (%p211) target = $region44
        $region43: #{_lambda_.5} parent=31 // pred_region
          %214 = dma.done [#allocation6], 16
        $region44: #{_lambda_.5} parent=31 // pred_fallthru
          _
        %s215 = sand.u32 %s43, 1
        %s216 = scalar_lea.sflag [#allocation3], %s215
        %s217 = sand.u32 %s43, 1
        %s218 = smul.addr %s217, 64
        %s219 = scalar_lea.vmem [#allocation2], %s218
        %p220 = pneg %p56
        %p221 = pneg %p53
        %p222 = pneg %p77
        %p223 = pneg %p74
        %p224 = pneg %p98
        %p225 = pneg %p95
        %p226 = pneg %p126
        %p227 = pneg %p123
        %s228 = sand.u32 %s113, 1
        %s229 = scalar_lea.sflag [#allocation4], %s228
        %s230 = sand.u32 %s113, 1
        %s231 = smul.addr %s230, 64
        %s232 = scalar_lea.vmem [#allocation8], %s231
        %s233 = smul.u32 8, %s26
        %s234 = smul.u32 8, %s26
        %v235 = vld [vmem:[%s202] sm:$0xf]
        %v236 = vld [vmem:[%s202 + $0x4] sm:$0xf]
        %v237 = vld [vmem:[%s202 + $0x8] sm:$0xf]
        %v238 = vld [vmem:[%s202 + $0xc] sm:$0xf]
        %v239 = vld [vmem:[%s202 + $0x10] sm:$0xf]
        %v240 = vld [vmem:[%s202 + $0x14] sm:$0xf]
        %v241 = vld [vmem:[%s202 + $0x18] sm:$0xf]
        %v242 = vld [vmem:[%s202 + $0x1c] sm:$0xf]
        %v243 = vld [vmem:[%s202 + $0x20] sm:$0xf]
        %v244 = vld [vmem:[%s202 + $0x24] sm:$0xf]
        %v245 = vld [vmem:[%s202 + $0x28] sm:$0xf]
        %v246 = vld [vmem:[%s202 + $0x2c] sm:$0xf]
        %v247 = vld [vmem:[%s202 + $0x30] sm:$0xf]
        %v248 = vld [vmem:[%s202 + $0x34] sm:$0xf]
        %v249 = vld [vmem:[%s202 + $0x38] sm:$0xf]
        %v250 = vld [vmem:[%s202 + $0x3c] sm:$0xf]
        %v251 = vunpack.c.l.bf16 %v235
        %v252 = vunpack.c.l.bf16 %v236
        %v253 = vunpack.c.l.bf16 %v237
        %v254 = vunpack.c.l.bf16 %v238
        %v255 = vunpack.c.l.bf16 %v239
        %v256 = vunpack.c.l.bf16 %v240
        %v257 = vunpack.c.l.bf16 %v241
        %v258 = vunpack.c.l.bf16 %v242
        %v259 = vunpack.c.l.bf16 %v243
        %v260 = vunpack.c.l.bf16 %v244
        %v261 = vunpack.c.l.bf16 %v245
        %v262 = vunpack.c.l.bf16 %v246
        %v263 = vunpack.c.l.bf16 %v247
        %v264 = vunpack.c.l.bf16 %v248
        %v265 = vunpack.c.l.bf16 %v249
        %v266 = vunpack.c.l.bf16 %v250
        %v267 = vld [vmem:[#allocation5] sm:$0x1]
        %v269 = vlaneseq
        %v270 = vshrl.u32 %v269, 7
        %v271 = vsub.s32 0, %v270
        %v272 = vrot.slane %v267, %v271
        %v274 = vmul.f32 %v251, %v272
        %v275 = vmul.f32 %v252, %v272
        %v276 = vmul.f32 %v253, %v272
        %v277 = vmul.f32 %v254, %v272
        %v278 = vmul.f32 %v255, %v272
        %v279 = vmul.f32 %v256, %v272
        %v280 = vmul.f32 %v257, %v272
        %v281 = vmul.f32 %v258, %v272
        %v282 = vmul.f32 %v259, %v272
        %v283 = vmul.f32 %v260, %v272
        %v284 = vmul.f32 %v261, %v272
        %v285 = vmul.f32 %v262, %v272
        %v286 = vmul.f32 %v263, %v272
        %v287 = vmul.f32 %v264, %v272
        %v288 = vmul.f32 %v265, %v272
        %v289 = vmul.f32 %v266, %v272
        %v290 = vld [vmem:[#allocation7] sm:$0x1]
        %v292 = vlaneseq
        %v293 = vshrl.u32 %v292, 7
        %v294 = vsub.s32 0, %v293
        %v295 = vrot.slane %v290, %v294
        %v297 = vadd.f32 %v274, %v295
        %v298 = vadd.f32 %v275, %v295
        %v299 = vadd.f32 %v276, %v295
        %v300 = vadd.f32 %v277, %v295
        %v301 = vadd.f32 %v278, %v295
        %v302 = vadd.f32 %v279, %v295
        %v303 = vadd.f32 %v280, %v295
        %v304 = vadd.f32 %v281, %v295
        %v305 = vadd.f32 %v282, %v295
        %v306 = vadd.f32 %v283, %v295
        %v307 = vadd.f32 %v284, %v295
        %v308 = vadd.f32 %v285, %v295
        %v309 = vadd.f32 %v286, %v295
        %v310 = vadd.f32 %v287, %v295
        %v311 = vadd.f32 %v288, %v295
        %v312 = vadd.f32 %v289, %v295
        %v313 = vmax.f32 %v297, 0.0
        %v314 = vmax.f32 %v298, 0.0
        %v315 = vmax.f32 %v299, 0.0
        %v316 = vmax.f32 %v300, 0.0
        %v317 = vmax.f32 %v301, 0.0
        %v318 = vmax.f32 %v302, 0.0
        %v319 = vmax.f32 %v303, 0.0
        %v320 = vmax.f32 %v304, 0.0
        %v321 = vmax.f32 %v305, 0.0
        %v322 = vmax.f32 %v306, 0.0
        %v323 = vmax.f32 %v307, 0.0
        %v324 = vmax.f32 %v308, 0.0
        %v325 = vmax.f32 %v309, 0.0
        %v326 = vmax.f32 %v310, 0.0
        %v327 = vmax.f32 %v311, 0.0
        %v328 = vmax.f32 %v312, 0.0
        %v329 = vpack.c.bf16 %v314, %v313
        %v330 = vpack.c.bf16 %v316, %v315
        %v331 = vpack.c.bf16 %v318, %v317
        %v332 = vpack.c.bf16 %v320, %v319
        %v333 = vpack.c.bf16 %v322, %v321
        %v334 = vpack.c.bf16 %v324, %v323
        %v335 = vpack.c.bf16 %v326, %v325
        %v336 = vpack.c.bf16 %v328, %v327
        %v345 = vunpack.c.l.b16 %v329
        %v346 = vunpack.c.h.b16 %v329
        %v347 = vunpack.c.l.b16 %v330
        %v348 = vunpack.c.h.b16 %v330
        %v349 = vunpack.c.l.b16 %v331
        %v350 = vunpack.c.h.b16 %v331
        %v351 = vunpack.c.l.b16 %v332
        %v352 = vunpack.c.h.b16 %v332
        %v353 = vunpack.c.l.b16 %v333
        %v354 = vunpack.c.h.b16 %v333
        %v355 = vunpack.c.l.b16 %v334
        %v356 = vunpack.c.h.b16 %v334
        %v357 = vunpack.c.l.b16 %v335
        %v358 = vunpack.c.h.b16 %v335
        %v359 = vunpack.c.l.b16 %v336
        %v360 = vunpack.c.h.b16 %v336
        %v361 = vpack.c.b16 %v345, %v345
        %v362 = vpack.c.b16 %v346, %v346
        %v363 = vpack.c.b16 %v347, %v347
        %v364 = vpack.c.b16 %v348, %v348
        %v365 = vpack.c.b16 %v349, %v349
        %v366 = vpack.c.b16 %v350, %v350
        %v367 = vpack.c.b16 %v351, %v351
        %v368 = vpack.c.b16 %v352, %v352
        %v369 = vpack.c.b16 %v353, %v353
        %v370 = vpack.c.b16 %v354, %v354
        %v371 = vpack.c.b16 %v355, %v355
        %v372 = vpack.c.b16 %v356, %v356
        %v373 = vpack.c.b16 %v357, %v357
        %v374 = vpack.c.b16 %v358, %v358
        %v375 = vpack.c.b16 %v359, %v359
        %v376 = vpack.c.b16 %v360, %v360
        %vm393 = vcmask 60416
        %394 = vst.msk [vmem:[%s232] sm:$0xf] %vm393, %v361
        %395 = vst.msk [vmem:[%s232 + $0x4] sm:$0xf] %vm393, %v362
        %396 = vst.msk [vmem:[%s232 + $0x8] sm:$0xf] %vm393, %v363
        %397 = vst.msk [vmem:[%s232 + $0xc] sm:$0xf] %vm393, %v364
        %398 = vst.msk [vmem:[%s232 + $0x10] sm:$0xf] %vm393, %v365
        %399 = vst.msk [vmem:[%s232 + $0x14] sm:$0xf] %vm393, %v366
        %400 = vst.msk [vmem:[%s232 + $0x18] sm:$0xf] %vm393, %v367
        %401 = vst.msk [vmem:[%s232 + $0x1c] sm:$0xf] %vm393, %v368
        %402 = vst.msk [vmem:[%s232 + $0x20] sm:$0xf] %vm393, %v369
        %403 = vst.msk [vmem:[%s232 + $0x24] sm:$0xf] %vm393, %v370
        %404 = vst.msk [vmem:[%s232 + $0x28] sm:$0xf] %vm393, %v371
        %405 = vst.msk [vmem:[%s232 + $0x2c] sm:$0xf] %vm393, %v372
        %406 = vst.msk [vmem:[%s232 + $0x30] sm:$0xf] %vm393, %v373
        %407 = vst.msk [vmem:[%s232 + $0x34] sm:$0xf] %vm393, %v374
        %408 = vst.msk [vmem:[%s232 + $0x38] sm:$0xf] %vm393, %v375
        %409 = vst.msk [vmem:[%s232 + $0x3c] sm:$0xf] %vm393, %v376
        %s410 = sand.u32 %s113, 1
        %s411 = scalar_lea.sflag [#allocation4], %s410
        %s412 = sand.u32 %s113, 1
        %s413 = smul.addr %s412, 64
        %s414 = scalar_lea.vmem [#allocation8], %s413
        // Predicated region
        $region45: #{_lambda_.5} parent=31 // pred_check
          %p415 = pneg %p123
        $region46: #{_lambda_.5} parent=31 // pred_check_branch
          %417 = sbr.rel (%p415) target = $region48
        $region47: #{_lambda_.5} parent=31 // pred_region
          %s418 = smul.u32 8, %s26
          %s420 = ssub.s32 1024, 1024
          %421 = vsyncadd %s411, %s420
          %s422 = smul.addr %s418, 2
          %s423 = smul.addr %s25, 32
          %s424 = sadd.s32 %s422, %s423
          %s425 = smul.addr %s424, 64
          %s426 = scalar_lea.hbm %s3, %s425
          %s427 = sshll.u32 %s414, 4
          %s428 = int_to_ptr.vmem [resolvable:$true] %s427
          %433 = dma.vmem_to_hbm [thread:$0]  %s428, 1024, %s426, %s411, 64, 64, 4
        $region48: #{_lambda_.5} parent=31 // pred_fallthru
          _
      $region32: #{_lambda_.5} parent=5 // pred_fallthru
        _
      %p434 = scmp.le.s32.totalorder 2, %s16
      // Predicated region
      $region49: #{_lambda_.5} parent=5 // pred_check
        %p435 = pneg %p434
      $region50: #{_lambda_.5} parent=5 // pred_check_branch
        %437 = sbr.rel (%p435) target = $region52
      $region51: #{_lambda_.5} parent=5 // pred_region
        %s438 = ssub.s32 %s16, 2
        // Predicated region
        $region53: #{_lambda_.5} parent=51 // pred_check
          %p439 = pneg %p129
        $region54: #{_lambda_.5} parent=51 // pred_check_branch
          %441 = sbr.rel (%p439) target = $region56
        $region55: #{_lambda_.5} parent=51 // pred_region
          %s442 = sand.u32 %s114, 1
          %s443 = scalar_lea.sflag [#allocation4], %s442
          %s444 = sand.u32 %s114, 1
          %s445 = smul.addr %s444, 64
          %s446 = scalar_lea.vmem [#allocation8], %s445
          %447 = dma.done %s443, 1024
        $region56: #{_lambda_.5} parent=51 // pred_fallthru
          _
      $region52: #{_lambda_.5} parent=5 // pred_fallthru
        _
    $region6: #{_lambda_.5} parent=1 // loop_footer
      %s20 = sadd.s32 1, %s16
    $region7: #{_lambda_.5} parent=1 // loop_footer_branch
      %15 = sbr.rel target = $region3
    $region8: #{_lambda_.5} parent=1 // loop_exit
      _
    %448 = vsyncpa [#allocation3], 1
    %s449 = scalar_lea.sflag [#allocation3], 1
    %450 = vsyncpa %s449, 1
    %451 = vsyncpa [#allocation6], 1
    %452 = vsyncpa [#allocation4], 1
    %s453 = scalar_lea.sflag [#allocation4], 1
    %454 = vsyncpa %s453, 1

// kernel: _lambda_.3
$region0: #{_lambda_.3}
  #allocation0 [shape = 'u32[]', space=smem, size = 0x4, offset = 0x4, fixed_abs, tag = 'smem constant byte address 0x4 - core index']
  #allocation1 [shape = 'u32[144,128]{1,0:T(1,128)}', space=vmem, size = 0x12000, scoped, tag = 'internal scratch']
  #allocation2 [shape = 'bf16[10,18,4]{2,1,0:T(8,128)(2,1)}', space=vmem, size = 0xf000, scoped, tag = 'scratch operand']
  #allocation3 [shape = 'bf16[128,12]{1,0:T(16,128)(2,1)}', space=vmem, size = 0x8000, scoped, tag = 'scratch operand']
  %s0 = inlined_call_operand.hbm [shape: bf16[2,16,16,4], index: 0, kind: input, shape index: {}, may-alias: {0,1,2}]
  %s1 = inlined_call_operand.hbm [shape: bf16[2,16,16,4], index: 1, kind: input, shape index: {}, may-alias: {0,1,2}]
  %s2 = inlined_call_operand.hbm [shape: bf16[2,16,16,4], index: 2, kind: input, shape index: {}, may-alias: {0,1,2}]
  %s3 = inlined_call_operand.hbm [shape: bf16[3,12,8], index: 3, kind: input, shape index: {}]
  %s4 = inlined_call_operand.hbm [shape: bf16[2,16,16,8], index: 4, kind: output, shape index: {0}]
  %s5 = inlined_call_operand.hbm [shape: f32[2,2,1,8], index: 5, kind: output, shape index: {1}]
  %s6 = inlined_call_operand.hbm [shape: f32[2,2,1,8], index: 6, kind: output, shape index: {2}]
  %7 = xla_tuple %s4, %s5, %s6
  %s8 = sld [smem:[#allocation0]]
  $region89: #{_lambda_.3} parent=0
    _
  %s10 = ssub.s32 1, %s8
  %s11 = scalar_select 0, %s10, %s8
  $region1: #{_lambda_.3} parent=0
    #allocation4 [shape = 'u8[8192]{0}', space=vmem, size = 0x2000, scoped, tag = 'input window, operand 0']
    #allocation5 [shape = 's32[2]{0}', space=sflag, size = 0x8, scoped, tag = 'scoped memory for _lambda_.3']
    #allocation6 [shape = 's32[2]{0}', space=sflag, size = 0x8, scoped, tag = 'scoped memory for _lambda_.3']
    #allocation7 [shape = 'u8[65536]{0}', space=vmem, size = 0x10000, scoped, tag = 'input window, operand 1']
    #allocation8 [shape = 's32[2]{0}', space=sflag, size = 0x8, scoped, tag = 'scoped memory for _lambda_.3']
    #allocation9 [shape = 'u8[8192]{0}', space=vmem, size = 0x2000, scoped, tag = 'input window, operand 2']
    #allocation10 [shape = 'u8[12288]{0}', space=vmem, size = 0x3000, scoped, tag = 'input window, operand 3, single buffered']
    #allocation11 [shape = 's32[1]{0}', space=sflag, size = 0x4, scoped, tag = 'scoped memory for _lambda_.3']
    #allocation12 [shape = 'u8[65536]{0}', space=vmem, size = 0x10000, scoped, tag = 'output window, operand 0']
    #allocation13 [shape = 'u8[1024]{0}', space=vmem, size = 0x400, scoped, tag = 'output window, operand 1']
    #allocation14 [shape = 's32[2]{0}', space=sflag, size = 0x8, scoped, tag = 'scoped memory for _lambda_.3']
    #allocation15 [shape = 'u8[1024]{0}', space=vmem, size = 0x400, scoped, tag = 'output window, operand 2']
    %12 = vsyncpa [#allocation5], 0
    %s13 = scalar_lea.sflag [#allocation5], 1
    %14 = vsyncpa %s13, 0
    %15 = vsyncpa [#allocation8], 0
    %s16 = scalar_lea.sflag [#allocation8], 1
    %17 = vsyncpa %s16, 0
    %18 = vsyncpa [#allocation11], 0
    %19 = vsyncpa [#allocation6], 0
    %s20 = scalar_lea.sflag [#allocation6], 1
    %21 = vsyncpa %s20, 0
    %22 = vsyncpa [#allocation14], 0
    %s23 = scalar_lea.sflag [#allocation14], 1
    %24 = vsyncpa %s23, 0
    loop: start=0, step=1, limit=6
    $region2: #{_lambda_.3} parent=1 // loop_pre_header
      _
    $region3: #{_lambda_.3} parent=1 // loop_header
      %s26 = sphi 0, %s30
      %p27 = scmp.ge.s32.totalorder %s26, 6
      %s33 = sphi 0, %s45
      %s34 = sphi 0, %s41
      %s35 = sphi 0, %s33
      %s36 = sphi 0, %s34
      %s37 = sphi 0, %s35
      %s38 = sphi 0, %s36
      %s58 = sphi 0, %s60
      %s61 = sphi 0, %s58
      %s62 = sphi 0, %s61
      %s78 = sphi 0, %s62
      %s86 = sphi 0, %s88
      %s89 = sphi 0, %s86
      %s90 = sphi 0, %s89
      %s106 = sphi 0, %s90
      %s122 = sphi 0, %s124
      %s125 = sphi 0, %s122
      %s126 = sphi 0, %s125
      %s142 = sphi 0, %s126
      %s146 = sphi 0, %s146
      %s148 = sphi 0, %s146
      %s149 = sphi 0, %s148
      %s163 = sphi 0, %s149
      %s171 = sphi 0, %s173
      %s174 = sphi 0, %s171
      %s175 = sphi 0, %s174
      %s191 = sphi 0, %s175
      %s199 = sphi 0, %s201
      %s202 = sphi 0, %s199
      %s203 = sphi 0, %s202
      %s219 = sphi 0, %s203
      %s227 = sphi 0, %s229
      %s230 = sphi 0, %s227
      %s231 = sphi 0, %s230
      %s247 = sphi 0, %s231
    $region4: #{_lambda_.3} parent=1 // loop_header_branch
      %29 = sbr.rel (%p27) target = $region8
    $region5: #{_lambda_.3} parent=1 // loop_body
      %s31 = ssub.s32 %s26, 1
      %s32 = ssub.s32 %s26, 2
      %s39 = sadd.s32 1, %s34
      %p40 = scmp.ge.s32.totalorder %s39, 2
      %s41 = scalar_select %p40, 0, %s39
      %s42 = sadd.s32 1, %s33
      %s43 = scalar_select %p40, %s42, %s33
      %p44 = scmp.ge.s32.totalorder %s43, 2
      %s45 = scalar_select %p44, 0, %s43
      %s46 = smul.u32 %s34, 8
      %s47 = ssub.s32 %s46, 1
      %p48 = scmp.gt.s32.totalorder %s47, 0
      %s49 = scalar_select %p48, %s47, 0
      %s50 = smul.u32 %s41, 8
      %s51 = ssub.s32 %s50, 1
      %p52 = scmp.gt.s32.totalorder %s51, 0
      %s53 = scalar_select %p52, %s51, 0
      %s54 = ssub.s32 %s33, %s45
      %s55 = ssub.s32 %s49, %s53
      %s56 = sor.u32 %s54, %s55
      %p57 = scmp.eq.s32.totalorder %s56, 0
      %s59 = sadd.s32 %s58, 1
      %s60 = scalar_select %p57, %s58, %s59
      %p63 = pneg %p57
      %p64 = scmp.eq.s32.totalorder %s26, 3
      %p65 = por %p63, %p64
      %p66 = scmp.ne.s32.totalorder %s58, %s61
      %p67 = scmp.eq.s32.totalorder %s26, 0
      %p68 = por %p66, %p67
      %p69 = scmp.ne.s32.totalorder %s58, %s61
      %p70 = scmp.eq.s32.totalorder %s31, 3
      %p71 = por %p69, %p70
      %p72 = scmp.ne.s32.totalorder %s61, %s62
      %p73 = scmp.eq.s32.totalorder %s31, 0
      %p74 = por %p72, %p73
      %p75 = scmp.ne.s32.totalorder %s61, %s62
      %p76 = scmp.eq.s32.totalorder %s32, 3
      %p77 = por %p75, %p76
      %p79 = scmp.ne.s32.totalorder %s62, %s78
      %p80 = scmp.eq.s32.totalorder %s32, 0
      %p81 = por %p79, %p80
      %s82 = ssub.s32 %s33, %s45
      %s83 = ssub.s32 %s34, %s41
      %s84 = sor.u32 %s82, %s83
      %p85 = scmp.eq.s32.totalorder %s84, 0
      %s87 = sadd.s32 %s86, 1
      %s88 = scalar_select %p85, %s86, %s87
      %p91 = pneg %p85
      %p92 = scmp.eq.s32.totalorder %s26, 3
      %p93 = por %p91, %p92
      %p94 = scmp.ne.s32.totalorder %s86, %s89
      %p95 = scmp.eq.s32.totalorder %s26, 0
      %p96 = por %p94, %p95
      %p97 = scmp.ne.s32.totalorder %s86, %s89
      %p98 = scmp.eq.s32.totalorder %s31, 3
      %p99 = por %p97, %p98
      %p100 = scmp.ne.s32.totalorder %s89, %s90
      %p101 = scmp.eq.s32.totalorder %s31, 0
      %p102 = por %p100, %p101
      %p103 = scmp.ne.s32.totalorder %s89, %s90
      %p104 = scmp.eq.s32.totalorder %s32, 3
      %p105 = por %p103, %p104
      %p107 = scmp.ne.s32.totalorder %s90, %s106
      %p108 = scmp.eq.s32.totalorder %s32, 0
      %p109 = por %p107, %p108
      %s110 = sadd.s32 %s34, 1
      %s111 = smul.u32 %s110, 8
      %p112 = scmp.lt.s32.totalorder %s111, 15
      %s113 = scalar_select %p112, %s111, 15
      %s114 = sadd.s32 %s41, 1
      %s115 = smul.u32 %s114, 8
      %p116 = scmp.lt.s32.totalorder %s115, 15
      %s117 = scalar_select %p116, %s115, 15
      %s118 = ssub.s32 %s33, %s45
      %s119 = ssub.s32 %s113, %s117
      %s120 = sor.u32 %s118, %s119
      %p121 = scmp.eq.s32.totalorder %s120, 0
      %s123 = sadd.s32 %s122, 1
      %s124 = scalar_select %p121, %s122, %s123
      %p127 = pneg %p121
      %p128 = scmp.eq.s32.totalorder %s26, 3
      %p129 = por %p127, %p128
      %p130 = scmp.ne.s32.totalorder %s122, %s125
      %p131 = scmp.eq.s32.totalorder %s26, 0
      %p132 = por %p130, %p131
      %p133 = scmp.ne.s32.totalorder %s122, %s125
      %p134 = scmp.eq.s32.totalorder %s31, 3
      %p135 = por %p133, %p134
      %p136 = scmp.ne.s32.totalorder %s125, %s126
      %p137 = scmp.eq.s32.totalorder %s31, 0
      %p138 = por %p136, %p137
      %p139 = scmp.ne.s32.totalorder %s125, %s126
      %p140 = scmp.eq.s32.totalorder %s32, 3
      %p141 = por %p139, %p140
      %p143 = scmp.ne.s32.totalorder %s126, %s142
      %p144 = scmp.eq.s32.totalorder %s32, 0
      %p145 = por %p143, %p144
      %s147 = sadd.s32 %s146, 1
      %p150 = scmp.eq.s32.totalorder %s26, 3
      %p151 = scmp.ne.s32.totalorder %s146, %s148
      %p152 = scmp.eq.s32.totalorder %s26, 0
      %p153 = por %p151, %p152
      %p154 = scmp.ne.s32.totalorder %s146, %s148
      %p155 = scmp.eq.s32.totalorder %s31, 3
      %p156 = por %p154, %p155
      %p157 = scmp.ne.s32.totalorder %s148, %s149
      %p158 = scmp.eq.s32.totalorder %s31, 0
      %p159 = por %p157, %p158
      %p160 = scmp.ne.s32.totalorder %s148, %s149
      %p161 = scmp.eq.s32.totalorder %s32, 3
      %p162 = por %p160, %p161
      %p164 = scmp.ne.s32.totalorder %s149, %s163
      %p165 = scmp.eq.s32.totalorder %s32, 0
      %p166 = por %p164, %p165
      %s167 = ssub.s32 %s33, %s45
      %s168 = ssub.s32 %s34, %s41
      %s169 = sor.u32 %s167, %s168
      %p170 = scmp.eq.s32.totalorder %s169, 0
      %s172 = sadd.s32 %s171, 1
      %s173 = scalar_select %p170, %s171, %s172
      %p176 = pneg %p170
      %p177 = scmp.eq.s32.totalorder %s26, 3
      %p178 = por %p176, %p177
      %p179 = scmp.ne.s32.totalorder %s171, %s174
      %p180 = scmp.eq.s32.totalorder %s26, 0
      %p181 = por %p179, %p180
      %p182 = scmp.ne.s32.totalorder %s171, %s174
      %p183 = scmp.eq.s32.totalorder %s31, 3
      %p184 = por %p182, %p183
      %p185 = scmp.ne.s32.totalorder %s174, %s175
      %p186 = scmp.eq.s32.totalorder %s31, 0
      %p187 = por %p185, %p186
      %p188 = scmp.ne.s32.totalorder %s174, %s175
      %p189 = scmp.eq.s32.totalorder %s32, 3
      %p190 = por %p188, %p189
      %p192 = scmp.ne.s32.totalorder %s175, %s191
      %p193 = scmp.eq.s32.totalorder %s32, 0
      %p194 = por %p192, %p193
      %s195 = ssub.s32 %s33, %s45
      %s196 = ssub.s32 %s34, %s41
      %s197 = sor.u32 %s195, %s196
      %p198 = scmp.eq.s32.totalorder %s197, 0
      %s200 = sadd.s32 %s199, 1
      %s201 = scalar_select %p198, %s199, %s200
      %p204 = pneg %p198
      %p205 = scmp.eq.s32.totalorder %s26, 3
      %p206 = por %p204, %p205
      %p207 = scmp.ne.s32.totalorder %s199, %s202
      %p208 = scmp.eq.s32.totalorder %s26, 0
      %p209 = por %p207, %p208
      %p210 = scmp.ne.s32.totalorder %s199, %s202
      %p211 = scmp.eq.s32.totalorder %s31, 3
      %p212 = por %p210, %p211
      %p213 = scmp.ne.s32.totalorder %s202, %s203
      %p214 = scmp.eq.s32.totalorder %s31, 0
      %p215 = por %p213, %p214
      %p216 = scmp.ne.s32.totalorder %s202, %s203
      %p217 = scmp.eq.s32.totalorder %s32, 3
      %p218 = por %p216, %p217
      %p220 = scmp.ne.s32.totalorder %s203, %s219
      %p221 = scmp.eq.s32.totalorder %s32, 0
      %p222 = por %p220, %p221
      %s223 = ssub.s32 %s33, %s45
      %s224 = ssub.s32 %s34, %s41
      %s225 = sor.u32 %s223, %s224
      %p226 = scmp.eq.s32.totalorder %s225, 0
      %s228 = sadd.s32 %s227, 1
      %s229 = scalar_select %p226, %s227, %s228
      %p232 = pneg %p226
      %p233 = scmp.eq.s32.totalorder %s26, 3
      %p234 = por %p232, %p233
      %p235 = scmp.ne.s32.totalorder %s227, %s230
      %p236 = scmp.eq.s32.totalorder %s26, 0
      %p237 = por %p235, %p236
      %p238 = scmp.ne.s32.totalorder %s227, %s230
      %p239 = scmp.eq.s32.totalorder %s31, 3
      %p240 = por %p238, %p239
      %p241 = scmp.ne.s32.totalorder %s230, %s231
      %p242 = scmp.eq.s32.totalorder %s31, 0
      %p243 = por %p241, %p242
      %p244 = scmp.ne.s32.totalorder %s230, %s231
      %p245 = scmp.eq.s32.totalorder %s32, 3
      %p246 = por %p244, %p245
      %p248 = scmp.ne.s32.totalorder %s231, %s247
      %p249 = scmp.eq.s32.totalorder %s32, 0
      %p250 = por %p248, %p249
      %p251 = scmp.le.s32.totalorder 1, %s26
      %p252 = scmp.lt.s32.totalorder %s26, 5
      %p253 = pnand %p251, %p252
      %p254 = pneg %p253
      // Predicated region
      $region9: #{_lambda_.3} parent=5 // pred_check
        _
      $region10: #{_lambda_.3} parent=5 // pred_check_branch
        %256 = sbr.rel (%p253) target = $region12
      $region11: #{_lambda_.3} parent=5 // pred_region
        %s257 = ssub.s32 %s26, 1
        // Predicated region
        $region13: #{_lambda_.3} parent=11 // pred_check
          %p258 = pneg %p159
        $region14: #{_lambda_.3} parent=11 // pred_check_branch
          %260 = sbr.rel (%p258) target = $region16
        $region15: #{_lambda_.3} parent=11 // pred_region
          %s262 = ssub.s32 384, 384
          %263 = vsyncadd [#allocation11], %s262
          %s264 = sshll.u32 [#allocation10], 4
          %s265 = int_to_ptr.vmem [resolvable:$true] %s264
          %270 = dma.hbm_to_vmem [thread:$0]  %s3, 384, %s265, [#allocation11], 64, 64, 4
        $region16: #{_lambda_.3} parent=11 // pred_fallthru
          _
      $region12: #{_lambda_.3} parent=5 // pred_fallthru
        _
      %p271 = scmp.lt.s32.totalorder %s26, 4
      // Predicated region
      $region17: #{_lambda_.3} parent=5 // pred_check
        %p272 = pneg %p271
      $region18: #{_lambda_.3} parent=5 // pred_check_branch
        %274 = sbr.rel (%p272) target = $region20
      $region19: #{_lambda_.3} parent=5 // pred_region
        // Predicated region
        $region21: #{_lambda_.3} parent=19 // pred_check
          %p275 = pneg %p68
        $region22: #{_lambda_.3} parent=19 // pred_check_branch
          %277 = sbr.rel (%p275) target = $region24
        $region23: #{_lambda_.3} parent=19 // pred_region
          %s278 = sand.u32 %s58, 1
          %s279 = scalar_lea.sflag [#allocation5], %s278
          %s280 = sand.u32 %s58, 1
          %s281 = smul.addr %s280, 8
          %s282 = scalar_lea.vmem [#allocation4], %s281
          %s283 = smul.u32 %s34, 8
          %s284 = ssub.s32 %s283, 1
          %p285 = scmp.gt.s32.totalorder %s284, 0
          %s286 = scalar_select %p285, %s284, 0
          %s288 = ssub.s32 128, 128
          %289 = vsyncadd %s279, %s288
          %s290 = smul.addr %s286, 2
          %s291 = smul.addr %s33, 32
          %s292 = sadd.s32 %s290, %s291
          %s293 = smul.addr %s292, 64
          %s294 = scalar_lea.hbm %s0, %s293
          %s295 = sshll.u32 %s282, 4
          %s296 = int_to_ptr.vmem [resolvable:$true] %s295
          %301 = dma.hbm_to_vmem [thread:$0]  %s294, 128, %s296, %s279, 64, 64, 4
        $region24: #{_lambda_.3} parent=19 // pred_fallthru
          _
        // Predicated region
        $region25: #{_lambda_.3} parent=19 // pred_check
          %p302 = pneg %p96
        $region26: #{_lambda_.3} parent=19 // pred_check_branch
          %304 = sbr.rel (%p302) target = $region28
        $region27: #{_lambda_.3} parent=19 // pred_region
          %s305 = sand.u32 %s26, 1
          %s306 = scalar_lea.sflag [#allocation8], %s305
          %s307 = sand.u32 %s86, 1
          %s308 = smul.addr %s307, 64
          %s309 = scalar_lea.vmem [#allocation7], %s308
          %s310 = smul.u32 8, %s34
          %s312 = ssub.s32 1024, 1024
          %313 = vsyncadd %s306, %s312
          %s314 = smul.addr %s310, 2
          %s315 = smul.addr %s33, 32
          %s316 = sadd.s32 %s314, %s315
          %s317 = smul.addr %s316, 64
          %s318 = scalar_lea.hbm %s1, %s317
          %s319 = sshll.u32 %s309, 4
          %s320 = int_to_ptr.vmem [resolvable:$true] %s319
          %325 = dma.hbm_to_vmem [thread:$0]  %s318, 1024, %s320, %s306, 64, 64, 4
        $region28: #{_lambda_.3} parent=19 // pred_fallthru
          _
        // Predicated region
        $region29: #{_lambda_.3} parent=19 // pred_check
          %p326 = pneg %p132
        $region30: #{_lambda_.3} parent=19 // pred_check_branch
          %328 = sbr.rel (%p326) target = $region32
        $region31: #{_lambda_.3} parent=19 // pred_region
          %s329 = sand.u32 %s26, 1
          %s330 = scalar_lea.sflag [#allocation8], %s329
          %s331 = sand.u32 %s122, 1
          %s332 = smul.addr %s331, 8
          %s333 = scalar_lea.vmem [#allocation9], %s332
          %s334 = sadd.s32 %s34, 1
          %s335 = smul.u32 %s334, 8
          %p336 = scmp.lt.s32.totalorder %s335, 15
          %s337 = scalar_select %p336, %s335, 15
          %s339 = ssub.s32 128, 128
          %340 = vsyncadd %s330, %s339
          %s341 = smul.addr %s337, 2
          %s342 = smul.addr %s33, 32
          %s343 = sadd.s32 %s341, %s342
          %s344 = smul.addr %s343, 64
          %s345 = scalar_lea.hbm %s2, %s344
          %s346 = sshll.u32 %s333, 4
          %s347 = int_to_ptr.vmem [resolvable:$true] %s346
          %352 = dma.hbm_to_vmem [thread:$0]  %s345, 128, %s347, %s330, 64, 64, 4
        $region32: #{_lambda_.3} parent=19 // pred_fallthru
          _
      $region20: #{_lambda_.3} parent=5 // pred_fallthru
        _
      %p353 = scmp.le.s32.totalorder 1, %s26
      %p354 = scmp.lt.s32.totalorder %s26, 5
      %p355 = pnand %p353, %p354
      %p356 = pneg %p355
      // Predicated region
      $region33: #{_lambda_.3} parent=5 // pred_check
        _
      $region34: #{_lambda_.3} parent=5 // pred_check_branch
        %358 = sbr.rel (%p355) target = $region36
      $region35: #{_lambda_.3} parent=5 // pred_region
        %s359 = ssub.s32 %s26, 1
        %s360 = sand.u32 %s61, 1
        %s361 = scalar_lea.sflag [#allocation5], %s360
        %s362 = sand.u32 %s61, 1
        %s363 = smul.addr %s362, 8
        %s364 = scalar_lea.vmem [#allocation4], %s363
        // Predicated region
        $region37: #{_lambda_.3} parent=35 // pred_check
          %p365 = pneg %p74
        $region38: #{_lambda_.3} parent=35 // pred_check_branch
          %367 = sbr.rel (%p365) target = $region40
        $region39: #{_lambda_.3} parent=35 // pred_region
          %368 = dma.done %s361, 128
        $region40: #{_lambda_.3} parent=35 // pred_fallthru
          _
        %s369 = sand.u32 %s31, 1
        %s370 = scalar_lea.sflag [#allocation8], %s369
        %s371 = sand.u32 %s89, 1
        %s372 = smul.addr %s371, 64
        %s373 = scalar_lea.vmem [#allocation7], %s372
        // Predicated region
        $region41: #{_lambda_.3} parent=35 // pred_check
          %p374 = pneg %p102
        $region42: #{_lambda_.3} parent=35 // pred_check_branch
          %376 = sbr.rel (%p374) target = $region44
        $region43: #{_lambda_.3} parent=35 // pred_region
          %377 = dma.done %s370, 1024
        $region44: #{_lambda_.3} parent=35 // pred_fallthru
          _
        %s378 = sand.u32 %s31, 1
        %s379 = scalar_lea.sflag [#allocation8], %s378
        %s380 = sand.u32 %s125, 1
        %s381 = smul.addr %s380, 8
        %s382 = scalar_lea.vmem [#allocation9], %s381
        // Predicated region
        $region45: #{_lambda_.3} parent=35 // pred_check
          %p383 = pneg %p138
        $region46: #{_lambda_.3} parent=35 // pred_check_branch
          %385 = sbr.rel (%p383) target = $region48
        $region47: #{_lambda_.3} parent=35 // pred_region
          %386 = dma.done %s379, 128
        $region48: #{_lambda_.3} parent=35 // pred_fallthru
          _
        // Predicated region
        $region49: #{_lambda_.3} parent=35 // pred_check
          %p387 = pneg %p159
        $region50: #{_lambda_.3} parent=35 // pred_check_branch
          %389 = sbr.rel (%p387) target = $region52
        $region51: #{_lambda_.3} parent=35 // pred_region
          %390 = dma.done [#allocation11], 384
        $region52: #{_lambda_.3} parent=35 // pred_fallthru
          _
        %s391 = sand.u32 %s61, 1
        %s392 = scalar_lea.sflag [#allocation5], %s391
        %s393 = sand.u32 %s61, 1
        %s394 = smul.addr %s393, 8
        %s395 = scalar_lea.vmem [#allocation4], %s394
        %p396 = pneg %p74
        %p397 = pneg %p71
        %s398 = sand.u32 %s31, 1
        %s399 = scalar_lea.sflag [#allocation8], %s398
        %s400 = sand.u32 %s89, 1
        %s401 = smul.addr %s400, 64
        %s402 = scalar_lea.vmem [#allocation7], %s401
        %p403 = pneg %p102
        %p404 = pneg %p99
        %s405 = sand.u32 %s31, 1
        %s406 = scalar_lea.sflag [#allocation8], %s405
        %s407 = sand.u32 %s125, 1
        %s408 = smul.addr %s407, 8
        %s409 = scalar_lea.vmem [#allocation9], %s408
        %p410 = pneg %p138
        %p411 = pneg %p135
        %p412 = pneg %p159
        %p413 = pneg %p156
        %p414 = pneg %p187
        %p415 = pneg %p184
        %s416 = sand.u32 %s174, 1
        %s417 = scalar_lea.sflag [#allocation6], %s416
        %s418 = sand.u32 %s174, 1
        %s419 = smul.addr %s418, 64
        %s420 = scalar_lea.vmem [#allocation12], %s419
        %p421 = pneg %p215
        %p422 = pneg %p212
        %s423 = sand.u32 %s31, 1
        %s424 = scalar_lea.sflag [#allocation14], %s423
        %s425 = sand.u32 %s202, 1
        %s426 = scalar_lea.vmem [#allocation13], %s425
        %p427 = pneg %p243
        %p428 = pneg %p240
        %s429 = sand.u32 %s31, 1
        %s430 = scalar_lea.sflag [#allocation14], %s429
        %s431 = sand.u32 %s230, 1
        %s432 = scalar_lea.vmem [#allocation15], %s431
        %s433 = smul.u32 %s36, 8
        %s434 = ssub.s32 %s433, 1
        %p435 = scmp.gt.s32.totalorder %s434, 0
        %s436 = scalar_select %p435, %s434, 0
        %s437 = smul.u32 8, %s36
        %s438 = sadd.s32 %s36, 1
        %s439 = smul.u32 %s438, 8
        %p440 = scmp.lt.s32.totalorder %s439, 15
        %s441 = scalar_select %p440, %s439, 15
        %s442 = smul.u32 8, %s36
        %vm444 = vcmask 27648
        %445 = vst.msk [vmem:[#allocation2] sm:$0xf] %vm444, 0
        %446 = vst.msk [vmem:[#allocation2 + $0x4] sm:$0xf] %vm444, 0
        %vm447 = vcmask 24576
        %448 = vst.msk [vmem:[#allocation2 + $0x8] sm:$0x1] %vm447, 0
        %s449 = scalar_lea.vmem [#allocation2], 108
        %450 = vst.msk [vmem:[%s449] sm:$0xf] %vm444, 0
        %451 = vst.msk [vmem:[%s449 + $0x4] sm:$0xf] %vm444, 0
        %452 = vst.msk [vmem:[%s449 + $0x8] sm:$0x1] %vm447, 0
        %vm453 = vcmask 24576
        %vm454 = vsmask.f32 256
        %vm455 = vmand %vm453, %vm454
        %v456 = vld [vmem:[#allocation2] sm:$0x1]
        %v457 = vsel %vm455, 0, %v456
        %458 = vst [vmem:[#allocation2] sm:$0x1] %v457
        %v459 = vld [vmem:[#allocation2 + $0xc] sm:$0x1]
        %v460 = vsel %vm455, 0, %v459
        %461 = vst [vmem:[#allocation2 + $0xc] sm:$0x1] %v460
        %v462 = vld [vmem:[#allocation2 + $0x18] sm:$0x1]
        %v463 = vsel %vm455, 0, %v462
        %464 = vst [vmem:[#allocation2 + $0x18] sm:$0x1] %v463
        %v465 = vld [vmem:[#allocation2 + $0x24] sm:$0x1]
        %v466 = vsel %vm455, 0, %v465
        %467 = vst [vmem:[#allocation2 + $0x24] sm:$0x1] %v466
        %v468 = vld [vmem:[#allocation2 + $0x30] sm:$0x1]
        %v469 = vsel %vm455, 0, %v468
        %470 = vst [vmem:[#allocation2 + $0x30] sm:$0x1] %v469
        %v471 = vld [vmem:[#allocation2 + $0x3c] sm:$0x1]
        %v472 = vsel %vm455, 0, %v471
        %473 = vst [vmem:[#allocation2 + $0x3c] sm:$0x1] %v472
        %v474 = vld [vmem:[#allocation2 + $0x48] sm:$0x1]
        %v475 = vsel %vm455, 0, %v474
        %476 = vst [vmem:[#allocation2 + $0x48] sm:$0x1] %v475
        %v477 = vld [vmem:[#allocation2 + $0x54] sm:$0x1]
        %v478 = vsel %vm455, 0, %v477
        %479 = vst [vmem:[#allocation2 + $0x54] sm:$0x1] %v478
        %v480 = vld [vmem:[#allocation2 + $0x60] sm:$0x1]
        %v481 = vsel %vm455, 0, %v480
        %482 = vst [vmem:[#allocation2 + $0x60] sm:$0x1] %v481
        %v483 = vld [vmem:[#allocation2 + $0x6c] sm:$0x1]
        %v484 = vsel %vm455, 0, %v483
        %485 = vst [vmem:[#allocation2 + $0x6c] sm:$0x1] %v484
        %vm486 = vsmask.f32 7938
        %vm487 = vmand %vm453, %vm486
        %v488 = vld [vmem:[#allocation2 + $0x8] sm:$0x1]
        %v489 = vsel %vm487, 0, %v488
        %490 = vst [vmem:[#allocation2 + $0x8] sm:$0x1] %v489
        %v491 = vld [vmem:[#allocation2 + $0x14] sm:$0x1]
        %v492 = vsel %vm487, 0, %v491
        %493 = vst [vmem:[#allocation2 + $0x14] sm:$0x1] %v492
        %v494 = vld [vmem:[#allocation2 + $0x20] sm:$0x1]
        %v495 = vsel %vm487, 0, %v494
        %496 = vst [vmem:[#allocation2 + $0x20] sm:$0x1] %v495
        %v497 = vld [vmem:[#allocation2 + $0x2c] sm:$0x1]
        %v498 = vsel %vm487, 0, %v497
        %499 = vst [vmem:[#allocation2 + $0x2c] sm:$0x1] %v498
        %v500 = vld [vmem:[#allocation2 + $0x38] sm:$0x1]
        %v501 = vsel %vm487, 0, %v500
        %502 = vst [vmem:[#allocation2 + $0x38] sm:$0x1] %v501
        %v503 = vld [vmem:[#allocation2 + $0x44] sm:$0x1]
        %v504 = vsel %vm487, 0, %v503
        %505 = vst [vmem:[#allocation2 + $0x44] sm:$0x1] %v504
        %v506 = vld [vmem:[#allocation2 + $0x50] sm:$0x1]
        %v507 = vsel %vm487, 0, %v506
        %508 = vst [vmem:[#allocation2 + $0x50] sm:$0x1] %v507
        %v509 = vld [vmem:[#allocation2 + $0x5c] sm:$0x1]
        %v510 = vsel %vm487, 0, %v509
        %511 = vst [vmem:[#allocation2 + $0x5c] sm:$0x1] %v510
        %v512 = vld [vmem:[#allocation2 + $0x68] sm:$0x1]
        %v513 = vsel %vm487, 0, %v512
        %514 = vst [vmem:[#allocation2 + $0x68] sm:$0x1] %v513
        %v515 = vld [vmem:[#allocation2 + $0x74] sm:$0x1]
        %v516 = vsel %vm487, 0, %v515
        %517 = vst [vmem:[#allocation2 + $0x74] sm:$0x1] %v516
        %v518 = vld [vmem:[%s373] sm:$0xf]
        %v519 = vld [vmem:[%s373 + $0x4] sm:$0xf]
        %v520 = vld [vmem:[%s373 + $0x8] sm:$0xf]
        %v521 = vld [vmem:[%s373 + $0xc] sm:$0xf]
        %v522 = vld [vmem:[%s373 + $0x10] sm:$0xf]
        %v523 = vld [vmem:[%s373 + $0x14] sm:$0xf]
        %v524 = vld [vmem:[%s373 + $0x18] sm:$0xf]
        %v525 = vld [vmem:[%s373 + $0x1c] sm:$0xf]
        %v526 = vld [vmem:[%s373 + $0x20] sm:$0xf]
        %v527 = vld [vmem:[%s373 + $0x24] sm:$0xf]
        %v528 = vld [vmem:[%s373 + $0x28] sm:$0xf]
        %v529 = vld [vmem:[%s373 + $0x2c] sm:$0xf]
        %v530 = vld [vmem:[%s373 + $0x30] sm:$0xf]
        %v531 = vld [vmem:[%s373 + $0x34] sm:$0xf]
        %v532 = vld [vmem:[%s373 + $0x38] sm:$0xf]
        %v533 = vld [vmem:[%s373 + $0x3c] sm:$0xf]
        %vm534 = vsmask.f32 4368
        %vm535 = vmor %vm454, %vm534
        %v537 = vshrl.u32 %v518, 16
        %v539 = vrot.slane %v537, 7
        %v540 = vshll.u32 %v518, 16
        %v542 = vor.u32 %v539, %v540
        %v543 = vrot.slane %v539, 4
        %v545 = vshrl.u32 %v519, 16
        %v547 = vrot.slane %v545, 7
        %v548 = vshll.u32 %v519, 16
        %v550 = vor.u32 %v547, %v548
        %v551 = vsel %vm535, %v543, %v550
        %v552 = vrot.slane %v547, 4
        %v554 = vshrl.u32 %v520, 16
        %v556 = vrot.slane %v554, 7
        %v557 = vshll.u32 %v520, 16
        %v559 = vor.u32 %v556, %v557
        %v560 = vrot.slane %v556, 4
        %v562 = vshrl.u32 %v521, 16
        %v564 = vrot.slane %v562, 7
        %v565 = vshll.u32 %v521, 16
        %v567 = vor.u32 %v564, %v565
        %v568 = vsel %vm535, %v560, %v567
        %v569 = vrot.slane %v564, 4
        %v571 = vshrl.u32 %v522, 16
        %v573 = vrot.slane %v571, 7
        %v574 = vshll.u32 %v522, 16
        %v576 = vor.u32 %v573, %v574
        %v577 = vrot.slane %v573, 4
        %v579 = vshrl.u32 %v523, 16
        %v581 = vrot.slane %v579, 7
        %v582 = vshll.u32 %v523, 16
        %v584 = vor.u32 %v581, %v582
        %v585 = vsel %vm535, %v577, %v584
        %v586 = vrot.slane %v581, 4
        %v588 = vshrl.u32 %v524, 16
        %v590 = vrot.slane %v588, 7
        %v591 = vshll.u32 %v524, 16
        %v593 = vor.u32 %v590, %v591
        %v594 = vrot.slane %v590, 4
        %v596 = vshrl.u32 %v525, 16
        %v598 = vrot.slane %v596, 7
        %v599 = vshll.u32 %v525, 16
        %v601 = vor.u32 %v598, %v599
        %v602 = vsel %vm535, %v594, %v601
        %v603 = vrot.slane %v598, 4
        %v605 = vshrl.u32 %v526, 16
        %v607 = vrot.slane %v605, 7
        %v608 = vshll.u32 %v526, 16
        %v610 = vor.u32 %v607, %v608
        %v611 = vrot.slane %v607, 4
        %v613 = vshrl.u32 %v527, 16
        %v615 = vrot.slane %v613, 7
        %v616 = vshll.u32 %v527, 16
        %v618 = vor.u32 %v615, %v616
        %v619 = vsel %vm535, %v611, %v618
        %v620 = vrot.slane %v615, 4
        %v622 = vshrl.u32 %v528, 16
        %v624 = vrot.slane %v622, 7
        %v625 = vshll.u32 %v528, 16
        %v627 = vor.u32 %v624, %v625
        %v628 = vrot.slane %v624, 4
        %v630 = vshrl.u32 %v529, 16
        %v632 = vrot.slane %v630, 7
        %v633 = vshll.u32 %v529, 16
        %v635 = vor.u32 %v632, %v633
        %v636 = vsel %vm535, %v628, %v635
        %v637 = vrot.slane %v632, 4
        %v639 = vshrl.u32 %v530, 16
        %v641 = vrot.slane %v639, 7
        %v642 = vshll.u32 %v530, 16
        %v644 = vor.u32 %v641, %v642
        %v645 = vrot.slane %v641, 4
        %v647 = vshrl.u32 %v531, 16
        %v649 = vrot.slane %v647, 7
        %v650 = vshll.u32 %v531, 16
        %v652 = vor.u32 %v649, %v650
        %v653 = vsel %vm535, %v645, %v652
        %v654 = vrot.slane %v649, 4
        %v656 = vshrl.u32 %v532, 16
        %v658 = vrot.slane %v656, 7
        %v659 = vshll.u32 %v532, 16
        %v661 = vor.u32 %v658, %v659
        %v662 = vrot.slane %v658, 4
        %v664 = vshrl.u32 %v533, 16
        %v666 = vrot.slane %v664, 7
        %v667 = vshll.u32 %v533, 16
        %v669 = vor.u32 %v666, %v667
        %v670 = vsel %vm535, %v662, %v669
        %v671 = vrot.slane %v666, 4
        %s696 = scalar_lea.vmem [#allocation2], 12
        %vm697 = vcmask 27648
        %vm698 = vmand %vm697, %vm486
        %v699 = vld [vmem:[%s696] sm:$0xf]
        %v700 = vsel %vm698, %v542, %v699
        %701 = vst [vmem:[%s696] sm:$0xf] %v700
        %702 = vst.msk [vmem:[%s696 + $0x4] sm:$0xf] %vm444, %v551
        %v703 = vld [vmem:[%s696 + $0x8] sm:$0x1]
        %v704 = vsel %vm455, %v552, %v703
        %705 = vst [vmem:[%s696 + $0x8] sm:$0x1] %v704
        %v706 = vld [vmem:[%s696 + $0xc] sm:$0xf]
        %v707 = vsel %vm698, %v559, %v706
        %708 = vst [vmem:[%s696 + $0xc] sm:$0xf] %v707
        %709 = vst.msk [vmem:[%s696 + $0x10] sm:$0xf] %vm444, %v568
        %v710 = vld [vmem:[%s696 + $0x14] sm:$0x1]
        %v711 = vsel %vm455, %v569, %v710
        %712 = vst [vmem:[%s696 + $0x14] sm:$0x1] %v711
        %v713 = vld [vmem:[%s696 + $0x18] sm:$0xf]
        %v714 = vsel %vm698, %v576, %v713
        %715 = vst [vmem:[%s696 + $0x18] sm:$0xf] %v714
        %716 = vst.msk [vmem:[%s696 + $0x1c] sm:$0xf] %vm444, %v585
        %v717 = vld [vmem:[%s696 + $0x20] sm:$0x1]
        %v718 = vsel %vm455, %v586, %v717
        %719 = vst [vmem:[%s696 + $0x20] sm:$0x1] %v718
        %v720 = vld [vmem:[%s696 + $0x24] sm:$0xf]
        %v721 = vsel %vm698, %v593, %v720
        %722 = vst [vmem:[%s696 + $0x24] sm:$0xf] %v721
        %723 = vst.msk [vmem:[%s696 + $0x28] sm:$0xf] %vm444, %v602
        %v724 = vld [vmem:[%s696 + $0x2c] sm:$0x1]
        %v725 = vsel %vm455, %v603, %v724
        %726 = vst [vmem:[%s696 + $0x2c] sm:$0x1] %v725
        %v727 = vld [vmem:[%s696 + $0x30] sm:$0xf]
        %v728 = vsel %vm698, %v610, %v727
        %729 = vst [vmem:[%s696 + $0x30] sm:$0xf] %v728
        %730 = vst.msk [vmem:[%s696 + $0x34] sm:$0xf] %vm444, %v619
        %v731 = vld [vmem:[%s696 + $0x38] sm:$0x1]
        %v732 = vsel %vm455, %v620, %v731
        %733 = vst [vmem:[%s696 + $0x38] sm:$0x1] %v732
        %v734 = vld [vmem:[%s696 + $0x3c] sm:$0xf]
        %v735 = vsel %vm698, %v627, %v734
        %736 = vst [vmem:[%s696 + $0x3c] sm:$0xf] %v735
        %737 = vst.msk [vmem:[%s696 + $0x40] sm:$0xf] %vm444, %v636
        %v738 = vld [vmem:[%s696 + $0x44] sm:$0x1]
        %v739 = vsel %vm455, %v637, %v738
        %740 = vst [vmem:[%s696 + $0x44] sm:$0x1] %v739
        %v741 = vld [vmem:[%s696 + $0x48] sm:$0xf]
        %v742 = vsel %vm698, %v644, %v741
        %743 = vst [vmem:[%s696 + $0x48] sm:$0xf] %v742
        %744 = vst.msk [vmem:[%s696 + $0x4c] sm:$0xf] %vm444, %v653
        %v745 = vld [vmem:[%s696 + $0x50] sm:$0x1]
        %v746 = vsel %vm455, %v654, %v745
        %747 = vst [vmem:[%s696 + $0x50] sm:$0x1] %v746
        %v748 = vld [vmem:[%s696 + $0x54] sm:$0xf]
        %v749 = vsel %vm698, %v661, %v748
        %750 = vst [vmem:[%s696 + $0x54] sm:$0xf] %v749
        %751 = vst.msk [vmem:[%s696 + $0x58] sm:$0xf] %vm444, %v670
        %v752 = vld [vmem:[%s696 + $0x5c] sm:$0x1]
        %v753 = vsel %vm455, %v671, %v752
        %754 = vst [vmem:[%s696 + $0x5c] sm:$0x1] %v753
        %p755 = scmp.gt.s32.totalorder %s36, 0
        // Predicated region
        $region53: #{_lambda_.3} parent=35 // pred_check
          %p756 = pneg %p755
        $region54: #{_lambda_.3} parent=35 // pred_check_branch
          %758 = sbr.rel (%p756) target = $region56
        $region55: #{_lambda_.3} parent=35 // pred_region
          %v759 = vld [vmem:[%s364] sm:$0xf]
          %v760 = vld [vmem:[%s364 + $0x4] sm:$0xf]
          %v762 = vshrl.u32 %v759, 16
          %v764 = vrot.slane %v762, 7
          %v765 = vshll.u32 %v759, 16
          %v767 = vor.u32 %v764, %v765
          %v768 = vrot.slane %v764, 4
          %v770 = vshrl.u32 %v760, 16
          %v772 = vrot.slane %v770, 7
          %v773 = vshll.u32 %v760, 16
          %v775 = vor.u32 %v772, %v773
          %v776 = vsel %vm535, %v768, %v775
          %v777 = vrot.slane %v772, 4
          %v781 = vld [vmem:[#allocation2] sm:$0xf]
          %v782 = vsel %vm698, %v767, %v781
          %783 = vst [vmem:[#allocation2] sm:$0xf] %v782
          %784 = vst.msk [vmem:[#allocation2 + $0x4] sm:$0xf] %vm444, %v776
          %v785 = vld [vmem:[#allocation2 + $0x8] sm:$0x1]
          %v786 = vsel %vm455, %v777, %v785
          %787 = vst [vmem:[#allocation2 + $0x8] sm:$0x1] %v786
        $region56: #{_lambda_.3} parent=35 // pred_fallthru
          _
        %p788 = scmp.lt.s32.totalorder %s36, 1
        // Predicated region
        $region57: #{_lambda_.3} parent=35 // pred_check
          %p789 = pneg %p788
        $region58: #{_lambda_.3} parent=35 // pred_check_branch
          %791 = sbr.rel (%p789) target = $region60
        $region59: #{_lambda_.3} parent=35 // pred_region
          %v792 = vld [vmem:[%s382] sm:$0xf]
          %v793 = vld [vmem:[%s382 + $0x4] sm:$0xf]
          %v795 = vshrl.u32 %v792, 16
          %v797 = vrot.slane %v795, 7
          %v798 = vshll.u32 %v792, 16
          %v800 = vor.u32 %v797, %v798
          %v801 = vrot.slane %v797, 4
          %v803 = vshrl.u32 %v793, 16
          %v805 = vrot.slane %v803, 7
          %v806 = vshll.u32 %v793, 16
          %v808 = vor.u32 %v805, %v806
          %v809 = vsel %vm535, %v801, %v808
          %v810 = vrot.slane %v805, 4
          %v814 = vld [vmem:[%s449] sm:$0xf]
          %v815 = vsel %vm698, %v800, %v814
          %816 = vst [vmem:[%s449] sm:$0xf] %v815
          %817 = vst.msk [vmem:[%s449 + $0x4] sm:$0xf] %vm444, %v809
          %v818 = vld [vmem:[%s449 + $0x8] sm:$0x1]
          %v819 = vsel %vm455, %v810, %v818
          %820 = vst [vmem:[%s449 + $0x8] sm:$0x1] %v819
        $region60: #{_lambda_.3} parent=35 // pred_fallthru
          _
        %v821 = vld [vmem:[#allocation2] sm:$0xf]
        %v822 = vld [vmem:[#allocation2 + $0x4] sm:$0xf]
        %v823 = vld [vmem:[#allocation2 + $0xc] sm:$0xf]
        %v824 = vld [vmem:[#allocation2 + $0x10] sm:$0xf]
        %v825 = vld [vmem:[#allocation2 + $0x18] sm:$0xf]
        %v826 = vld [vmem:[#allocation2 + $0x1c] sm:$0xf]
        %v827 = vld [vmem:[#allocation2 + $0x24] sm:$0xf]
        %v828 = vld [vmem:[#allocation2 + $0x28] sm:$0xf]
        %v829 = vld [vmem:[#allocation2 + $0x30] sm:$0xf]
        %v830 = vld [vmem:[#allocation2 + $0x34] sm:$0xf]
        %v831 = vld [vmem:[#allocation2 + $0x3c] sm:$0xf]
        %v832 = vld [vmem:[#allocation2 + $0x40] sm:$0xf]
        %v833 = vld [vmem:[#allocation2 + $0x48] sm:$0xf]
        %v834 = vld [vmem:[#allocation2 + $0x4c] sm:$0xf]
        %v835 = vld [vmem:[#allocation2 + $0x54] sm:$0xf]
        %v836 = vld [vmem:[#allocation2 + $0x58] sm:$0xf]
        %v853 = vunpack.c.l.b16 %v821
        %v854 = vunpack.c.l.b16 %v822
        %v855 = vunpack.c.l.b16 %v823
        %v856 = vunpack.c.l.b16 %v824
        %v857 = vunpack.c.l.b16 %v825
        %v858 = vunpack.c.l.b16 %v826
        %v859 = vunpack.c.l.b16 %v827
        %v860 = vunpack.c.l.b16 %v828
        %v861 = vunpack.c.l.b16 %v829
        %v862 = vunpack.c.l.b16 %v830
        %v863 = vunpack.c.l.b16 %v831
        %v864 = vunpack.c.l.b16 %v832
        %v865 = vunpack.c.l.b16 %v833
        %v866 = vunpack.c.l.b16 %v834
        %v867 = vunpack.c.l.b16 %v835
        %v868 = vunpack.c.l.b16 %v836
        %v869 = vpack.c.b16 %v854, %v853
        %v870 = vpack.c.b16 %v856, %v855
        %v871 = vpack.c.b16 %v858, %v857
        %v872 = vpack.c.b16 %v860, %v859
        %v873 = vpack.c.b16 %v862, %v861
        %v874 = vpack.c.b16 %v864, %v863
        %v875 = vpack.c.b16 %v866, %v865
        %v876 = vpack.c.b16 %v868, %v867
        %vm885 = vcmask 31744
        %886 = vst.msk [vmem:[#allocation3] sm:$0xff] %vm885, %v869
        %887 = vst.msk [vmem:[#allocation3 + $0x8] sm:$0xff] %vm885, %v870
        %888 = vst.msk [vmem:[#allocation3 + $0x10] sm:$0xff] %vm885, %v871
        %889 = vst.msk [vmem:[#allocation3 + $0x18] sm:$0xff] %vm885, %v872
        %890 = vst.msk [vmem:[#allocation3 + $0x20] sm:$0xff] %vm885, %v873
        %891 = vst.msk [vmem:[#allocation3 + $0x28] sm:$0xff] %vm885, %v874
        %892 = vst.msk [vmem:[#allocation3 + $0x30] sm:$0xff] %vm885, %v875
        %893 = vst.msk [vmem:[#allocation3 + $0x38] sm:$0xff] %vm885, %v876
        %v894 = vld [vmem:[#allocation2] sm:$0xf]
        %v895 = vld [vmem:[#allocation2 + $0x4] sm:$0xf]
        %v896 = vld [vmem:[#allocation2 + $0x8] sm:$0x1]
        %v897 = vld [vmem:[#allocation2 + $0xc] sm:$0xf]
        %v898 = vld [vmem:[#allocation2 + $0x10] sm:$0xf]
        %v899 = vld [vmem:[#allocation2 + $0x14] sm:$0x1]
        %v900 = vld [vmem:[#allocation2 + $0x18] sm:$0xf]
        %v901 = vld [vmem:[#allocation2 + $0x1c] sm:$0xf]
        %v902 = vld [vmem:[#allocation2 + $0x20] sm:$0x1]
        %v903 = vld [vmem:[#allocation2 + $0x24] sm:$0xf]
        %v904 = vld [vmem:[#allocation2 + $0x28] sm:$0xf]
        %v905 = vld [vmem:[#allocation2 + $0x2c] sm:$0x1]
        %v906 = vld [vmem:[#allocation2 + $0x30] sm:$0xf]
        %v907 = vld [vmem:[#allocation2 + $0x34] sm:$0xf]
        %v908 = vld [vmem:[#allocation2 + $0x38] sm:$0x1]
        %v909 = vld [vmem:[#allocation2 + $0x3c] sm:$0xf]
        %v910 = vld [vmem:[#allocation2 + $0x40] sm:$0xf]
        %v911 = vld [vmem:[#allocation2 + $0x44] sm:$0x1]
        %v912 = vld [vmem:[#allocation2 + $0x48] sm:$0xf]
        %v913 = vld [vmem:[#allocation2 + $0x4c] sm:$0xf]
        %v914 = vld [vmem:[#allocation2 + $0x50] sm:$0x1]
        %v915 = vld [vmem:[#allocation2 + $0x54] sm:$0xf]
        %v916 = vld [vmem:[#allocation2 + $0x58] sm:$0xf]
        %v917 = vld [vmem:[#allocation2 + $0x5c] sm:$0x1]
        %vm918 = vsmask.f32 3328
        %vm919 = vsmask.f32 7440
        %vm920 = vmor %vm918, %vm919
        %v922 = vshrl.u32 %v894, 16
        %v924 = vrot.slane %v922, 4
        %v925 = vshll.u32 %v894, 16
        %v927 = vrot.slane %v925, 5
        %v928 = vor.u32 %v924, %v927
        %v929 = vrot.slane %v928, 4
        %v931 = vshll.u32 %v895, 16
        %v933 = vrot.slane %v931, 5
        %v934 = vsel %vm920, %v929, %v933
        %v935 = vshrl.u32 %v895, 16
        %v937 = vrot.slane %v935, 4
        %v938 = vor.u32 %v937, %v933
        %v939 = vrot.slane %v938, 4
        %v941 = vshll.u32 %v896, 16
        %v943 = vrot.slane %v941, 5
        %v944 = vsel %vm920, %v939, %v943
        %v946 = vshrl.u32 %v897, 16
        %v948 = vrot.slane %v946, 4
        %v949 = vshll.u32 %v897, 16
        %v951 = vrot.slane %v949, 5
        %v952 = vor.u32 %v948, %v951
        %v953 = vrot.slane %v952, 4
        %v955 = vshll.u32 %v898, 16
        %v957 = vrot.slane %v955, 5
        %v958 = vsel %vm920, %v953, %v957
        %v959 = vshrl.u32 %v898, 16
        %v961 = vrot.slane %v959, 4
        %v962 = vor.u32 %v961, %v957
        %v963 = vrot.slane %v962, 4
        %v965 = vshll.u32 %v899, 16
        %v967 = vrot.slane %v965, 5
        %v968 = vsel %vm920, %v963, %v967
        %v970 = vshrl.u32 %v900, 16
        %v972 = vrot.slane %v970, 4
        %v973 = vshll.u32 %v900, 16
        %v975 = vrot.slane %v973, 5
        %v976 = vor.u32 %v972, %v975
        %v977 = vrot.slane %v976, 4
        %v979 = vshll.u32 %v901, 16
        %v981 = vrot.slane %v979, 5
        %v982 = vsel %vm920, %v977, %v981
        %v983 = vshrl.u32 %v901, 16
        %v985 = vrot.slane %v983, 4
        %v986 = vor.u32 %v985, %v981
        %v987 = vrot.slane %v986, 4
        %v989 = vshll.u32 %v902, 16
        %v991 = vrot.slane %v989, 5
        %v992 = vsel %vm920, %v987, %v991
        %v994 = vshrl.u32 %v903, 16
        %v996 = vrot.slane %v994, 4
        %v997 = vshll.u32 %v903, 16
        %v999 = vrot.slane %v997, 5
        %v1000 = vor.u32 %v996, %v999
        %v1001 = vrot.slane %v1000, 4
        %v1003 = vshll.u32 %v904, 16
        %v1005 = vrot.slane %v1003, 5
        %v1006 = vsel %vm920, %v1001, %v1005
        %v1007 = vshrl.u32 %v904, 16
        %v1009 = vrot.slane %v1007, 4
        %v1010 = vor.u32 %v1009, %v1005
        %v1011 = vrot.slane %v1010, 4
        %v1013 = vshll.u32 %v905, 16
        %v1015 = vrot.slane %v1013, 5
        %v1016 = vsel %vm920, %v1011, %v1015
        %v1018 = vshrl.u32 %v906, 16
        %v1020 = vrot.slane %v1018, 4
        %v1021 = vshll.u32 %v906, 16
        %v1023 = vrot.slane %v1021, 5
        %v1024 = vor.u32 %v1020, %v1023
        %v1025 = vrot.slane %v1024, 4
        %v1027 = vshll.u32 %v907, 16
        %v1029 = vrot.slane %v1027, 5
        %v1030 = vsel %vm920, %v1025, %v1029
        %v1031 = vshrl.u32 %v907, 16
        %v1033 = vrot.slane %v1031, 4
        %v1034 = vor.u32 %v1033, %v1029
        %v1035 = vrot.slane %v1034, 4
        %v1037 = vshll.u32 %v908, 16
        %v1039 = vrot.slane %v1037, 5
        %v1040 = vsel %vm920, %v1035, %v1039
        %v1042 = vshrl.u32 %v909, 16
        %v1044 = vrot.slane %v1042, 4
        %v1045 = vshll.u32 %v909, 16
        %v1047 = vrot.slane %v1045, 5
        %v1048 = vor.u32 %v1044, %v1047
        %v1049 = vrot.slane %v1048, 4
        %v1051 = vshll.u32 %v910, 16
        %v1053 = vrot.slane %v1051, 5
        %v1054 = vsel %vm920, %v1049, %v1053
        %v1055 = vshrl.u32 %v910, 16
        %v1057 = vrot.slane %v1055, 4
        %v1058 = vor.u32 %v1057, %v1053
        %v1059 = vrot.slane %v1058, 4
        %v1061 = vshll.u32 %v911, 16
        %v1063 = vrot.slane %v1061, 5
        %v1064 = vsel %vm920, %v1059, %v1063
        %v1066 = vshrl.u32 %v912, 16
        %v1068 = vrot.slane %v1066, 4
        %v1069 = vshll.u32 %v912, 16
        %v1071 = vrot.slane %v1069, 5
        %v1072 = vor.u32 %v1068, %v1071
        %v1073 = vrot.slane %v1072, 4
        %v1075 = vshll.u32 %v913, 16
        %v1077 = vrot.slane %v1075, 5
        %v1078 = vsel %vm920, %v1073, %v1077
        %v1079 = vshrl.u32 %v913, 16
        %v1081 = vrot.slane %v1079, 4
        %v1082 = vor.u32 %v1081, %v1077
        %v1083 = vrot.slane %v1082, 4
        %v1085 = vshll.u32 %v914, 16
        %v1087 = vrot.slane %v1085, 5
        %v1088 = vsel %vm920, %v1083, %v1087
        %v1090 = vshrl.u32 %v915, 16
        %v1092 = vrot.slane %v1090, 4
        %v1093 = vshll.u32 %v915, 16
        %v1095 = vrot.slane %v1093, 5
        %v1096 = vor.u32 %v1092, %v1095
        %v1097 = vrot.slane %v1096, 4
        %v1099 = vshll.u32 %v916, 16
        %v1101 = vrot.slane %v1099, 5
        %v1102 = vsel %vm920, %v1097, %v1101
        %v1103 = vshrl.u32 %v916, 16
        %v1105 = vrot.slane %v1103, 4
        %v1106 = vor.u32 %v1105, %v1101
        %v1107 = vrot.slane %v1106, 4
        %v1109 = vshll.u32 %v917, 16
        %v1111 = vrot.slane %v1109, 5
        %v1112 = vsel %vm920, %v1107, %v1111
        %v1113 = vunpack.c.l.b16 %v934
        %v1114 = vunpack.c.l.b16 %v944
        %v1115 = vunpack.c.l.b16 %v958
        %v1116 = vunpack.c.l.b16 %v968
        %v1117 = vunpack.c.l.b16 %v982
        %v1118 = vunpack.c.l.b16 %v992
        %v1119 = vunpack.c.l.b16 %v1006
        %v1120 = vunpack.c.l.b16 %v1016
        %v1121 = vunpack.c.l.b16 %v1030
        %v1122 = vunpack.c.l.b16 %v1040
        %v1123 = vunpack.c.l.b16 %v1054
        %v1124 = vunpack.c.l.b16 %v1064
        %v1125 = vunpack.c.l.b16 %v1078
        %v1126 = vunpack.c.l.b16 %v1088
        %v1127 = vunpack.c.l.b16 %v1102
        %v1128 = vunpack.c.l.b16 %v1112
        %v1129 = vpack.c.b16 %v1114, %v1113
        %v1130 = vpack.c.b16 %v1116, %v1115
        %v1131 = vpack.c.b16 %v1118, %v1117
        %v1132 = vpack.c.b16 %v1120, %v1119
        %v1133 = vpack.c.b16 %v1122, %v1121
        %v1134 = vpack.c.b16 %v1124, %v1123
        %v1135 = vpack.c.b16 %v1126, %v1125
        %v1136 = vpack.c.b16 %v1128, %v1127
        %1137 = vrot.lane.b32.xlu0 %v1129, 4
        %v1138 = vpop.permute.xlu0 %1137
        %1139 = vrot.lane.b32.xlu0 %v1130, 4
        %v1140 = vpop.permute.xlu0 %1139
        %1141 = vrot.lane.b32.xlu0 %v1131, 4
        %v1142 = vpop.permute.xlu0 %1141
        %1143 = vrot.lane.b32.xlu0 %v1132, 4
        %v1144 = vpop.permute.xlu0 %1143
        %1145 = vrot.lane.b32.xlu0 %v1133, 4
        %v1146 = vpop.permute.xlu0 %1145
        %1147 = vrot.lane.b32.xlu0 %v1134, 4
        %v1148 = vpop.permute.xlu0 %1147
        %1149 = vrot.lane.b32.xlu0 %v1135, 4
        %v1150 = vpop.permute.xlu0 %1149
        %1151 = vrot.lane.b32.xlu0 %v1136, 4
        %v1152 = vpop.permute.xlu0 %1151
        %vm1161 = vcmask 64544
        %1162 = vst.msk [vmem:[#allocation3] sm:$0xff] %vm1161, %v1138
        %1163 = vst.msk [vmem:[#allocation3 + $0x8] sm:$0xff] %vm1161, %v1140
        %1164 = vst.msk [vmem:[#allocation3 + $0x10] sm:$0xff] %vm1161, %v1142
        %1165 = vst.msk [vmem:[#allocation3 + $0x18] sm:$0xff] %vm1161, %v1144
        %1166 = vst.msk [vmem:[#allocation3 + $0x20] sm:$0xff] %vm1161, %v1146
        %1167 = vst.msk [vmem:[#allocation3 + $0x28] sm:$0xff] %vm1161, %v1148
        %1168 = vst.msk [vmem:[#allocation3 + $0x30] sm:$0xff] %vm1161, %v1150
        %1169 = vst.msk [vmem:[#allocation3 + $0x38] sm:$0xff] %vm1161, %v1152
        %v1170 = vld [vmem:[#allocation2] sm:$0xe]
        %v1171 = vld [vmem:[#allocation2 + $0x4] sm:$0xf]
        %v1172 = vld [vmem:[#allocation2 + $0x8] sm:$0x1]
        %v1173 = vld [vmem:[#allocation2 + $0xc] sm:$0xe]
        %v1174 = vld [vmem:[#allocation2 + $0x10] sm:$0xf]
        %v1175 = vld [vmem:[#allocation2 + $0x14] sm:$0x1]
        %v1176 = vld [vmem:[#allocation2 + $0x18] sm:$0xe]
        %v1177 = vld [vmem:[#allocation2 + $0x1c] sm:$0xf]
        %v1178 = vld [vmem:[#allocation2 + $0x20] sm:$0x1]
        %v1179 = vld [vmem:[#allocation2 + $0x24] sm:$0xe]
        %v1180 = vld [vmem:[#allocation2 + $0x28] sm:$0xf]
        %v1181 = vld [vmem:[#allocation2 + $0x2c] sm:$0x1]
        %v1182 = vld [vmem:[#allocation2 + $0x30] sm:$0xe]
        %v1183 = vld [vmem:[#allocation2 + $0x34] sm:$0xf]
        %v1184 = vld [vmem:[#allocation2 + $0x38] sm:$0x1]
        %v1185 = vld [vmem:[#allocation2 + $0x3c] sm:$0xe]
        %v1186 = vld [vmem:[#allocation2 + $0x40] sm:$0xf]
        %v1187 = vld [vmem:[#allocation2 + $0x44] sm:$0x1]
        %v1188 = vld [vmem:[#allocation2 + $0x48] sm:$0xe]
        %v1189 = vld [vmem:[#allocation2 + $0x4c] sm:$0xf]
        %v1190 = vld [vmem:[#allocation2 + $0x50] sm:$0x1]
        %v1191 = vld [vmem:[#allocation2 + $0x54] sm:$0xe]
        %v1192 = vld [vmem:[#allocation2 + $0x58] sm:$0xf]
        %v1193 = vld [vmem:[#allocation2 + $0x5c] sm:$0x1]
        %vm1218 = vcmask 1042432
        %vm1219 = vcmask 1046532
        %vm1220 = vmor %vm1218, %vm1219
        %v1221 = vrot.slane %v1170, 5
        %v1222 = vrot.slane %v1221, 4
        %v1223 = vrot.slane %v1171, 5
        %v1224 = vsel %vm1220, %v1222, %v1223
        %v1225 = vrot.slane %v1223, 4
        %v1226 = vrot.slane %v1172, 5
        %v1227 = vsel %vm1220, %v1225, %v1226
        %v1228 = vrot.slane %v1173, 5
        %v1229 = vrot.slane %v1228, 4
        %v1230 = vrot.slane %v1174, 5
        %v1231 = vsel %vm1220, %v1229, %v1230
        %v1232 = vrot.slane %v1230, 4
        %v1233 = vrot.slane %v1175, 5
        %v1234 = vsel %vm1220, %v1232, %v1233
        %v1235 = vrot.slane %v1176, 5
        %v1236 = vrot.slane %v1235, 4
        %v1237 = vrot.slane %v1177, 5
        %v1238 = vsel %vm1220, %v1236, %v1237
        %v1239 = vrot.slane %v1237, 4
        %v1240 = vrot.slane %v1178, 5
        %v1241 = vsel %vm1220, %v1239, %v1240
        %v1242 = vrot.slane %v1179, 5
        %v1243 = vrot.slane %v1242, 4
        %v1244 = vrot.slane %v1180, 5
        %v1245 = vsel %vm1220, %v1243, %v1244
        %v1246 = vrot.slane %v1244, 4
        %v1247 = vrot.slane %v1181, 5
        %v1248 = vsel %vm1220, %v1246, %v1247
        %v1249 = vrot.slane %v1182, 5
        %v1250 = vrot.slane %v1249, 4
        %v1251 = vrot.slane %v1183, 5
        %v1252 = vsel %vm1220, %v1250, %v1251
        %v1253 = vrot.slane %v1251, 4
        %v1254 = vrot.slane %v1184, 5
        %v1255 = vsel %vm1220, %v1253, %v1254
        %v1256 = vrot.slane %v1185, 5
        %v1257 = vrot.slane %v1256, 4
        %v1258 = vrot.slane %v1186, 5
        %v1259 = vsel %vm1220, %v1257, %v1258
        %v1260 = vrot.slane %v1258, 4
        %v1261 = vrot.slane %v1187, 5
        %v1262 = vsel %vm1220, %v1260, %v1261
        %v1263 = vrot.slane %v1188, 5
        %v1264 = vrot.slane %v1263, 4
        %v1265 = vrot.slane %v1189, 5
        %v1266 = vsel %vm1220, %v1264, %v1265
        %v1267 = vrot.slane %v1265, 4
        %v1268 = vrot.slane %v1190, 5
        %v1269 = vsel %vm1220, %v1267, %v1268
        %v1270 = vrot.slane %v1191, 5
        %v1271 = vrot.slane %v1270, 4
        %v1272 = vrot.slane %v1192, 5
        %v1273 = vsel %vm1220, %v1271, %v1272
        %v1274 = vrot.slane %v1272, 4
        %v1275 = vrot.slane %v1193, 5
        %v1276 = vsel %vm1220, %v1274, %v1275
        %v1277 = vunpack.c.l.b16 %v1224
        %v1278 = vunpack.c.l.b16 %v1227
        %v1279 = vunpack.c.l.b16 %v1231
        %v1280 = vunpack.c.l.b16 %v1234
        %v1281 = vunpack.c.l.b16 %v1238
        %v1282 = vunpack.c.l.b16 %v1241
        %v1283 = vunpack.c.l.b16 %v1245
        %v1284 = vunpack.c.l.b16 %v1248
        %v1285 = vunpack.c.l.b16 %v1252
        %v1286 = vunpack.c.l.b16 %v1255
        %v1287 = vunpack.c.l.b16 %v1259
        %v1288 = vunpack.c.l.b16 %v1262
        %v1289 = vunpack.c.l.b16 %v1266
        %v1290 = vunpack.c.l.b16 %v1269
        %v1291 = vunpack.c.l.b16 %v1273
        %v1292 = vunpack.c.l.b16 %v1276
        %v1293 = vpack.c.b16 %v1278, %v1277
        %v1294 = vpack.c.b16 %v1280, %v1279
        %v1295 = vpack.c.b16 %v1282, %v1281
        %v1296 = vpack.c.b16 %v1284, %v1283
        %v1297 = vpack.c.b16 %v1286, %v1285
        %v1298 = vpack.c.b16 %v1288, %v1287
        %v1299 = vpack.c.b16 %v1290, %v1289
        %v1300 = vpack.c.b16 %v1292, %v1291
        %1301 = vrot.lane.b32.xlu0 %v1293, 8
        %v1302 = vpop.permute.xlu0 %1301
        %1303 = vrot.lane.b32.xlu0 %v1294, 8
        %v1304 = vpop.permute.xlu0 %1303
        %1305 = vrot.lane.b32.xlu0 %v1295, 8
        %v1306 = vpop.permute.xlu0 %1305
        %1307 = vrot.lane.b32.xlu0 %v1296, 8
        %v1308 = vpop.permute.xlu0 %1307
        %1309 = vrot.lane.b32.xlu0 %v1297, 8
        %v1310 = vpop.permute.xlu0 %1309
        %1311 = vrot.lane.b32.xlu0 %v1298, 8
        %v1312 = vpop.permute.xlu0 %1311
        %1313 = vrot.lane.b32.xlu0 %v1299, 8
        %v1314 = vpop.permute.xlu0 %1313
        %1315 = vrot.lane.b32.xlu0 %v1300, 8
        %v1316 = vpop.permute.xlu0 %1315
        %vm1325 = vcmask 97344
        %1326 = vst.msk [vmem:[#allocation3] sm:$0xff] %vm1325, %v1302
        %1327 = vst.msk [vmem:[#allocation3 + $0x8] sm:$0xff] %vm1325, %v1304
        %1328 = vst.msk [vmem:[#allocation3 + $0x10] sm:$0xff] %vm1325, %v1306
        %1329 = vst.msk [vmem:[#allocation3 + $0x18] sm:$0xff] %vm1325, %v1308
        %1330 = vst.msk [vmem:[#allocation3 + $0x20] sm:$0xff] %vm1325, %v1310
        %1331 = vst.msk [vmem:[#allocation3 + $0x28] sm:$0xff] %vm1325, %v1312
        %1332 = vst.msk [vmem:[#allocation3 + $0x30] sm:$0xff] %vm1325, %v1314
        %1333 = vst.msk [vmem:[#allocation3 + $0x38] sm:$0xff] %vm1325, %v1316
        %v1334 = vld [vmem:[#allocation3] sm:$0xff]
        %v1335 = vld [vmem:[#allocation3 + $0x8] sm:$0xff]
        %v1336 = vld [vmem:[#allocation3 + $0x10] sm:$0xff]
        %v1337 = vld [vmem:[#allocation3 + $0x18] sm:$0xff]
        %v1338 = vld [vmem:[#allocation3 + $0x20] sm:$0xff]
        %v1339 = vld [vmem:[#allocation3 + $0x28] sm:$0xff]
        %v1340 = vld [vmem:[#allocation3 + $0x30] sm:$0xff]
        %v1341 = vld [vmem:[#allocation3 + $0x38] sm:$0xff]
        %v1342 = vld [vmem:[#allocation10] sm:$0xf]
        %v1343 = vld [vmem:[#allocation10 + $0x4] sm:$0x3]
        %v1344 = vld [vmem:[%s696] sm:$0xf]
        %v1345 = vld [vmem:[%s696 + $0x4] sm:$0xf]
        %v1346 = vld [vmem:[%s696 + $0xc] sm:$0xf]
        %v1347 = vld [vmem:[%s696 + $0x10] sm:$0xf]
        %v1348 = vld [vmem:[%s696 + $0x18] sm:$0xf]
        %v1349 = vld [vmem:[%s696 + $0x1c] sm:$0xf]
        %v1350 = vld [vmem:[%s696 + $0x24] sm:$0xf]
        %v1351 = vld [vmem:[%s696 + $0x28] sm:$0xf]
        %v1352 = vld [vmem:[%s696 + $0x30] sm:$0xf]
        %v1353 = vld [vmem:[%s696 + $0x34] sm:$0xf]
        %v1354 = vld [vmem:[%s696 + $0x3c] sm:$0xf]
        %v1355 = vld [vmem:[%s696 + $0x40] sm:$0xf]
        %v1356 = vld [vmem:[%s696 + $0x48] sm:$0xf]
        %v1357 = vld [vmem:[%s696 + $0x4c] sm:$0xf]
        %v1358 = vld [vmem:[%s696 + $0x54] sm:$0xf]
        %v1359 = vld [vmem:[%s696 + $0x58] sm:$0xf]
        %v1376 = vunpack.c.l.b16 %v1344
        %v1377 = vunpack.c.l.b16 %v1345
        %v1378 = vunpack.c.l.b16 %v1346
        %v1379 = vunpack.c.l.b16 %v1347
        %v1380 = vunpack.c.l.b16 %v1348
        %v1381 = vunpack.c.l.b16 %v1349
        %v1382 = vunpack.c.l.b16 %v1350
        %v1383 = vunpack.c.l.b16 %v1351
        %v1384 = vunpack.c.l.b16 %v1352
        %v1385 = vunpack.c.l.b16 %v1353
        %v1386 = vunpack.c.l.b16 %v1354
        %v1387 = vunpack.c.l.b16 %v1355
        %v1388 = vunpack.c.l.b16 %v1356
        %v1389 = vunpack.c.l.b16 %v1357
        %v1390 = vunpack.c.l.b16 %v1358
        %v1391 = vunpack.c.l.b16 %v1359
        %v1392 = vpack.c.b16 %v1377, %v1376
        %v1393 = vpack.c.b16 %v1379, %v1378
        %v1394 = vpack.c.b16 %v1381, %v1380
        %v1395 = vpack.c.b16 %v1383, %v1382
        %v1396 = vpack.c.b16 %v1385, %v1384
        %v1397 = vpack.c.b16 %v1387, %v1386
        %v1398 = vpack.c.b16 %v1389, %v1388
        %v1399 = vpack.c.b16 %v1391, %v1390
        %1408 = vst.msk [vmem:[#allocation3] sm:$0xff] %vm885, %v1392
        %1409 = vst.msk [vmem:[#allocation3 + $0x8] sm:$0xff] %vm885, %v1393
        %1410 = vst.msk [vmem:[#allocation3 + $0x10] sm:$0xff] %vm885, %v1394
        %1411 = vst.msk [vmem:[#allocation3 + $0x18] sm:$0xff] %vm885, %v1395
        %1412 = vst.msk [vmem:[#allocation3 + $0x20] sm:$0xff] %vm885, %v1396
        %1413 = vst.msk [vmem:[#allocation3 + $0x28] sm:$0xff] %vm885, %v1397
        %1414 = vst.msk [vmem:[#allocation3 + $0x30] sm:$0xff] %vm885, %v1398
        %1415 = vst.msk [vmem:[#allocation3 + $0x38] sm:$0xff] %vm885, %v1399
        %v1416 = vld [vmem:[%s696] sm:$0xf]
        %v1417 = vld [vmem:[%s696 + $0x4] sm:$0xf]
        %v1418 = vld [vmem:[%s696 + $0x8] sm:$0x1]
        %v1419 = vld [vmem:[%s696 + $0xc] sm:$0xf]
        %v1420 = vld [vmem:[%s696 + $0x10] sm:$0xf]
        %v1421 = vld [vmem:[%s696 + $0x14] sm:$0x1]
        %v1422 = vld [vmem:[%s696 + $0x18] sm:$0xf]
        %v1423 = vld [vmem:[%s696 + $0x1c] sm:$0xf]
        %v1424 = vld [vmem:[%s696 + $0x20] sm:$0x1]
        %v1425 = vld [vmem:[%s696 + $0x24] sm:$0xf]
        %v1426 = vld [vmem:[%s696 + $0x28] sm:$0xf]
        %v1427 = vld [vmem:[%s696 + $0x2c] sm:$0x1]
        %v1428 = vld [vmem:[%s696 + $0x30] sm:$0xf]
        %v1429 = vld [vmem:[%s696 + $0x34] sm:$0xf]
        %v1430 = vld [vmem:[%s696 + $0x38] sm:$0x1]
        %v1431 = vld [vmem:[%s696 + $0x3c] sm:$0xf]
        %v1432 = vld [vmem:[%s696 + $0x40] sm:$0xf]
        %v1433 = vld [vmem:[%s696 + $0x44] sm:$0x1]
        %v1434 = vld [vmem:[%s696 + $0x48] sm:$0xf]
        %v1435 = vld [vmem:[%s696 + $0x4c] sm:$0xf]
        %v1436 = vld [vmem:[%s696 + $0x50] sm:$0x1]
        %v1437 = vld [vmem:[%s696 + $0x54] sm:$0xf]
        %v1438 = vld [vmem:[%s696 + $0x58] sm:$0xf]
        %v1439 = vld [vmem:[%s696 + $0x5c] sm:$0x1]
        %v1441 = vshrl.u32 %v1416, 16
        %v1443 = vrot.slane %v1441, 4
        %v1444 = vshll.u32 %v1416, 16
        %v1446 = vrot.slane %v1444, 5
        %v1447 = vor.u32 %v1443, %v1446
        %v1448 = vrot.slane %v1447, 4
        %v1450 = vshll.u32 %v1417, 16
        %v1452 = vrot.slane %v1450, 5
        %v1453 = vsel %vm920, %v1448, %v1452
        %v1454 = vshrl.u32 %v1417, 16
        %v1456 = vrot.slane %v1454, 4
        %v1457 = vor.u32 %v1456, %v1452
        %v1458 = vrot.slane %v1457, 4
        %v1460 = vshll.u32 %v1418, 16
        %v1462 = vrot.slane %v1460, 5
        %v1463 = vsel %vm920, %v1458, %v1462
        %v1465 = vshrl.u32 %v1419, 16
        %v1467 = vrot.slane %v1465, 4
        %v1468 = vshll.u32 %v1419, 16
        %v1470 = vrot.slane %v1468, 5
        %v1471 = vor.u32 %v1467, %v1470
        %v1472 = vrot.slane %v1471, 4
        %v1474 = vshll.u32 %v1420, 16
        %v1476 = vrot.slane %v1474, 5
        %v1477 = vsel %vm920, %v1472, %v1476
        %v1478 = vshrl.u32 %v1420, 16
        %v1480 = vrot.slane %v1478, 4
        %v1481 = vor.u32 %v1480, %v1476
        %v1482 = vrot.slane %v1481, 4
        %v1484 = vshll.u32 %v1421, 16
        %v1486 = vrot.slane %v1484, 5
        %v1487 = vsel %vm920, %v1482, %v1486
        %v1489 = vshrl.u32 %v1422, 16
        %v1491 = vrot.slane %v1489, 4
        %v1492 = vshll.u32 %v1422, 16
        %v1494 = vrot.slane %v1492, 5
        %v1495 = vor.u32 %v1491, %v1494
        %v1496 = vrot.slane %v1495, 4
        %v1498 = vshll.u32 %v1423, 16
        %v1500 = vrot.slane %v1498, 5
        %v1501 = vsel %vm920, %v1496, %v1500
        %v1502 = vshrl.u32 %v1423, 16
        %v1504 = vrot.slane %v1502, 4
        %v1505 = vor.u32 %v1504, %v1500
        %v1506 = vrot.slane %v1505, 4
        %v1508 = vshll.u32 %v1424, 16
        %v1510 = vrot.slane %v1508, 5
        %v1511 = vsel %vm920, %v1506, %v1510
        %v1513 = vshrl.u32 %v1425, 16
        %v1515 = vrot.slane %v1513, 4
        %v1516 = vshll.u32 %v1425, 16
        %v1518 = vrot.slane %v1516, 5
        %v1519 = vor.u32 %v1515, %v1518
        %v1520 = vrot.slane %v1519, 4
        %v1522 = vshll.u32 %v1426, 16
        %v1524 = vrot.slane %v1522, 5
        %v1525 = vsel %vm920, %v1520, %v1524
        %v1526 = vshrl.u32 %v1426, 16
        %v1528 = vrot.slane %v1526, 4
        %v1529 = vor.u32 %v1528, %v1524
        %v1530 = vrot.slane %v1529, 4
        %v1532 = vshll.u32 %v1427, 16
        %v1534 = vrot.slane %v1532, 5
        %v1535 = vsel %vm920, %v1530, %v1534
        %v1537 = vshrl.u32 %v1428, 16
        %v1539 = vrot.slane %v1537, 4
        %v1540 = vshll.u32 %v1428, 16
        %v1542 = vrot.slane %v1540, 5
        %v1543 = vor.u32 %v1539, %v1542
        %v1544 = vrot.slane %v1543, 4
        %v1546 = vshll.u32 %v1429, 16
        %v1548 = vrot.slane %v1546, 5
        %v1549 = vsel %vm920, %v1544, %v1548
        %v1550 = vshrl.u32 %v1429, 16
        %v1552 = vrot.slane %v1550, 4
        %v1553 = vor.u32 %v1552, %v1548
        %v1554 = vrot.slane %v1553, 4
        %v1556 = vshll.u32 %v1430, 16
        %v1558 = vrot.slane %v1556, 5
        %v1559 = vsel %vm920, %v1554, %v1558
        %v1561 = vshrl.u32 %v1431, 16
        %v1563 = vrot.slane %v1561, 4
        %v1564 = vshll.u32 %v1431, 16
        %v1566 = vrot.slane %v1564, 5
        %v1567 = vor.u32 %v1563, %v1566
        %v1568 = vrot.slane %v1567, 4
        %v1570 = vshll.u32 %v1432, 16
        %v1572 = vrot.slane %v1570, 5
        %v1573 = vsel %vm920, %v1568, %v1572
        %v1574 = vshrl.u32 %v1432, 16
        %v1576 = vrot.slane %v1574, 4
        %v1577 = vor.u32 %v1576, %v1572
        %v1578 = vrot.slane %v1577, 4
        %v1580 = vshll.u32 %v1433, 16
        %v1582 = vrot.slane %v1580, 5
        %v1583 = vsel %vm920, %v1578, %v1582
        %v1585 = vshrl.u32 %v1434, 16
        %v1587 = vrot.slane %v1585, 4
        %v1588 = vshll.u32 %v1434, 16
        %v1590 = vrot.slane %v1588, 5
        %v1591 = vor.u32 %v1587, %v1590
        %v1592 = vrot.slane %v1591, 4
        %v1594 = vshll.u32 %v1435, 16
        %v1596 = vrot.slane %v1594, 5
        %v1597 = vsel %vm920, %v1592, %v1596
        %v1598 = vshrl.u32 %v1435, 16
        %v1600 = vrot.slane %v1598, 4
        %v1601 = vor.u32 %v1600, %v1596
        %v1602 = vrot.slane %v1601, 4
        %v1604 = vshll.u32 %v1436, 16
        %v1606 = vrot.slane %v1604, 5
        %v1607 = vsel %vm920, %v1602, %v1606
        %v1609 = vshrl.u32 %v1437, 16
        %v1611 = vrot.slane %v1609, 4
        %v1612 = vshll.u32 %v1437, 16
        %v1614 = vrot.slane %v1612, 5
        %v1615 = vor.u32 %v1611, %v1614
        %v1616 = vrot.slane %v1615, 4
        %v1618 = vshll.u32 %v1438, 16
        %v1620 = vrot.slane %v1618, 5
        %v1621 = vsel %vm920, %v1616, %v1620
        %v1622 = vshrl.u32 %v1438, 16
        %v1624 = vrot.slane %v1622, 4
        %v1625 = vor.u32 %v1624, %v1620
        %v1626 = vrot.slane %v1625, 4
        %v1628 = vshll.u32 %v1439, 16
        %v1630 = vrot.slane %v1628, 5
        %v1631 = vsel %vm920, %v1626, %v1630
        %v1632 = vunpack.c.l.b16 %v1453
        %v1633 = vunpack.c.l.b16 %v1463
        %v1634 = vunpack.c.l.b16 %v1477
        %v1635 = vunpack.c.l.b16 %v1487
        %v1636 = vunpack.c.l.b16 %v1501
        %v1637 = vunpack.c.l.b16 %v1511
        %v1638 = vunpack.c.l.b16 %v1525
        %v1639 = vunpack.c.l.b16 %v1535
        %v1640 = vunpack.c.l.b16 %v1549
        %v1641 = vunpack.c.l.b16 %v1559
        %v1642 = vunpack.c.l.b16 %v1573
        %v1643 = vunpack.c.l.b16 %v1583
        %v1644 = vunpack.c.l.b16 %v1597
        %v1645 = vunpack.c.l.b16 %v1607
        %v1646 = vunpack.c.l.b16 %v1621
        %v1647 = vunpack.c.l.b16 %v1631
        %v1648 = vpack.c.b16 %v1633, %v1632
        %v1649 = vpack.c.b16 %v1635, %v1634
        %v1650 = vpack.c.b16 %v1637, %v1636
        %v1651 = vpack.c.b16 %v1639, %v1638
        %v1652 = vpack.c.b16 %v1641, %v1640
        %v1653 = vpack.c.b16 %v1643, %v1642
        %v1654 = vpack.c.b16 %v1645, %v1644
        %v1655 = vpack.c.b16 %v1647, %v1646
        %1656 = vrot.lane.b32.xlu0 %v1648, 4
        %v1657 = vpop.permute.xlu0 %1656
        %1658 = vrot.lane.b32.xlu0 %v1649, 4
        %v1659 = vpop.permute.xlu0 %1658
        %1660 = vrot.lane.b32.xlu0 %v1650, 4
        %v1661 = vpop.permute.xlu0 %1660
        %1662 = vrot.lane.b32.xlu0 %v1651, 4
        %v1663 = vpop.permute.xlu0 %1662
        %1664 = vrot.lane.b32.xlu0 %v1652, 4
        %v1665 = vpop.permute.xlu0 %1664
        %1666 = vrot.lane.b32.xlu0 %v1653, 4
        %v1667 = vpop.permute.xlu0 %1666
        %1668 = vrot.lane.b32.xlu0 %v1654, 4
        %v1669 = vpop.permute.xlu0 %1668
        %1670 = vrot.lane.b32.xlu0 %v1655, 4
        %v1671 = vpop.permute.xlu0 %1670
        %1680 = vst.msk [vmem:[#allocation3] sm:$0xff] %vm1161, %v1657
        %1681 = vst.msk [vmem:[#allocation3 + $0x8] sm:$0xff] %vm1161, %v1659
        %1682 = vst.msk [vmem:[#allocation3 + $0x10] sm:$0xff] %vm1161, %v1661
        %1683 = vst.msk [vmem:[#allocation3 + $0x18] sm:$0xff] %vm1161, %v1663
        %1684 = vst.msk [vmem:[#allocation3 + $0x20] sm:$0xff] %vm1161, %v1665
        %1685 = vst.msk [vmem:[#allocation3 + $0x28] sm:$0xff] %vm1161, %v1667
        %1686 = vst.msk [vmem:[#allocation3 + $0x30] sm:$0xff] %vm1161, %v1669
        %1687 = vst.msk [vmem:[#allocation3 + $0x38] sm:$0xff] %vm1161, %v1671
        %v1688 = vld [vmem:[%s696] sm:$0xe]
        %v1689 = vld [vmem:[%s696 + $0x4] sm:$0xf]
        %v1690 = vld [vmem:[%s696 + $0x8] sm:$0x1]
        %v1691 = vld [vmem:[%s696 + $0xc] sm:$0xe]
        %v1692 = vld [vmem:[%s696 + $0x10] sm:$0xf]
        %v1693 = vld [vmem:[%s696 + $0x14] sm:$0x1]
        %v1694 = vld [vmem:[%s696 + $0x18] sm:$0xe]
        %v1695 = vld [vmem:[%s696 + $0x1c] sm:$0xf]
        %v1696 = vld [vmem:[%s696 + $0x20] sm:$0x1]
        %v1697 = vld [vmem:[%s696 + $0x24] sm:$0xe]
        %v1698 = vld [vmem:[%s696 + $0x28] sm:$0xf]
        %v1699 = vld [vmem:[%s696 + $0x2c] sm:$0x1]
        %v1700 = vld [vmem:[%s696 + $0x30] sm:$0xe]
        %v1701 = vld [vmem:[%s696 + $0x34] sm:$0xf]
        %v1702 = vld [vmem:[%s696 + $0x38] sm:$0x1]
        %v1703 = vld [vmem:[%s696 + $0x3c] sm:$0xe]
        %v1704 = vld [vmem:[%s696 + $0x40] sm:$0xf]
        %v1705 = vld [vmem:[%s696 + $0x44] sm:$0x1]
        %v1706 = vld [vmem:[%s696 + $0x48] sm:$0xe]
        %v1707 = vld [vmem:[%s696 + $0x4c] sm:$0xf]
        %v1708 = vld [vmem:[%s696 + $0x50] sm:$0x1]
        %v1709 = vld [vmem:[%s696 + $0x54] sm:$0xe]
        %v1710 = vld [vmem:[%s696 + $0x58] sm:$0xf]
        %v1711 = vld [vmem:[%s696 + $0x5c] sm:$0x1]
        %v1736 = vrot.slane %v1688, 5
        %v1737 = vrot.slane %v1736, 4
        %v1738 = vrot.slane %v1689, 5
        %v1739 = vsel %vm1220, %v1737, %v1738
        %v1740 = vrot.slane %v1738, 4
        %v1741 = vrot.slane %v1690, 5
        %v1742 = vsel %vm1220, %v1740, %v1741
        %v1743 = vrot.slane %v1691, 5
        %v1744 = vrot.slane %v1743, 4
        %v1745 = vrot.slane %v1692, 5
        %v1746 = vsel %vm1220, %v1744, %v1745
        %v1747 = vrot.slane %v1745, 4
        %v1748 = vrot.slane %v1693, 5
        %v1749 = vsel %vm1220, %v1747, %v1748
        %v1750 = vrot.slane %v1694, 5
        %v1751 = vrot.slane %v1750, 4
        %v1752 = vrot.slane %v1695, 5
        %v1753 = vsel %vm1220, %v1751, %v1752
        %v1754 = vrot.slane %v1752, 4
        %v1755 = vrot.slane %v1696, 5
        %v1756 = vsel %vm1220, %v1754, %v1755
        %v1757 = vrot.slane %v1697, 5
        %v1758 = vrot.slane %v1757, 4
        %v1759 = vrot.slane %v1698, 5
        %v1760 = vsel %vm1220, %v1758, %v1759
        %v1761 = vrot.slane %v1759, 4
        %v1762 = vrot.slane %v1699, 5
        %v1763 = vsel %vm1220, %v1761, %v1762
        %v1764 = vrot.slane %v1700, 5
        %v1765 = vrot.slane %v1764, 4
        %v1766 = vrot.slane %v1701, 5
        %v1767 = vsel %vm1220, %v1765, %v1766
        %v1768 = vrot.slane %v1766, 4
        %v1769 = vrot.slane %v1702, 5
        %v1770 = vsel %vm1220, %v1768, %v1769
        %v1771 = vrot.slane %v1703, 5
        %v1772 = vrot.slane %v1771, 4
        %v1773 = vrot.slane %v1704, 5
        %v1774 = vsel %vm1220, %v1772, %v1773
        %v1775 = vrot.slane %v1773, 4
        %v1776 = vrot.slane %v1705, 5
        %v1777 = vsel %vm1220, %v1775, %v1776
        %v1778 = vrot.slane %v1706, 5
        %v1779 = vrot.slane %v1778, 4
        %v1780 = vrot.slane %v1707, 5
        %v1781 = vsel %vm1220, %v1779, %v1780
        %v1782 = vrot.slane %v1780, 4
        %v1783 = vrot.slane %v1708, 5
        %v1784 = vsel %vm1220, %v1782, %v1783
        %v1785 = vrot.slane %v1709, 5
        %v1786 = vrot.slane %v1785, 4
        %v1787 = vrot.slane %v1710, 5
        %v1788 = vsel %vm1220, %v1786, %v1787
        %v1789 = vrot.slane %v1787, 4
        %v1790 = vrot.slane %v1711, 5
        %v1791 = vsel %vm1220, %v1789, %v1790
        %v1792 = vunpack.c.l.b16 %v1739
        %v1793 = vunpack.c.l.b16 %v1742
        %v1794 = vunpack.c.l.b16 %v1746
        %v1795 = vunpack.c.l.b16 %v1749
        %v1796 = vunpack.c.l.b16 %v1753
        %v1797 = vunpack.c.l.b16 %v1756
        %v1798 = vunpack.c.l.b16 %v1760
        %v1799 = vunpack.c.l.b16 %v1763
        %v1800 = vunpack.c.l.b16 %v1767
        %v1801 = vunpack.c.l.b16 %v1770
        %v1802 = vunpack.c.l.b16 %v1774
        %v1803 = vunpack.c.l.b16 %v1777
        %v1804 = vunpack.c.l.b16 %v1781
        %v1805 = vunpack.c.l.b16 %v1784
        %v1806 = vunpack.c.l.b16 %v1788
        %v1807 = vunpack.c.l.b16 %v1791
        %v1808 = vpack.c.b16 %v1793, %v1792
        %v1809 = vpack.c.b16 %v1795, %v1794
        %v1810 = vpack.c.b16 %v1797, %v1796
        %v1811 = vpack.c.b16 %v1799, %v1798
        %v1812 = vpack.c.b16 %v1801, %v1800
        %v1813 = vpack.c.b16 %v1803, %v1802
        %v1814 = vpack.c.b16 %v1805, %v1804
        %v1815 = vpack.c.b16 %v1807, %v1806
        %1816 = vrot.lane.b32.xlu0 %v1808, 8
        %v1817 = vpop.permute.xlu0 %1816
        %1818 = vrot.lane.b32.xlu0 %v1809, 8
        %v1819 = vpop.permute.xlu0 %1818
        %1820 = vrot.lane.b32.xlu0 %v1810, 8
        %v1821 = vpop.permute.xlu0 %1820
        %1822 = vrot.lane.b32.xlu0 %v1811, 8
        %v1823 = vpop.permute.xlu0 %1822
        %1824 = vrot.lane.b32.xlu0 %v1812, 8
        %v1825 = vpop.permute.xlu0 %1824
        %1826 = vrot.lane.b32.xlu0 %v1813, 8
        %v1827 = vpop.permute.xlu0 %1826
        %1828 = vrot.lane.b32.xlu0 %v1814, 8
        %v1829 = vpop.permute.xlu0 %1828
        %1830 = vrot.lane.b32.xlu0 %v1815, 8
        %v1831 = vpop.permute.xlu0 %1830
        %1840 = vst.msk [vmem:[#allocation3] sm:$0xff] %vm1325, %v1817
        %1841 = vst.msk [vmem:[#allocation3 + $0x8] sm:$0xff] %vm1325, %v1819
        %1842 = vst.msk [vmem:[#allocation3 + $0x10] sm:$0xff] %vm1325, %v1821
        %1843 = vst.msk [vmem:[#allocation3 + $0x18] sm:$0xff] %vm1325, %v1823
        %1844 = vst.msk [vmem:[#allocation3 + $0x20] sm:$0xff] %vm1325, %v1825
        %1845 = vst.msk [vmem:[#allocation3 + $0x28] sm:$0xff] %vm1325, %v1827
        %1846 = vst.msk [vmem:[#allocation3 + $0x30] sm:$0xff] %vm1325, %v1829
        %1847 = vst.msk [vmem:[#allocation3 + $0x38] sm:$0xff] %vm1325, %v1831
        %v1848 = vld [vmem:[#allocation3] sm:$0xff]
        %v1849 = vld [vmem:[#allocation3 + $0x8] sm:$0xff]
        %v1850 = vld [vmem:[#allocation3 + $0x10] sm:$0xff]
        %v1851 = vld [vmem:[#allocation3 + $0x18] sm:$0xff]
        %v1852 = vld [vmem:[#allocation3 + $0x20] sm:$0xff]
        %v1853 = vld [vmem:[#allocation3 + $0x28] sm:$0xff]
        %v1854 = vld [vmem:[#allocation3 + $0x30] sm:$0xff]
        %v1855 = vld [vmem:[#allocation3 + $0x38] sm:$0xff]
        %s1856 = scalar_lea.vmem [#allocation10], 8
        %v1857 = vld [vmem:[%s1856] sm:$0xf]
        %v1858 = vld [vmem:[%s1856 + $0x4] sm:$0x3]
        %v1861 = vunpack.c.l.b16 %v1857
        %v1862 = vunpack.c.l.b16 %v1858
        %v1863 = vpack.c.b16 %v1862, %v1861
        %vm1864 = vcmask 97280
        %v1866 = vsel %vm1864, %v1848, 0
        %v1869 = vsel %vm1864, %v1849, 0
        %v1872 = vsel %vm1864, %v1850, 0
        %v1875 = vsel %vm1864, %v1851, 0
        %v1878 = vsel %vm1864, %v1852, 0
        %v1881 = vsel %vm1864, %v1853, 0
        %v1884 = vsel %vm1864, %v1854, 0
        %v1887 = vsel %vm1864, %v1855, 0
        %vm1889 = vcmask 1045504
        %v1891 = vsel %vm1889, %v1863, 0
        %1893 = vmatprep.subr.bf16.mxu0 0
        %1894 = vmatpush1.bf16.msra.mxu0 %v1891
        %1895 = vmatprep.subr.bf16.mxu0 0
        %1896 = vmatpush1.bf16.msra.mxu0 0
        %1897 = vmatprep.subr.bf16.mxu0 0
        %1898 = vmatpush1.bf16.msra.mxu0 0
        %1899 = vmatprep.subr.bf16.mxu0 0
        %1900 = vmatpush1.bf16.msra.mxu0 0
        %1901 = vmatprep.subr.bf16.mxu0 0
        %1902 = vmatpush1.bf16.msra.mxu0 0
        %1903 = vmatprep.subr.bf16.mxu0 0
        %1904 = vmatpush1.bf16.msra.mxu0 0
        %1905 = vmatprep.subr.bf16.mxu0 0
        %1906 = vmatpush1.bf16.msra.mxu0 0
        %1907 = vmatprep.subr.bf16.mxu0 0
        %1908 = vmatpush1.bf16.msra.mxu0 0
        %1909 = vmatprep.subr.bf16.mxu0 0
        %1910 = vmatpush1.bf16.msra.mxu0 0
        %1911 = vmatprep.subr.bf16.mxu0 0
        %1912 = vmatpush1.bf16.msra.mxu0 0
        %1913 = vmatprep.subr.bf16.mxu0 0
        %1914 = vmatpush1.bf16.msra.mxu0 0
        %1915 = vmatprep.subr.bf16.mxu0 0
        %1916 = vmatpush1.bf16.msra.mxu0 0
        %1917 = vmatprep.subr.bf16.mxu0 0
        %1918 = vmatpush1.bf16.msra.mxu0 0
        %1919 = vmatprep.subr.bf16.mxu0 0
        %1920 = vmatpush1.bf16.msra.mxu0 0
        %1921 = vmatprep.subr.bf16.mxu0 0
        %1922 = vmatpush1.bf16.msra.mxu0 0
        %1923 = vmatprep.subr.bf16.mxu0 0
        %1924 = vmatpush1.bf16.msra.mxu0 0
        %1925 = vmatprep.mubr.bf16.mxu0 0
        %1926 = vmatmul.mubr.bf16.gmra.mrb[0].mxu0 %v1866
        %v1927 = vpop.f32.mrb[0].mxu0
        %v1928 = vadd.f32 0.0, %v1927
        %v1929 = vpop.f32.mrb[0].mxu0
        %v1930 = vpop.f32.mrb[0].mxu0
        %v1931 = vadd.f32 0.0, %v1930
        %v1932 = vpop.f32.mrb[0].mxu0
        %1933 = vmatprep.mubr.bf16.mxu0 0
        %1934 = vmatmul.mubr.bf16.gmra.mrb[0].mxu0 %v1869
        %v1935 = vpop.f32.mrb[0].mxu0
        %v1936 = vadd.f32 0.0, %v1935
        %v1937 = vpop.f32.mrb[0].mxu0
        %v1938 = vpop.f32.mrb[0].mxu0
        %v1939 = vadd.f32 0.0, %v1938
        %v1940 = vpop.f32.mrb[0].mxu0
        %1941 = vmatprep.mubr.bf16.mxu0 0
        %1942 = vmatmul.mubr.bf16.gmra.mrb[0].mxu0 %v1872
        %v1943 = vpop.f32.mrb[0].mxu0
        %v1944 = vadd.f32 0.0, %v1943
        %v1945 = vpop.f32.mrb[0].mxu0
        %v1946 = vpop.f32.mrb[0].mxu0
        %v1947 = vadd.f32 0.0, %v1946
        %v1948 = vpop.f32.mrb[0].mxu0
        %1949 = vmatprep.mubr.bf16.mxu0 0
        %1950 = vmatmul.mubr.bf16.gmra.mrb[0].mxu0 %v1875
        %v1951 = vpop.f32.mrb[0].mxu0
        %v1952 = vadd.f32 0.0, %v1951
        %v1953 = vpop.f32.mrb[0].mxu0
        %v1954 = vpop.f32.mrb[0].mxu0
        %v1955 = vadd.f32 0.0, %v1954
        %v1956 = vpop.f32.mrb[0].mxu0
        %1957 = vmatprep.mubr.bf16.mxu0 0
        %1958 = vmatmul.mubr.bf16.gmra.mrb[0].mxu0 %v1878
        %v1959 = vpop.f32.mrb[0].mxu0
        %v1960 = vadd.f32 0.0, %v1959
        %v1961 = vpop.f32.mrb[0].mxu0
        %v1962 = vpop.f32.mrb[0].mxu0
        %v1963 = vadd.f32 0.0, %v1962
        %v1964 = vpop.f32.mrb[0].mxu0
        %1965 = vmatprep.mubr.bf16.mxu0 0
        %1966 = vmatmul.mubr.bf16.gmra.mrb[0].mxu0 %v1881
        %v1967 = vpop.f32.mrb[0].mxu0
        %v1968 = vadd.f32 0.0, %v1967
        %v1969 = vpop.f32.mrb[0].mxu0
        %v1970 = vpop.f32.mrb[0].mxu0
        %v1971 = vadd.f32 0.0, %v1970
        %v1972 = vpop.f32.mrb[0].mxu0
        %1973 = vmatprep.mubr.bf16.mxu0 0
        %1974 = vmatmul.mubr.bf16.gmra.mrb[0].mxu0 %v1884
        %v1975 = vpop.f32.mrb[0].mxu0
        %v1976 = vadd.f32 0.0, %v1975
        %v1977 = vpop.f32.mrb[0].mxu0
        %v1978 = vpop.f32.mrb[0].mxu0
        %v1979 = vadd.f32 0.0, %v1978
        %v1980 = vpop.f32.mrb[0].mxu0
        %1981 = vmatprep.mubr.bf16.mxu0 0
        %1982 = vmatmul.mubr.bf16.gmra.mrb[0].mxu0 %v1887
        %v1983 = vpop.f32.mrb[0].mxu0
        %v1984 = vadd.f32 0.0, %v1983
        %v1985 = vpop.f32.mrb[0].mxu0
        %v1986 = vpop.f32.mrb[0].mxu0
        %v1987 = vadd.f32 0.0, %v1986
        %v1988 = vpop.f32.mrb[0].mxu0
        %1989 = vdwg.mxu0
        %v1992 = vunpack.c.l.b16 %v1342
        %v1993 = vunpack.c.l.b16 %v1343
        %v1994 = vpack.c.b16 %v1993, %v1992
        %v1996 = vsel %vm1864, %v1334, 0
        %v1999 = vsel %vm1864, %v1335, 0
        %v2002 = vsel %vm1864, %v1336, 0
        %v2005 = vsel %vm1864, %v1337, 0
        %v2008 = vsel %vm1864, %v1338, 0
        %v2011 = vsel %vm1864, %v1339, 0
        %v2014 = vsel %vm1864, %v1340, 0
        %v2017 = vsel %vm1864, %v1341, 0
        %v2020 = vsel %vm1889, %v1994, 0
        %2022 = vmatprep.subr.bf16.mxu0 0
        %2023 = vmatpush1.bf16.msra.mxu0 %v2020
        %2024 = vmatprep.subr.bf16.mxu0 0
        %2025 = vmatpush1.bf16.msra.mxu0 0
        %2026 = vmatprep.subr.bf16.mxu0 0
        %2027 = vmatpush1.bf16.msra.mxu0 0
        %2028 = vmatprep.subr.bf16.mxu0 0
        %2029 = vmatpush1.bf16.msra.mxu0 0
        %2030 = vmatprep.subr.bf16.mxu0 0
        %2031 = vmatpush1.bf16.msra.mxu0 0
        %2032 = vmatprep.subr.bf16.mxu0 0
        %2033 = vmatpush1.bf16.msra.mxu0 0
        %2034 = vmatprep.subr.bf16.mxu0 0
        %2035 = vmatpush1.bf16.msra.mxu0 0
        %2036 = vmatprep.subr.bf16.mxu0 0
        %2037 = vmatpush1.bf16.msra.mxu0 0
        %2038 = vmatprep.subr.bf16.mxu0 0
        %2039 = vmatpush1.bf16.msra.mxu0 0
        %2040 = vmatprep.subr.bf16.mxu0 0
        %2041 = vmatpush1.bf16.msra.mxu0 0
        %2042 = vmatprep.subr.bf16.mxu0 0
        %2043 = vmatpush1.bf16.msra.mxu0 0
        %2044 = vmatprep.subr.bf16.mxu0 0
        %2045 = vmatpush1.bf16.msra.mxu0 0
        %2046 = vmatprep.subr.bf16.mxu0 0
        %2047 = vmatpush1.bf16.msra.mxu0 0
        %2048 = vmatprep.subr.bf16.mxu0 0
        %2049 = vmatpush1.bf16.msra.mxu0 0
        %2050 = vmatprep.subr.bf16.mxu0 0
        %2051 = vmatpush1.bf16.msra.mxu0 0
        %2052 = vmatprep.subr.bf16.mxu0 0
        %2053 = vmatpush1.bf16.msra.mxu0 0
        %2054 = vmatprep.mubr.bf16.mxu0 0
        %2055 = vmatmul.mubr.bf16.gmra.mrb[0].mxu0 %v1996
        %v2056 = vpop.f32.mrb[0].mxu0
        %v2057 = vadd.f32 %v1928, %v2056
        %v2058 = vpop.f32.mrb[0].mxu0
        %v2059 = vpop.f32.mrb[0].mxu0
        %v2060 = vadd.f32 %v1931, %v2059
        %v2061 = vpop.f32.mrb[0].mxu0
        %2062 = vmatprep.mubr.bf16.mxu0 0
        %2063 = vmatmul.mubr.bf16.gmra.mrb[0].mxu0 %v1999
        %v2064 = vpop.f32.mrb[0].mxu0
        %v2065 = vadd.f32 %v1936, %v2064
        %v2066 = vpop.f32.mrb[0].mxu0
        %v2067 = vpop.f32.mrb[0].mxu0
        %v2068 = vadd.f32 %v1939, %v2067
        %v2069 = vpop.f32.mrb[0].mxu0
        %2070 = vmatprep.mubr.bf16.mxu0 0
        %2071 = vmatmul.mubr.bf16.gmra.mrb[0].mxu0 %v2002
        %v2072 = vpop.f32.mrb[0].mxu0
        %v2073 = vadd.f32 %v1944, %v2072
        %v2074 = vpop.f32.mrb[0].mxu0
        %v2075 = vpop.f32.mrb[0].mxu0
        %v2076 = vadd.f32 %v1947, %v2075
        %v2077 = vpop.f32.mrb[0].mxu0
        %2078 = vmatprep.mubr.bf16.mxu0 0
        %2079 = vmatmul.mubr.bf16.gmra.mrb[0].mxu0 %v2005
        %v2080 = vpop.f32.mrb[0].mxu0
        %v2081 = vadd.f32 %v1952, %v2080
        %v2082 = vpop.f32.mrb[0].mxu0
        %v2083 = vpop.f32.mrb[0].mxu0
        %v2084 = vadd.f32 %v1955, %v2083
        %v2085 = vpop.f32.mrb[0].mxu0
        %2086 = vmatprep.mubr.bf16.mxu0 0
        %2087 = vmatmul.mubr.bf16.gmra.mrb[0].mxu0 %v2008
        %v2088 = vpop.f32.mrb[0].mxu0
        %v2089 = vadd.f32 %v1960, %v2088
        %v2090 = vpop.f32.mrb[0].mxu0
        %v2091 = vpop.f32.mrb[0].mxu0
        %v2092 = vadd.f32 %v1963, %v2091
        %v2093 = vpop.f32.mrb[0].mxu0
        %2094 = vmatprep.mubr.bf16.mxu0 0
        %2095 = vmatmul.mubr.bf16.gmra.mrb[0].mxu0 %v2011
        %v2096 = vpop.f32.mrb[0].mxu0
        %v2097 = vadd.f32 %v1968, %v2096
        %v2098 = vpop.f32.mrb[0].mxu0
        %v2099 = vpop.f32.mrb[0].mxu0
        %v2100 = vadd.f32 %v1971, %v2099
        %v2101 = vpop.f32.mrb[0].mxu0
        %2102 = vmatprep.mubr.bf16.mxu0 0
        %2103 = vmatmul.mubr.bf16.gmra.mrb[0].mxu0 %v2014
        %v2104 = vpop.f32.mrb[0].mxu0
        %v2105 = vadd.f32 %v1976, %v2104
        %v2106 = vpop.f32.mrb[0].mxu0
        %v2107 = vpop.f32.mrb[0].mxu0
        %v2108 = vadd.f32 %v1979, %v2107
        %v2109 = vpop.f32.mrb[0].mxu0
        %2110 = vmatprep.mubr.bf16.mxu0 0
        %2111 = vmatmul.mubr.bf16.gmra.mrb[0].mxu0 %v2017
        %v2112 = vpop.f32.mrb[0].mxu0
        %v2113 = vadd.f32 %v1984, %v2112
        %v2114 = vpop.f32.mrb[0].mxu0
        %v2115 = vpop.f32.mrb[0].mxu0
        %v2116 = vadd.f32 %v1987, %v2115
        %v2117 = vpop.f32.mrb[0].mxu0
        %2118 = vdwg.mxu0
        %s2119 = scalar_lea.vmem [#allocation2], 24
        %v2120 = vld [vmem:[%s2119] sm:$0xf]
        %v2121 = vld [vmem:[%s2119 + $0x4] sm:$0xf]
        %v2122 = vld [vmem:[%s2119 + $0xc] sm:$0xf]
        %v2123 = vld [vmem:[%s2119 + $0x10] sm:$0xf]
        %v2124 = vld [vmem:[%s2119 + $0x18] sm:$0xf]
        %v2125 = vld [vmem:[%s2119 + $0x1c] sm:$0xf]
        %v2126 = vld [vmem:[%s2119 + $0x24] sm:$0xf]
        %v2127 = vld [vmem:[%s2119 + $0x28] sm:$0xf]
        %v2128 = vld [vmem:[%s2119 + $0x30] sm:$0xf]
        %v2129 = vld [vmem:[%s2119 + $0x34] sm:$0xf]
        %v2130 = vld [vmem:[%s2119 + $0x3c] sm:$0xf]
        %v2131 = vld [vmem:[%s2119 + $0x40] sm:$0xf]
        %v2132 = vld [vmem:[%s2119 + $0x48] sm:$0xf]
        %v2133 = vld [vmem:[%s2119 + $0x4c] sm:$0xf]
        %v2134 = vld [vmem:[%s2119 + $0x54] sm:$0xf]
        %v2135 = vld [vmem:[%s2119 + $0x58] sm:$0xf]
        %v2152 = vunpack.c.l.b16 %v2120
        %v2153 = vunpack.c.l.b16 %v2121
        %v2154 = vunpack.c.l.b16 %v2122
        %v2155 = vunpack.c.l.b16 %v2123
        %v2156 = vunpack.c.l.b16 %v2124
        %v2157 = vunpack.c.l.b16 %v2125
        %v2158 = vunpack.c.l.b16 %v2126
        %v2159 = vunpack.c.l.b16 %v2127
        %v2160 = vunpack.c.l.b16 %v2128
        %v2161 = vunpack.c.l.b16 %v2129
        %v2162 = vunpack.c.l.b16 %v2130
        %v2163 = vunpack.c.l.b16 %v2131
        %v2164 = vunpack.c.l.b16 %v2132
        %v2165 = vunpack.c.l.b16 %v2133
        %v2166 = vunpack.c.l.b16 %v2134
        %v2167 = vunpack.c.l.b16 %v2135
        %v2168 = vpack.c.b16 %v2153, %v2152
        %v2169 = vpack.c.b16 %v2155, %v2154
        %v2170 = vpack.c.b16 %v2157, %v2156
        %v2171 = vpack.c.b16 %v2159, %v2158
        %v2172 = vpack.c.b16 %v2161, %v2160
        %v2173 = vpack.c.b16 %v2163, %v2162
        %v2174 = vpack.c.b16 %v2165, %v2164
        %v2175 = vpack.c.b16 %v2167, %v2166
        %2184 = vst.msk [vmem:[#allocation3] sm:$0xff] %vm885, %v2168
        %2185 = vst.msk [vmem:[#allocation3 + $0x8] sm:$0xff] %vm885, %v2169
        %2186 = vst.msk [vmem:[#allocation3 + $0x10] sm:$0xff] %vm885, %v2170
        %2187 = vst.msk [vmem:[#allocation3 + $0x18] sm:$0xff] %vm885, %v2171
        %2188 = vst.msk [vmem:[#allocation3 + $0x20] sm:$0xff] %vm885, %v2172
        %2189 = vst.msk [vmem:[#allocation3 + $0x28] sm:$0xff] %vm885, %v2173
        %2190 = vst.msk [vmem:[#allocation3 + $0x30] sm:$0xff] %vm885, %v2174
        %2191 = vst.msk [vmem:[#allocation3 + $0x38] sm:$0xff] %vm885, %v2175
        %v2192 = vld [vmem:[%s2119] sm:$0xf]
        %v2193 = vld [vmem:[%s2119 + $0x4] sm:$0xf]
        %v2194 = vld [vmem:[%s2119 + $0x8] sm:$0x1]
        %v2195 = vld [vmem:[%s2119 + $0xc] sm:$0xf]
        %v2196 = vld [vmem:[%s2119 + $0x10] sm:$0xf]
        %v2197 = vld [vmem:[%s2119 + $0x14] sm:$0x1]
        %v2198 = vld [vmem:[%s2119 + $0x18] sm:$0xf]
        %v2199 = vld [vmem:[%s2119 + $0x1c] sm:$0xf]
        %v2200 = vld [vmem:[%s2119 + $0x20] sm:$0x1]
        %v2201 = vld [vmem:[%s2119 + $0x24] sm:$0xf]
        %v2202 = vld [vmem:[%s2119 + $0x28] sm:$0xf]
        %v2203 = vld [vmem:[%s2119 + $0x2c] sm:$0x1]
        %v2204 = vld [vmem:[%s2119 + $0x30] sm:$0xf]
        %v2205 = vld [vmem:[%s2119 + $0x34] sm:$0xf]
        %v2206 = vld [vmem:[%s2119 + $0x38] sm:$0x1]
        %v2207 = vld [vmem:[%s2119 + $0x3c] sm:$0xf]
        %v2208 = vld [vmem:[%s2119 + $0x40] sm:$0xf]
        %v2209 = vld [vmem:[%s2119 + $0x44] sm:$0x1]
        %v2210 = vld [vmem:[%s2119 + $0x48] sm:$0xf]
        %v2211 = vld [vmem:[%s2119 + $0x4c] sm:$0xf]
        %v2212 = vld [vmem:[%s2119 + $0x50] sm:$0x1]
        %v2213 = vld [vmem:[%s2119 + $0x54] sm:$0xf]
        %v2214 = vld [vmem:[%s2119 + $0x58] sm:$0xf]
        %v2215 = vld [vmem:[%s2119 + $0x5c] sm:$0x1]
        %v2217 = vshrl.u32 %v2192, 16
        %v2219 = vrot.slane %v2217, 4
        %v2220 = vshll.u32 %v2192, 16
        %v2222 = vrot.slane %v2220, 5
        %v2223 = vor.u32 %v2219, %v2222
        %v2224 = vrot.slane %v2223, 4
        %v2226 = vshll.u32 %v2193, 16
        %v2228 = vrot.slane %v2226, 5
        %v2229 = vsel %vm920, %v2224, %v2228
        %v2230 = vshrl.u32 %v2193, 16
        %v2232 = vrot.slane %v2230, 4
        %v2233 = vor.u32 %v2232, %v2228
        %v2234 = vrot.slane %v2233, 4
        %v2236 = vshll.u32 %v2194, 16
        %v2238 = vrot.slane %v2236, 5
        %v2239 = vsel %vm920, %v2234, %v2238
        %v2241 = vshrl.u32 %v2195, 16
        %v2243 = vrot.slane %v2241, 4
        %v2244 = vshll.u32 %v2195, 16
        %v2246 = vrot.slane %v2244, 5
        %v2247 = vor.u32 %v2243, %v2246
        %v2248 = vrot.slane %v2247, 4
        %v2250 = vshll.u32 %v2196, 16
        %v2252 = vrot.slane %v2250, 5
        %v2253 = vsel %vm920, %v2248, %v2252
        %v2254 = vshrl.u32 %v2196, 16
        %v2256 = vrot.slane %v2254, 4
        %v2257 = vor.u32 %v2256, %v2252
        %v2258 = vrot.slane %v2257, 4
        %v2260 = vshll.u32 %v2197, 16
        %v2262 = vrot.slane %v2260, 5
        %v2263 = vsel %vm920, %v2258, %v2262
        %v2265 = vshrl.u32 %v2198, 16
        %v2267 = vrot.slane %v2265, 4
        %v2268 = vshll.u32 %v2198, 16
        %v2270 = vrot.slane %v2268, 5
        %v2271 = vor.u32 %v2267, %v2270
        %v2272 = vrot.slane %v2271, 4
        %v2274 = vshll.u32 %v2199, 16
        %v2276 = vrot.slane %v2274, 5
        %v2277 = vsel %vm920, %v2272, %v2276
        %v2278 = vshrl.u32 %v2199, 16
        %v2280 = vrot.slane %v2278, 4
        %v2281 = vor.u32 %v2280, %v2276
        %v2282 = vrot.slane %v2281, 4
        %v2284 = vshll.u32 %v2200, 16
        %v2286 = vrot.slane %v2284, 5
        %v2287 = vsel %vm920, %v2282, %v2286
        %v2289 = vshrl.u32 %v2201, 16
        %v2291 = vrot.slane %v2289, 4
        %v2292 = vshll.u32 %v2201, 16
        %v2294 = vrot.slane %v2292, 5
        %v2295 = vor.u32 %v2291, %v2294
        %v2296 = vrot.slane %v2295, 4
        %v2298 = vshll.u32 %v2202, 16
        %v2300 = vrot.slane %v2298, 5
        %v2301 = vsel %vm920, %v2296, %v2300
        %v2302 = vshrl.u32 %v2202, 16
        %v2304 = vrot.slane %v2302, 4
        %v2305 = vor.u32 %v2304, %v2300
        %v2306 = vrot.slane %v2305, 4
        %v2308 = vshll.u32 %v2203, 16
        %v2310 = vrot.slane %v2308, 5
        %v2311 = vsel %vm920, %v2306, %v2310
        %v2313 = vshrl.u32 %v2204, 16
        %v2315 = vrot.slane %v2313, 4
        %v2316 = vshll.u32 %v2204, 16
        %v2318 = vrot.slane %v2316, 5
        %v2319 = vor.u32 %v2315, %v2318
        %v2320 = vrot.slane %v2319, 4
        %v2322 = vshll.u32 %v2205, 16
        %v2324 = vrot.slane %v2322, 5
        %v2325 = vsel %vm920, %v2320, %v2324
        %v2326 = vshrl.u32 %v2205, 16
        %v2328 = vrot.slane %v2326, 4
        %v2329 = vor.u32 %v2328, %v2324
        %v2330 = vrot.slane %v2329, 4
        %v2332 = vshll.u32 %v2206, 16
        %v2334 = vrot.slane %v2332, 5
        %v2335 = vsel %vm920, %v2330, %v2334
        %v2337 = vshrl.u32 %v2207, 16
        %v2339 = vrot.slane %v2337, 4
        %v2340 = vshll.u32 %v2207, 16
        %v2342 = vrot.slane %v2340, 5
        %v2343 = vor.u32 %v2339, %v2342
        %v2344 = vrot.slane %v2343, 4
        %v2346 = vshll.u32 %v2208, 16
        %v2348 = vrot.slane %v2346, 5
        %v2349 = vsel %vm920, %v2344, %v2348
        %v2350 = vshrl.u32 %v2208, 16
        %v2352 = vrot.slane %v2350, 4
        %v2353 = vor.u32 %v2352, %v2348
        %v2354 = vrot.slane %v2353, 4
        %v2356 = vshll.u32 %v2209, 16
        %v2358 = vrot.slane %v2356, 5
        %v2359 = vsel %vm920, %v2354, %v2358
        %v2361 = vshrl.u32 %v2210, 16
        %v2363 = vrot.slane %v2361, 4
        %v2364 = vshll.u32 %v2210, 16
        %v2366 = vrot.slane %v2364, 5
        %v2367 = vor.u32 %v2363, %v2366
        %v2368 = vrot.slane %v2367, 4
        %v2370 = vshll.u32 %v2211, 16
        %v2372 = vrot.slane %v2370, 5
        %v2373 = vsel %vm920, %v2368, %v2372
        %v2374 = vshrl.u32 %v2211, 16
        %v2376 = vrot.slane %v2374, 4
        %v2377 = vor.u32 %v2376, %v2372
        %v2378 = vrot.slane %v2377, 4
        %v2380 = vshll.u32 %v2212, 16
        %v2382 = vrot.slane %v2380, 5
        %v2383 = vsel %vm920, %v2378, %v2382
        %v2385 = vshrl.u32 %v2213, 16
        %v2387 = vrot.slane %v2385, 4
        %v2388 = vshll.u32 %v2213, 16
        %v2390 = vrot.slane %v2388, 5
        %v2391 = vor.u32 %v2387, %v2390
        %v2392 = vrot.slane %v2391, 4
        %v2394 = vshll.u32 %v2214, 16
        %v2396 = vrot.slane %v2394, 5
        %v2397 = vsel %vm920, %v2392, %v2396
        %v2398 = vshrl.u32 %v2214, 16
        %v2400 = vrot.slane %v2398, 4
        %v2401 = vor.u32 %v2400, %v2396
        %v2402 = vrot.slane %v2401, 4
        %v2404 = vshll.u32 %v2215, 16
        %v2406 = vrot.slane %v2404, 5
        %v2407 = vsel %vm920, %v2402, %v2406
        %v2408 = vunpack.c.l.b16 %v2229
        %v2409 = vunpack.c.l.b16 %v2239
        %v2410 = vunpack.c.l.b16 %v2253
        %v2411 = vunpack.c.l.b16 %v2263
        %v2412 = vunpack.c.l.b16 %v2277
        %v2413 = vunpack.c.l.b16 %v2287
        %v2414 = vunpack.c.l.b16 %v2301
        %v2415 = vunpack.c.l.b16 %v2311
        %v2416 = vunpack.c.l.b16 %v2325
        %v2417 = vunpack.c.l.b16 %v2335
        %v2418 = vunpack.c.l.b16 %v2349
        %v2419 = vunpack.c.l.b16 %v2359
        %v2420 = vunpack.c.l.b16 %v2373
        %v2421 = vunpack.c.l.b16 %v2383
        %v2422 = vunpack.c.l.b16 %v2397
        %v2423 = vunpack.c.l.b16 %v2407
        %v2424 = vpack.c.b16 %v2409, %v2408
        %v2425 = vpack.c.b16 %v2411, %v2410
        %v2426 = vpack.c.b16 %v2413, %v2412
        %v2427 = vpack.c.b16 %v2415, %v2414
        %v2428 = vpack.c.b16 %v2417, %v2416
        %v2429 = vpack.c.b16 %v2419, %v2418
        %v2430 = vpack.c.b16 %v2421, %v2420
        %v2431 = vpack.c.b16 %v2423, %v2422
        %2432 = vrot.lane.b32.xlu0 %v2424, 4
        %v2433 = vpop.permute.xlu0 %2432
        %2434 = vrot.lane.b32.xlu0 %v2425, 4
        %v2435 = vpop.permute.xlu0 %2434
        %2436 = vrot.lane.b32.xlu0 %v2426, 4
        %v2437 = vpop.permute.xlu0 %2436
        %2438 = vrot.lane.b32.xlu0 %v2427, 4
        %v2439 = vpop.permute.xlu0 %2438
        %2440 = vrot.lane.b32.xlu0 %v2428, 4
        %v2441 = vpop.permute.xlu0 %2440
        %2442 = vrot.lane.b32.xlu0 %v2429, 4
        %v2443 = vpop.permute.xlu0 %2442
        %2444 = vrot.lane.b32.xlu0 %v2430, 4
        %v2445 = vpop.permute.xlu0 %2444
        %2446 = vrot.lane.b32.xlu0 %v2431, 4
        %v2447 = vpop.permute.xlu0 %2446
        %2456 = vst.msk [vmem:[#allocation3] sm:$0xff] %vm1161, %v2433
        %2457 = vst.msk [vmem:[#allocation3 + $0x8] sm:$0xff] %vm1161, %v2435
        %2458 = vst.msk [vmem:[#allocation3 + $0x10] sm:$0xff] %vm1161, %v2437
        %2459 = vst.msk [vmem:[#allocation3 + $0x18] sm:$0xff] %vm1161, %v2439
        %2460 = vst.msk [vmem:[#allocation3 + $0x20] sm:$0xff] %vm1161, %v2441
        %2461 = vst.msk [vmem:[#allocation3 + $0x28] sm:$0xff] %vm1161, %v2443
        %2462 = vst.msk [vmem:[#allocation3 + $0x30] sm:$0xff] %vm1161, %v2445
        %2463 = vst.msk [vmem:[#allocation3 + $0x38] sm:$0xff] %vm1161, %v2447
        %v2464 = vld [vmem:[%s2119] sm:$0xe]
        %v2465 = vld [vmem:[%s2119 + $0x4] sm:$0xf]
        %v2466 = vld [vmem:[%s2119 + $0x8] sm:$0x1]
        %v2467 = vld [vmem:[%s2119 + $0xc] sm:$0xe]
        %v2468 = vld [vmem:[%s2119 + $0x10] sm:$0xf]
        %v2469 = vld [vmem:[%s2119 + $0x14] sm:$0x1]
        %v2470 = vld [vmem:[%s2119 + $0x18] sm:$0xe]
        %v2471 = vld [vmem:[%s2119 + $0x1c] sm:$0xf]
        %v2472 = vld [vmem:[%s2119 + $0x20] sm:$0x1]
        %v2473 = vld [vmem:[%s2119 + $0x24] sm:$0xe]
        %v2474 = vld [vmem:[%s2119 + $0x28] sm:$0xf]
        %v2475 = vld [vmem:[%s2119 + $0x2c] sm:$0x1]
        %v2476 = vld [vmem:[%s2119 + $0x30] sm:$0xe]
        %v2477 = vld [vmem:[%s2119 + $0x34] sm:$0xf]
        %v2478 = vld [vmem:[%s2119 + $0x38] sm:$0x1]
        %v2479 = vld [vmem:[%s2119 + $0x3c] sm:$0xe]
        %v2480 = vld [vmem:[%s2119 + $0x40] sm:$0xf]
        %v2481 = vld [vmem:[%s2119 + $0x44] sm:$0x1]
        %v2482 = vld [vmem:[%s2119 + $0x48] sm:$0xe]
        %v2483 = vld [vmem:[%s2119 + $0x4c] sm:$0xf]
        %v2484 = vld [vmem:[%s2119 + $0x50] sm:$0x1]
        %v2485 = vld [vmem:[%s2119 + $0x54] sm:$0xe]
        %v2486 = vld [vmem:[%s2119 + $0x58] sm:$0xf]
        %v2487 = vld [vmem:[%s2119 + $0x5c] sm:$0x1]
        %v2512 = vrot.slane %v2464, 5
        %v2513 = vrot.slane %v2512, 4
        %v2514 = vrot.slane %v2465, 5
        %v2515 = vsel %vm1220, %v2513, %v2514
        %v2516 = vrot.slane %v2514, 4
        %v2517 = vrot.slane %v2466, 5
        %v2518 = vsel %vm1220, %v2516, %v2517
        %v2519 = vrot.slane %v2467, 5
        %v2520 = vrot.slane %v2519, 4
        %v2521 = vrot.slane %v2468, 5
        %v2522 = vsel %vm1220, %v2520, %v2521
        %v2523 = vrot.slane %v2521, 4
        %v2524 = vrot.slane %v2469, 5
        %v2525 = vsel %vm1220, %v2523, %v2524
        %v2526 = vrot.slane %v2470, 5
        %v2527 = vrot.slane %v2526, 4
        %v2528 = vrot.slane %v2471, 5
        %v2529 = vsel %vm1220, %v2527, %v2528
        %v2530 = vrot.slane %v2528, 4
        %v2531 = vrot.slane %v2472, 5
        %v2532 = vsel %vm1220, %v2530, %v2531
        %v2533 = vrot.slane %v2473, 5
        %v2534 = vrot.slane %v2533, 4
        %v2535 = vrot.slane %v2474, 5
        %v2536 = vsel %vm1220, %v2534, %v2535
        %v2537 = vrot.slane %v2535, 4
        %v2538 = vrot.slane %v2475, 5
        %v2539 = vsel %vm1220, %v2537, %v2538
        %v2540 = vrot.slane %v2476, 5
        %v2541 = vrot.slane %v2540, 4
        %v2542 = vrot.slane %v2477, 5
        %v2543 = vsel %vm1220, %v2541, %v2542
        %v2544 = vrot.slane %v2542, 4
        %v2545 = vrot.slane %v2478, 5
        %v2546 = vsel %vm1220, %v2544, %v2545
        %v2547 = vrot.slane %v2479, 5
        %v2548 = vrot.slane %v2547, 4
        %v2549 = vrot.slane %v2480, 5
        %v2550 = vsel %vm1220, %v2548, %v2549
        %v2551 = vrot.slane %v2549, 4
        %v2552 = vrot.slane %v2481, 5
        %v2553 = vsel %vm1220, %v2551, %v2552
        %v2554 = vrot.slane %v2482, 5
        %v2555 = vrot.slane %v2554, 4
        %v2556 = vrot.slane %v2483, 5
        %v2557 = vsel %vm1220, %v2555, %v2556
        %v2558 = vrot.slane %v2556, 4
        %v2559 = vrot.slane %v2484, 5
        %v2560 = vsel %vm1220, %v2558, %v2559
        %v2561 = vrot.slane %v2485, 5
        %v2562 = vrot.slane %v2561, 4
        %v2563 = vrot.slane %v2486, 5
        %v2564 = vsel %vm1220, %v2562, %v2563
        %v2565 = vrot.slane %v2563, 4
        %v2566 = vrot.slane %v2487, 5
        %v2567 = vsel %vm1220, %v2565, %v2566
        %v2568 = vunpack.c.l.b16 %v2515
        %v2569 = vunpack.c.l.b16 %v2518
        %v2570 = vunpack.c.l.b16 %v2522
        %v2571 = vunpack.c.l.b16 %v2525
        %v2572 = vunpack.c.l.b16 %v2529
        %v2573 = vunpack.c.l.b16 %v2532
        %v2574 = vunpack.c.l.b16 %v2536
        %v2575 = vunpack.c.l.b16 %v2539
        %v2576 = vunpack.c.l.b16 %v2543
        %v2577 = vunpack.c.l.b16 %v2546
        %v2578 = vunpack.c.l.b16 %v2550
        %v2579 = vunpack.c.l.b16 %v2553
        %v2580 = vunpack.c.l.b16 %v2557
        %v2581 = vunpack.c.l.b16 %v2560
        %v2582 = vunpack.c.l.b16 %v2564
        %v2583 = vunpack.c.l.b16 %v2567
        %v2584 = vpack.c.b16 %v2569, %v2568
        %v2585 = vpack.c.b16 %v2571, %v2570
        %v2586 = vpack.c.b16 %v2573, %v2572
        %v2587 = vpack.c.b16 %v2575, %v2574
        %v2588 = vpack.c.b16 %v2577, %v2576
        %v2589 = vpack.c.b16 %v2579, %v2578
        %v2590 = vpack.c.b16 %v2581, %v2580
        %v2591 = vpack.c.b16 %v2583, %v2582
        %2592 = vrot.lane.b32.xlu0 %v2584, 8
        %v2593 = vpop.permute.xlu0 %2592
        %2594 = vrot.lane.b32.xlu0 %v2585, 8
        %v2595 = vpop.permute.xlu0 %2594
        %2596 = vrot.lane.b32.xlu0 %v2586, 8
        %v2597 = vpop.permute.xlu0 %2596
        %2598 = vrot.lane.b32.xlu0 %v2587, 8
        %v2599 = vpop.permute.xlu0 %2598
        %2600 = vrot.lane.b32.xlu0 %v2588, 8
        %v2601 = vpop.permute.xlu0 %2600
        %2602 = vrot.lane.b32.xlu0 %v2589, 8
        %v2603 = vpop.permute.xlu0 %2602
        %2604 = vrot.lane.b32.xlu0 %v2590, 8
        %v2605 = vpop.permute.xlu0 %2604
        %2606 = vrot.lane.b32.xlu0 %v2591, 8
        %v2607 = vpop.permute.xlu0 %2606
        %2616 = vst.msk [vmem:[#allocation3] sm:$0xff] %vm1325, %v2593
        %2617 = vst.msk [vmem:[#allocation3 + $0x8] sm:$0xff] %vm1325, %v2595
        %2618 = vst.msk [vmem:[#allocation3 + $0x10] sm:$0xff] %vm1325, %v2597
        %2619 = vst.msk [vmem:[#allocation3 + $0x18] sm:$0xff] %vm1325, %v2599
        %2620 = vst.msk [vmem:[#allocation3 + $0x20] sm:$0xff] %vm1325, %v2601
        %2621 = vst.msk [vmem:[#allocation3 + $0x28] sm:$0xff] %vm1325, %v2603
        %2622 = vst.msk [vmem:[#allocation3 + $0x30] sm:$0xff] %vm1325, %v2605
        %2623 = vst.msk [vmem:[#allocation3 + $0x38] sm:$0xff] %vm1325, %v2607
        %v2624 = vld [vmem:[#allocation3] sm:$0xff]
        %v2625 = vld [vmem:[#allocation3 + $0x8] sm:$0xff]
        %v2626 = vld [vmem:[#allocation3 + $0x10] sm:$0xff]
        %v2627 = vld [vmem:[#allocation3 + $0x18] sm:$0xff]
        %v2628 = vld [vmem:[#allocation3 + $0x20] sm:$0xff]
        %v2629 = vld [vmem:[#allocation3 + $0x28] sm:$0xff]
        %v2630 = vld [vmem:[#allocation3 + $0x30] sm:$0xff]
        %v2631 = vld [vmem:[#allocation3 + $0x38] sm:$0xff]
        %s2632 = scalar_lea.vmem [#allocation10], 16
        %v2633 = vld [vmem:[%s2632] sm:$0xf]
        %v2634 = vld [vmem:[%s2632 + $0x4] sm:$0x3]
        %v2637 = vunpack.c.l.b16 %v2633
        %v2638 = vunpack.c.l.b16 %v2634
        %v2639 = vpack.c.b16 %v2638, %v2637
        %v2641 = vsel %vm1864, %v2624, 0
        %v2644 = vsel %vm1864, %v2625, 0
        %v2647 = vsel %vm1864, %v2626, 0
        %v2650 = vsel %vm1864, %v2627, 0
        %v2653 = vsel %vm1864, %v2628, 0
        %v2656 = vsel %vm1864, %v2629, 0
        %v2659 = vsel %vm1864, %v2630, 0
        %v2662 = vsel %vm1864, %v2631, 0
        %v2665 = vsel %vm1889, %v2639, 0
        %2667 = vmatprep.subr.bf16.mxu0 0
        %2668 = vmatpush1.bf16.msra.mxu0 %v2665
        %2669 = vmatprep.subr.bf16.mxu0 0
        %2670 = vmatpush1.bf16.msra.mxu0 0
        %2671 = vmatprep.subr.bf16.mxu0 0
        %2672 = vmatpush1.bf16.msra.mxu0 0
        %2673 = vmatprep.subr.bf16.mxu0 0
        %2674 = vmatpush1.bf16.msra.mxu0 0
        %2675 = vmatprep.subr.bf16.mxu0 0
        %2676 = vmatpush1.bf16.msra.mxu0 0
        %2677 = vmatprep.subr.bf16.mxu0 0
        %2678 = vmatpush1.bf16.msra.mxu0 0
        %2679 = vmatprep.subr.bf16.mxu0 0
        %2680 = vmatpush1.bf16.msra.mxu0 0
        %2681 = vmatprep.subr.bf16.mxu0 0
        %2682 = vmatpush1.bf16.msra.mxu0 0
        %2683 = vmatprep.subr.bf16.mxu0 0
        %2684 = vmatpush1.bf16.msra.mxu0 0
        %2685 = vmatprep.subr.bf16.mxu0 0
        %2686 = vmatpush1.bf16.msra.mxu0 0
        %2687 = vmatprep.subr.bf16.mxu0 0
        %2688 = vmatpush1.bf16.msra.mxu0 0
        %2689 = vmatprep.subr.bf16.mxu0 0
        %2690 = vmatpush1.bf16.msra.mxu0 0
        %2691 = vmatprep.subr.bf16.mxu0 0
        %2692 = vmatpush1.bf16.msra.mxu0 0
        %2693 = vmatprep.subr.bf16.mxu0 0
        %2694 = vmatpush1.bf16.msra.mxu0 0
        %2695 = vmatprep.subr.bf16.mxu0 0
        %2696 = vmatpush1.bf16.msra.mxu0 0
        %2697 = vmatprep.subr.bf16.mxu0 0
        %2698 = vmatpush1.bf16.msra.mxu0 0
        %2699 = vmatprep.mubr.bf16.mxu0 0
        %2700 = vmatmul.mubr.bf16.gmra.mrb[0].mxu0 %v2641
        %v2701 = vpop.f32.mrb[0].mxu0
        %v2702 = vadd.f32 0.0, %v2701
        %v2703 = vpop.f32.mrb[0].mxu0
        %v2704 = vpop.f32.mrb[0].mxu0
        %v2705 = vadd.f32 0.0, %v2704
        %v2706 = vpop.f32.mrb[0].mxu0
        %2707 = vmatprep.mubr.bf16.mxu0 0
        %2708 = vmatmul.mubr.bf16.gmra.mrb[0].mxu0 %v2644
        %v2709 = vpop.f32.mrb[0].mxu0
        %v2710 = vadd.f32 0.0, %v2709
        %v2711 = vpop.f32.mrb[0].mxu0
        %v2712 = vpop.f32.mrb[0].mxu0
        %v2713 = vadd.f32 0.0, %v2712
        %v2714 = vpop.f32.mrb[0].mxu0
        %2715 = vmatprep.mubr.bf16.mxu0 0
        %2716 = vmatmul.mubr.bf16.gmra.mrb[0].mxu0 %v2647
        %v2717 = vpop.f32.mrb[0].mxu0
        %v2718 = vadd.f32 0.0, %v2717
        %v2719 = vpop.f32.mrb[0].mxu0
        %v2720 = vpop.f32.mrb[0].mxu0
        %v2721 = vadd.f32 0.0, %v2720
        %v2722 = vpop.f32.mrb[0].mxu0
        %2723 = vmatprep.mubr.bf16.mxu0 0
        %2724 = vmatmul.mubr.bf16.gmra.mrb[0].mxu0 %v2650
        %v2725 = vpop.f32.mrb[0].mxu0
        %v2726 = vadd.f32 0.0, %v2725
        %v2727 = vpop.f32.mrb[0].mxu0
        %v2728 = vpop.f32.mrb[0].mxu0
        %v2729 = vadd.f32 0.0, %v2728
        %v2730 = vpop.f32.mrb[0].mxu0
        %2731 = vmatprep.mubr.bf16.mxu0 0
        %2732 = vmatmul.mubr.bf16.gmra.mrb[0].mxu0 %v2653
        %v2733 = vpop.f32.mrb[0].mxu0
        %v2734 = vadd.f32 0.0, %v2733
        %v2735 = vpop.f32.mrb[0].mxu0
        %v2736 = vpop.f32.mrb[0].mxu0
        %v2737 = vadd.f32 0.0, %v2736
        %v2738 = vpop.f32.mrb[0].mxu0
        %2739 = vmatprep.mubr.bf16.mxu0 0
        %2740 = vmatmul.mubr.bf16.gmra.mrb[0].mxu0 %v2656
        %v2741 = vpop.f32.mrb[0].mxu0
        %v2742 = vadd.f32 0.0, %v2741
        %v2743 = vpop.f32.mrb[0].mxu0
        %v2744 = vpop.f32.mrb[0].mxu0
        %v2745 = vadd.f32 0.0, %v2744
        %v2746 = vpop.f32.mrb[0].mxu0
        %2747 = vmatprep.mubr.bf16.mxu0 0
        %2748 = vmatmul.mubr.bf16.gmra.mrb[0].mxu0 %v2659
        %v2749 = vpop.f32.mrb[0].mxu0
        %v2750 = vadd.f32 0.0, %v2749
        %v2751 = vpop.f32.mrb[0].mxu0
        %v2752 = vpop.f32.mrb[0].mxu0
        %v2753 = vadd.f32 0.0, %v2752
        %v2754 = vpop.f32.mrb[0].mxu0
        %2755 = vmatprep.mubr.bf16.mxu0 0
        %2756 = vmatmul.mubr.bf16.gmra.mrb[0].mxu0 %v2662
        %v2757 = vpop.f32.mrb[0].mxu0
        %v2758 = vadd.f32 0.0, %v2757
        %v2759 = vpop.f32.mrb[0].mxu0
        %v2760 = vpop.f32.mrb[0].mxu0
        %v2761 = vadd.f32 0.0, %v2760
        %v2762 = vpop.f32.mrb[0].mxu0
        %2763 = vdwg.mxu0
        %v2764 = vadd.f32 %v2057, %v2702
        %v2765 = vadd.f32 %v2060, %v2705
        %v2766 = vadd.f32 %v2065, %v2710
        %v2767 = vadd.f32 %v2068, %v2713
        %v2768 = vadd.f32 %v2073, %v2718
        %v2769 = vadd.f32 %v2076, %v2721
        %v2770 = vadd.f32 %v2081, %v2726
        %v2771 = vadd.f32 %v2084, %v2729
        %v2772 = vadd.f32 %v2089, %v2734
        %v2773 = vadd.f32 %v2092, %v2737
        %v2774 = vadd.f32 %v2097, %v2742
        %v2775 = vadd.f32 %v2100, %v2745
        %v2776 = vadd.f32 %v2105, %v2750
        %v2777 = vadd.f32 %v2108, %v2753
        %v2778 = vadd.f32 %v2113, %v2758
        %v2779 = vadd.f32 %v2116, %v2761
        %v2780 = vpack.c.bf16 %v2765, %v2764
        %v2781 = vpack.c.bf16 %v2767, %v2766
        %v2782 = vpack.c.bf16 %v2769, %v2768
        %v2783 = vpack.c.bf16 %v2771, %v2770
        %v2784 = vpack.c.bf16 %v2773, %v2772
        %v2785 = vpack.c.bf16 %v2775, %v2774
        %v2786 = vpack.c.bf16 %v2777, %v2776
        %v2787 = vpack.c.bf16 %v2779, %v2778
        %v2796 = vunpack.c.l.b16 %v2780
        %v2797 = vunpack.c.h.b16 %v2780
        %v2798 = vunpack.c.l.b16 %v2781
        %v2799 = vunpack.c.h.b16 %v2781
        %v2800 = vunpack.c.l.b16 %v2782
        %v2801 = vunpack.c.h.b16 %v2782
        %v2802 = vunpack.c.l.b16 %v2783
        %v2803 = vunpack.c.h.b16 %v2783
        %v2804 = vunpack.c.l.b16 %v2784
        %v2805 = vunpack.c.h.b16 %v2784
        %v2806 = vunpack.c.l.b16 %v2785
        %v2807 = vunpack.c.h.b16 %v2785
        %v2808 = vunpack.c.l.b16 %v2786
        %v2809 = vunpack.c.h.b16 %v2786
        %v2810 = vunpack.c.l.b16 %v2787
        %v2811 = vunpack.c.h.b16 %v2787
        %v2812 = vpack.c.b16 %v2796, %v2796
        %v2813 = vpack.c.b16 %v2797, %v2797
        %v2814 = vpack.c.b16 %v2798, %v2798
        %v2815 = vpack.c.b16 %v2799, %v2799
        %v2816 = vpack.c.b16 %v2800, %v2800
        %v2817 = vpack.c.b16 %v2801, %v2801
        %v2818 = vpack.c.b16 %v2802, %v2802
        %v2819 = vpack.c.b16 %v2803, %v2803
        %v2820 = vpack.c.b16 %v2804, %v2804
        %v2821 = vpack.c.b16 %v2805, %v2805
        %v2822 = vpack.c.b16 %v2806, %v2806
        %v2823 = vpack.c.b16 %v2807, %v2807
        %v2824 = vpack.c.b16 %v2808, %v2808
        %v2825 = vpack.c.b16 %v2809, %v2809
        %v2826 = vpack.c.b16 %v2810, %v2810
        %v2827 = vpack.c.b16 %v2811, %v2811
        %vm2844 = vcmask 60416
        %2845 = vst.msk [vmem:[%s420] sm:$0xf] %vm2844, %v2812
        %2846 = vst.msk [vmem:[%s420 + $0x4] sm:$0xf] %vm2844, %v2813
        %2847 = vst.msk [vmem:[%s420 + $0x8] sm:$0xf] %vm2844, %v2814
        %2848 = vst.msk [vmem:[%s420 + $0xc] sm:$0xf] %vm2844, %v2815
        %2849 = vst.msk [vmem:[%s420 + $0x10] sm:$0xf] %vm2844, %v2816
        %2850 = vst.msk [vmem:[%s420 + $0x14] sm:$0xf] %vm2844, %v2817
        %2851 = vst.msk [vmem:[%s420 + $0x18] sm:$0xf] %vm2844, %v2818
        %2852 = vst.msk [vmem:[%s420 + $0x1c] sm:$0xf] %vm2844, %v2819
        %2853 = vst.msk [vmem:[%s420 + $0x20] sm:$0xf] %vm2844, %v2820
        %2854 = vst.msk [vmem:[%s420 + $0x24] sm:$0xf] %vm2844, %v2821
        %2855 = vst.msk [vmem:[%s420 + $0x28] sm:$0xf] %vm2844, %v2822
        %2856 = vst.msk [vmem:[%s420 + $0x2c] sm:$0xf] %vm2844, %v2823
        %2857 = vst.msk [vmem:[%s420 + $0x30] sm:$0xf] %vm2844, %v2824
        %2858 = vst.msk [vmem:[%s420 + $0x34] sm:$0xf] %vm2844, %v2825
        %2859 = vst.msk [vmem:[%s420 + $0x38] sm:$0xf] %vm2844, %v2826
        %2860 = vst.msk [vmem:[%s420 + $0x3c] sm:$0xf] %vm2844, %v2827
        %vm2861 = vcmask 64512
        %v2862 = vsel %vm2861, %v2764, 0.0
        %v2863 = vsel %vm2861, %v2765, 0.0
        %v2864 = vadd.f32 %v2862, %v2863
        %v2865 = vsel %vm2861, %v2766, 0.0
        %v2866 = vadd.f32 %v2864, %v2865
        %v2867 = vsel %vm2861, %v2767, 0.0
        %v2868 = vadd.f32 %v2866, %v2867
        %v2869 = vsel %vm2861, %v2768, 0.0
        %v2870 = vadd.f32 %v2868, %v2869
        %v2871 = vsel %vm2861, %v2769, 0.0
        %v2872 = vadd.f32 %v2870, %v2871
        %v2873 = vsel %vm2861, %v2770, 0.0
        %v2874 = vadd.f32 %v2872, %v2873
        %v2875 = vsel %vm2861, %v2771, 0.0
        %v2876 = vadd.f32 %v2874, %v2875
        %v2877 = vsel %vm2861, %v2772, 0.0
        %v2878 = vadd.f32 %v2876, %v2877
        %v2879 = vsel %vm2861, %v2773, 0.0
        %v2880 = vadd.f32 %v2878, %v2879
        %v2881 = vsel %vm2861, %v2774, 0.0
        %v2882 = vadd.f32 %v2880, %v2881
        %v2883 = vsel %vm2861, %v2775, 0.0
        %v2884 = vadd.f32 %v2882, %v2883
        %v2885 = vsel %vm2861, %v2776, 0.0
        %v2886 = vadd.f32 %v2884, %v2885
        %v2887 = vsel %vm2861, %v2777, 0.0
        %v2888 = vadd.f32 %v2886, %v2887
        %v2889 = vsel %vm2861, %v2778, 0.0
        %v2890 = vadd.f32 %v2888, %v2889
        %v2891 = vsel %vm2861, %v2779, 0.0
        %v2892 = vadd.f32 %v2890, %v2891
        %v2893 = vrot.slane %v2892, 4
        %v2894 = vadd.f32 %v2892, %v2893
        %v2895 = vrot.slane %v2894, 2
        %v2896 = vadd.f32 %v2894, %v2895
        %v2897 = vrot.slane %v2896, 1
        %v2898 = vadd.f32 %v2896, %v2897
        %vm2899 = vcmask 57344
        %2900 = vst.msk [vmem:[%s426] sm:$0x1] %vm2899, %v2898
        %v2901 = vmul.f32 %v2764, %v2764
        %v2902 = vmul.f32 %v2765, %v2765
        %v2903 = vmul.f32 %v2766, %v2766
        %v2904 = vmul.f32 %v2767, %v2767
        %v2905 = vmul.f32 %v2768, %v2768
        %v2906 = vmul.f32 %v2769, %v2769
        %v2907 = vmul.f32 %v2770, %v2770
        %v2908 = vmul.f32 %v2771, %v2771
        %v2909 = vmul.f32 %v2772, %v2772
        %v2910 = vmul.f32 %v2773, %v2773
        %v2911 = vmul.f32 %v2774, %v2774
        %v2912 = vmul.f32 %v2775, %v2775
        %v2913 = vmul.f32 %v2776, %v2776
        %v2914 = vmul.f32 %v2777, %v2777
        %v2915 = vmul.f32 %v2778, %v2778
        %v2916 = vmul.f32 %v2779, %v2779
        %v2917 = vsel %vm2861, %v2901, 0.0
        %v2918 = vsel %vm2861, %v2902, 0.0
        %v2919 = vadd.f32 %v2917, %v2918
        %v2920 = vsel %vm2861, %v2903, 0.0
        %v2921 = vadd.f32 %v2919, %v2920
        %v2922 = vsel %vm2861, %v2904, 0.0
        %v2923 = vadd.f32 %v2921, %v2922
        %v2924 = vsel %vm2861, %v2905, 0.0
        %v2925 = vadd.f32 %v2923, %v2924
        %v2926 = vsel %vm2861, %v2906, 0.0
        %v2927 = vadd.f32 %v2925, %v2926
        %v2928 = vsel %vm2861, %v2907, 0.0
        %v2929 = vadd.f32 %v2927, %v2928
        %v2930 = vsel %vm2861, %v2908, 0.0
        %v2931 = vadd.f32 %v2929, %v2930
        %v2932 = vsel %vm2861, %v2909, 0.0
        %v2933 = vadd.f32 %v2931, %v2932
        %v2934 = vsel %vm2861, %v2910, 0.0
        %v2935 = vadd.f32 %v2933, %v2934
        %v2936 = vsel %vm2861, %v2911, 0.0
        %v2937 = vadd.f32 %v2935, %v2936
        %v2938 = vsel %vm2861, %v2912, 0.0
        %v2939 = vadd.f32 %v2937, %v2938
        %v2940 = vsel %vm2861, %v2913, 0.0
        %v2941 = vadd.f32 %v2939, %v2940
        %v2942 = vsel %vm2861, %v2914, 0.0
        %v2943 = vadd.f32 %v2941, %v2942
        %v2944 = vsel %vm2861, %v2915, 0.0
        %v2945 = vadd.f32 %v2943, %v2944
        %v2946 = vsel %vm2861, %v2916, 0.0
        %v2947 = vadd.f32 %v2945, %v2946
        %v2948 = vrot.slane %v2947, 4
        %v2949 = vadd.f32 %v2947, %v2948
        %v2950 = vrot.slane %v2949, 2
        %v2951 = vadd.f32 %v2949, %v2950
        %v2952 = vrot.slane %v2951, 1
        %v2953 = vadd.f32 %v2951, %v2952
        %2954 = vst.msk [vmem:[%s432] sm:$0x1] %vm2899, %v2953
        %s2955 = sand.u32 %s174, 1
        %s2956 = scalar_lea.sflag [#allocation6], %s2955
        %s2957 = sand.u32 %s174, 1
        %s2958 = smul.addr %s2957, 64
        %s2959 = scalar_lea.vmem [#allocation12], %s2958
        %s2960 = sand.u32 %s31, 1
        %s2961 = scalar_lea.sflag [#allocation14], %s2960
        %s2962 = sand.u32 %s202, 1
        %s2963 = scalar_lea.vmem [#allocation13], %s2962
        %s2964 = sand.u32 %s31, 1
        %s2965 = scalar_lea.sflag [#allocation14], %s2964
        %s2966 = sand.u32 %s230, 1
        %s2967 = scalar_lea.vmem [#allocation15], %s2966
        // Predicated region
        $region61: #{_lambda_.3} parent=35 // pred_check
          %p2968 = pneg %p184
        $region62: #{_lambda_.3} parent=35 // pred_check_branch
          %2970 = sbr.rel (%p2968) target = $region64
        $region63: #{_lambda_.3} parent=35 // pred_region
          %s2971 = smul.u32 8, %s36
          %s2973 = ssub.s32 1024, 1024
          %2974 = vsyncadd %s2956, %s2973
          %s2975 = smul.addr %s2971, 2
          %s2976 = smul.addr %s35, 32
          %s2977 = sadd.s32 %s2975, %s2976
          %s2978 = smul.addr %s2977, 64
          %s2979 = scalar_lea.hbm %s4, %s2978
          %s2980 = sshll.u32 %s2959, 4
          %s2981 = int_to_ptr.vmem [resolvable:$true] %s2980
          %2986 = dma.vmem_to_hbm [thread:$0]  %s2981, 1024, %s2979, %s2956, 64, 64, 4
        $region64: #{_lambda_.3} parent=35 // pred_fallthru
          _
        // Predicated region
        $region65: #{_lambda_.3} parent=35 // pred_check
          %p2987 = pneg %p212
        $region66: #{_lambda_.3} parent=35 // pred_check_branch
          %2989 = sbr.rel (%p2987) target = $region68
        $region67: #{_lambda_.3} parent=35 // pred_region
          %s2991 = ssub.s32 16, 16
          %2992 = vsyncadd %s2961, %s2991
          %s2993 = smul.addr %s35, 2
          %s2994 = sadd.s32 %s36, %s2993
          %s2995 = smul.addr %s2994, 16
          %s2996 = scalar_lea.hbm %s5, %s2995
          %s2998 = sshll.u32 %s2963, 4
          %s2999 = int_to_ptr.vmem [resolvable:$true] %s2998
          %3001 = dma.vmem_to_hbm [thread:$0]  %s2999, 16, %s2996, %s2961
        $region68: #{_lambda_.3} parent=35 // pred_fallthru
          _
        // Predicated region
        $region69: #{_lambda_.3} parent=35 // pred_check
          %p3002 = pneg %p240
        $region70: #{_lambda_.3} parent=35 // pred_check_branch
          %3004 = sbr.rel (%p3002) target = $region72
        $region71: #{_lambda_.3} parent=35 // pred_region
          %s3006 = ssub.s32 16, 16
          %3007 = vsyncadd %s2965, %s3006
          %s3008 = smul.addr %s35, 2
          %s3009 = sadd.s32 %s36, %s3008
          %s3010 = smul.addr %s3009, 16
          %s3011 = scalar_lea.hbm %s6, %s3010
          %s3013 = sshll.u32 %s2967, 4
          %s3014 = int_to_ptr.vmem [resolvable:$true] %s3013
          %3016 = dma.vmem_to_hbm [thread:$0]  %s3014, 16, %s3011, %s2965
        $region72: #{_lambda_.3} parent=35 // pred_fallthru
          _
      $region36: #{_lambda_.3} parent=5 // pred_fallthru
        _
      %p3017 = scmp.le.s32.totalorder 2, %s26
      // Predicated region
      $region73: #{_lambda_.3} parent=5 // pred_check
        %p3018 = pneg %p3017
      $region74: #{_lambda_.3} parent=5 // pred_check_branch
        %3020 = sbr.rel (%p3018) target = $region76
      $region75: #{_lambda_.3} parent=5 // pred_region
        %s3021 = ssub.s32 %s26, 2
        // Predicated region
        $region77: #{_lambda_.3} parent=75 // pred_check
          %p3022 = pneg %p190
        $region78: #{_lambda_.3} parent=75 // pred_check_branch
          %3024 = sbr.rel (%p3022) target = $region80
        $region79: #{_lambda_.3} parent=75 // pred_region
          %s3025 = sand.u32 %s175, 1
          %s3026 = scalar_lea.sflag [#allocation6], %s3025
          %s3027 = sand.u32 %s175, 1
          %s3028 = smul.addr %s3027, 64
          %s3029 = scalar_lea.vmem [#allocation12], %s3028
          %3030 = dma.done %s3026, 1024
        $region80: #{_lambda_.3} parent=75 // pred_fallthru
          _
        // Predicated region
        $region81: #{_lambda_.3} parent=75 // pred_check
          %p3031 = pneg %p218
        $region82: #{_lambda_.3} parent=75 // pred_check_branch
          %3033 = sbr.rel (%p3031) target = $region84
        $region83: #{_lambda_.3} parent=75 // pred_region
          %s3034 = sand.u32 %s32, 1
          %s3035 = scalar_lea.sflag [#allocation14], %s3034
          %s3036 = sand.u32 %s203, 1
          %s3037 = scalar_lea.vmem [#allocation13], %s3036
          %3038 = dma.done %s3035, 16
        $region84: #{_lambda_.3} parent=75 // pred_fallthru
          _
        // Predicated region
        $region85: #{_lambda_.3} parent=75 // pred_check
          %p3039 = pneg %p246
        $region86: #{_lambda_.3} parent=75 // pred_check_branch
          %3041 = sbr.rel (%p3039) target = $region88
        $region87: #{_lambda_.3} parent=75 // pred_region
          %s3042 = sand.u32 %s32, 1
          %s3043 = scalar_lea.sflag [#allocation14], %s3042
          %s3044 = sand.u32 %s231, 1
          %s3045 = scalar_lea.vmem [#allocation15], %s3044
          %3046 = dma.done %s3043, 16
        $region88: #{_lambda_.3} parent=75 // pred_fallthru
          _
      $region76: #{_lambda_.3} parent=5 // pred_fallthru
        _
    $region6: #{_lambda_.3} parent=1 // loop_footer
      %s30 = sadd.s32 1, %s26
    $region7: #{_lambda_.3} parent=1 // loop_footer_branch
      %25 = sbr.rel target = $region3
    $region8: #{_lambda_.3} parent=1 // loop_exit
      _
    %3047 = vsyncpa [#allocation5], 1
    %s3048 = scalar_lea.sflag [#allocation5], 1
    %3049 = vsyncpa %s3048, 1
    %3050 = vsyncpa [#allocation8], 1
    %s3051 = scalar_lea.sflag [#allocation8], 1
    %3052 = vsyncpa %s3051, 1
    %3053 = vsyncpa [#allocation11], 1
    %3054 = vsyncpa [#allocation6], 1
    %s3055 = scalar_lea.sflag [#allocation6], 1
    %3056 = vsyncpa %s3055, 1
    %3057 = vsyncpa [#allocation14], 1
    %s3058 = scalar_lea.sflag [#allocation14], 1
    %3059 = vsyncpa %s3058, 1

// kernel: _lambda_.4
$region0: #{_lambda_.4}
  #allocation0 [shape = 'u32[]', space=smem, size = 0x4, offset = 0x4, fixed_abs, tag = 'smem constant byte address 0x4 - core index']
  #allocation1 [shape = 'u32[144,128]{1,0:T(1,128)}', space=vmem, size = 0x12000, scoped, tag = 'internal scratch']
  #allocation2 [shape = 'bf16[10,18,8]{2,1,0:T(8,128)(2,1)}', space=vmem, size = 0xf000, scoped, tag = 'scratch operand']
  #allocation3 [shape = 'bf16[128,24]{1,0:T(16,128)(2,1)}', space=vmem, size = 0x8000, scoped, tag = 'scratch operand']
  %s0 = inlined_call_operand.hbm [shape: bf16[2,16,16,8], index: 0, kind: input, shape index: {}, may-alias: {0,1,2}]
  %s1 = inlined_call_operand.hbm [shape: bf16[2,16,16,8], index: 1, kind: input, shape index: {}, may-alias: {0,1,2}]
  %s2 = inlined_call_operand.hbm [shape: bf16[2,16,16,8], index: 2, kind: input, shape index: {}, may-alias: {0,1,2}]
  %s3 = inlined_call_operand.hbm [shape: bf16[3,24,8], index: 3, kind: input, shape index: {}]
  %s4 = inlined_call_operand.hbm [shape: f32[1,8], index: 4, kind: input, shape index: {}]
  %s5 = inlined_call_operand.hbm [shape: f32[1,8], index: 5, kind: input, shape index: {}]
  %s6 = inlined_call_operand.hbm [shape: bf16[2,16,16,8], index: 6, kind: output, shape index: {0}]
  %s7 = inlined_call_operand.hbm [shape: f32[2,2,1,8], index: 7, kind: output, shape index: {1}]
  %s8 = inlined_call_operand.hbm [shape: f32[2,2,1,8], index: 8, kind: output, shape index: {2}]
  %9 = xla_tuple %s6, %s7, %s8
  %s10 = sld [smem:[#allocation0]]
  $region105: #{_lambda_.4} parent=0
    _
  %s12 = ssub.s32 1, %s10
  %s13 = scalar_select 0, %s12, %s10
  $region1: #{_lambda_.4} parent=0
    #allocation4 [shape = 'u8[8192]{0}', space=vmem, size = 0x2000, scoped, tag = 'input window, operand 0']
    #allocation5 [shape = 's32[2]{0}', space=sflag, size = 0x8, scoped, tag = 'scoped memory for _lambda_.4']
    #allocation6 [shape = 's32[2]{0}', space=sflag, size = 0x8, scoped, tag = 'scoped memory for _lambda_.4']
    #allocation7 [shape = 'u8[65536]{0}', space=vmem, size = 0x10000, scoped, tag = 'input window, operand 1']
    #allocation8 [shape = 's32[2]{0}', space=sflag, size = 0x8, scoped, tag = 'scoped memory for _lambda_.4']
    #allocation9 [shape = 'u8[8192]{0}', space=vmem, size = 0x2000, scoped, tag = 'input window, operand 2']
    #allocation10 [shape = 'u8[18432]{0}', space=vmem, size = 0x4800, scoped, tag = 'input window, operand 3, single buffered']
    #allocation11 [shape = 's32[1]{0}', space=sflag, size = 0x4, scoped, tag = 'scoped memory for _lambda_.4']
    #allocation12 [shape = 'u8[512]{0}', space=vmem, size = 0x400, scoped, tag = 'input window, operand 4, single buffered']
    #allocation13 [shape = 'u8[512]{0}', space=vmem, size = 0x400, scoped, tag = 'input window, operand 5, single buffered']
    #allocation14 [shape = 's32[1]{0}', space=sflag, size = 0x4, scoped, tag = 'scoped memory for _lambda_.4']
    #allocation15 [shape = 'u8[65536]{0}', space=vmem, size = 0x10000, scoped, tag = 'output window, operand 0']
    #allocation16 [shape = 'u8[1024]{0}', space=vmem, size = 0x400, scoped, tag = 'output window, operand 1']
    #allocation17 [shape = 's32[2]{0}', space=sflag, size = 0x8, scoped, tag = 'scoped memory for _lambda_.4']
    #allocation18 [shape = 'u8[1024]{0}', space=vmem, size = 0x400, scoped, tag = 'output window, operand 2']
    %14 = vsyncpa [#allocation5], 0
    %s15 = scalar_lea.sflag [#allocation5], 1
    %16 = vsyncpa %s15, 0
    %17 = vsyncpa [#allocation8], 0
    %s18 = scalar_lea.sflag [#allocation8], 1
    %19 = vsyncpa %s18, 0
    %20 = vsyncpa [#allocation11], 0
    %21 = vsyncpa [#allocation14], 0
    %22 = vsyncpa [#allocation6], 0
    %s23 = scalar_lea.sflag [#allocation6], 1
    %24 = vsyncpa %s23, 0
    %25 = vsyncpa [#allocation17], 0
    %s26 = scalar_lea.sflag [#allocation17], 1
    %27 = vsyncpa %s26, 0
    loop: start=0, step=1, limit=6
    $region2: #{_lambda_.4} parent=1 // loop_pre_header
      _
    $region3: #{_lambda_.4} parent=1 // loop_header
      %s29 = sphi 0, %s33
      %p30 = scmp.ge.s32.totalorder %s29, 6
      %s36 = sphi 0, %s48
      %s37 = sphi 0, %s44
      %s38 = sphi 0, %s36
      %s39 = sphi 0, %s37
      %s40 = sphi 0, %s38
      %s41 = sphi 0, %s39
      %s61 = sphi 0, %s63
      %s64 = sphi 0, %s61
      %s65 = sphi 0, %s64
      %s81 = sphi 0, %s65
      %s89 = sphi 0, %s91
      %s92 = sphi 0, %s89
      %s93 = sphi 0, %s92
      %s109 = sphi 0, %s93
      %s125 = sphi 0, %s127
      %s128 = sphi 0, %s125
      %s129 = sphi 0, %s128
      %s145 = sphi 0, %s129
      %s149 = sphi 0, %s149
      %s151 = sphi 0, %s149
      %s152 = sphi 0, %s151
      %s166 = sphi 0, %s152
      %s170 = sphi 0, %s170
      %s172 = sphi 0, %s170
      %s173 = sphi 0, %s172
      %s187 = sphi 0, %s173
      %s191 = sphi 0, %s191
      %s193 = sphi 0, %s191
      %s194 = sphi 0, %s193
      %s208 = sphi 0, %s194
      %s216 = sphi 0, %s218
      %s219 = sphi 0, %s216
      %s220 = sphi 0, %s219
      %s236 = sphi 0, %s220
      %s244 = sphi 0, %s246
      %s247 = sphi 0, %s244
      %s248 = sphi 0, %s247
      %s264 = sphi 0, %s248
      %s272 = sphi 0, %s274
      %s275 = sphi 0, %s272
      %s276 = sphi 0, %s275
      %s292 = sphi 0, %s276
    $region4: #{_lambda_.4} parent=1 // loop_header_branch
      %32 = sbr.rel (%p30) target = $region8
    $region5: #{_lambda_.4} parent=1 // loop_body
      %s34 = ssub.s32 %s29, 1
      %s35 = ssub.s32 %s29, 2
      %s42 = sadd.s32 1, %s37
      %p43 = scmp.ge.s32.totalorder %s42, 2
      %s44 = scalar_select %p43, 0, %s42
      %s45 = sadd.s32 1, %s36
      %s46 = scalar_select %p43, %s45, %s36
      %p47 = scmp.ge.s32.totalorder %s46, 2
      %s48 = scalar_select %p47, 0, %s46
      %s49 = smul.u32 %s37, 8
      %s50 = ssub.s32 %s49, 1
      %p51 = scmp.gt.s32.totalorder %s50, 0
      %s52 = scalar_select %p51, %s50, 0
      %s53 = smul.u32 %s44, 8
      %s54 = ssub.s32 %s53, 1
      %p55 = scmp.gt.s32.totalorder %s54, 0
      %s56 = scalar_select %p55, %s54, 0
      %s57 = ssub.s32 %s36, %s48
      %s58 = ssub.s32 %s52, %s56
      %s59 = sor.u32 %s57, %s58
      %p60 = scmp.eq.s32.totalorder %s59, 0
      %s62 = sadd.s32 %s61, 1
      %s63 = scalar_select %p60, %s61, %s62
      %p66 = pneg %p60
      %p67 = scmp.eq.s32.totalorder %s29, 3
      %p68 = por %p66, %p67
      %p69 = scmp.ne.s32.totalorder %s61, %s64
      %p70 = scmp.eq.s32.totalorder %s29, 0
      %p71 = por %p69, %p70
      %p72 = scmp.ne.s32.totalorder %s61, %s64
      %p73 = scmp.eq.s32.totalorder %s34, 3
      %p74 = por %p72, %p73
      %p75 = scmp.ne.s32.totalorder %s64, %s65
      %p76 = scmp.eq.s32.totalorder %s34, 0
      %p77 = por %p75, %p76
      %p78 = scmp.ne.s32.totalorder %s64, %s65
      %p79 = scmp.eq.s32.totalorder %s35, 3
      %p80 = por %p78, %p79
      %p82 = scmp.ne.s32.totalorder %s65, %s81
      %p83 = scmp.eq.s32.totalorder %s35, 0
      %p84 = por %p82, %p83
      %s85 = ssub.s32 %s36, %s48
      %s86 = ssub.s32 %s37, %s44
      %s87 = sor.u32 %s85, %s86
      %p88 = scmp.eq.s32.totalorder %s87, 0
      %s90 = sadd.s32 %s89, 1
      %s91 = scalar_select %p88, %s89, %s90
      %p94 = pneg %p88
      %p95 = scmp.eq.s32.totalorder %s29, 3
      %p96 = por %p94, %p95
      %p97 = scmp.ne.s32.totalorder %s89, %s92
      %p98 = scmp.eq.s32.totalorder %s29, 0
      %p99 = por %p97, %p98
      %p100 = scmp.ne.s32.totalorder %s89, %s92
      %p101 = scmp.eq.s32.totalorder %s34, 3
      %p102 = por %p100, %p101
      %p103 = scmp.ne.s32.totalorder %s92, %s93
      %p104 = scmp.eq.s32.totalorder %s34, 0
      %p105 = por %p103, %p104
      %p106 = scmp.ne.s32.totalorder %s92, %s93
      %p107 = scmp.eq.s32.totalorder %s35, 3
      %p108 = por %p106, %p107
      %p110 = scmp.ne.s32.totalorder %s93, %s109
      %p111 = scmp.eq.s32.totalorder %s35, 0
      %p112 = por %p110, %p111
      %s113 = sadd.s32 %s37, 1
      %s114 = smul.u32 %s113, 8
      %p115 = scmp.lt.s32.totalorder %s114, 15
      %s116 = scalar_select %p115, %s114, 15
      %s117 = sadd.s32 %s44, 1
      %s118 = smul.u32 %s117, 8
      %p119 = scmp.lt.s32.totalorder %s118, 15
      %s120 = scalar_select %p119, %s118, 15
      %s121 = ssub.s32 %s36, %s48
      %s122 = ssub.s32 %s116, %s120
      %s123 = sor.u32 %s121, %s122
      %p124 = scmp.eq.s32.totalorder %s123, 0
      %s126 = sadd.s32 %s125, 1
      %s127 = scalar_select %p124, %s125, %s126
      %p130 = pneg %p124
      %p131 = scmp.eq.s32.totalorder %s29, 3
      %p132 = por %p130, %p131
      %p133 = scmp.ne.s32.totalorder %s125, %s128
      %p134 = scmp.eq.s32.totalorder %s29, 0
      %p135 = por %p133, %p134
      %p136 = scmp.ne.s32.totalorder %s125, %s128
      %p137 = scmp.eq.s32.totalorder %s34, 3
      %p138 = por %p136, %p137
      %p139 = scmp.ne.s32.totalorder %s128, %s129
      %p140 = scmp.eq.s32.totalorder %s34, 0
      %p141 = por %p139, %p140
      %p142 = scmp.ne.s32.totalorder %s128, %s129
      %p143 = scmp.eq.s32.totalorder %s35, 3
      %p144 = por %p142, %p143
      %p146 = scmp.ne.s32.totalorder %s129, %s145
      %p147 = scmp.eq.s32.totalorder %s35, 0
      %p148 = por %p146, %p147
      %s150 = sadd.s32 %s149, 1
      %p153 = scmp.eq.s32.totalorder %s29, 3
      %p154 = scmp.ne.s32.totalorder %s149, %s151
      %p155 = scmp.eq.s32.totalorder %s29, 0
      %p156 = por %p154, %p155
      %p157 = scmp.ne.s32.totalorder %s149, %s151
      %p158 = scmp.eq.s32.totalorder %s34, 3
      %p159 = por %p157, %p158
      %p160 = scmp.ne.s32.totalorder %s151, %s152
      %p161 = scmp.eq.s32.totalorder %s34, 0
      %p162 = por %p160, %p161
      %p163 = scmp.ne.s32.totalorder %s151, %s152
      %p164 = scmp.eq.s32.totalorder %s35, 3
      %p165 = por %p163, %p164
      %p167 = scmp.ne.s32.totalorder %s152, %s166
      %p168 = scmp.eq.s32.totalorder %s35, 0
      %p169 = por %p167, %p168
      %s171 = sadd.s32 %s170, 1
      %p174 = scmp.eq.s32.totalorder %s29, 3
      %p175 = scmp.ne.s32.totalorder %s170, %s172
      %p176 = scmp.eq.s32.totalorder %s29, 0
      %p177 = por %p175, %p176
      %p178 = scmp.ne.s32.totalorder %s170, %s172
      %p179 = scmp.eq.s32.totalorder %s34, 3
      %p180 = por %p178, %p179
      %p181 = scmp.ne.s32.totalorder %s172, %s173
      %p182 = scmp.eq.s32.totalorder %s34, 0
      %p183 = por %p181, %p182
      %p184 = scmp.ne.s32.totalorder %s172, %s173
      %p185 = scmp.eq.s32.totalorder %s35, 3
      %p186 = por %p184, %p185
      %p188 = scmp.ne.s32.totalorder %s173, %s187
      %p189 = scmp.eq.s32.totalorder %s35, 0
      %p190 = por %p188, %p189
      %s192 = sadd.s32 %s191, 1
      %p195 = scmp.eq.s32.totalorder %s29, 3
      %p196 = scmp.ne.s32.totalorder %s191, %s193
      %p197 = scmp.eq.s32.totalorder %s29, 0
      %p198 = por %p196, %p197
      %p199 = scmp.ne.s32.totalorder %s191, %s193
      %p200 = scmp.eq.s32.totalorder %s34, 3
      %p201 = por %p199, %p200
      %p202 = scmp.ne.s32.totalorder %s193, %s194
      %p203 = scmp.eq.s32.totalorder %s34, 0
      %p204 = por %p202, %p203
      %p205 = scmp.ne.s32.totalorder %s193, %s194
      %p206 = scmp.eq.s32.totalorder %s35, 3
      %p207 = por %p205, %p206
      %p209 = scmp.ne.s32.totalorder %s194, %s208
      %p210 = scmp.eq.s32.totalorder %s35, 0
      %p211 = por %p209, %p210
      %s212 = ssub.s32 %s36, %s48
      %s213 = ssub.s32 %s37, %s44
      %s214 = sor.u32 %s212, %s213
      %p215 = scmp.eq.s32.totalorder %s214, 0
      %s217 = sadd.s32 %s216, 1
      %s218 = scalar_select %p215, %s216, %s217
      %p221 = pneg %p215
      %p222 = scmp.eq.s32.totalorder %s29, 3
      %p223 = por %p221, %p222
      %p224 = scmp.ne.s32.totalorder %s216, %s219
      %p225 = scmp.eq.s32.totalorder %s29, 0
      %p226 = por %p224, %p225
      %p227 = scmp.ne.s32.totalorder %s216, %s219
      %p228 = scmp.eq.s32.totalorder %s34, 3
      %p229 = por %p227, %p228
      %p230 = scmp.ne.s32.totalorder %s219, %s220
      %p231 = scmp.eq.s32.totalorder %s34, 0
      %p232 = por %p230, %p231
      %p233 = scmp.ne.s32.totalorder %s219, %s220
      %p234 = scmp.eq.s32.totalorder %s35, 3
      %p235 = por %p233, %p234
      %p237 = scmp.ne.s32.totalorder %s220, %s236
      %p238 = scmp.eq.s32.totalorder %s35, 0
      %p239 = por %p237, %p238
      %s240 = ssub.s32 %s36, %s48
      %s241 = ssub.s32 %s37, %s44
      %s242 = sor.u32 %s240, %s241
      %p243 = scmp.eq.s32.totalorder %s242, 0
      %s245 = sadd.s32 %s244, 1
      %s246 = scalar_select %p243, %s244, %s245
      %p249 = pneg %p243
      %p250 = scmp.eq.s32.totalorder %s29, 3
      %p251 = por %p249, %p250
      %p252 = scmp.ne.s32.totalorder %s244, %s247
      %p253 = scmp.eq.s32.totalorder %s29, 0
      %p254 = por %p252, %p253
      %p255 = scmp.ne.s32.totalorder %s244, %s247
      %p256 = scmp.eq.s32.totalorder %s34, 3
      %p257 = por %p255, %p256
      %p258 = scmp.ne.s32.totalorder %s247, %s248
      %p259 = scmp.eq.s32.totalorder %s34, 0
      %p260 = por %p258, %p259
      %p261 = scmp.ne.s32.totalorder %s247, %s248
      %p262 = scmp.eq.s32.totalorder %s35, 3
      %p263 = por %p261, %p262
      %p265 = scmp.ne.s32.totalorder %s248, %s264
      %p266 = scmp.eq.s32.totalorder %s35, 0
      %p267 = por %p265, %p266
      %s268 = ssub.s32 %s36, %s48
      %s269 = ssub.s32 %s37, %s44
      %s270 = sor.u32 %s268, %s269
      %p271 = scmp.eq.s32.totalorder %s270, 0
      %s273 = sadd.s32 %s272, 1
      %s274 = scalar_select %p271, %s272, %s273
      %p277 = pneg %p271
      %p278 = scmp.eq.s32.totalorder %s29, 3
      %p279 = por %p277, %p278
      %p280 = scmp.ne.s32.totalorder %s272, %s275
      %p281 = scmp.eq.s32.totalorder %s29, 0
      %p282 = por %p280, %p281
      %p283 = scmp.ne.s32.totalorder %s272, %s275
      %p284 = scmp.eq.s32.totalorder %s34, 3
      %p285 = por %p283, %p284
      %p286 = scmp.ne.s32.totalorder %s275, %s276
      %p287 = scmp.eq.s32.totalorder %s34, 0
      %p288 = por %p286, %p287
      %p289 = scmp.ne.s32.totalorder %s275, %s276
      %p290 = scmp.eq.s32.totalorder %s35, 3
      %p291 = por %p289, %p290
      %p293 = scmp.ne.s32.totalorder %s276, %s292
      %p294 = scmp.eq.s32.totalorder %s35, 0
      %p295 = por %p293, %p294
      %p296 = scmp.le.s32.totalorder 1, %s29
      %p297 = scmp.lt.s32.totalorder %s29, 5
      %p298 = pnand %p296, %p297
      %p299 = pneg %p298
      // Predicated region
      $region9: #{_lambda_.4} parent=5 // pred_check
        _
      $region10: #{_lambda_.4} parent=5 // pred_check_branch
        %301 = sbr.rel (%p298) target = $region12
      $region11: #{_lambda_.4} parent=5 // pred_region
        %s302 = ssub.s32 %s29, 1
        // Predicated region
        $region13: #{_lambda_.4} parent=11 // pred_check
          %p303 = pneg %p162
        $region14: #{_lambda_.4} parent=11 // pred_check_branch
          %305 = sbr.rel (%p303) target = $region16
        $region15: #{_lambda_.4} parent=11 // pred_region
          %s307 = ssub.s32 576, 576
          %308 = vsyncadd [#allocation11], %s307
          %s309 = sshll.u32 [#allocation10], 4
          %s310 = int_to_ptr.vmem [resolvable:$true] %s309
          %315 = dma.hbm_to_vmem [thread:$0]  %s3, 576, %s310, [#allocation11], 64, 64, 4
        $region16: #{_lambda_.4} parent=11 // pred_fallthru
          _
        // Predicated region
        $region17: #{_lambda_.4} parent=11 // pred_check
          %p316 = pneg %p183
        $region18: #{_lambda_.4} parent=11 // pred_check_branch
          %318 = sbr.rel (%p316) target = $region20
        $region19: #{_lambda_.4} parent=11 // pred_region
          %s320 = ssub.s32 16, 16
          %321 = vsyncadd [#allocation11], %s320
          %s323 = sshll.u32 [#allocation12], 4
          %s324 = int_to_ptr.vmem [resolvable:$true] %s323
          %326 = dma.hbm_to_vmem [thread:$0]  %s4, 16, %s324, [#allocation11]
        $region20: #{_lambda_.4} parent=11 // pred_fallthru
          _
        // Predicated region
        $region21: #{_lambda_.4} parent=11 // pred_check
          %p327 = pneg %p204
        $region22: #{_lambda_.4} parent=11 // pred_check_branch
          %329 = sbr.rel (%p327) target = $region24
        $region23: #{_lambda_.4} parent=11 // pred_region
          %s331 = ssub.s32 16, 16
          %332 = vsyncadd [#allocation14], %s331
          %s334 = sshll.u32 [#allocation13], 4
          %s335 = int_to_ptr.vmem [resolvable:$true] %s334
          %337 = dma.hbm_to_vmem [thread:$0]  %s5, 16, %s335, [#allocation14]
        $region24: #{_lambda_.4} parent=11 // pred_fallthru
          _
      $region12: #{_lambda_.4} parent=5 // pred_fallthru
        _
      %p338 = scmp.lt.s32.totalorder %s29, 4
      // Predicated region
      $region25: #{_lambda_.4} parent=5 // pred_check
        %p339 = pneg %p338
      $region26: #{_lambda_.4} parent=5 // pred_check_branch
        %341 = sbr.rel (%p339) target = $region28
      $region27: #{_lambda_.4} parent=5 // pred_region
        // Predicated region
        $region29: #{_lambda_.4} parent=27 // pred_check
          %p342 = pneg %p71
        $region30: #{_lambda_.4} parent=27 // pred_check_branch
          %344 = sbr.rel (%p342) target = $region32
        $region31: #{_lambda_.4} parent=27 // pred_region
          %s345 = sand.u32 %s61, 1
          %s346 = scalar_lea.sflag [#allocation5], %s345
          %s347 = sand.u32 %s61, 1
          %s348 = smul.addr %s347, 8
          %s349 = scalar_lea.vmem [#allocation4], %s348
          %s350 = smul.u32 %s37, 8
          %s351 = ssub.s32 %s350, 1
          %p352 = scmp.gt.s32.totalorder %s351, 0
          %s353 = scalar_select %p352, %s351, 0
          %s355 = ssub.s32 128, 128
          %356 = vsyncadd %s346, %s355
          %s357 = smul.addr %s353, 2
          %s358 = smul.addr %s36, 32
          %s359 = sadd.s32 %s357, %s358
          %s360 = smul.addr %s359, 64
          %s361 = scalar_lea.hbm %s0, %s360
          %s362 = sshll.u32 %s349, 4
          %s363 = int_to_ptr.vmem [resolvable:$true] %s362
          %368 = dma.hbm_to_vmem [thread:$0]  %s361, 128, %s363, %s346, 64, 64, 4
        $region32: #{_lambda_.4} parent=27 // pred_fallthru
          _
        // Predicated region
        $region33: #{_lambda_.4} parent=27 // pred_check
          %p369 = pneg %p99
        $region34: #{_lambda_.4} parent=27 // pred_check_branch
          %371 = sbr.rel (%p369) target = $region36
        $region35: #{_lambda_.4} parent=27 // pred_region
          %s372 = sand.u32 %s29, 1
          %s373 = scalar_lea.sflag [#allocation8], %s372
          %s374 = sand.u32 %s89, 1
          %s375 = smul.addr %s374, 64
          %s376 = scalar_lea.vmem [#allocation7], %s375
          %s377 = smul.u32 8, %s37
          %s379 = ssub.s32 1024, 1024
          %380 = vsyncadd %s373, %s379
          %s381 = smul.addr %s377, 2
          %s382 = smul.addr %s36, 32
          %s383 = sadd.s32 %s381, %s382
          %s384 = smul.addr %s383, 64
          %s385 = scalar_lea.hbm %s1, %s384
          %s386 = sshll.u32 %s376, 4
          %s387 = int_to_ptr.vmem [resolvable:$true] %s386
          %392 = dma.hbm_to_vmem [thread:$0]  %s385, 1024, %s387, %s373, 64, 64, 4
        $region36: #{_lambda_.4} parent=27 // pred_fallthru
          _
        // Predicated region
        $region37: #{_lambda_.4} parent=27 // pred_check
          %p393 = pneg %p135
        $region38: #{_lambda_.4} parent=27 // pred_check_branch
          %395 = sbr.rel (%p393) target = $region40
        $region39: #{_lambda_.4} parent=27 // pred_region
          %s396 = sand.u32 %s29, 1
          %s397 = scalar_lea.sflag [#allocation8], %s396
          %s398 = sand.u32 %s125, 1
          %s399 = smul.addr %s398, 8
          %s400 = scalar_lea.vmem [#allocation9], %s399
          %s401 = sadd.s32 %s37, 1
          %s402 = smul.u32 %s401, 8
          %p403 = scmp.lt.s32.totalorder %s402, 15
          %s404 = scalar_select %p403, %s402, 15
          %s406 = ssub.s32 128, 128
          %407 = vsyncadd %s397, %s406
          %s408 = smul.addr %s404, 2
          %s409 = smul.addr %s36, 32
          %s410 = sadd.s32 %s408, %s409
          %s411 = smul.addr %s410, 64
          %s412 = scalar_lea.hbm %s2, %s411
          %s413 = sshll.u32 %s400, 4
          %s414 = int_to_ptr.vmem [resolvable:$true] %s413
          %419 = dma.hbm_to_vmem [thread:$0]  %s412, 128, %s414, %s397, 64, 64, 4
        $region40: #{_lambda_.4} parent=27 // pred_fallthru
          _
      $region28: #{_lambda_.4} parent=5 // pred_fallthru
        _
      %p420 = scmp.le.s32.totalorder 1, %s29
      %p421 = scmp.lt.s32.totalorder %s29, 5
      %p422 = pnand %p420, %p421
      %p423 = pneg %p422
      // Predicated region
      $region41: #{_lambda_.4} parent=5 // pred_check
        _
      $region42: #{_lambda_.4} parent=5 // pred_check_branch
        %425 = sbr.rel (%p422) target = $region44
      $region43: #{_lambda_.4} parent=5 // pred_region
        %s426 = ssub.s32 %s29, 1
        %s427 = sand.u32 %s64, 1
        %s428 = scalar_lea.sflag [#allocation5], %s427
        %s429 = sand.u32 %s64, 1
        %s430 = smul.addr %s429, 8
        %s431 = scalar_lea.vmem [#allocation4], %s430
        // Predicated region
        $region45: #{_lambda_.4} parent=43 // pred_check
          %p432 = pneg %p77
        $region46: #{_lambda_.4} parent=43 // pred_check_branch
          %434 = sbr.rel (%p432) target = $region48
        $region47: #{_lambda_.4} parent=43 // pred_region
          %435 = dma.done %s428, 128
        $region48: #{_lambda_.4} parent=43 // pred_fallthru
          _
        %s436 = sand.u32 %s34, 1
        %s437 = scalar_lea.sflag [#allocation8], %s436
        %s438 = sand.u32 %s92, 1
        %s439 = smul.addr %s438, 64
        %s440 = scalar_lea.vmem [#allocation7], %s439
        // Predicated region
        $region49: #{_lambda_.4} parent=43 // pred_check
          %p441 = pneg %p105
        $region50: #{_lambda_.4} parent=43 // pred_check_branch
          %443 = sbr.rel (%p441) target = $region52
        $region51: #{_lambda_.4} parent=43 // pred_region
          %444 = dma.done %s437, 1024
        $region52: #{_lambda_.4} parent=43 // pred_fallthru
          _
        %s445 = sand.u32 %s34, 1
        %s446 = scalar_lea.sflag [#allocation8], %s445
        %s447 = sand.u32 %s128, 1
        %s448 = smul.addr %s447, 8
        %s449 = scalar_lea.vmem [#allocation9], %s448
        // Predicated region
        $region53: #{_lambda_.4} parent=43 // pred_check
          %p450 = pneg %p141
        $region54: #{_lambda_.4} parent=43 // pred_check_branch
          %452 = sbr.rel (%p450) target = $region56
        $region55: #{_lambda_.4} parent=43 // pred_region
          %453 = dma.done %s446, 128
        $region56: #{_lambda_.4} parent=43 // pred_fallthru
          _
        // Predicated region
        $region57: #{_lambda_.4} parent=43 // pred_check
          %p454 = pneg %p162
        $region58: #{_lambda_.4} parent=43 // pred_check_branch
          %456 = sbr.rel (%p454) target = $region60
        $region59: #{_lambda_.4} parent=43 // pred_region
          %457 = dma.done [#allocation11], 576
        $region60: #{_lambda_.4} parent=43 // pred_fallthru
          _
        // Predicated region
        $region61: #{_lambda_.4} parent=43 // pred_check
          %p458 = pneg %p183
        $region62: #{_lambda_.4} parent=43 // pred_check_branch
          %460 = sbr.rel (%p458) target = $region64
        $region63: #{_lambda_.4} parent=43 // pred_region
          %461 = dma.done [#allocation11], 16
        $region64: #{_lambda_.4} parent=43 // pred_fallthru
          _
        // Predicated region
        $region65: #{_lambda_.4} parent=43 // pred_check
          %p462 = pneg %p204
        $region66: #{_lambda_.4} parent=43 // pred_check_branch
          %464 = sbr.rel (%p462) target = $region68
        $region67: #{_lambda_.4} parent=43 // pred_region
          %465 = dma.done [#allocation14], 16
        $region68: #{_lambda_.4} parent=43 // pred_fallthru
          _
        %s466 = sand.u32 %s64, 1
        %s467 = scalar_lea.sflag [#allocation5], %s466
        %s468 = sand.u32 %s64, 1
        %s469 = smul.addr %s468, 8
        %s470 = scalar_lea.vmem [#allocation4], %s469
        %p471 = pneg %p77
        %p472 = pneg %p74
        %s473 = sand.u32 %s34, 1
        %s474 = scalar_lea.sflag [#allocation8], %s473
        %s475 = sand.u32 %s92, 1
        %s476 = smul.addr %s475, 64
        %s477 = scalar_lea.vmem [#allocation7], %s476
        %p478 = pneg %p105
        %p479 = pneg %p102
        %s480 = sand.u32 %s34, 1
        %s481 = scalar_lea.sflag [#allocation8], %s480
        %s482 = sand.u32 %s128, 1
        %s483 = smul.addr %s482, 8
        %s484 = scalar_lea.vmem [#allocation9], %s483
        %p485 = pneg %p141
        %p486 = pneg %p138
        %p487 = pneg %p162
        %p488 = pneg %p159
        %p489 = pneg %p183
        %p490 = pneg %p180
        %p491 = pneg %p204
        %p492 = pneg %p201
        %p493 = pneg %p232
        %p494 = pneg %p229
        %s495 = sand.u32 %s219, 1
        %s496 = scalar_lea.sflag [#allocation6], %s495
        %s497 = sand.u32 %s219, 1
        %s498 = smul.addr %s497, 64
        %s499 = scalar_lea.vmem [#allocation15], %s498
        %p500 = pneg %p260
        %p501 = pneg %p257
        %s502 = sand.u32 %s34, 1
        %s503 = scalar_lea.sflag [#allocation17], %s502
        %s504 = sand.u32 %s247, 1
        %s505 = scalar_lea.vmem [#allocation16], %s504
        %p506 = pneg %p288
        %p507 = pneg %p285
        %s508 = sand.u32 %s34, 1
        %s509 = scalar_lea.sflag [#allocation17], %s508
        %s510 = sand.u32 %s275, 1
        %s511 = scalar_lea.vmem [#allocation18], %s510
        %s512 = smul.u32 %s39, 8
        %s513 = ssub.s32 %s512, 1
        %p514 = scmp.gt.s32.totalorder %s513, 0
        %s515 = scalar_select %p514, %s513, 0
        %s516 = smul.u32 8, %s39
        %s517 = sadd.s32 %s39, 1
        %s518 = smul.u32 %s517, 8
        %p519 = scmp.lt.s32.totalorder %s518, 15
        %s520 = scalar_select %p519, %s518, 15
        %s521 = smul.u32 8, %s39
        %vm523 = vcmask 60416
        %524 = vst.msk [vmem:[#allocation2] sm:$0xf] %vm523, 0
        %525 = vst.msk [vmem:[#allocation2 + $0x4] sm:$0xf] %vm523, 0
        %vm526 = vcmask 57344
        %527 = vst.msk [vmem:[#allocation2 + $0x8] sm:$0x1] %vm526, 0
        %s528 = scalar_lea.vmem [#allocation2], 108
        %529 = vst.msk [vmem:[%s528] sm:$0xf] %vm523, 0
        %530 = vst.msk [vmem:[%s528 + $0x4] sm:$0xf] %vm523, 0
        %531 = vst.msk [vmem:[%s528 + $0x8] sm:$0x1] %vm526, 0
        %vm532 = vcmask 57344
        %vm533 = vsmask.f32 256
        %vm534 = vmand %vm532, %vm533
        %v535 = vld [vmem:[#allocation2] sm:$0x1]
        %v536 = vsel %vm534, 0, %v535
        %537 = vst [vmem:[#allocation2] sm:$0x1] %v536
        %v538 = vld [vmem:[#allocation2 + $0xc] sm:$0x1]
        %v539 = vsel %vm534, 0, %v538
        %540 = vst [vmem:[#allocation2 + $0xc] sm:$0x1] %v539
        %v541 = vld [vmem:[#allocation2 + $0x18] sm:$0x1]
        %v542 = vsel %vm534, 0, %v541
        %543 = vst [vmem:[#allocation2 + $0x18] sm:$0x1] %v542
        %v544 = vld [vmem:[#allocation2 + $0x24] sm:$0x1]
        %v545 = vsel %vm534, 0, %v544
        %546 = vst [vmem:[#allocation2 + $0x24] sm:$0x1] %v545
        %v547 = vld [vmem:[#allocation2 + $0x30] sm:$0x1]
        %v548 = vsel %vm534, 0, %v547
        %549 = vst [vmem:[#allocation2 + $0x30] sm:$0x1] %v548
        %v550 = vld [vmem:[#allocation2 + $0x3c] sm:$0x1]
        %v551 = vsel %vm534, 0, %v550
        %552 = vst [vmem:[#allocation2 + $0x3c] sm:$0x1] %v551
        %v553 = vld [vmem:[#allocation2 + $0x48] sm:$0x1]
        %v554 = vsel %vm534, 0, %v553
        %555 = vst [vmem:[#allocation2 + $0x48] sm:$0x1] %v554
        %v556 = vld [vmem:[#allocation2 + $0x54] sm:$0x1]
        %v557 = vsel %vm534, 0, %v556
        %558 = vst [vmem:[#allocation2 + $0x54] sm:$0x1] %v557
        %v559 = vld [vmem:[#allocation2 + $0x60] sm:$0x1]
        %v560 = vsel %vm534, 0, %v559
        %561 = vst [vmem:[#allocation2 + $0x60] sm:$0x1] %v560
        %v562 = vld [vmem:[#allocation2 + $0x6c] sm:$0x1]
        %v563 = vsel %vm534, 0, %v562
        %564 = vst [vmem:[#allocation2 + $0x6c] sm:$0x1] %v563
        %vm565 = vsmask.f32 7938
        %vm566 = vmand %vm532, %vm565
        %v567 = vld [vmem:[#allocation2 + $0x8] sm:$0x1]
        %v568 = vsel %vm566, 0, %v567
        %569 = vst [vmem:[#allocation2 + $0x8] sm:$0x1] %v568
        %v570 = vld [vmem:[#allocation2 + $0x14] sm:$0x1]
        %v571 = vsel %vm566, 0, %v570
        %572 = vst [vmem:[#allocation2 + $0x14] sm:$0x1] %v571
        %v573 = vld [vmem:[#allocation2 + $0x20] sm:$0x1]
        %v574 = vsel %vm566, 0, %v573
        %575 = vst [vmem:[#allocation2 + $0x20] sm:$0x1] %v574
        %v576 = vld [vmem:[#allocation2 + $0x2c] sm:$0x1]
        %v577 = vsel %vm566, 0, %v576
        %578 = vst [vmem:[#allocation2 + $0x2c] sm:$0x1] %v577
        %v579 = vld [vmem:[#allocation2 + $0x38] sm:$0x1]
        %v580 = vsel %vm566, 0, %v579
        %581 = vst [vmem:[#allocation2 + $0x38] sm:$0x1] %v580
        %v582 = vld [vmem:[#allocation2 + $0x44] sm:$0x1]
        %v583 = vsel %vm566, 0, %v582
        %584 = vst [vmem:[#allocation2 + $0x44] sm:$0x1] %v583
        %v585 = vld [vmem:[#allocation2 + $0x50] sm:$0x1]
        %v586 = vsel %vm566, 0, %v585
        %587 = vst [vmem:[#allocation2 + $0x50] sm:$0x1] %v586
        %v588 = vld [vmem:[#allocation2 + $0x5c] sm:$0x1]
        %v589 = vsel %vm566, 0, %v588
        %590 = vst [vmem:[#allocation2 + $0x5c] sm:$0x1] %v589
        %v591 = vld [vmem:[#allocation2 + $0x68] sm:$0x1]
        %v592 = vsel %vm566, 0, %v591
        %593 = vst [vmem:[#allocation2 + $0x68] sm:$0x1] %v592
        %v594 = vld [vmem:[#allocation2 + $0x74] sm:$0x1]
        %v595 = vsel %vm566, 0, %v594
        %596 = vst [vmem:[#allocation2 + $0x74] sm:$0x1] %v595
        %v597 = vld [vmem:[%s440] sm:$0xf]
        %v598 = vld [vmem:[%s440 + $0x4] sm:$0xf]
        %v599 = vld [vmem:[%s440 + $0x8] sm:$0xf]
        %v600 = vld [vmem:[%s440 + $0xc] sm:$0xf]
        %v601 = vld [vmem:[%s440 + $0x10] sm:$0xf]
        %v602 = vld [vmem:[%s440 + $0x14] sm:$0xf]
        %v603 = vld [vmem:[%s440 + $0x18] sm:$0xf]
        %v604 = vld [vmem:[%s440 + $0x1c] sm:$0xf]
        %v605 = vld [vmem:[%s440 + $0x20] sm:$0xf]
        %v606 = vld [vmem:[%s440 + $0x24] sm:$0xf]
        %v607 = vld [vmem:[%s440 + $0x28] sm:$0xf]
        %v608 = vld [vmem:[%s440 + $0x2c] sm:$0xf]
        %v609 = vld [vmem:[%s440 + $0x30] sm:$0xf]
        %v610 = vld [vmem:[%s440 + $0x34] sm:$0xf]
        %v611 = vld [vmem:[%s440 + $0x38] sm:$0xf]
        %v612 = vld [vmem:[%s440 + $0x3c] sm:$0xf]
        %v613 = vunpack.c.l.bf16 %v597
        %v614 = vunpack.c.l.bf16 %v598
        %v615 = vunpack.c.l.bf16 %v599
        %v616 = vunpack.c.l.bf16 %v600
        %v617 = vunpack.c.l.bf16 %v601
        %v618 = vunpack.c.l.bf16 %v602
        %v619 = vunpack.c.l.bf16 %v603
        %v620 = vunpack.c.l.bf16 %v604
        %v621 = vunpack.c.l.bf16 %v605
        %v622 = vunpack.c.l.bf16 %v606
        %v623 = vunpack.c.l.bf16 %v607
        %v624 = vunpack.c.l.bf16 %v608
        %v625 = vunpack.c.l.bf16 %v609
        %v626 = vunpack.c.l.bf16 %v610
        %v627 = vunpack.c.l.bf16 %v611
        %v628 = vunpack.c.l.bf16 %v612
        %v629 = vld [vmem:[#allocation12] sm:$0x1]
        %v631 = vlaneseq
        %v632 = vshrl.u32 %v631, 7
        %v633 = vsub.s32 0, %v632
        %v634 = vrot.slane %v629, %v633
        %v636 = vmul.f32 %v613, %v634
        %v637 = vmul.f32 %v614, %v634
        %v638 = vmul.f32 %v615, %v634
        %v639 = vmul.f32 %v616, %v634
        %v640 = vmul.f32 %v617, %v634
        %v641 = vmul.f32 %v618, %v634
        %v642 = vmul.f32 %v619, %v634
        %v643 = vmul.f32 %v620, %v634
        %v644 = vmul.f32 %v621, %v634
        %v645 = vmul.f32 %v622, %v634
        %v646 = vmul.f32 %v623, %v634
        %v647 = vmul.f32 %v624, %v634
        %v648 = vmul.f32 %v625, %v634
        %v649 = vmul.f32 %v626, %v634
        %v650 = vmul.f32 %v627, %v634
        %v651 = vmul.f32 %v628, %v634
        %v652 = vld [vmem:[#allocation13] sm:$0x1]
        %v654 = vlaneseq
        %v655 = vshrl.u32 %v654, 7
        %v656 = vsub.s32 0, %v655
        %v657 = vrot.slane %v652, %v656
        %v659 = vadd.f32 %v636, %v657
        %v660 = vadd.f32 %v637, %v657
        %v661 = vadd.f32 %v638, %v657
        %v662 = vadd.f32 %v639, %v657
        %v663 = vadd.f32 %v640, %v657
        %v664 = vadd.f32 %v641, %v657
        %v665 = vadd.f32 %v642, %v657
        %v666 = vadd.f32 %v643, %v657
        %v667 = vadd.f32 %v644, %v657
        %v668 = vadd.f32 %v645, %v657
        %v669 = vadd.f32 %v646, %v657
        %v670 = vadd.f32 %v647, %v657
        %v671 = vadd.f32 %v648, %v657
        %v672 = vadd.f32 %v649, %v657
        %v673 = vadd.f32 %v650, %v657
        %v674 = vadd.f32 %v651, %v657
        %v675 = vmax.f32 %v659, 0.0
        %v676 = vmax.f32 %v660, 0.0
        %v677 = vmax.f32 %v661, 0.0
        %v678 = vmax.f32 %v662, 0.0
        %v679 = vmax.f32 %v663, 0.0
        %v680 = vmax.f32 %v664, 0.0
        %v681 = vmax.f32 %v665, 0.0
        %v682 = vmax.f32 %v666, 0.0
        %v683 = vmax.f32 %v667, 0.0
        %v684 = vmax.f32 %v668, 0.0
        %v685 = vmax.f32 %v669, 0.0
        %v686 = vmax.f32 %v670, 0.0
        %v687 = vmax.f32 %v671, 0.0
        %v688 = vmax.f32 %v672, 0.0
        %v689 = vmax.f32 %v673, 0.0
        %v690 = vmax.f32 %v674, 0.0
        %v691 = vpack.c.bf16 %v676, %v675
        %v692 = vpack.c.bf16 %v678, %v677
        %v693 = vpack.c.bf16 %v680, %v679
        %v694 = vpack.c.bf16 %v682, %v681
        %v695 = vpack.c.bf16 %v684, %v683
        %v696 = vpack.c.bf16 %v686, %v685
        %v697 = vpack.c.bf16 %v688, %v687
        %v698 = vpack.c.bf16 %v690, %v689
        %v707 = vunpack.c.l.b16 %v691
        %v708 = vunpack.c.h.b16 %v691
        %v709 = vunpack.c.l.b16 %v692
        %v710 = vunpack.c.h.b16 %v692
        %v711 = vunpack.c.l.b16 %v693
        %v712 = vunpack.c.h.b16 %v693
        %v713 = vunpack.c.l.b16 %v694
        %v714 = vunpack.c.h.b16 %v694
        %v715 = vunpack.c.l.b16 %v695
        %v716 = vunpack.c.h.b16 %v695
        %v717 = vunpack.c.l.b16 %v696
        %v718 = vunpack.c.h.b16 %v696
        %v719 = vunpack.c.l.b16 %v697
        %v720 = vunpack.c.h.b16 %v697
        %v721 = vunpack.c.l.b16 %v698
        %v722 = vunpack.c.h.b16 %v698
        %v723 = vpack.c.b16 %v707, %v707
        %v724 = vpack.c.b16 %v708, %v708
        %v725 = vpack.c.b16 %v709, %v709
        %v726 = vpack.c.b16 %v710, %v710
        %v727 = vpack.c.b16 %v711, %v711
        %v728 = vpack.c.b16 %v712, %v712
        %v729 = vpack.c.b16 %v713, %v713
        %v730 = vpack.c.b16 %v714, %v714
        %v731 = vpack.c.b16 %v715, %v715
        %v732 = vpack.c.b16 %v716, %v716
        %v733 = vpack.c.b16 %v717, %v717
        %v734 = vpack.c.b16 %v718, %v718
        %v735 = vpack.c.b16 %v719, %v719
        %v736 = vpack.c.b16 %v720, %v720
        %v737 = vpack.c.b16 %v721, %v721
        %v738 = vpack.c.b16 %v722, %v722
        %vm739 = vsmask.f32 4368
        %vm740 = vmor %vm533, %vm739
        %v742 = vshrl.u32 %v723, 16
        %v744 = vrot.slane %v742, 7
        %v745 = vshll.u32 %v723, 16
        %v747 = vor.u32 %v744, %v745
        %v748 = vrot.slane %v744, 4
        %v750 = vshrl.u32 %v724, 16
        %v752 = vrot.slane %v750, 7
        %v753 = vshll.u32 %v724, 16
        %v755 = vor.u32 %v752, %v753
        %v756 = vsel %vm740, %v748, %v755
        %v757 = vrot.slane %v752, 4
        %v759 = vshrl.u32 %v725, 16
        %v761 = vrot.slane %v759, 7
        %v762 = vshll.u32 %v725, 16
        %v764 = vor.u32 %v761, %v762
        %v765 = vrot.slane %v761, 4
        %v767 = vshrl.u32 %v726, 16
        %v769 = vrot.slane %v767, 7
        %v770 = vshll.u32 %v726, 16
        %v772 = vor.u32 %v769, %v770
        %v773 = vsel %vm740, %v765, %v772
        %v774 = vrot.slane %v769, 4
        %v776 = vshrl.u32 %v727, 16
        %v778 = vrot.slane %v776, 7
        %v779 = vshll.u32 %v727, 16
        %v781 = vor.u32 %v778, %v779
        %v782 = vrot.slane %v778, 4
        %v784 = vshrl.u32 %v728, 16
        %v786 = vrot.slane %v784, 7
        %v787 = vshll.u32 %v728, 16
        %v789 = vor.u32 %v786, %v787
        %v790 = vsel %vm740, %v782, %v789
        %v791 = vrot.slane %v786, 4
        %v793 = vshrl.u32 %v729, 16
        %v795 = vrot.slane %v793, 7
        %v796 = vshll.u32 %v729, 16
        %v798 = vor.u32 %v795, %v796
        %v799 = vrot.slane %v795, 4
        %v801 = vshrl.u32 %v730, 16
        %v803 = vrot.slane %v801, 7
        %v804 = vshll.u32 %v730, 16
        %v806 = vor.u32 %v803, %v804
        %v807 = vsel %vm740, %v799, %v806
        %v808 = vrot.slane %v803, 4
        %v810 = vshrl.u32 %v731, 16
        %v812 = vrot.slane %v810, 7
        %v813 = vshll.u32 %v731, 16
        %v815 = vor.u32 %v812, %v813
        %v816 = vrot.slane %v812, 4
        %v818 = vshrl.u32 %v732, 16
        %v820 = vrot.slane %v818, 7
        %v821 = vshll.u32 %v732, 16
        %v823 = vor.u32 %v820, %v821
        %v824 = vsel %vm740, %v816, %v823
        %v825 = vrot.slane %v820, 4
        %v827 = vshrl.u32 %v733, 16
        %v829 = vrot.slane %v827, 7
        %v830 = vshll.u32 %v733, 16
        %v832 = vor.u32 %v829, %v830
        %v833 = vrot.slane %v829, 4
        %v835 = vshrl.u32 %v734, 16
        %v837 = vrot.slane %v835, 7
        %v838 = vshll.u32 %v734, 16
        %v840 = vor.u32 %v837, %v838
        %v841 = vsel %vm740, %v833, %v840
        %v842 = vrot.slane %v837, 4
        %v844 = vshrl.u32 %v735, 16
        %v846 = vrot.slane %v844, 7
        %v847 = vshll.u32 %v735, 16
        %v849 = vor.u32 %v846, %v847
        %v850 = vrot.slane %v846, 4
        %v852 = vshrl.u32 %v736, 16
        %v854 = vrot.slane %v852, 7
        %v855 = vshll.u32 %v736, 16
        %v857 = vor.u32 %v854, %v855
        %v858 = vsel %vm740, %v850, %v857
        %v859 = vrot.slane %v854, 4
        %v861 = vshrl.u32 %v737, 16
        %v863 = vrot.slane %v861, 7
        %v864 = vshll.u32 %v737, 16
        %v866 = vor.u32 %v863, %v864
        %v867 = vrot.slane %v863, 4
        %v869 = vshrl.u32 %v738, 16
        %v871 = vrot.slane %v869, 7
        %v872 = vshll.u32 %v738, 16
        %v874 = vor.u32 %v871, %v872
        %v875 = vsel %vm740, %v867, %v874
        %v876 = vrot.slane %v871, 4
        %s901 = scalar_lea.vmem [#allocation2], 12
        %vm902 = vcmask 60416
        %vm903 = vmand %vm902, %vm565
        %v904 = vld [vmem:[%s901] sm:$0xf]
        %v905 = vsel %vm903, %v747, %v904
        %906 = vst [vmem:[%s901] sm:$0xf] %v905
        %907 = vst.msk [vmem:[%s901 + $0x4] sm:$0xf] %vm523, %v756
        %v908 = vld [vmem:[%s901 + $0x8] sm:$0x1]
        %v909 = vsel %vm534, %v757, %v908
        %910 = vst [vmem:[%s901 + $0x8] sm:$0x1] %v909
        %v911 = vld [vmem:[%s901 + $0xc] sm:$0xf]
        %v912 = vsel %vm903, %v764, %v911
        %913 = vst [vmem:[%s901 + $0xc] sm:$0xf] %v912
        %914 = vst.msk [vmem:[%s901 + $0x10] sm:$0xf] %vm523, %v773
        %v915 = vld [vmem:[%s901 + $0x14] sm:$0x1]
        %v916 = vsel %vm534, %v774, %v915
        %917 = vst [vmem:[%s901 + $0x14] sm:$0x1] %v916
        %v918 = vld [vmem:[%s901 + $0x18] sm:$0xf]
        %v919 = vsel %vm903, %v781, %v918
        %920 = vst [vmem:[%s901 + $0x18] sm:$0xf] %v919
        %921 = vst.msk [vmem:[%s901 + $0x1c] sm:$0xf] %vm523, %v790
        %v922 = vld [vmem:[%s901 + $0x20] sm:$0x1]
        %v923 = vsel %vm534, %v791, %v922
        %924 = vst [vmem:[%s901 + $0x20] sm:$0x1] %v923
        %v925 = vld [vmem:[%s901 + $0x24] sm:$0xf]
        %v926 = vsel %vm903, %v798, %v925
        %927 = vst [vmem:[%s901 + $0x24] sm:$0xf] %v926
        %928 = vst.msk [vmem:[%s901 + $0x28] sm:$0xf] %vm523, %v807
        %v929 = vld [vmem:[%s901 + $0x2c] sm:$0x1]
        %v930 = vsel %vm534, %v808, %v929
        %931 = vst [vmem:[%s901 + $0x2c] sm:$0x1] %v930
        %v932 = vld [vmem:[%s901 + $0x30] sm:$0xf]
        %v933 = vsel %vm903, %v815, %v932
        %934 = vst [vmem:[%s901 + $0x30] sm:$0xf] %v933
        %935 = vst.msk [vmem:[%s901 + $0x34] sm:$0xf] %vm523, %v824
        %v936 = vld [vmem:[%s901 + $0x38] sm:$0x1]
        %v937 = vsel %vm534, %v825, %v936
        %938 = vst [vmem:[%s901 + $0x38] sm:$0x1] %v937
        %v939 = vld [vmem:[%s901 + $0x3c] sm:$0xf]
        %v940 = vsel %vm903, %v832, %v939
        %941 = vst [vmem:[%s901 + $0x3c] sm:$0xf] %v940
        %942 = vst.msk [vmem:[%s901 + $0x40] sm:$0xf] %vm523, %v841
        %v943 = vld [vmem:[%s901 + $0x44] sm:$0x1]
        %v944 = vsel %vm534, %v842, %v943
        %945 = vst [vmem:[%s901 + $0x44] sm:$0x1] %v944
        %v946 = vld [vmem:[%s901 + $0x48] sm:$0xf]
        %v947 = vsel %vm903, %v849, %v946
        %948 = vst [vmem:[%s901 + $0x48] sm:$0xf] %v947
        %949 = vst.msk [vmem:[%s901 + $0x4c] sm:$0xf] %vm523, %v858
        %v950 = vld [vmem:[%s901 + $0x50] sm:$0x1]
        %v951 = vsel %vm534, %v859, %v950
        %952 = vst [vmem:[%s901 + $0x50] sm:$0x1] %v951
        %v953 = vld [vmem:[%s901 + $0x54] sm:$0xf]
        %v954 = vsel %vm903, %v866, %v953
        %955 = vst [vmem:[%s901 + $0x54] sm:$0xf] %v954
        %956 = vst.msk [vmem:[%s901 + $0x58] sm:$0xf] %vm523, %v875
        %v957 = vld [vmem:[%s901 + $0x5c] sm:$0x1]
        %v958 = vsel %vm534, %v876, %v957
        %959 = vst [vmem:[%s901 + $0x5c] sm:$0x1] %v958
        %p960 = scmp.gt.s32.totalorder %s39, 0
        // Predicated region
        $region69: #{_lambda_.4} parent=43 // pred_check
          %p961 = pneg %p960
        $region70: #{_lambda_.4} parent=43 // pred_check_branch
          %963 = sbr.rel (%p961) target = $region72
        $region71: #{_lambda_.4} parent=43 // pred_region
          %v964 = vld [vmem:[%s431] sm:$0xf]
          %v965 = vld [vmem:[%s431 + $0x4] sm:$0xf]
          %v966 = vunpack.c.l.bf16 %v964
          %v967 = vunpack.c.l.bf16 %v965
          %v968 = vld [vmem:[#allocation12] sm:$0x1]
          %v970 = vlaneseq
          %v971 = vshrl.u32 %v970, 7
          %v972 = vsub.s32 0, %v971
          %v973 = vrot.slane %v968, %v972
          %v975 = vmul.f32 %v966, %v973
          %v976 = vmul.f32 %v967, %v973
          %v977 = vld [vmem:[#allocation13] sm:$0x1]
          %v979 = vlaneseq
          %v980 = vshrl.u32 %v979, 7
          %v981 = vsub.s32 0, %v980
          %v982 = vrot.slane %v977, %v981
          %v984 = vadd.f32 %v975, %v982
          %v985 = vadd.f32 %v976, %v982
          %v986 = vmax.f32 %v984, 0.0
          %v987 = vmax.f32 %v985, 0.0
          %v988 = vpack.c.bf16 %v987, %v986
          %v990 = vunpack.c.l.b16 %v988
          %v991 = vunpack.c.h.b16 %v988
          %v992 = vpack.c.b16 %v990, %v990
          %v993 = vpack.c.b16 %v991, %v991
          %v995 = vshrl.u32 %v992, 16
          %v997 = vrot.slane %v995, 7
          %v998 = vshll.u32 %v992, 16
          %v1000 = vor.u32 %v997, %v998
          %v1001 = vrot.slane %v997, 4
          %v1003 = vshrl.u32 %v993, 16
          %v1005 = vrot.slane %v1003, 7
          %v1006 = vshll.u32 %v993, 16
          %v1008 = vor.u32 %v1005, %v1006
          %v1009 = vsel %vm740, %v1001, %v1008
          %v1010 = vrot.slane %v1005, 4
          %v1014 = vld [vmem:[#allocation2] sm:$0xf]
          %v1015 = vsel %vm903, %v1000, %v1014
          %1016 = vst [vmem:[#allocation2] sm:$0xf] %v1015
          %1017 = vst.msk [vmem:[#allocation2 + $0x4] sm:$0xf] %vm523, %v1009
          %v1018 = vld [vmem:[#allocation2 + $0x8] sm:$0x1]
          %v1019 = vsel %vm534, %v1010, %v1018
          %1020 = vst [vmem:[#allocation2 + $0x8] sm:$0x1] %v1019
        $region72: #{_lambda_.4} parent=43 // pred_fallthru
          _
        %p1021 = scmp.lt.s32.totalorder %s39, 1
        // Predicated region
        $region73: #{_lambda_.4} parent=43 // pred_check
          %p1022 = pneg %p1021
        $region74: #{_lambda_.4} parent=43 // pred_check_branch
          %1024 = sbr.rel (%p1022) target = $region76
        $region75: #{_lambda_.4} parent=43 // pred_region
          %v1025 = vld [vmem:[%s449] sm:$0xf]
          %v1026 = vld [vmem:[%s449 + $0x4] sm:$0xf]
          %v1027 = vunpack.c.l.bf16 %v1025
          %v1028 = vunpack.c.l.bf16 %v1026
          %v1029 = vld [vmem:[#allocation12] sm:$0x1]
          %v1031 = vlaneseq
          %v1032 = vshrl.u32 %v1031, 7
          %v1033 = vsub.s32 0, %v1032
          %v1034 = vrot.slane %v1029, %v1033
          %v1036 = vmul.f32 %v1027, %v1034
          %v1037 = vmul.f32 %v1028, %v1034
          %v1038 = vld [vmem:[#allocation13] sm:$0x1]
          %v1040 = vlaneseq
          %v1041 = vshrl.u32 %v1040, 7
          %v1042 = vsub.s32 0, %v1041
          %v1043 = vrot.slane %v1038, %v1042
          %v1045 = vadd.f32 %v1036, %v1043
          %v1046 = vadd.f32 %v1037, %v1043
          %v1047 = vmax.f32 %v1045, 0.0
          %v1048 = vmax.f32 %v1046, 0.0
          %v1049 = vpack.c.bf16 %v1048, %v1047
          %v1051 = vunpack.c.l.b16 %v1049
          %v1052 = vunpack.c.h.b16 %v1049
          %v1053 = vpack.c.b16 %v1051, %v1051
          %v1054 = vpack.c.b16 %v1052, %v1052
          %v1056 = vshrl.u32 %v1053, 16
          %v1058 = vrot.slane %v1056, 7
          %v1059 = vshll.u32 %v1053, 16
          %v1061 = vor.u32 %v1058, %v1059
          %v1062 = vrot.slane %v1058, 4
          %v1064 = vshrl.u32 %v1054, 16
          %v1066 = vrot.slane %v1064, 7
          %v1067 = vshll.u32 %v1054, 16
          %v1069 = vor.u32 %v1066, %v1067
          %v1070 = vsel %vm740, %v1062, %v1069
          %v1071 = vrot.slane %v1066, 4
          %v1075 = vld [vmem:[%s528] sm:$0xf]
          %v1076 = vsel %vm903, %v1061, %v1075
          %1077 = vst [vmem:[%s528] sm:$0xf] %v1076
          %1078 = vst.msk [vmem:[%s528 + $0x4] sm:$0xf] %vm523, %v1070
          %v1079 = vld [vmem:[%s528 + $0x8] sm:$0x1]
          %v1080 = vsel %vm534, %v1071, %v1079
          %1081 = vst [vmem:[%s528 + $0x8] sm:$0x1] %v1080
        $region76: #{_lambda_.4} parent=43 // pred_fallthru
          _
        %v1082 = vld [vmem:[#allocation2] sm:$0xf]
        %v1083 = vld [vmem:[#allocation2 + $0x4] sm:$0xf]
        %v1084 = vld [vmem:[#allocation2 + $0xc] sm:$0xf]
        %v1085 = vld [vmem:[#allocation2 + $0x10] sm:$0xf]
        %v1086 = vld [vmem:[#allocation2 + $0x18] sm:$0xf]
        %v1087 = vld [vmem:[#allocation2 + $0x1c] sm:$0xf]
        %v1088 = vld [vmem:[#allocation2 + $0x24] sm:$0xf]
        %v1089 = vld [vmem:[#allocation2 + $0x28] sm:$0xf]
        %v1090 = vld [vmem:[#allocation2 + $0x30] sm:$0xf]
        %v1091 = vld [vmem:[#allocation2 + $0x34] sm:$0xf]
        %v1092 = vld [vmem:[#allocation2 + $0x3c] sm:$0xf]
        %v1093 = vld [vmem:[#allocation2 + $0x40] sm:$0xf]
        %v1094 = vld [vmem:[#allocation2 + $0x48] sm:$0xf]
        %v1095 = vld [vmem:[#allocation2 + $0x4c] sm:$0xf]
        %v1096 = vld [vmem:[#allocation2 + $0x54] sm:$0xf]
        %v1097 = vld [vmem:[#allocation2 + $0x58] sm:$0xf]
        %v1114 = vunpack.c.l.b16 %v1082
        %v1115 = vunpack.c.l.b16 %v1083
        %v1116 = vunpack.c.l.b16 %v1084
        %v1117 = vunpack.c.l.b16 %v1085
        %v1118 = vunpack.c.l.b16 %v1086
        %v1119 = vunpack.c.l.b16 %v1087
        %v1120 = vunpack.c.l.b16 %v1088
        %v1121 = vunpack.c.l.b16 %v1089
        %v1122 = vunpack.c.l.b16 %v1090
        %v1123 = vunpack.c.l.b16 %v1091
        %v1124 = vunpack.c.l.b16 %v1092
        %v1125 = vunpack.c.l.b16 %v1093
        %v1126 = vunpack.c.l.b16 %v1094
        %v1127 = vunpack.c.l.b16 %v1095
        %v1128 = vunpack.c.l.b16 %v1096
        %v1129 = vunpack.c.l.b16 %v1097
        %v1130 = vpack.c.b16 %v1115, %v1114
        %v1131 = vpack.c.b16 %v1117, %v1116
        %v1132 = vpack.c.b16 %v1119, %v1118
        %v1133 = vpack.c.b16 %v1121, %v1120
        %v1134 = vpack.c.b16 %v1123, %v1122
        %v1135 = vpack.c.b16 %v1125, %v1124
        %v1136 = vpack.c.b16 %v1127, %v1126
        %v1137 = vpack.c.b16 %v1129, %v1128
        %vm1146 = vcmask 64512
        %1147 = vst.msk [vmem:[#allocation3] sm:$0xff] %vm1146, %v1130
        %1148 = vst.msk [vmem:[#allocation3 + $0x8] sm:$0xff] %vm1146, %v1131
        %1149 = vst.msk [vmem:[#allocation3 + $0x10] sm:$0xff] %vm1146, %v1132
        %1150 = vst.msk [vmem:[#allocation3 + $0x18] sm:$0xff] %vm1146, %v1133
        %1151 = vst.msk [vmem:[#allocation3 + $0x20] sm:$0xff] %vm1146, %v1134
        %1152 = vst.msk [vmem:[#allocation3 + $0x28] sm:$0xff] %vm1146, %v1135
        %1153 = vst.msk [vmem:[#allocation3 + $0x30] sm:$0xff] %vm1146, %v1136
        %1154 = vst.msk [vmem:[#allocation3 + $0x38] sm:$0xff] %vm1146, %v1137
        %v1155 = vld [vmem:[#allocation2] sm:$0xf]
        %v1156 = vld [vmem:[#allocation2 + $0x4] sm:$0xf]
        %v1157 = vld [vmem:[#allocation2 + $0x8] sm:$0x1]
        %v1158 = vld [vmem:[#allocation2 + $0xc] sm:$0xf]
        %v1159 = vld [vmem:[#allocation2 + $0x10] sm:$0xf]
        %v1160 = vld [vmem:[#allocation2 + $0x14] sm:$0x1]
        %v1161 = vld [vmem:[#allocation2 + $0x18] sm:$0xf]
        %v1162 = vld [vmem:[#allocation2 + $0x1c] sm:$0xf]
        %v1163 = vld [vmem:[#allocation2 + $0x20] sm:$0x1]
        %v1164 = vld [vmem:[#allocation2 + $0x24] sm:$0xf]
        %v1165 = vld [vmem:[#allocation2 + $0x28] sm:$0xf]
        %v1166 = vld [vmem:[#allocation2 + $0x2c] sm:$0x1]
        %v1167 = vld [vmem:[#allocation2 + $0x30] sm:$0xf]
        %v1168 = vld [vmem:[#allocation2 + $0x34] sm:$0xf]
        %v1169 = vld [vmem:[#allocation2 + $0x38] sm:$0x1]
        %v1170 = vld [vmem:[#allocation2 + $0x3c] sm:$0xf]
        %v1171 = vld [vmem:[#allocation2 + $0x40] sm:$0xf]
        %v1172 = vld [vmem:[#allocation2 + $0x44] sm:$0x1]
        %v1173 = vld [vmem:[#allocation2 + $0x48] sm:$0xf]
        %v1174 = vld [vmem:[#allocation2 + $0x4c] sm:$0xf]
        %v1175 = vld [vmem:[#allocation2 + $0x50] sm:$0x1]
        %v1176 = vld [vmem:[#allocation2 + $0x54] sm:$0xf]
        %v1177 = vld [vmem:[#allocation2 + $0x58] sm:$0xf]
        %v1178 = vld [vmem:[#allocation2 + $0x5c] sm:$0x1]
        %vm1179 = vsmask.f32 3328
        %vm1180 = vsmask.f32 7440
        %vm1181 = vmor %vm1179, %vm1180
        %v1183 = vshrl.u32 %v1155, 16
        %v1185 = vrot.slane %v1183, 4
        %v1186 = vshll.u32 %v1155, 16
        %v1188 = vrot.slane %v1186, 5
        %v1189 = vor.u32 %v1185, %v1188
        %v1190 = vrot.slane %v1189, 4
        %v1192 = vshll.u32 %v1156, 16
        %v1194 = vrot.slane %v1192, 5
        %v1195 = vsel %vm1181, %v1190, %v1194
        %v1196 = vshrl.u32 %v1156, 16
        %v1198 = vrot.slane %v1196, 4
        %v1199 = vor.u32 %v1198, %v1194
        %v1200 = vrot.slane %v1199, 4
        %v1202 = vshll.u32 %v1157, 16
        %v1204 = vrot.slane %v1202, 5
        %v1205 = vsel %vm1181, %v1200, %v1204
        %v1207 = vshrl.u32 %v1158, 16
        %v1209 = vrot.slane %v1207, 4
        %v1210 = vshll.u32 %v1158, 16
        %v1212 = vrot.slane %v1210, 5
        %v1213 = vor.u32 %v1209, %v1212
        %v1214 = vrot.slane %v1213, 4
        %v1216 = vshll.u32 %v1159, 16
        %v1218 = vrot.slane %v1216, 5
        %v1219 = vsel %vm1181, %v1214, %v1218
        %v1220 = vshrl.u32 %v1159, 16
        %v1222 = vrot.slane %v1220, 4
        %v1223 = vor.u32 %v1222, %v1218
        %v1224 = vrot.slane %v1223, 4
        %v1226 = vshll.u32 %v1160, 16
        %v1228 = vrot.slane %v1226, 5
        %v1229 = vsel %vm1181, %v1224, %v1228
        %v1231 = vshrl.u32 %v1161, 16
        %v1233 = vrot.slane %v1231, 4
        %v1234 = vshll.u32 %v1161, 16
        %v1236 = vrot.slane %v1234, 5
        %v1237 = vor.u32 %v1233, %v1236
        %v1238 = vrot.slane %v1237, 4
        %v1240 = vshll.u32 %v1162, 16
        %v1242 = vrot.slane %v1240, 5
        %v1243 = vsel %vm1181, %v1238, %v1242
        %v1244 = vshrl.u32 %v1162, 16
        %v1246 = vrot.slane %v1244, 4
        %v1247 = vor.u32 %v1246, %v1242
        %v1248 = vrot.slane %v1247, 4
        %v1250 = vshll.u32 %v1163, 16
        %v1252 = vrot.slane %v1250, 5
        %v1253 = vsel %vm1181, %v1248, %v1252
        %v1255 = vshrl.u32 %v1164, 16
        %v1257 = vrot.slane %v1255, 4
        %v1258 = vshll.u32 %v1164, 16
        %v1260 = vrot.slane %v1258, 5
        %v1261 = vor.u32 %v1257, %v1260
        %v1262 = vrot.slane %v1261, 4
        %v1264 = vshll.u32 %v1165, 16
        %v1266 = vrot.slane %v1264, 5
        %v1267 = vsel %vm1181, %v1262, %v1266
        %v1268 = vshrl.u32 %v1165, 16
        %v1270 = vrot.slane %v1268, 4
        %v1271 = vor.u32 %v1270, %v1266
        %v1272 = vrot.slane %v1271, 4
        %v1274 = vshll.u32 %v1166, 16
        %v1276 = vrot.slane %v1274, 5
        %v1277 = vsel %vm1181, %v1272, %v1276
        %v1279 = vshrl.u32 %v1167, 16
        %v1281 = vrot.slane %v1279, 4
        %v1282 = vshll.u32 %v1167, 16
        %v1284 = vrot.slane %v1282, 5
        %v1285 = vor.u32 %v1281, %v1284
        %v1286 = vrot.slane %v1285, 4
        %v1288 = vshll.u32 %v1168, 16
        %v1290 = vrot.slane %v1288, 5
        %v1291 = vsel %vm1181, %v1286, %v1290
        %v1292 = vshrl.u32 %v1168, 16
        %v1294 = vrot.slane %v1292, 4
        %v1295 = vor.u32 %v1294, %v1290
        %v1296 = vrot.slane %v1295, 4
        %v1298 = vshll.u32 %v1169, 16
        %v1300 = vrot.slane %v1298, 5
        %v1301 = vsel %vm1181, %v1296, %v1300
        %v1303 = vshrl.u32 %v1170, 16
        %v1305 = vrot.slane %v1303, 4
        %v1306 = vshll.u32 %v1170, 16
        %v1308 = vrot.slane %v1306, 5
        %v1309 = vor.u32 %v1305, %v1308
        %v1310 = vrot.slane %v1309, 4
        %v1312 = vshll.u32 %v1171, 16
        %v1314 = vrot.slane %v1312, 5
        %v1315 = vsel %vm1181, %v1310, %v1314
        %v1316 = vshrl.u32 %v1171, 16
        %v1318 = vrot.slane %v1316, 4
        %v1319 = vor.u32 %v1318, %v1314
        %v1320 = vrot.slane %v1319, 4
        %v1322 = vshll.u32 %v1172, 16
        %v1324 = vrot.slane %v1322, 5
        %v1325 = vsel %vm1181, %v1320, %v1324
        %v1327 = vshrl.u32 %v1173, 16
        %v1329 = vrot.slane %v1327, 4
        %v1330 = vshll.u32 %v1173, 16
        %v1332 = vrot.slane %v1330, 5
        %v1333 = vor.u32 %v1329, %v1332
        %v1334 = vrot.slane %v1333, 4
        %v1336 = vshll.u32 %v1174, 16
        %v1338 = vrot.slane %v1336, 5
        %v1339 = vsel %vm1181, %v1334, %v1338
        %v1340 = vshrl.u32 %v1174, 16
        %v1342 = vrot.slane %v1340, 4
        %v1343 = vor.u32 %v1342, %v1338
        %v1344 = vrot.slane %v1343, 4
        %v1346 = vshll.u32 %v1175, 16
        %v1348 = vrot.slane %v1346, 5
        %v1349 = vsel %vm1181, %v1344, %v1348
        %v1351 = vshrl.u32 %v1176, 16
        %v1353 = vrot.slane %v1351, 4
        %v1354 = vshll.u32 %v1176, 16
        %v1356 = vrot.slane %v1354, 5
        %v1357 = vor.u32 %v1353, %v1356
        %v1358 = vrot.slane %v1357, 4
        %v1360 = vshll.u32 %v1177, 16
        %v1362 = vrot.slane %v1360, 5
        %v1363 = vsel %vm1181, %v1358, %v1362
        %v1364 = vshrl.u32 %v1177, 16
        %v1366 = vrot.slane %v1364, 4
        %v1367 = vor.u32 %v1366, %v1362
        %v1368 = vrot.slane %v1367, 4
        %v1370 = vshll.u32 %v1178, 16
        %v1372 = vrot.slane %v1370, 5
        %v1373 = vsel %vm1181, %v1368, %v1372
        %v1374 = vunpack.c.l.b16 %v1195
        %v1375 = vunpack.c.l.b16 %v1205
        %v1376 = vunpack.c.l.b16 %v1219
        %v1377 = vunpack.c.l.b16 %v1229
        %v1378 = vunpack.c.l.b16 %v1243
        %v1379 = vunpack.c.l.b16 %v1253
        %v1380 = vunpack.c.l.b16 %v1267
        %v1381 = vunpack.c.l.b16 %v1277
        %v1382 = vunpack.c.l.b16 %v1291
        %v1383 = vunpack.c.l.b16 %v1301
        %v1384 = vunpack.c.l.b16 %v1315
        %v1385 = vunpack.c.l.b16 %v1325
        %v1386 = vunpack.c.l.b16 %v1339
        %v1387 = vunpack.c.l.b16 %v1349
        %v1388 = vunpack.c.l.b16 %v1363
        %v1389 = vunpack.c.l.b16 %v1373
        %v1390 = vpack.c.b16 %v1375, %v1374
        %v1391 = vpack.c.b16 %v1377, %v1376
        %v1392 = vpack.c.b16 %v1379, %v1378
        %v1393 = vpack.c.b16 %v1381, %v1380
        %v1394 = vpack.c.b16 %v1383, %v1382
        %v1395 = vpack.c.b16 %v1385, %v1384
        %v1396 = vpack.c.b16 %v1387, %v1386
        %v1397 = vpack.c.b16 %v1389, %v1388
        %1398 = vrot.lane.b32.xlu0 %v1390, 8
        %v1399 = vpop.permute.xlu0 %1398
        %1400 = vrot.lane.b32.xlu0 %v1391, 8
        %v1401 = vpop.permute.xlu0 %1400
        %1402 = vrot.lane.b32.xlu0 %v1392, 8
        %v1403 = vpop.permute.xlu0 %1402
        %1404 = vrot.lane.b32.xlu0 %v1393, 8
        %v1405 = vpop.permute.xlu0 %1404
        %1406 = vrot.lane.b32.xlu0 %v1394, 8
        %v1407 = vpop.permute.xlu0 %1406
        %1408 = vrot.lane.b32.xlu0 %v1395, 8
        %v1409 = vpop.permute.xlu0 %1408
        %1410 = vrot.lane.b32.xlu0 %v1396, 8
        %v1411 = vpop.permute.xlu0 %1410
        %1412 = vrot.lane.b32.xlu0 %v1397, 8
        %v1413 = vpop.permute.xlu0 %1412
        %vm1422 = vcmask 130112
        %1423 = vst.msk [vmem:[#allocation3] sm:$0xff] %vm1422, %v1399
        %1424 = vst.msk [vmem:[#allocation3 + $0x8] sm:$0xff] %vm1422, %v1401
        %1425 = vst.msk [vmem:[#allocation3 + $0x10] sm:$0xff] %vm1422, %v1403
        %1426 = vst.msk [vmem:[#allocation3 + $0x18] sm:$0xff] %vm1422, %v1405
        %1427 = vst.msk [vmem:[#allocation3 + $0x20] sm:$0xff] %vm1422, %v1407
        %1428 = vst.msk [vmem:[#allocation3 + $0x28] sm:$0xff] %vm1422, %v1409
        %1429 = vst.msk [vmem:[#allocation3 + $0x30] sm:$0xff] %vm1422, %v1411
        %1430 = vst.msk [vmem:[#allocation3 + $0x38] sm:$0xff] %vm1422, %v1413
        %v1431 = vld [vmem:[#allocation2] sm:$0xe]
        %v1432 = vld [vmem:[#allocation2 + $0x4] sm:$0xf]
        %v1433 = vld [vmem:[#allocation2 + $0x8] sm:$0x1]
        %v1434 = vld [vmem:[#allocation2 + $0xc] sm:$0xe]
        %v1435 = vld [vmem:[#allocation2 + $0x10] sm:$0xf]
        %v1436 = vld [vmem:[#allocation2 + $0x14] sm:$0x1]
        %v1437 = vld [vmem:[#allocation2 + $0x18] sm:$0xe]
        %v1438 = vld [vmem:[#allocation2 + $0x1c] sm:$0xf]
        %v1439 = vld [vmem:[#allocation2 + $0x20] sm:$0x1]
        %v1440 = vld [vmem:[#allocation2 + $0x24] sm:$0xe]
        %v1441 = vld [vmem:[#allocation2 + $0x28] sm:$0xf]
        %v1442 = vld [vmem:[#allocation2 + $0x2c] sm:$0x1]
        %v1443 = vld [vmem:[#allocation2 + $0x30] sm:$0xe]
        %v1444 = vld [vmem:[#allocation2 + $0x34] sm:$0xf]
        %v1445 = vld [vmem:[#allocation2 + $0x38] sm:$0x1]
        %v1446 = vld [vmem:[#allocation2 + $0x3c] sm:$0xe]
        %v1447 = vld [vmem:[#allocation2 + $0x40] sm:$0xf]
        %v1448 = vld [vmem:[#allocation2 + $0x44] sm:$0x1]
        %v1449 = vld [vmem:[#allocation2 + $0x48] sm:$0xe]
        %v1450 = vld [vmem:[#allocation2 + $0x4c] sm:$0xf]
        %v1451 = vld [vmem:[#allocation2 + $0x50] sm:$0x1]
        %v1452 = vld [vmem:[#allocation2 + $0x54] sm:$0xe]
        %v1453 = vld [vmem:[#allocation2 + $0x58] sm:$0xf]
        %v1454 = vld [vmem:[#allocation2 + $0x5c] sm:$0x1]
        %vm1479 = vcmask 1042432
        %vm1480 = vcmask 1046532
        %vm1481 = vmor %vm1479, %vm1480
        %v1482 = vrot.slane %v1431, 5
        %v1483 = vrot.slane %v1482, 4
        %v1484 = vrot.slane %v1432, 5
        %v1485 = vsel %vm1481, %v1483, %v1484
        %v1486 = vrot.slane %v1484, 4
        %v1487 = vrot.slane %v1433, 5
        %v1488 = vsel %vm1481, %v1486, %v1487
        %v1489 = vrot.slane %v1434, 5
        %v1490 = vrot.slane %v1489, 4
        %v1491 = vrot.slane %v1435, 5
        %v1492 = vsel %vm1481, %v1490, %v1491
        %v1493 = vrot.slane %v1491, 4
        %v1494 = vrot.slane %v1436, 5
        %v1495 = vsel %vm1481, %v1493, %v1494
        %v1496 = vrot.slane %v1437, 5
        %v1497 = vrot.slane %v1496, 4
        %v1498 = vrot.slane %v1438, 5
        %v1499 = vsel %vm1481, %v1497, %v1498
        %v1500 = vrot.slane %v1498, 4
        %v1501 = vrot.slane %v1439, 5
        %v1502 = vsel %vm1481, %v1500, %v1501
        %v1503 = vrot.slane %v1440, 5
        %v1504 = vrot.slane %v1503, 4
        %v1505 = vrot.slane %v1441, 5
        %v1506 = vsel %vm1481, %v1504, %v1505
        %v1507 = vrot.slane %v1505, 4
        %v1508 = vrot.slane %v1442, 5
        %v1509 = vsel %vm1481, %v1507, %v1508
        %v1510 = vrot.slane %v1443, 5
        %v1511 = vrot.slane %v1510, 4
        %v1512 = vrot.slane %v1444, 5
        %v1513 = vsel %vm1481, %v1511, %v1512
        %v1514 = vrot.slane %v1512, 4
        %v1515 = vrot.slane %v1445, 5
        %v1516 = vsel %vm1481, %v1514, %v1515
        %v1517 = vrot.slane %v1446, 5
        %v1518 = vrot.slane %v1517, 4
        %v1519 = vrot.slane %v1447, 5
        %v1520 = vsel %vm1481, %v1518, %v1519
        %v1521 = vrot.slane %v1519, 4
        %v1522 = vrot.slane %v1448, 5
        %v1523 = vsel %vm1481, %v1521, %v1522
        %v1524 = vrot.slane %v1449, 5
        %v1525 = vrot.slane %v1524, 4
        %v1526 = vrot.slane %v1450, 5
        %v1527 = vsel %vm1481, %v1525, %v1526
        %v1528 = vrot.slane %v1526, 4
        %v1529 = vrot.slane %v1451, 5
        %v1530 = vsel %vm1481, %v1528, %v1529
        %v1531 = vrot.slane %v1452, 5
        %v1532 = vrot.slane %v1531, 4
        %v1533 = vrot.slane %v1453, 5
        %v1534 = vsel %vm1481, %v1532, %v1533
        %v1535 = vrot.slane %v1533, 4
        %v1536 = vrot.slane %v1454, 5
        %v1537 = vsel %vm1481, %v1535, %v1536
        %v1538 = vunpack.c.l.b16 %v1485
        %v1539 = vunpack.c.l.b16 %v1488
        %v1540 = vunpack.c.l.b16 %v1492
        %v1541 = vunpack.c.l.b16 %v1495
        %v1542 = vunpack.c.l.b16 %v1499
        %v1543 = vunpack.c.l.b16 %v1502
        %v1544 = vunpack.c.l.b16 %v1506
        %v1545 = vunpack.c.l.b16 %v1509
        %v1546 = vunpack.c.l.b16 %v1513
        %v1547 = vunpack.c.l.b16 %v1516
        %v1548 = vunpack.c.l.b16 %v1520
        %v1549 = vunpack.c.l.b16 %v1523
        %v1550 = vunpack.c.l.b16 %v1527
        %v1551 = vunpack.c.l.b16 %v1530
        %v1552 = vunpack.c.l.b16 %v1534
        %v1553 = vunpack.c.l.b16 %v1537
        %v1554 = vpack.c.b16 %v1539, %v1538
        %v1555 = vpack.c.b16 %v1541, %v1540
        %v1556 = vpack.c.b16 %v1543, %v1542
        %v1557 = vpack.c.b16 %v1545, %v1544
        %v1558 = vpack.c.b16 %v1547, %v1546
        %v1559 = vpack.c.b16 %v1549, %v1548
        %v1560 = vpack.c.b16 %v1551, %v1550
        %v1561 = vpack.c.b16 %v1553, %v1552
        %1562 = vrot.lane.b32.xlu0 %v1554, 16
        %v1563 = vpop.permute.xlu0 %1562
        %1564 = vrot.lane.b32.xlu0 %v1555, 16
        %v1565 = vpop.permute.xlu0 %1564
        %1566 = vrot.lane.b32.xlu0 %v1556, 16
        %v1567 = vpop.permute.xlu0 %1566
        %1568 = vrot.lane.b32.xlu0 %v1557, 16
        %v1569 = vpop.permute.xlu0 %1568
        %1570 = vrot.lane.b32.xlu0 %v1558, 16
        %v1571 = vpop.permute.xlu0 %1570
        %1572 = vrot.lane.b32.xlu0 %v1559, 16
        %v1573 = vpop.permute.xlu0 %1572
        %1574 = vrot.lane.b32.xlu0 %v1560, 16
        %v1575 = vpop.permute.xlu0 %1574
        %1576 = vrot.lane.b32.xlu0 %v1561, 16
        %v1577 = vpop.permute.xlu0 %1576
        %vm1586 = vcmask 195712
        %1587 = vst.msk [vmem:[#allocation3] sm:$0xff] %vm1586, %v1563
        %1588 = vst.msk [vmem:[#allocation3 + $0x8] sm:$0xff] %vm1586, %v1565
        %1589 = vst.msk [vmem:[#allocation3 + $0x10] sm:$0xff] %vm1586, %v1567
        %1590 = vst.msk [vmem:[#allocation3 + $0x18] sm:$0xff] %vm1586, %v1569
        %1591 = vst.msk [vmem:[#allocation3 + $0x20] sm:$0xff] %vm1586, %v1571
        %1592 = vst.msk [vmem:[#allocation3 + $0x28] sm:$0xff] %vm1586, %v1573
        %1593 = vst.msk [vmem:[#allocation3 + $0x30] sm:$0xff] %vm1586, %v1575
        %1594 = vst.msk [vmem:[#allocation3 + $0x38] sm:$0xff] %vm1586, %v1577
        %v1595 = vld [vmem:[#allocation3] sm:$0xff]
        %v1596 = vld [vmem:[#allocation3 + $0x8] sm:$0xff]
        %v1597 = vld [vmem:[#allocation3 + $0x10] sm:$0xff]
        %v1598 = vld [vmem:[#allocation3 + $0x18] sm:$0xff]
        %v1599 = vld [vmem:[#allocation3 + $0x20] sm:$0xff]
        %v1600 = vld [vmem:[#allocation3 + $0x28] sm:$0xff]
        %v1601 = vld [vmem:[#allocation3 + $0x30] sm:$0xff]
        %v1602 = vld [vmem:[#allocation3 + $0x38] sm:$0xff]
        %v1603 = vld [vmem:[#allocation10] sm:$0xf]
        %v1604 = vld [vmem:[#allocation10 + $0x4] sm:$0xf]
        %v1605 = vld [vmem:[#allocation10 + $0x8] sm:$0xf]
        %v1606 = vld [vmem:[%s901] sm:$0xf]
        %v1607 = vld [vmem:[%s901 + $0x4] sm:$0xf]
        %v1608 = vld [vmem:[%s901 + $0xc] sm:$0xf]
        %v1609 = vld [vmem:[%s901 + $0x10] sm:$0xf]
        %v1610 = vld [vmem:[%s901 + $0x18] sm:$0xf]
        %v1611 = vld [vmem:[%s901 + $0x1c] sm:$0xf]
        %v1612 = vld [vmem:[%s901 + $0x24] sm:$0xf]
        %v1613 = vld [vmem:[%s901 + $0x28] sm:$0xf]
        %v1614 = vld [vmem:[%s901 + $0x30] sm:$0xf]
        %v1615 = vld [vmem:[%s901 + $0x34] sm:$0xf]
        %v1616 = vld [vmem:[%s901 + $0x3c] sm:$0xf]
        %v1617 = vld [vmem:[%s901 + $0x40] sm:$0xf]
        %v1618 = vld [vmem:[%s901 + $0x48] sm:$0xf]
        %v1619 = vld [vmem:[%s901 + $0x4c] sm:$0xf]
        %v1620 = vld [vmem:[%s901 + $0x54] sm:$0xf]
        %v1621 = vld [vmem:[%s901 + $0x58] sm:$0xf]
        %v1638 = vunpack.c.l.b16 %v1606
        %v1639 = vunpack.c.l.b16 %v1607
        %v1640 = vunpack.c.l.b16 %v1608
        %v1641 = vunpack.c.l.b16 %v1609
        %v1642 = vunpack.c.l.b16 %v1610
        %v1643 = vunpack.c.l.b16 %v1611
        %v1644 = vunpack.c.l.b16 %v1612
        %v1645 = vunpack.c.l.b16 %v1613
        %v1646 = vunpack.c.l.b16 %v1614
        %v1647 = vunpack.c.l.b16 %v1615
        %v1648 = vunpack.c.l.b16 %v1616
        %v1649 = vunpack.c.l.b16 %v1617
        %v1650 = vunpack.c.l.b16 %v1618
        %v1651 = vunpack.c.l.b16 %v1619
        %v1652 = vunpack.c.l.b16 %v1620
        %v1653 = vunpack.c.l.b16 %v1621
        %v1654 = vpack.c.b16 %v1639, %v1638
        %v1655 = vpack.c.b16 %v1641, %v1640
        %v1656 = vpack.c.b16 %v1643, %v1642
        %v1657 = vpack.c.b16 %v1645, %v1644
        %v1658 = vpack.c.b16 %v1647, %v1646
        %v1659 = vpack.c.b16 %v1649, %v1648
        %v1660 = vpack.c.b16 %v1651, %v1650
        %v1661 = vpack.c.b16 %v1653, %v1652
        %1670 = vst.msk [vmem:[#allocation3] sm:$0xff] %vm1146, %v1654
        %1671 = vst.msk [vmem:[#allocation3 + $0x8] sm:$0xff] %vm1146, %v1655
        %1672 = vst.msk [vmem:[#allocation3 + $0x10] sm:$0xff] %vm1146, %v1656
        %1673 = vst.msk [vmem:[#allocation3 + $0x18] sm:$0xff] %vm1146, %v1657
        %1674 = vst.msk [vmem:[#allocation3 + $0x20] sm:$0xff] %vm1146, %v1658
        %1675 = vst.msk [vmem:[#allocation3 + $0x28] sm:$0xff] %vm1146, %v1659
        %1676 = vst.msk [vmem:[#allocation3 + $0x30] sm:$0xff] %vm1146, %v1660
        %1677 = vst.msk [vmem:[#allocation3 + $0x38] sm:$0xff] %vm1146, %v1661
        %v1678 = vld [vmem:[%s901] sm:$0xf]
        %v1679 = vld [vmem:[%s901 + $0x4] sm:$0xf]
        %v1680 = vld [vmem:[%s901 + $0x8] sm:$0x1]
        %v1681 = vld [vmem:[%s901 + $0xc] sm:$0xf]
        %v1682 = vld [vmem:[%s901 + $0x10] sm:$0xf]
        %v1683 = vld [vmem:[%s901 + $0x14] sm:$0x1]
        %v1684 = vld [vmem:[%s901 + $0x18] sm:$0xf]
        %v1685 = vld [vmem:[%s901 + $0x1c] sm:$0xf]
        %v1686 = vld [vmem:[%s901 + $0x20] sm:$0x1]
        %v1687 = vld [vmem:[%s901 + $0x24] sm:$0xf]
        %v1688 = vld [vmem:[%s901 + $0x28] sm:$0xf]
        %v1689 = vld [vmem:[%s901 + $0x2c] sm:$0x1]
        %v1690 = vld [vmem:[%s901 + $0x30] sm:$0xf]
        %v1691 = vld [vmem:[%s901 + $0x34] sm:$0xf]
        %v1692 = vld [vmem:[%s901 + $0x38] sm:$0x1]
        %v1693 = vld [vmem:[%s901 + $0x3c] sm:$0xf]
        %v1694 = vld [vmem:[%s901 + $0x40] sm:$0xf]
        %v1695 = vld [vmem:[%s901 + $0x44] sm:$0x1]
        %v1696 = vld [vmem:[%s901 + $0x48] sm:$0xf]
        %v1697 = vld [vmem:[%s901 + $0x4c] sm:$0xf]
        %v1698 = vld [vmem:[%s901 + $0x50] sm:$0x1]
        %v1699 = vld [vmem:[%s901 + $0x54] sm:$0xf]
        %v1700 = vld [vmem:[%s901 + $0x58] sm:$0xf]
        %v1701 = vld [vmem:[%s901 + $0x5c] sm:$0x1]
        %v1703 = vshrl.u32 %v1678, 16
        %v1705 = vrot.slane %v1703, 4
        %v1706 = vshll.u32 %v1678, 16
        %v1708 = vrot.slane %v1706, 5
        %v1709 = vor.u32 %v1705, %v1708
        %v1710 = vrot.slane %v1709, 4
        %v1712 = vshll.u32 %v1679, 16
        %v1714 = vrot.slane %v1712, 5
        %v1715 = vsel %vm1181, %v1710, %v1714
        %v1716 = vshrl.u32 %v1679, 16
        %v1718 = vrot.slane %v1716, 4
        %v1719 = vor.u32 %v1718, %v1714
        %v1720 = vrot.slane %v1719, 4
        %v1722 = vshll.u32 %v1680, 16
        %v1724 = vrot.slane %v1722, 5
        %v1725 = vsel %vm1181, %v1720, %v1724
        %v1727 = vshrl.u32 %v1681, 16
        %v1729 = vrot.slane %v1727, 4
        %v1730 = vshll.u32 %v1681, 16
        %v1732 = vrot.slane %v1730, 5
        %v1733 = vor.u32 %v1729, %v1732
        %v1734 = vrot.slane %v1733, 4
        %v1736 = vshll.u32 %v1682, 16
        %v1738 = vrot.slane %v1736, 5
        %v1739 = vsel %vm1181, %v1734, %v1738
        %v1740 = vshrl.u32 %v1682, 16
        %v1742 = vrot.slane %v1740, 4
        %v1743 = vor.u32 %v1742, %v1738
        %v1744 = vrot.slane %v1743, 4
        %v1746 = vshll.u32 %v1683, 16
        %v1748 = vrot.slane %v1746, 5
        %v1749 = vsel %vm1181, %v1744, %v1748
        %v1751 = vshrl.u32 %v1684, 16
        %v1753 = vrot.slane %v1751, 4
        %v1754 = vshll.u32 %v1684, 16
        %v1756 = vrot.slane %v1754, 5
        %v1757 = vor.u32 %v1753, %v1756
        %v1758 = vrot.slane %v1757, 4
        %v1760 = vshll.u32 %v1685, 16
        %v1762 = vrot.slane %v1760, 5
        %v1763 = vsel %vm1181, %v1758, %v1762
        %v1764 = vshrl.u32 %v1685, 16
        %v1766 = vrot.slane %v1764, 4
        %v1767 = vor.u32 %v1766, %v1762
        %v1768 = vrot.slane %v1767, 4
        %v1770 = vshll.u32 %v1686, 16
        %v1772 = vrot.slane %v1770, 5
        %v1773 = vsel %vm1181, %v1768, %v1772
        %v1775 = vshrl.u32 %v1687, 16
        %v1777 = vrot.slane %v1775, 4
        %v1778 = vshll.u32 %v1687, 16
        %v1780 = vrot.slane %v1778, 5
        %v1781 = vor.u32 %v1777, %v1780
        %v1782 = vrot.slane %v1781, 4
        %v1784 = vshll.u32 %v1688, 16
        %v1786 = vrot.slane %v1784, 5
        %v1787 = vsel %vm1181, %v1782, %v1786
        %v1788 = vshrl.u32 %v1688, 16
        %v1790 = vrot.slane %v1788, 4
        %v1791 = vor.u32 %v1790, %v1786
        %v1792 = vrot.slane %v1791, 4
        %v1794 = vshll.u32 %v1689, 16
        %v1796 = vrot.slane %v1794, 5
        %v1797 = vsel %vm1181, %v1792, %v1796
        %v1799 = vshrl.u32 %v1690, 16
        %v1801 = vrot.slane %v1799, 4
        %v1802 = vshll.u32 %v1690, 16
        %v1804 = vrot.slane %v1802, 5
        %v1805 = vor.u32 %v1801, %v1804
        %v1806 = vrot.slane %v1805, 4
        %v1808 = vshll.u32 %v1691, 16
        %v1810 = vrot.slane %v1808, 5
        %v1811 = vsel %vm1181, %v1806, %v1810
        %v1812 = vshrl.u32 %v1691, 16
        %v1814 = vrot.slane %v1812, 4
        %v1815 = vor.u32 %v1814, %v1810
        %v1816 = vrot.slane %v1815, 4
        %v1818 = vshll.u32 %v1692, 16
        %v1820 = vrot.slane %v1818, 5
        %v1821 = vsel %vm1181, %v1816, %v1820
        %v1823 = vshrl.u32 %v1693, 16
        %v1825 = vrot.slane %v1823, 4
        %v1826 = vshll.u32 %v1693, 16
        %v1828 = vrot.slane %v1826, 5
        %v1829 = vor.u32 %v1825, %v1828
        %v1830 = vrot.slane %v1829, 4
        %v1832 = vshll.u32 %v1694, 16
        %v1834 = vrot.slane %v1832, 5
        %v1835 = vsel %vm1181, %v1830, %v1834
        %v1836 = vshrl.u32 %v1694, 16
        %v1838 = vrot.slane %v1836, 4
        %v1839 = vor.u32 %v1838, %v1834
        %v1840 = vrot.slane %v1839, 4
        %v1842 = vshll.u32 %v1695, 16
        %v1844 = vrot.slane %v1842, 5
        %v1845 = vsel %vm1181, %v1840, %v1844
        %v1847 = vshrl.u32 %v1696, 16
        %v1849 = vrot.slane %v1847, 4
        %v1850 = vshll.u32 %v1696, 16
        %v1852 = vrot.slane %v1850, 5
        %v1853 = vor.u32 %v1849, %v1852
        %v1854 = vrot.slane %v1853, 4
        %v1856 = vshll.u32 %v1697, 16
        %v1858 = vrot.slane %v1856, 5
        %v1859 = vsel %vm1181, %v1854, %v1858
        %v1860 = vshrl.u32 %v1697, 16
        %v1862 = vrot.slane %v1860, 4
        %v1863 = vor.u32 %v1862, %v1858
        %v1864 = vrot.slane %v1863, 4
        %v1866 = vshll.u32 %v1698, 16
        %v1868 = vrot.slane %v1866, 5
        %v1869 = vsel %vm1181, %v1864, %v1868
        %v1871 = vshrl.u32 %v1699, 16
        %v1873 = vrot.slane %v1871, 4
        %v1874 = vshll.u32 %v1699, 16
        %v1876 = vrot.slane %v1874, 5
        %v1877 = vor.u32 %v1873, %v1876
        %v1878 = vrot.slane %v1877, 4
        %v1880 = vshll.u32 %v1700, 16
        %v1882 = vrot.slane %v1880, 5
        %v1883 = vsel %vm1181, %v1878, %v1882
        %v1884 = vshrl.u32 %v1700, 16
        %v1886 = vrot.slane %v1884, 4
        %v1887 = vor.u32 %v1886, %v1882
        %v1888 = vrot.slane %v1887, 4
        %v1890 = vshll.u32 %v1701, 16
        %v1892 = vrot.slane %v1890, 5
        %v1893 = vsel %vm1181, %v1888, %v1892
        %v1894 = vunpack.c.l.b16 %v1715
        %v1895 = vunpack.c.l.b16 %v1725
        %v1896 = vunpack.c.l.b16 %v1739
        %v1897 = vunpack.c.l.b16 %v1749
        %v1898 = vunpack.c.l.b16 %v1763
        %v1899 = vunpack.c.l.b16 %v1773
        %v1900 = vunpack.c.l.b16 %v1787
        %v1901 = vunpack.c.l.b16 %v1797
        %v1902 = vunpack.c.l.b16 %v1811
        %v1903 = vunpack.c.l.b16 %v1821
        %v1904 = vunpack.c.l.b16 %v1835
        %v1905 = vunpack.c.l.b16 %v1845
        %v1906 = vunpack.c.l.b16 %v1859
        %v1907 = vunpack.c.l.b16 %v1869
        %v1908 = vunpack.c.l.b16 %v1883
        %v1909 = vunpack.c.l.b16 %v1893
        %v1910 = vpack.c.b16 %v1895, %v1894
        %v1911 = vpack.c.b16 %v1897, %v1896
        %v1912 = vpack.c.b16 %v1899, %v1898
        %v1913 = vpack.c.b16 %v1901, %v1900
        %v1914 = vpack.c.b16 %v1903, %v1902
        %v1915 = vpack.c.b16 %v1905, %v1904
        %v1916 = vpack.c.b16 %v1907, %v1906
        %v1917 = vpack.c.b16 %v1909, %v1908
        %1918 = vrot.lane.b32.xlu0 %v1910, 8
        %v1919 = vpop.permute.xlu0 %1918
        %1920 = vrot.lane.b32.xlu0 %v1911, 8
        %v1921 = vpop.permute.xlu0 %1920
        %1922 = vrot.lane.b32.xlu0 %v1912, 8
        %v1923 = vpop.permute.xlu0 %1922
        %1924 = vrot.lane.b32.xlu0 %v1913, 8
        %v1925 = vpop.permute.xlu0 %1924
        %1926 = vrot.lane.b32.xlu0 %v1914, 8
        %v1927 = vpop.permute.xlu0 %1926
        %1928 = vrot.lane.b32.xlu0 %v1915, 8
        %v1929 = vpop.permute.xlu0 %1928
        %1930 = vrot.lane.b32.xlu0 %v1916, 8
        %v1931 = vpop.permute.xlu0 %1930
        %1932 = vrot.lane.b32.xlu0 %v1917, 8
        %v1933 = vpop.permute.xlu0 %1932
        %1942 = vst.msk [vmem:[#allocation3] sm:$0xff] %vm1422, %v1919
        %1943 = vst.msk [vmem:[#allocation3 + $0x8] sm:$0xff] %vm1422, %v1921
        %1944 = vst.msk [vmem:[#allocation3 + $0x10] sm:$0xff] %vm1422, %v1923
        %1945 = vst.msk [vmem:[#allocation3 + $0x18] sm:$0xff] %vm1422, %v1925
        %1946 = vst.msk [vmem:[#allocation3 + $0x20] sm:$0xff] %vm1422, %v1927
        %1947 = vst.msk [vmem:[#allocation3 + $0x28] sm:$0xff] %vm1422, %v1929
        %1948 = vst.msk [vmem:[#allocation3 + $0x30] sm:$0xff] %vm1422, %v1931
        %1949 = vst.msk [vmem:[#allocation3 + $0x38] sm:$0xff] %vm1422, %v1933
        %v1950 = vld [vmem:[%s901] sm:$0xe]
        %v1951 = vld [vmem:[%s901 + $0x4] sm:$0xf]
        %v1952 = vld [vmem:[%s901 + $0x8] sm:$0x1]
        %v1953 = vld [vmem:[%s901 + $0xc] sm:$0xe]
        %v1954 = vld [vmem:[%s901 + $0x10] sm:$0xf]
        %v1955 = vld [vmem:[%s901 + $0x14] sm:$0x1]
        %v1956 = vld [vmem:[%s901 + $0x18] sm:$0xe]
        %v1957 = vld [vmem:[%s901 + $0x1c] sm:$0xf]
        %v1958 = vld [vmem:[%s901 + $0x20] sm:$0x1]
        %v1959 = vld [vmem:[%s901 + $0x24] sm:$0xe]
        %v1960 = vld [vmem:[%s901 + $0x28] sm:$0xf]
        %v1961 = vld [vmem:[%s901 + $0x2c] sm:$0x1]
        %v1962 = vld [vmem:[%s901 + $0x30] sm:$0xe]
        %v1963 = vld [vmem:[%s901 + $0x34] sm:$0xf]
        %v1964 = vld [vmem:[%s901 + $0x38] sm:$0x1]
        %v1965 = vld [vmem:[%s901 + $0x3c] sm:$0xe]
        %v1966 = vld [vmem:[%s901 + $0x40] sm:$0xf]
        %v1967 = vld [vmem:[%s901 + $0x44] sm:$0x1]
        %v1968 = vld [vmem:[%s901 + $0x48] sm:$0xe]
        %v1969 = vld [vmem:[%s901 + $0x4c] sm:$0xf]
        %v1970 = vld [vmem:[%s901 + $0x50] sm:$0x1]
        %v1971 = vld [vmem:[%s901 + $0x54] sm:$0xe]
        %v1972 = vld [vmem:[%s901 + $0x58] sm:$0xf]
        %v1973 = vld [vmem:[%s901 + $0x5c] sm:$0x1]
        %v1998 = vrot.slane %v1950, 5
        %v1999 = vrot.slane %v1998, 4
        %v2000 = vrot.slane %v1951, 5
        %v2001 = vsel %vm1481, %v1999, %v2000
        %v2002 = vrot.slane %v2000, 4
        %v2003 = vrot.slane %v1952, 5
        %v2004 = vsel %vm1481, %v2002, %v2003
        %v2005 = vrot.slane %v1953, 5
        %v2006 = vrot.slane %v2005, 4
        %v2007 = vrot.slane %v1954, 5
        %v2008 = vsel %vm1481, %v2006, %v2007
        %v2009 = vrot.slane %v2007, 4
        %v2010 = vrot.slane %v1955, 5
        %v2011 = vsel %vm1481, %v2009, %v2010
        %v2012 = vrot.slane %v1956, 5
        %v2013 = vrot.slane %v2012, 4
        %v2014 = vrot.slane %v1957, 5
        %v2015 = vsel %vm1481, %v2013, %v2014
        %v2016 = vrot.slane %v2014, 4
        %v2017 = vrot.slane %v1958, 5
        %v2018 = vsel %vm1481, %v2016, %v2017
        %v2019 = vrot.slane %v1959, 5
        %v2020 = vrot.slane %v2019, 4
        %v2021 = vrot.slane %v1960, 5
        %v2022 = vsel %vm1481, %v2020, %v2021
        %v2023 = vrot.slane %v2021, 4
        %v2024 = vrot.slane %v1961, 5
        %v2025 = vsel %vm1481, %v2023, %v2024
        %v2026 = vrot.slane %v1962, 5
        %v2027 = vrot.slane %v2026, 4
        %v2028 = vrot.slane %v1963, 5
        %v2029 = vsel %vm1481, %v2027, %v2028
        %v2030 = vrot.slane %v2028, 4
        %v2031 = vrot.slane %v1964, 5
        %v2032 = vsel %vm1481, %v2030, %v2031
        %v2033 = vrot.slane %v1965, 5
        %v2034 = vrot.slane %v2033, 4
        %v2035 = vrot.slane %v1966, 5
        %v2036 = vsel %vm1481, %v2034, %v2035
        %v2037 = vrot.slane %v2035, 4
        %v2038 = vrot.slane %v1967, 5
        %v2039 = vsel %vm1481, %v2037, %v2038
        %v2040 = vrot.slane %v1968, 5
        %v2041 = vrot.slane %v2040, 4
        %v2042 = vrot.slane %v1969, 5
        %v2043 = vsel %vm1481, %v2041, %v2042
        %v2044 = vrot.slane %v2042, 4
        %v2045 = vrot.slane %v1970, 5
        %v2046 = vsel %vm1481, %v2044, %v2045
        %v2047 = vrot.slane %v1971, 5
        %v2048 = vrot.slane %v2047, 4
        %v2049 = vrot.slane %v1972, 5
        %v2050 = vsel %vm1481, %v2048, %v2049
        %v2051 = vrot.slane %v2049, 4
        %v2052 = vrot.slane %v1973, 5
        %v2053 = vsel %vm1481, %v2051, %v2052
        %v2054 = vunpack.c.l.b16 %v2001
        %v2055 = vunpack.c.l.b16 %v2004
        %v2056 = vunpack.c.l.b16 %v2008
        %v2057 = vunpack.c.l.b16 %v2011
        %v2058 = vunpack.c.l.b16 %v2015
        %v2059 = vunpack.c.l.b16 %v2018
        %v2060 = vunpack.c.l.b16 %v2022
        %v2061 = vunpack.c.l.b16 %v2025
        %v2062 = vunpack.c.l.b16 %v2029
        %v2063 = vunpack.c.l.b16 %v2032
        %v2064 = vunpack.c.l.b16 %v2036
        %v2065 = vunpack.c.l.b16 %v2039
        %v2066 = vunpack.c.l.b16 %v2043
        %v2067 = vunpack.c.l.b16 %v2046
        %v2068 = vunpack.c.l.b16 %v2050
        %v2069 = vunpack.c.l.b16 %v2053
        %v2070 = vpack.c.b16 %v2055, %v2054
        %v2071 = vpack.c.b16 %v2057, %v2056
        %v2072 = vpack.c.b16 %v2059, %v2058
        %v2073 = vpack.c.b16 %v2061, %v2060
        %v2074 = vpack.c.b16 %v2063, %v2062
        %v2075 = vpack.c.b16 %v2065, %v2064
        %v2076 = vpack.c.b16 %v2067, %v2066
        %v2077 = vpack.c.b16 %v2069, %v2068
        %2078 = vrot.lane.b32.xlu0 %v2070, 16
        %v2079 = vpop.permute.xlu0 %2078
        %2080 = vrot.lane.b32.xlu0 %v2071, 16
        %v2081 = vpop.permute.xlu0 %2080
        %2082 = vrot.lane.b32.xlu0 %v2072, 16
        %v2083 = vpop.permute.xlu0 %2082
        %2084 = vrot.lane.b32.xlu0 %v2073, 16
        %v2085 = vpop.permute.xlu0 %2084
        %2086 = vrot.lane.b32.xlu0 %v2074, 16
        %v2087 = vpop.permute.xlu0 %2086
        %2088 = vrot.lane.b32.xlu0 %v2075, 16
        %v2089 = vpop.permute.xlu0 %2088
        %2090 = vrot.lane.b32.xlu0 %v2076, 16
        %v2091 = vpop.permute.xlu0 %2090
        %2092 = vrot.lane.b32.xlu0 %v2077, 16
        %v2093 = vpop.permute.xlu0 %2092
        %2102 = vst.msk [vmem:[#allocation3] sm:$0xff] %vm1586, %v2079
        %2103 = vst.msk [vmem:[#allocation3 + $0x8] sm:$0xff] %vm1586, %v2081
        %2104 = vst.msk [vmem:[#allocation3 + $0x10] sm:$0xff] %vm1586, %v2083
        %2105 = vst.msk [vmem:[#allocation3 + $0x18] sm:$0xff] %vm1586, %v2085
        %2106 = vst.msk [vmem:[#allocation3 + $0x20] sm:$0xff] %vm1586, %v2087
        %2107 = vst.msk [vmem:[#allocation3 + $0x28] sm:$0xff] %vm1586, %v2089
        %2108 = vst.msk [vmem:[#allocation3 + $0x30] sm:$0xff] %vm1586, %v2091
        %2109 = vst.msk [vmem:[#allocation3 + $0x38] sm:$0xff] %vm1586, %v2093
        %v2110 = vld [vmem:[#allocation3] sm:$0xff]
        %v2111 = vld [vmem:[#allocation3 + $0x8] sm:$0xff]
        %v2112 = vld [vmem:[#allocation3 + $0x10] sm:$0xff]
        %v2113 = vld [vmem:[#allocation3 + $0x18] sm:$0xff]
        %v2114 = vld [vmem:[#allocation3 + $0x20] sm:$0xff]
        %v2115 = vld [vmem:[#allocation3 + $0x28] sm:$0xff]
        %v2116 = vld [vmem:[#allocation3 + $0x30] sm:$0xff]
        %v2117 = vld [vmem:[#allocation3 + $0x38] sm:$0xff]
        %s2118 = scalar_lea.vmem [#allocation10], 12
        %v2119 = vld [vmem:[%s2118] sm:$0xf]
        %v2120 = vld [vmem:[%s2118 + $0x4] sm:$0xf]
        %v2121 = vld [vmem:[%s2118 + $0x8] sm:$0xf]
        %v2125 = vunpack.c.l.b16 %v2119
        %v2126 = vunpack.c.l.b16 %v2120
        %v2127 = vunpack.c.l.b16 %v2121
        %v2128 = vpack.c.b16 %v2126, %v2125
        %v2129 = vpack.c.b16 %v2127, %v2127
        %vm2131 = vcmask 195584
        %v2133 = vsel %vm2131, %v2110, 0
        %v2136 = vsel %vm2131, %v2111, 0
        %v2139 = vsel %vm2131, %v2112, 0
        %v2142 = vsel %vm2131, %v2113, 0
        %v2145 = vsel %vm2131, %v2114, 0
        %v2148 = vsel %vm2131, %v2115, 0
        %v2151 = vsel %vm2131, %v2116, 0
        %v2154 = vsel %vm2131, %v2117, 0
        %vm2156 = vcmask 1043456
        %v2158 = vsel %vm2156, %v2129, 0
        %2160 = vmatprep.subr.bf16.mxu0 0
        %2161 = vmatpush1.bf16.msra.mxu0 %v2128
        %2162 = vmatprep.subr.bf16.mxu0 0
        %2163 = vmatpush1.bf16.msra.mxu0 %v2158
        %2164 = vmatprep.subr.bf16.mxu0 0
        %2165 = vmatpush1.bf16.msra.mxu0 0
        %2166 = vmatprep.subr.bf16.mxu0 0
        %2167 = vmatpush1.bf16.msra.mxu0 0
        %2168 = vmatprep.subr.bf16.mxu0 0
        %2169 = vmatpush1.bf16.msra.mxu0 0
        %2170 = vmatprep.subr.bf16.mxu0 0
        %2171 = vmatpush1.bf16.msra.mxu0 0
        %2172 = vmatprep.subr.bf16.mxu0 0
        %2173 = vmatpush1.bf16.msra.mxu0 0
        %2174 = vmatprep.subr.bf16.mxu0 0
        %2175 = vmatpush1.bf16.msra.mxu0 0
        %2176 = vmatprep.subr.bf16.mxu0 0
        %2177 = vmatpush1.bf16.msra.mxu0 0
        %2178 = vmatprep.subr.bf16.mxu0 0
        %2179 = vmatpush1.bf16.msra.mxu0 0
        %2180 = vmatprep.subr.bf16.mxu0 0
        %2181 = vmatpush1.bf16.msra.mxu0 0
        %2182 = vmatprep.subr.bf16.mxu0 0
        %2183 = vmatpush1.bf16.msra.mxu0 0
        %2184 = vmatprep.subr.bf16.mxu0 0
        %2185 = vmatpush1.bf16.msra.mxu0 0
        %2186 = vmatprep.subr.bf16.mxu0 0
        %2187 = vmatpush1.bf16.msra.mxu0 0
        %2188 = vmatprep.subr.bf16.mxu0 0
        %2189 = vmatpush1.bf16.msra.mxu0 0
        %2190 = vmatprep.subr.bf16.mxu0 0
        %2191 = vmatpush1.bf16.msra.mxu0 0
        %2192 = vmatprep.mubr.bf16.mxu0 0
        %2193 = vmatmul.mubr.bf16.gmra.mrb[0].mxu0 %v2133
        %v2194 = vpop.f32.mrb[0].mxu0
        %v2195 = vadd.f32 0.0, %v2194
        %v2196 = vpop.f32.mrb[0].mxu0
        %v2197 = vpop.f32.mrb[0].mxu0
        %v2198 = vadd.f32 0.0, %v2197
        %v2199 = vpop.f32.mrb[0].mxu0
        %2200 = vmatprep.mubr.bf16.mxu0 0
        %2201 = vmatmul.mubr.bf16.gmra.mrb[0].mxu0 %v2136
        %v2202 = vpop.f32.mrb[0].mxu0
        %v2203 = vadd.f32 0.0, %v2202
        %v2204 = vpop.f32.mrb[0].mxu0
        %v2205 = vpop.f32.mrb[0].mxu0
        %v2206 = vadd.f32 0.0, %v2205
        %v2207 = vpop.f32.mrb[0].mxu0
        %2208 = vmatprep.mubr.bf16.mxu0 0
        %2209 = vmatmul.mubr.bf16.gmra.mrb[0].mxu0 %v2139
        %v2210 = vpop.f32.mrb[0].mxu0
        %v2211 = vadd.f32 0.0, %v2210
        %v2212 = vpop.f32.mrb[0].mxu0
        %v2213 = vpop.f32.mrb[0].mxu0
        %v2214 = vadd.f32 0.0, %v2213
        %v2215 = vpop.f32.mrb[0].mxu0
        %2216 = vmatprep.mubr.bf16.mxu0 0
        %2217 = vmatmul.mubr.bf16.gmra.mrb[0].mxu0 %v2142
        %v2218 = vpop.f32.mrb[0].mxu0
        %v2219 = vadd.f32 0.0, %v2218
        %v2220 = vpop.f32.mrb[0].mxu0
        %v2221 = vpop.f32.mrb[0].mxu0
        %v2222 = vadd.f32 0.0, %v2221
        %v2223 = vpop.f32.mrb[0].mxu0
        %2224 = vmatprep.mubr.bf16.mxu0 0
        %2225 = vmatmul.mubr.bf16.gmra.mrb[0].mxu0 %v2145
        %v2226 = vpop.f32.mrb[0].mxu0
        %v2227 = vadd.f32 0.0, %v2226
        %v2228 = vpop.f32.mrb[0].mxu0
        %v2229 = vpop.f32.mrb[0].mxu0
        %v2230 = vadd.f32 0.0, %v2229
        %v2231 = vpop.f32.mrb[0].mxu0
        %2232 = vmatprep.mubr.bf16.mxu0 0
        %2233 = vmatmul.mubr.bf16.gmra.mrb[0].mxu0 %v2148
        %v2234 = vpop.f32.mrb[0].mxu0
        %v2235 = vadd.f32 0.0, %v2234
        %v2236 = vpop.f32.mrb[0].mxu0
        %v2237 = vpop.f32.mrb[0].mxu0
        %v2238 = vadd.f32 0.0, %v2237
        %v2239 = vpop.f32.mrb[0].mxu0
        %2240 = vmatprep.mubr.bf16.mxu0 0
        %2241 = vmatmul.mubr.bf16.gmra.mrb[0].mxu0 %v2151
        %v2242 = vpop.f32.mrb[0].mxu0
        %v2243 = vadd.f32 0.0, %v2242
        %v2244 = vpop.f32.mrb[0].mxu0
        %v2245 = vpop.f32.mrb[0].mxu0
        %v2246 = vadd.f32 0.0, %v2245
        %v2247 = vpop.f32.mrb[0].mxu0
        %2248 = vmatprep.mubr.bf16.mxu0 0
        %2249 = vmatmul.mubr.bf16.gmra.mrb[0].mxu0 %v2154
        %v2250 = vpop.f32.mrb[0].mxu0
        %v2251 = vadd.f32 0.0, %v2250
        %v2252 = vpop.f32.mrb[0].mxu0
        %v2253 = vpop.f32.mrb[0].mxu0
        %v2254 = vadd.f32 0.0, %v2253
        %v2255 = vpop.f32.mrb[0].mxu0
        %2256 = vdwg.mxu0
        %v2260 = vunpack.c.l.b16 %v1603
        %v2261 = vunpack.c.l.b16 %v1604
        %v2262 = vunpack.c.l.b16 %v1605
        %v2263 = vpack.c.b16 %v2261, %v2260
        %v2264 = vpack.c.b16 %v2262, %v2262
        %v2267 = vsel %vm2131, %v1595, 0
        %v2270 = vsel %vm2131, %v1596, 0
        %v2273 = vsel %vm2131, %v1597, 0
        %v2276 = vsel %vm2131, %v1598, 0
        %v2279 = vsel %vm2131, %v1599, 0
        %v2282 = vsel %vm2131, %v1600, 0
        %v2285 = vsel %vm2131, %v1601, 0
        %v2288 = vsel %vm2131, %v1602, 0
        %v2291 = vsel %vm2156, %v2264, 0
        %2293 = vmatprep.subr.bf16.mxu0 0
        %2294 = vmatpush1.bf16.msra.mxu0 %v2263
        %2295 = vmatprep.subr.bf16.mxu0 0
        %2296 = vmatpush1.bf16.msra.mxu0 %v2291
        %2297 = vmatprep.subr.bf16.mxu0 0
        %2298 = vmatpush1.bf16.msra.mxu0 0
        %2299 = vmatprep.subr.bf16.mxu0 0
        %2300 = vmatpush1.bf16.msra.mxu0 0
        %2301 = vmatprep.subr.bf16.mxu0 0
        %2302 = vmatpush1.bf16.msra.mxu0 0
        %2303 = vmatprep.subr.bf16.mxu0 0
        %2304 = vmatpush1.bf16.msra.mxu0 0
        %2305 = vmatprep.subr.bf16.mxu0 0
        %2306 = vmatpush1.bf16.msra.mxu0 0
        %2307 = vmatprep.subr.bf16.mxu0 0
        %2308 = vmatpush1.bf16.msra.mxu0 0
        %2309 = vmatprep.subr.bf16.mxu0 0
        %2310 = vmatpush1.bf16.msra.mxu0 0
        %2311 = vmatprep.subr.bf16.mxu0 0
        %2312 = vmatpush1.bf16.msra.mxu0 0
        %2313 = vmatprep.subr.bf16.mxu0 0
        %2314 = vmatpush1.bf16.msra.mxu0 0
        %2315 = vmatprep.subr.bf16.mxu0 0
        %2316 = vmatpush1.bf16.msra.mxu0 0
        %2317 = vmatprep.subr.bf16.mxu0 0
        %2318 = vmatpush1.bf16.msra.mxu0 0
        %2319 = vmatprep.subr.bf16.mxu0 0
        %2320 = vmatpush1.bf16.msra.mxu0 0
        %2321 = vmatprep.subr.bf16.mxu0 0
        %2322 = vmatpush1.bf16.msra.mxu0 0
        %2323 = vmatprep.subr.bf16.mxu0 0
        %2324 = vmatpush1.bf16.msra.mxu0 0
        %2325 = vmatprep.mubr.bf16.mxu0 0
        %2326 = vmatmul.mubr.bf16.gmra.mrb[0].mxu0 %v2267
        %v2327 = vpop.f32.mrb[0].mxu0
        %v2328 = vadd.f32 %v2195, %v2327
        %v2329 = vpop.f32.mrb[0].mxu0
        %v2330 = vpop.f32.mrb[0].mxu0
        %v2331 = vadd.f32 %v2198, %v2330
        %v2332 = vpop.f32.mrb[0].mxu0
        %2333 = vmatprep.mubr.bf16.mxu0 0
        %2334 = vmatmul.mubr.bf16.gmra.mrb[0].mxu0 %v2270
        %v2335 = vpop.f32.mrb[0].mxu0
        %v2336 = vadd.f32 %v2203, %v2335
        %v2337 = vpop.f32.mrb[0].mxu0
        %v2338 = vpop.f32.mrb[0].mxu0
        %v2339 = vadd.f32 %v2206, %v2338
        %v2340 = vpop.f32.mrb[0].mxu0
        %2341 = vmatprep.mubr.bf16.mxu0 0
        %2342 = vmatmul.mubr.bf16.gmra.mrb[0].mxu0 %v2273
        %v2343 = vpop.f32.mrb[0].mxu0
        %v2344 = vadd.f32 %v2211, %v2343
        %v2345 = vpop.f32.mrb[0].mxu0
        %v2346 = vpop.f32.mrb[0].mxu0
        %v2347 = vadd.f32 %v2214, %v2346
        %v2348 = vpop.f32.mrb[0].mxu0
        %2349 = vmatprep.mubr.bf16.mxu0 0
        %2350 = vmatmul.mubr.bf16.gmra.mrb[0].mxu0 %v2276
        %v2351 = vpop.f32.mrb[0].mxu0
        %v2352 = vadd.f32 %v2219, %v2351
        %v2353 = vpop.f32.mrb[0].mxu0
        %v2354 = vpop.f32.mrb[0].mxu0
        %v2355 = vadd.f32 %v2222, %v2354
        %v2356 = vpop.f32.mrb[0].mxu0
        %2357 = vmatprep.mubr.bf16.mxu0 0
        %2358 = vmatmul.mubr.bf16.gmra.mrb[0].mxu0 %v2279
        %v2359 = vpop.f32.mrb[0].mxu0
        %v2360 = vadd.f32 %v2227, %v2359
        %v2361 = vpop.f32.mrb[0].mxu0
        %v2362 = vpop.f32.mrb[0].mxu0
        %v2363 = vadd.f32 %v2230, %v2362
        %v2364 = vpop.f32.mrb[0].mxu0
        %2365 = vmatprep.mubr.bf16.mxu0 0
        %2366 = vmatmul.mubr.bf16.gmra.mrb[0].mxu0 %v2282
        %v2367 = vpop.f32.mrb[0].mxu0
        %v2368 = vadd.f32 %v2235, %v2367
        %v2369 = vpop.f32.mrb[0].mxu0
        %v2370 = vpop.f32.mrb[0].mxu0
        %v2371 = vadd.f32 %v2238, %v2370
        %v2372 = vpop.f32.mrb[0].mxu0
        %2373 = vmatprep.mubr.bf16.mxu0 0
        %2374 = vmatmul.mubr.bf16.gmra.mrb[0].mxu0 %v2285
        %v2375 = vpop.f32.mrb[0].mxu0
        %v2376 = vadd.f32 %v2243, %v2375
        %v2377 = vpop.f32.mrb[0].mxu0
        %v2378 = vpop.f32.mrb[0].mxu0
        %v2379 = vadd.f32 %v2246, %v2378
        %v2380 = vpop.f32.mrb[0].mxu0
        %2381 = vmatprep.mubr.bf16.mxu0 0
        %2382 = vmatmul.mubr.bf16.gmra.mrb[0].mxu0 %v2288
        %v2383 = vpop.f32.mrb[0].mxu0
        %v2384 = vadd.f32 %v2251, %v2383
        %v2385 = vpop.f32.mrb[0].mxu0
        %v2386 = vpop.f32.mrb[0].mxu0
        %v2387 = vadd.f32 %v2254, %v2386
        %v2388 = vpop.f32.mrb[0].mxu0
        %2389 = vdwg.mxu0
        %s2390 = scalar_lea.vmem [#allocation2], 24
        %v2391 = vld [vmem:[%s2390] sm:$0xf]
        %v2392 = vld [vmem:[%s2390 + $0x4] sm:$0xf]
        %v2393 = vld [vmem:[%s2390 + $0xc] sm:$0xf]
        %v2394 = vld [vmem:[%s2390 + $0x10] sm:$0xf]
        %v2395 = vld [vmem:[%s2390 + $0x18] sm:$0xf]
        %v2396 = vld [vmem:[%s2390 + $0x1c] sm:$0xf]
        %v2397 = vld [vmem:[%s2390 + $0x24] sm:$0xf]
        %v2398 = vld [vmem:[%s2390 + $0x28] sm:$0xf]
        %v2399 = vld [vmem:[%s2390 + $0x30] sm:$0xf]
        %v2400 = vld [vmem:[%s2390 + $0x34] sm:$0xf]
        %v2401 = vld [vmem:[%s2390 + $0x3c] sm:$0xf]
        %v2402 = vld [vmem:[%s2390 + $0x40] sm:$0xf]
        %v2403 = vld [vmem:[%s2390 + $0x48] sm:$0xf]
        %v2404 = vld [vmem:[%s2390 + $0x4c] sm:$0xf]
        %v2405 = vld [vmem:[%s2390 + $0x54] sm:$0xf]
        %v2406 = vld [vmem:[%s2390 + $0x58] sm:$0xf]
        %v2423 = vunpack.c.l.b16 %v2391
        %v2424 = vunpack.c.l.b16 %v2392
        %v2425 = vunpack.c.l.b16 %v2393
        %v2426 = vunpack.c.l.b16 %v2394
        %v2427 = vunpack.c.l.b16 %v2395
        %v2428 = vunpack.c.l.b16 %v2396
        %v2429 = vunpack.c.l.b16 %v2397
        %v2430 = vunpack.c.l.b16 %v2398
        %v2431 = vunpack.c.l.b16 %v2399
        %v2432 = vunpack.c.l.b16 %v2400
        %v2433 = vunpack.c.l.b16 %v2401
        %v2434 = vunpack.c.l.b16 %v2402
        %v2435 = vunpack.c.l.b16 %v2403
        %v2436 = vunpack.c.l.b16 %v2404
        %v2437 = vunpack.c.l.b16 %v2405
        %v2438 = vunpack.c.l.b16 %v2406
        %v2439 = vpack.c.b16 %v2424, %v2423
        %v2440 = vpack.c.b16 %v2426, %v2425
        %v2441 = vpack.c.b16 %v2428, %v2427
        %v2442 = vpack.c.b16 %v2430, %v2429
        %v2443 = vpack.c.b16 %v2432, %v2431
        %v2444 = vpack.c.b16 %v2434, %v2433
        %v2445 = vpack.c.b16 %v2436, %v2435
        %v2446 = vpack.c.b16 %v2438, %v2437
        %2455 = vst.msk [vmem:[#allocation3] sm:$0xff] %vm1146, %v2439
        %2456 = vst.msk [vmem:[#allocation3 + $0x8] sm:$0xff] %vm1146, %v2440
        %2457 = vst.msk [vmem:[#allocation3 + $0x10] sm:$0xff] %vm1146, %v2441
        %2458 = vst.msk [vmem:[#allocation3 + $0x18] sm:$0xff] %vm1146, %v2442
        %2459 = vst.msk [vmem:[#allocation3 + $0x20] sm:$0xff] %vm1146, %v2443
        %2460 = vst.msk [vmem:[#allocation3 + $0x28] sm:$0xff] %vm1146, %v2444
        %2461 = vst.msk [vmem:[#allocation3 + $0x30] sm:$0xff] %vm1146, %v2445
        %2462 = vst.msk [vmem:[#allocation3 + $0x38] sm:$0xff] %vm1146, %v2446
        %v2463 = vld [vmem:[%s2390] sm:$0xf]
        %v2464 = vld [vmem:[%s2390 + $0x4] sm:$0xf]
        %v2465 = vld [vmem:[%s2390 + $0x8] sm:$0x1]
        %v2466 = vld [vmem:[%s2390 + $0xc] sm:$0xf]
        %v2467 = vld [vmem:[%s2390 + $0x10] sm:$0xf]
        %v2468 = vld [vmem:[%s2390 + $0x14] sm:$0x1]
        %v2469 = vld [vmem:[%s2390 + $0x18] sm:$0xf]
        %v2470 = vld [vmem:[%s2390 + $0x1c] sm:$0xf]
        %v2471 = vld [vmem:[%s2390 + $0x20] sm:$0x1]
        %v2472 = vld [vmem:[%s2390 + $0x24] sm:$0xf]
        %v2473 = vld [vmem:[%s2390 + $0x28] sm:$0xf]
        %v2474 = vld [vmem:[%s2390 + $0x2c] sm:$0x1]
        %v2475 = vld [vmem:[%s2390 + $0x30] sm:$0xf]
        %v2476 = vld [vmem:[%s2390 + $0x34] sm:$0xf]
        %v2477 = vld [vmem:[%s2390 + $0x38] sm:$0x1]
        %v2478 = vld [vmem:[%s2390 + $0x3c] sm:$0xf]
        %v2479 = vld [vmem:[%s2390 + $0x40] sm:$0xf]
        %v2480 = vld [vmem:[%s2390 + $0x44] sm:$0x1]
        %v2481 = vld [vmem:[%s2390 + $0x48] sm:$0xf]
        %v2482 = vld [vmem:[%s2390 + $0x4c] sm:$0xf]
        %v2483 = vld [vmem:[%s2390 + $0x50] sm:$0x1]
        %v2484 = vld [vmem:[%s2390 + $0x54] sm:$0xf]
        %v2485 = vld [vmem:[%s2390 + $0x58] sm:$0xf]
        %v2486 = vld [vmem:[%s2390 + $0x5c] sm:$0x1]
        %v2488 = vshrl.u32 %v2463, 16
        %v2490 = vrot.slane %v2488, 4
        %v2491 = vshll.u32 %v2463, 16
        %v2493 = vrot.slane %v2491, 5
        %v2494 = vor.u32 %v2490, %v2493
        %v2495 = vrot.slane %v2494, 4
        %v2497 = vshll.u32 %v2464, 16
        %v2499 = vrot.slane %v2497, 5
        %v2500 = vsel %vm1181, %v2495, %v2499
        %v2501 = vshrl.u32 %v2464, 16
        %v2503 = vrot.slane %v2501, 4
        %v2504 = vor.u32 %v2503, %v2499
        %v2505 = vrot.slane %v2504, 4
        %v2507 = vshll.u32 %v2465, 16
        %v2509 = vrot.slane %v2507, 5
        %v2510 = vsel %vm1181, %v2505, %v2509
        %v2512 = vshrl.u32 %v2466, 16
        %v2514 = vrot.slane %v2512, 4
        %v2515 = vshll.u32 %v2466, 16
        %v2517 = vrot.slane %v2515, 5
        %v2518 = vor.u32 %v2514, %v2517
        %v2519 = vrot.slane %v2518, 4
        %v2521 = vshll.u32 %v2467, 16
        %v2523 = vrot.slane %v2521, 5
        %v2524 = vsel %vm1181, %v2519, %v2523
        %v2525 = vshrl.u32 %v2467, 16
        %v2527 = vrot.slane %v2525, 4
        %v2528 = vor.u32 %v2527, %v2523
        %v2529 = vrot.slane %v2528, 4
        %v2531 = vshll.u32 %v2468, 16
        %v2533 = vrot.slane %v2531, 5
        %v2534 = vsel %vm1181, %v2529, %v2533
        %v2536 = vshrl.u32 %v2469, 16
        %v2538 = vrot.slane %v2536, 4
        %v2539 = vshll.u32 %v2469, 16
        %v2541 = vrot.slane %v2539, 5
        %v2542 = vor.u32 %v2538, %v2541
        %v2543 = vrot.slane %v2542, 4
        %v2545 = vshll.u32 %v2470, 16
        %v2547 = vrot.slane %v2545, 5
        %v2548 = vsel %vm1181, %v2543, %v2547
        %v2549 = vshrl.u32 %v2470, 16
        %v2551 = vrot.slane %v2549, 4
        %v2552 = vor.u32 %v2551, %v2547
        %v2553 = vrot.slane %v2552, 4
        %v2555 = vshll.u32 %v2471, 16
        %v2557 = vrot.slane %v2555, 5
        %v2558 = vsel %vm1181, %v2553, %v2557
        %v2560 = vshrl.u32 %v2472, 16
        %v2562 = vrot.slane %v2560, 4
        %v2563 = vshll.u32 %v2472, 16
        %v2565 = vrot.slane %v2563, 5
        %v2566 = vor.u32 %v2562, %v2565
        %v2567 = vrot.slane %v2566, 4
        %v2569 = vshll.u32 %v2473, 16
        %v2571 = vrot.slane %v2569, 5
        %v2572 = vsel %vm1181, %v2567, %v2571
        %v2573 = vshrl.u32 %v2473, 16
        %v2575 = vrot.slane %v2573, 4
        %v2576 = vor.u32 %v2575, %v2571
        %v2577 = vrot.slane %v2576, 4
        %v2579 = vshll.u32 %v2474, 16
        %v2581 = vrot.slane %v2579, 5
        %v2582 = vsel %vm1181, %v2577, %v2581
        %v2584 = vshrl.u32 %v2475, 16
        %v2586 = vrot.slane %v2584, 4
        %v2587 = vshll.u32 %v2475, 16
        %v2589 = vrot.slane %v2587, 5
        %v2590 = vor.u32 %v2586, %v2589
        %v2591 = vrot.slane %v2590, 4
        %v2593 = vshll.u32 %v2476, 16
        %v2595 = vrot.slane %v2593, 5
        %v2596 = vsel %vm1181, %v2591, %v2595
        %v2597 = vshrl.u32 %v2476, 16
        %v2599 = vrot.slane %v2597, 4
        %v2600 = vor.u32 %v2599, %v2595
        %v2601 = vrot.slane %v2600, 4
        %v2603 = vshll.u32 %v2477, 16
        %v2605 = vrot.slane %v2603, 5
        %v2606 = vsel %vm1181, %v2601, %v2605
        %v2608 = vshrl.u32 %v2478, 16
        %v2610 = vrot.slane %v2608, 4
        %v2611 = vshll.u32 %v2478, 16
        %v2613 = vrot.slane %v2611, 5
        %v2614 = vor.u32 %v2610, %v2613
        %v2615 = vrot.slane %v2614, 4
        %v2617 = vshll.u32 %v2479, 16
        %v2619 = vrot.slane %v2617, 5
        %v2620 = vsel %vm1181, %v2615, %v2619
        %v2621 = vshrl.u32 %v2479, 16
        %v2623 = vrot.slane %v2621, 4
        %v2624 = vor.u32 %v2623, %v2619
        %v2625 = vrot.slane %v2624, 4
        %v2627 = vshll.u32 %v2480, 16
        %v2629 = vrot.slane %v2627, 5
        %v2630 = vsel %vm1181, %v2625, %v2629
        %v2632 = vshrl.u32 %v2481, 16
        %v2634 = vrot.slane %v2632, 4
        %v2635 = vshll.u32 %v2481, 16
        %v2637 = vrot.slane %v2635, 5
        %v2638 = vor.u32 %v2634, %v2637
        %v2639 = vrot.slane %v2638, 4
        %v2641 = vshll.u32 %v2482, 16
        %v2643 = vrot.slane %v2641, 5
        %v2644 = vsel %vm1181, %v2639, %v2643
        %v2645 = vshrl.u32 %v2482, 16
        %v2647 = vrot.slane %v2645, 4
        %v2648 = vor.u32 %v2647, %v2643
        %v2649 = vrot.slane %v2648, 4
        %v2651 = vshll.u32 %v2483, 16
        %v2653 = vrot.slane %v2651, 5
        %v2654 = vsel %vm1181, %v2649, %v2653
        %v2656 = vshrl.u32 %v2484, 16
        %v2658 = vrot.slane %v2656, 4
        %v2659 = vshll.u32 %v2484, 16
        %v2661 = vrot.slane %v2659, 5
        %v2662 = vor.u32 %v2658, %v2661
        %v2663 = vrot.slane %v2662, 4
        %v2665 = vshll.u32 %v2485, 16
        %v2667 = vrot.slane %v2665, 5
        %v2668 = vsel %vm1181, %v2663, %v2667
        %v2669 = vshrl.u32 %v2485, 16
        %v2671 = vrot.slane %v2669, 4
        %v2672 = vor.u32 %v2671, %v2667
        %v2673 = vrot.slane %v2672, 4
        %v2675 = vshll.u32 %v2486, 16
        %v2677 = vrot.slane %v2675, 5
        %v2678 = vsel %vm1181, %v2673, %v2677
        %v2679 = vunpack.c.l.b16 %v2500
        %v2680 = vunpack.c.l.b16 %v2510
        %v2681 = vunpack.c.l.b16 %v2524
        %v2682 = vunpack.c.l.b16 %v2534
        %v2683 = vunpack.c.l.b16 %v2548
        %v2684 = vunpack.c.l.b16 %v2558
        %v2685 = vunpack.c.l.b16 %v2572
        %v2686 = vunpack.c.l.b16 %v2582
        %v2687 = vunpack.c.l.b16 %v2596
        %v2688 = vunpack.c.l.b16 %v2606
        %v2689 = vunpack.c.l.b16 %v2620
        %v2690 = vunpack.c.l.b16 %v2630
        %v2691 = vunpack.c.l.b16 %v2644
        %v2692 = vunpack.c.l.b16 %v2654
        %v2693 = vunpack.c.l.b16 %v2668
        %v2694 = vunpack.c.l.b16 %v2678
        %v2695 = vpack.c.b16 %v2680, %v2679
        %v2696 = vpack.c.b16 %v2682, %v2681
        %v2697 = vpack.c.b16 %v2684, %v2683
        %v2698 = vpack.c.b16 %v2686, %v2685
        %v2699 = vpack.c.b16 %v2688, %v2687
        %v2700 = vpack.c.b16 %v2690, %v2689
        %v2701 = vpack.c.b16 %v2692, %v2691
        %v2702 = vpack.c.b16 %v2694, %v2693
        %2703 = vrot.lane.b32.xlu0 %v2695, 8
        %v2704 = vpop.permute.xlu0 %2703
        %2705 = vrot.lane.b32.xlu0 %v2696, 8
        %v2706 = vpop.permute.xlu0 %2705
        %2707 = vrot.lane.b32.xlu0 %v2697, 8
        %v2708 = vpop.permute.xlu0 %2707
        %2709 = vrot.lane.b32.xlu0 %v2698, 8
        %v2710 = vpop.permute.xlu0 %2709
        %2711 = vrot.lane.b32.xlu0 %v2699, 8
        %v2712 = vpop.permute.xlu0 %2711
        %2713 = vrot.lane.b32.xlu0 %v2700, 8
        %v2714 = vpop.permute.xlu0 %2713
        %2715 = vrot.lane.b32.xlu0 %v2701, 8
        %v2716 = vpop.permute.xlu0 %2715
        %2717 = vrot.lane.b32.xlu0 %v2702, 8
        %v2718 = vpop.permute.xlu0 %2717
        %2727 = vst.msk [vmem:[#allocation3] sm:$0xff] %vm1422, %v2704
        %2728 = vst.msk [vmem:[#allocation3 + $0x8] sm:$0xff] %vm1422, %v2706
        %2729 = vst.msk [vmem:[#allocation3 + $0x10] sm:$0xff] %vm1422, %v2708
        %2730 = vst.msk [vmem:[#allocation3 + $0x18] sm:$0xff] %vm1422, %v2710
        %2731 = vst.msk [vmem:[#allocation3 + $0x20] sm:$0xff] %vm1422, %v2712
        %2732 = vst.msk [vmem:[#allocation3 + $0x28] sm:$0xff] %vm1422, %v2714
        %2733 = vst.msk [vmem:[#allocation3 + $0x30] sm:$0xff] %vm1422, %v2716
        %2734 = vst.msk [vmem:[#allocation3 + $0x38] sm:$0xff] %vm1422, %v2718
        %v2735 = vld [vmem:[%s2390] sm:$0xe]
        %v2736 = vld [vmem:[%s2390 + $0x4] sm:$0xf]
        %v2737 = vld [vmem:[%s2390 + $0x8] sm:$0x1]
        %v2738 = vld [vmem:[%s2390 + $0xc] sm:$0xe]
        %v2739 = vld [vmem:[%s2390 + $0x10] sm:$0xf]
        %v2740 = vld [vmem:[%s2390 + $0x14] sm:$0x1]
        %v2741 = vld [vmem:[%s2390 + $0x18] sm:$0xe]
        %v2742 = vld [vmem:[%s2390 + $0x1c] sm:$0xf]
        %v2743 = vld [vmem:[%s2390 + $0x20] sm:$0x1]
        %v2744 = vld [vmem:[%s2390 + $0x24] sm:$0xe]
        %v2745 = vld [vmem:[%s2390 + $0x28] sm:$0xf]
        %v2746 = vld [vmem:[%s2390 + $0x2c] sm:$0x1]
        %v2747 = vld [vmem:[%s2390 + $0x30] sm:$0xe]
        %v2748 = vld [vmem:[%s2390 + $0x34] sm:$0xf]
        %v2749 = vld [vmem:[%s2390 + $0x38] sm:$0x1]
        %v2750 = vld [vmem:[%s2390 + $0x3c] sm:$0xe]
        %v2751 = vld [vmem:[%s2390 + $0x40] sm:$0xf]
        %v2752 = vld [vmem:[%s2390 + $0x44] sm:$0x1]
        %v2753 = vld [vmem:[%s2390 + $0x48] sm:$0xe]
        %v2754 = vld [vmem:[%s2390 + $0x4c] sm:$0xf]
        %v2755 = vld [vmem:[%s2390 + $0x50] sm:$0x1]
        %v2756 = vld [vmem:[%s2390 + $0x54] sm:$0xe]
        %v2757 = vld [vmem:[%s2390 + $0x58] sm:$0xf]
        %v2758 = vld [vmem:[%s2390 + $0x5c] sm:$0x1]
        %v2783 = vrot.slane %v2735, 5
        %v2784 = vrot.slane %v2783, 4
        %v2785 = vrot.slane %v2736, 5
        %v2786 = vsel %vm1481, %v2784, %v2785
        %v2787 = vrot.slane %v2785, 4
        %v2788 = vrot.slane %v2737, 5
        %v2789 = vsel %vm1481, %v2787, %v2788
        %v2790 = vrot.slane %v2738, 5
        %v2791 = vrot.slane %v2790, 4
        %v2792 = vrot.slane %v2739, 5
        %v2793 = vsel %vm1481, %v2791, %v2792
        %v2794 = vrot.slane %v2792, 4
        %v2795 = vrot.slane %v2740, 5
        %v2796 = vsel %vm1481, %v2794, %v2795
        %v2797 = vrot.slane %v2741, 5
        %v2798 = vrot.slane %v2797, 4
        %v2799 = vrot.slane %v2742, 5
        %v2800 = vsel %vm1481, %v2798, %v2799
        %v2801 = vrot.slane %v2799, 4
        %v2802 = vrot.slane %v2743, 5
        %v2803 = vsel %vm1481, %v2801, %v2802
        %v2804 = vrot.slane %v2744, 5
        %v2805 = vrot.slane %v2804, 4
        %v2806 = vrot.slane %v2745, 5
        %v2807 = vsel %vm1481, %v2805, %v2806
        %v2808 = vrot.slane %v2806, 4
        %v2809 = vrot.slane %v2746, 5
        %v2810 = vsel %vm1481, %v2808, %v2809
        %v2811 = vrot.slane %v2747, 5
        %v2812 = vrot.slane %v2811, 4
        %v2813 = vrot.slane %v2748, 5
        %v2814 = vsel %vm1481, %v2812, %v2813
        %v2815 = vrot.slane %v2813, 4
        %v2816 = vrot.slane %v2749, 5
        %v2817 = vsel %vm1481, %v2815, %v2816
        %v2818 = vrot.slane %v2750, 5
        %v2819 = vrot.slane %v2818, 4
        %v2820 = vrot.slane %v2751, 5
        %v2821 = vsel %vm1481, %v2819, %v2820
        %v2822 = vrot.slane %v2820, 4
        %v2823 = vrot.slane %v2752, 5
        %v2824 = vsel %vm1481, %v2822, %v2823
        %v2825 = vrot.slane %v2753, 5
        %v2826 = vrot.slane %v2825, 4
        %v2827 = vrot.slane %v2754, 5
        %v2828 = vsel %vm1481, %v2826, %v2827
        %v2829 = vrot.slane %v2827, 4
        %v2830 = vrot.slane %v2755, 5
        %v2831 = vsel %vm1481, %v2829, %v2830
        %v2832 = vrot.slane %v2756, 5
        %v2833 = vrot.slane %v2832, 4
        %v2834 = vrot.slane %v2757, 5
        %v2835 = vsel %vm1481, %v2833, %v2834
        %v2836 = vrot.slane %v2834, 4
        %v2837 = vrot.slane %v2758, 5
        %v2838 = vsel %vm1481, %v2836, %v2837
        %v2839 = vunpack.c.l.b16 %v2786
        %v2840 = vunpack.c.l.b16 %v2789
        %v2841 = vunpack.c.l.b16 %v2793
        %v2842 = vunpack.c.l.b16 %v2796
        %v2843 = vunpack.c.l.b16 %v2800
        %v2844 = vunpack.c.l.b16 %v2803
        %v2845 = vunpack.c.l.b16 %v2807
        %v2846 = vunpack.c.l.b16 %v2810
        %v2847 = vunpack.c.l.b16 %v2814
        %v2848 = vunpack.c.l.b16 %v2817
        %v2849 = vunpack.c.l.b16 %v2821
        %v2850 = vunpack.c.l.b16 %v2824
        %v2851 = vunpack.c.l.b16 %v2828
        %v2852 = vunpack.c.l.b16 %v2831
        %v2853 = vunpack.c.l.b16 %v2835
        %v2854 = vunpack.c.l.b16 %v2838
        %v2855 = vpack.c.b16 %v2840, %v2839
        %v2856 = vpack.c.b16 %v2842, %v2841
        %v2857 = vpack.c.b16 %v2844, %v2843
        %v2858 = vpack.c.b16 %v2846, %v2845
        %v2859 = vpack.c.b16 %v2848, %v2847
        %v2860 = vpack.c.b16 %v2850, %v2849
        %v2861 = vpack.c.b16 %v2852, %v2851
        %v2862 = vpack.c.b16 %v2854, %v2853
        %2863 = vrot.lane.b32.xlu0 %v2855, 16
        %v2864 = vpop.permute.xlu0 %2863
        %2865 = vrot.lane.b32.xlu0 %v2856, 16
        %v2866 = vpop.permute.xlu0 %2865
        %2867 = vrot.lane.b32.xlu0 %v2857, 16
        %v2868 = vpop.permute.xlu0 %2867
        %2869 = vrot.lane.b32.xlu0 %v2858, 16
        %v2870 = vpop.permute.xlu0 %2869
        %2871 = vrot.lane.b32.xlu0 %v2859, 16
        %v2872 = vpop.permute.xlu0 %2871
        %2873 = vrot.lane.b32.xlu0 %v2860, 16
        %v2874 = vpop.permute.xlu0 %2873
        %2875 = vrot.lane.b32.xlu0 %v2861, 16
        %v2876 = vpop.permute.xlu0 %2875
        %2877 = vrot.lane.b32.xlu0 %v2862, 16
        %v2878 = vpop.permute.xlu0 %2877
        %2887 = vst.msk [vmem:[#allocation3] sm:$0xff] %vm1586, %v2864
        %2888 = vst.msk [vmem:[#allocation3 + $0x8] sm:$0xff] %vm1586, %v2866
        %2889 = vst.msk [vmem:[#allocation3 + $0x10] sm:$0xff] %vm1586, %v2868
        %2890 = vst.msk [vmem:[#allocation3 + $0x18] sm:$0xff] %vm1586, %v2870
        %2891 = vst.msk [vmem:[#allocation3 + $0x20] sm:$0xff] %vm1586, %v2872
        %2892 = vst.msk [vmem:[#allocation3 + $0x28] sm:$0xff] %vm1586, %v2874
        %2893 = vst.msk [vmem:[#allocation3 + $0x30] sm:$0xff] %vm1586, %v2876
        %2894 = vst.msk [vmem:[#allocation3 + $0x38] sm:$0xff] %vm1586, %v2878
        %v2895 = vld [vmem:[#allocation3] sm:$0xff]
        %v2896 = vld [vmem:[#allocation3 + $0x8] sm:$0xff]
        %v2897 = vld [vmem:[#allocation3 + $0x10] sm:$0xff]
        %v2898 = vld [vmem:[#allocation3 + $0x18] sm:$0xff]
        %v2899 = vld [vmem:[#allocation3 + $0x20] sm:$0xff]
        %v2900 = vld [vmem:[#allocation3 + $0x28] sm:$0xff]
        %v2901 = vld [vmem:[#allocation3 + $0x30] sm:$0xff]
        %v2902 = vld [vmem:[#allocation3 + $0x38] sm:$0xff]
        %s2903 = scalar_lea.vmem [#allocation10], 24
        %v2904 = vld [vmem:[%s2903] sm:$0xf]
        %v2905 = vld [vmem:[%s2903 + $0x4] sm:$0xf]
        %v2906 = vld [vmem:[%s2903 + $0x8] sm:$0xf]
        %v2910 = vunpack.c.l.b16 %v2904
        %v2911 = vunpack.c.l.b16 %v2905
        %v2912 = vunpack.c.l.b16 %v2906
        %v2913 = vpack.c.b16 %v2911, %v2910
        %v2914 = vpack.c.b16 %v2912, %v2912
        %v2917 = vsel %vm2131, %v2895, 0
        %v2920 = vsel %vm2131, %v2896, 0
        %v2923 = vsel %vm2131, %v2897, 0
        %v2926 = vsel %vm2131, %v2898, 0
        %v2929 = vsel %vm2131, %v2899, 0
        %v2932 = vsel %vm2131, %v2900, 0
        %v2935 = vsel %vm2131, %v2901, 0
        %v2938 = vsel %vm2131, %v2902, 0
        %v2941 = vsel %vm2156, %v2914, 0
        %2943 = vmatprep.subr.bf16.mxu0 0
        %2944 = vmatpush1.bf16.msra.mxu0 %v2913
        %2945 = vmatprep.subr.bf16.mxu0 0
        %2946 = vmatpush1.bf16.msra.mxu0 %v2941
        %2947 = vmatprep.subr.bf16.mxu0 0
        %2948 = vmatpush1.bf16.msra.mxu0 0
        %2949 = vmatprep.subr.bf16.mxu0 0
        %2950 = vmatpush1.bf16.msra.mxu0 0
        %2951 = vmatprep.subr.bf16.mxu0 0
        %2952 = vmatpush1.bf16.msra.mxu0 0
        %2953 = vmatprep.subr.bf16.mxu0 0
        %2954 = vmatpush1.bf16.msra.mxu0 0
        %2955 = vmatprep.subr.bf16.mxu0 0
        %2956 = vmatpush1.bf16.msra.mxu0 0
        %2957 = vmatprep.subr.bf16.mxu0 0
        %2958 = vmatpush1.bf16.msra.mxu0 0
        %2959 = vmatprep.subr.bf16.mxu0 0
        %2960 = vmatpush1.bf16.msra.mxu0 0
        %2961 = vmatprep.subr.bf16.mxu0 0
        %2962 = vmatpush1.bf16.msra.mxu0 0
        %2963 = vmatprep.subr.bf16.mxu0 0
        %2964 = vmatpush1.bf16.msra.mxu0 0
        %2965 = vmatprep.subr.bf16.mxu0 0
        %2966 = vmatpush1.bf16.msra.mxu0 0
        %2967 = vmatprep.subr.bf16.mxu0 0
        %2968 = vmatpush1.bf16.msra.mxu0 0
        %2969 = vmatprep.subr.bf16.mxu0 0
        %2970 = vmatpush1.bf16.msra.mxu0 0
        %2971 = vmatprep.subr.bf16.mxu0 0
        %2972 = vmatpush1.bf16.msra.mxu0 0
        %2973 = vmatprep.subr.bf16.mxu0 0
        %2974 = vmatpush1.bf16.msra.mxu0 0
        %2975 = vmatprep.mubr.bf16.mxu0 0
        %2976 = vmatmul.mubr.bf16.gmra.mrb[0].mxu0 %v2917
        %v2977 = vpop.f32.mrb[0].mxu0
        %v2978 = vadd.f32 0.0, %v2977
        %v2979 = vpop.f32.mrb[0].mxu0
        %v2980 = vpop.f32.mrb[0].mxu0
        %v2981 = vadd.f32 0.0, %v2980
        %v2982 = vpop.f32.mrb[0].mxu0
        %2983 = vmatprep.mubr.bf16.mxu0 0
        %2984 = vmatmul.mubr.bf16.gmra.mrb[0].mxu0 %v2920
        %v2985 = vpop.f32.mrb[0].mxu0
        %v2986 = vadd.f32 0.0, %v2985
        %v2987 = vpop.f32.mrb[0].mxu0
        %v2988 = vpop.f32.mrb[0].mxu0
        %v2989 = vadd.f32 0.0, %v2988
        %v2990 = vpop.f32.mrb[0].mxu0
        %2991 = vmatprep.mubr.bf16.mxu0 0
        %2992 = vmatmul.mubr.bf16.gmra.mrb[0].mxu0 %v2923
        %v2993 = vpop.f32.mrb[0].mxu0
        %v2994 = vadd.f32 0.0, %v2993
        %v2995 = vpop.f32.mrb[0].mxu0
        %v2996 = vpop.f32.mrb[0].mxu0
        %v2997 = vadd.f32 0.0, %v2996
        %v2998 = vpop.f32.mrb[0].mxu0
        %2999 = vmatprep.mubr.bf16.mxu0 0
        %3000 = vmatmul.mubr.bf16.gmra.mrb[0].mxu0 %v2926
        %v3001 = vpop.f32.mrb[0].mxu0
        %v3002 = vadd.f32 0.0, %v3001
        %v3003 = vpop.f32.mrb[0].mxu0
        %v3004 = vpop.f32.mrb[0].mxu0
        %v3005 = vadd.f32 0.0, %v3004
        %v3006 = vpop.f32.mrb[0].mxu0
        %3007 = vmatprep.mubr.bf16.mxu0 0
        %3008 = vmatmul.mubr.bf16.gmra.mrb[0].mxu0 %v2929
        %v3009 = vpop.f32.mrb[0].mxu0
        %v3010 = vadd.f32 0.0, %v3009
        %v3011 = vpop.f32.mrb[0].mxu0
        %v3012 = vpop.f32.mrb[0].mxu0
        %v3013 = vadd.f32 0.0, %v3012
        %v3014 = vpop.f32.mrb[0].mxu0
        %3015 = vmatprep.mubr.bf16.mxu0 0
        %3016 = vmatmul.mubr.bf16.gmra.mrb[0].mxu0 %v2932
        %v3017 = vpop.f32.mrb[0].mxu0
        %v3018 = vadd.f32 0.0, %v3017
        %v3019 = vpop.f32.mrb[0].mxu0
        %v3020 = vpop.f32.mrb[0].mxu0
        %v3021 = vadd.f32 0.0, %v3020
        %v3022 = vpop.f32.mrb[0].mxu0
        %3023 = vmatprep.mubr.bf16.mxu0 0
        %3024 = vmatmul.mubr.bf16.gmra.mrb[0].mxu0 %v2935
        %v3025 = vpop.f32.mrb[0].mxu0
        %v3026 = vadd.f32 0.0, %v3025
        %v3027 = vpop.f32.mrb[0].mxu0
        %v3028 = vpop.f32.mrb[0].mxu0
        %v3029 = vadd.f32 0.0, %v3028
        %v3030 = vpop.f32.mrb[0].mxu0
        %3031 = vmatprep.mubr.bf16.mxu0 0
        %3032 = vmatmul.mubr.bf16.gmra.mrb[0].mxu0 %v2938
        %v3033 = vpop.f32.mrb[0].mxu0
        %v3034 = vadd.f32 0.0, %v3033
        %v3035 = vpop.f32.mrb[0].mxu0
        %v3036 = vpop.f32.mrb[0].mxu0
        %v3037 = vadd.f32 0.0, %v3036
        %v3038 = vpop.f32.mrb[0].mxu0
        %3039 = vdwg.mxu0
        %v3040 = vadd.f32 %v2328, %v2978
        %v3041 = vadd.f32 %v2331, %v2981
        %v3042 = vadd.f32 %v2336, %v2986
        %v3043 = vadd.f32 %v2339, %v2989
        %v3044 = vadd.f32 %v2344, %v2994
        %v3045 = vadd.f32 %v2347, %v2997
        %v3046 = vadd.f32 %v2352, %v3002
        %v3047 = vadd.f32 %v2355, %v3005
        %v3048 = vadd.f32 %v2360, %v3010
        %v3049 = vadd.f32 %v2363, %v3013
        %v3050 = vadd.f32 %v2368, %v3018
        %v3051 = vadd.f32 %v2371, %v3021
        %v3052 = vadd.f32 %v2376, %v3026
        %v3053 = vadd.f32 %v2379, %v3029
        %v3054 = vadd.f32 %v2384, %v3034
        %v3055 = vadd.f32 %v2387, %v3037
        %v3056 = vpack.c.bf16 %v3041, %v3040
        %v3057 = vpack.c.bf16 %v3043, %v3042
        %v3058 = vpack.c.bf16 %v3045, %v3044
        %v3059 = vpack.c.bf16 %v3047, %v3046
        %v3060 = vpack.c.bf16 %v3049, %v3048
        %v3061 = vpack.c.bf16 %v3051, %v3050
        %v3062 = vpack.c.bf16 %v3053, %v3052
        %v3063 = vpack.c.bf16 %v3055, %v3054
        %v3072 = vunpack.c.l.b16 %v3056
        %v3073 = vunpack.c.h.b16 %v3056
        %v3074 = vunpack.c.l.b16 %v3057
        %v3075 = vunpack.c.h.b16 %v3057
        %v3076 = vunpack.c.l.b16 %v3058
        %v3077 = vunpack.c.h.b16 %v3058
        %v3078 = vunpack.c.l.b16 %v3059
        %v3079 = vunpack.c.h.b16 %v3059
        %v3080 = vunpack.c.l.b16 %v3060
        %v3081 = vunpack.c.h.b16 %v3060
        %v3082 = vunpack.c.l.b16 %v3061
        %v3083 = vunpack.c.h.b16 %v3061
        %v3084 = vunpack.c.l.b16 %v3062
        %v3085 = vunpack.c.h.b16 %v3062
        %v3086 = vunpack.c.l.b16 %v3063
        %v3087 = vunpack.c.h.b16 %v3063
        %v3088 = vpack.c.b16 %v3072, %v3072
        %v3089 = vpack.c.b16 %v3073, %v3073
        %v3090 = vpack.c.b16 %v3074, %v3074
        %v3091 = vpack.c.b16 %v3075, %v3075
        %v3092 = vpack.c.b16 %v3076, %v3076
        %v3093 = vpack.c.b16 %v3077, %v3077
        %v3094 = vpack.c.b16 %v3078, %v3078
        %v3095 = vpack.c.b16 %v3079, %v3079
        %v3096 = vpack.c.b16 %v3080, %v3080
        %v3097 = vpack.c.b16 %v3081, %v3081
        %v3098 = vpack.c.b16 %v3082, %v3082
        %v3099 = vpack.c.b16 %v3083, %v3083
        %v3100 = vpack.c.b16 %v3084, %v3084
        %v3101 = vpack.c.b16 %v3085, %v3085
        %v3102 = vpack.c.b16 %v3086, %v3086
        %v3103 = vpack.c.b16 %v3087, %v3087
        %3120 = vst.msk [vmem:[%s499] sm:$0xf] %vm523, %v3088
        %3121 = vst.msk [vmem:[%s499 + $0x4] sm:$0xf] %vm523, %v3089
        %3122 = vst.msk [vmem:[%s499 + $0x8] sm:$0xf] %vm523, %v3090
        %3123 = vst.msk [vmem:[%s499 + $0xc] sm:$0xf] %vm523, %v3091
        %3124 = vst.msk [vmem:[%s499 + $0x10] sm:$0xf] %vm523, %v3092
        %3125 = vst.msk [vmem:[%s499 + $0x14] sm:$0xf] %vm523, %v3093
        %3126 = vst.msk [vmem:[%s499 + $0x18] sm:$0xf] %vm523, %v3094
        %3127 = vst.msk [vmem:[%s499 + $0x1c] sm:$0xf] %vm523, %v3095
        %3128 = vst.msk [vmem:[%s499 + $0x20] sm:$0xf] %vm523, %v3096
        %3129 = vst.msk [vmem:[%s499 + $0x24] sm:$0xf] %vm523, %v3097
        %3130 = vst.msk [vmem:[%s499 + $0x28] sm:$0xf] %vm523, %v3098
        %3131 = vst.msk [vmem:[%s499 + $0x2c] sm:$0xf] %vm523, %v3099
        %3132 = vst.msk [vmem:[%s499 + $0x30] sm:$0xf] %vm523, %v3100
        %3133 = vst.msk [vmem:[%s499 + $0x34] sm:$0xf] %vm523, %v3101
        %3134 = vst.msk [vmem:[%s499 + $0x38] sm:$0xf] %vm523, %v3102
        %3135 = vst.msk [vmem:[%s499 + $0x3c] sm:$0xf] %vm523, %v3103
        %v3136 = vsel %vm1146, %v3040, 0.0
        %v3137 = vsel %vm1146, %v3041, 0.0
        %v3138 = vadd.f32 %v3136, %v3137
        %v3139 = vsel %vm1146, %v3042, 0.0
        %v3140 = vadd.f32 %v3138, %v3139
        %v3141 = vsel %vm1146, %v3043, 0.0
        %v3142 = vadd.f32 %v3140, %v3141
        %v3143 = vsel %vm1146, %v3044, 0.0
        %v3144 = vadd.f32 %v3142, %v3143
        %v3145 = vsel %vm1146, %v3045, 0.0
        %v3146 = vadd.f32 %v3144, %v3145
        %v3147 = vsel %vm1146, %v3046, 0.0
        %v3148 = vadd.f32 %v3146, %v3147
        %v3149 = vsel %vm1146, %v3047, 0.0
        %v3150 = vadd.f32 %v3148, %v3149
        %v3151 = vsel %vm1146, %v3048, 0.0
        %v3152 = vadd.f32 %v3150, %v3151
        %v3153 = vsel %vm1146, %v3049, 0.0
        %v3154 = vadd.f32 %v3152, %v3153
        %v3155 = vsel %vm1146, %v3050, 0.0
        %v3156 = vadd.f32 %v3154, %v3155
        %v3157 = vsel %vm1146, %v3051, 0.0
        %v3158 = vadd.f32 %v3156, %v3157
        %v3159 = vsel %vm1146, %v3052, 0.0
        %v3160 = vadd.f32 %v3158, %v3159
        %v3161 = vsel %vm1146, %v3053, 0.0
        %v3162 = vadd.f32 %v3160, %v3161
        %v3163 = vsel %vm1146, %v3054, 0.0
        %v3164 = vadd.f32 %v3162, %v3163
        %v3165 = vsel %vm1146, %v3055, 0.0
        %v3166 = vadd.f32 %v3164, %v3165
        %v3167 = vrot.slane %v3166, 4
        %v3168 = vadd.f32 %v3166, %v3167
        %v3169 = vrot.slane %v3168, 2
        %v3170 = vadd.f32 %v3168, %v3169
        %v3171 = vrot.slane %v3170, 1
        %v3172 = vadd.f32 %v3170, %v3171
        %3173 = vst.msk [vmem:[%s505] sm:$0x1] %vm526, %v3172
        %v3174 = vmul.f32 %v3040, %v3040
        %v3175 = vmul.f32 %v3041, %v3041
        %v3176 = vmul.f32 %v3042, %v3042
        %v3177 = vmul.f32 %v3043, %v3043
        %v3178 = vmul.f32 %v3044, %v3044
        %v3179 = vmul.f32 %v3045, %v3045
        %v3180 = vmul.f32 %v3046, %v3046
        %v3181 = vmul.f32 %v3047, %v3047
        %v3182 = vmul.f32 %v3048, %v3048
        %v3183 = vmul.f32 %v3049, %v3049
        %v3184 = vmul.f32 %v3050, %v3050
        %v3185 = vmul.f32 %v3051, %v3051
        %v3186 = vmul.f32 %v3052, %v3052
        %v3187 = vmul.f32 %v3053, %v3053
        %v3188 = vmul.f32 %v3054, %v3054
        %v3189 = vmul.f32 %v3055, %v3055
        %v3190 = vsel %vm1146, %v3174, 0.0
        %v3191 = vsel %vm1146, %v3175, 0.0
        %v3192 = vadd.f32 %v3190, %v3191
        %v3193 = vsel %vm1146, %v3176, 0.0
        %v3194 = vadd.f32 %v3192, %v3193
        %v3195 = vsel %vm1146, %v3177, 0.0
        %v3196 = vadd.f32 %v3194, %v3195
        %v3197 = vsel %vm1146, %v3178, 0.0
        %v3198 = vadd.f32 %v3196, %v3197
        %v3199 = vsel %vm1146, %v3179, 0.0
        %v3200 = vadd.f32 %v3198, %v3199
        %v3201 = vsel %vm1146, %v3180, 0.0
        %v3202 = vadd.f32 %v3200, %v3201
        %v3203 = vsel %vm1146, %v3181, 0.0
        %v3204 = vadd.f32 %v3202, %v3203
        %v3205 = vsel %vm1146, %v3182, 0.0
        %v3206 = vadd.f32 %v3204, %v3205
        %v3207 = vsel %vm1146, %v3183, 0.0
        %v3208 = vadd.f32 %v3206, %v3207
        %v3209 = vsel %vm1146, %v3184, 0.0
        %v3210 = vadd.f32 %v3208, %v3209
        %v3211 = vsel %vm1146, %v3185, 0.0
        %v3212 = vadd.f32 %v3210, %v3211
        %v3213 = vsel %vm1146, %v3186, 0.0
        %v3214 = vadd.f32 %v3212, %v3213
        %v3215 = vsel %vm1146, %v3187, 0.0
        %v3216 = vadd.f32 %v3214, %v3215
        %v3217 = vsel %vm1146, %v3188, 0.0
        %v3218 = vadd.f32 %v3216, %v3217
        %v3219 = vsel %vm1146, %v3189, 0.0
        %v3220 = vadd.f32 %v3218, %v3219
        %v3221 = vrot.slane %v3220, 4
        %v3222 = vadd.f32 %v3220, %v3221
        %v3223 = vrot.slane %v3222, 2
        %v3224 = vadd.f32 %v3222, %v3223
        %v3225 = vrot.slane %v3224, 1
        %v3226 = vadd.f32 %v3224, %v3225
        %3227 = vst.msk [vmem:[%s511] sm:$0x1] %vm526, %v3226
        %s3228 = sand.u32 %s219, 1
        %s3229 = scalar_lea.sflag [#allocation6], %s3228
        %s3230 = sand.u32 %s219, 1
        %s3231 = smul.addr %s3230, 64
        %s3232 = scalar_lea.vmem [#allocation15], %s3231
        %s3233 = sand.u32 %s34, 1
        %s3234 = scalar_lea.sflag [#allocation17], %s3233
        %s3235 = sand.u32 %s247, 1
        %s3236 = scalar_lea.vmem [#allocation16], %s3235
        %s3237 = sand.u32 %s34, 1
        %s3238 = scalar_lea.sflag [#allocation17], %s3237
        %s3239 = sand.u32 %s275, 1
        %s3240 = scalar_lea.vmem [#allocation18], %s3239
        // Predicated region
        $region77: #{_lambda_.4} parent=43 // pred_check
          %p3241 = pneg %p229
        $region78: #{_lambda_.4} parent=43 // pred_check_branch
          %3243 = sbr.rel (%p3241) target = $region80
        $region79: #{_lambda_.4} parent=43 // pred_region
          %s3244 = smul.u32 8, %s39
          %s3246 = ssub.s32 1024, 1024
          %3247 = vsyncadd %s3229, %s3246
          %s3248 = smul.addr %s3244, 2
          %s3249 = smul.addr %s38, 32
          %s3250 = sadd.s32 %s3248, %s3249
          %s3251 = smul.addr %s3250, 64
          %s3252 = scalar_lea.hbm %s6, %s3251
          %s3253 = sshll.u32 %s3232, 4
          %s3254 = int_to_ptr.vmem [resolvable:$true] %s3253
          %3259 = dma.vmem_to_hbm [thread:$0]  %s3254, 1024, %s3252, %s3229, 64, 64, 4
        $region80: #{_lambda_.4} parent=43 // pred_fallthru
          _
        // Predicated region
        $region81: #{_lambda_.4} parent=43 // pred_check
          %p3260 = pneg %p257
        $region82: #{_lambda_.4} parent=43 // pred_check_branch
          %3262 = sbr.rel (%p3260) target = $region84
        $region83: #{_lambda_.4} parent=43 // pred_region
          %s3264 = ssub.s32 16, 16
          %3265 = vsyncadd %s3234, %s3264
          %s3266 = smul.addr %s38, 2
          %s3267 = sadd.s32 %s39, %s3266
          %s3268 = smul.addr %s3267, 16
          %s3269 = scalar_lea.hbm %s7, %s3268
          %s3271 = sshll.u32 %s3236, 4
          %s3272 = int_to_ptr.vmem [resolvable:$true] %s3271
          %3274 = dma.vmem_to_hbm [thread:$0]  %s3272, 16, %s3269, %s3234
        $region84: #{_lambda_.4} parent=43 // pred_fallthru
          _
        // Predicated region
        $region85: #{_lambda_.4} parent=43 // pred_check
          %p3275 = pneg %p285
        $region86: #{_lambda_.4} parent=43 // pred_check_branch
          %3277 = sbr.rel (%p3275) target = $region88
        $region87: #{_lambda_.4} parent=43 // pred_region
          %s3279 = ssub.s32 16, 16
          %3280 = vsyncadd %s3238, %s3279
          %s3281 = smul.addr %s38, 2
          %s3282 = sadd.s32 %s39, %s3281
          %s3283 = smul.addr %s3282, 16
          %s3284 = scalar_lea.hbm %s8, %s3283
          %s3286 = sshll.u32 %s3240, 4
          %s3287 = int_to_ptr.vmem [resolvable:$true] %s3286
          %3289 = dma.vmem_to_hbm [thread:$0]  %s3287, 16, %s3284, %s3238
        $region88: #{_lambda_.4} parent=43 // pred_fallthru
          _
      $region44: #{_lambda_.4} parent=5 // pred_fallthru
        _
      %p3290 = scmp.le.s32.totalorder 2, %s29
      // Predicated region
      $region89: #{_lambda_.4} parent=5 // pred_check
        %p3291 = pneg %p3290
      $region90: #{_lambda_.4} parent=5 // pred_check_branch
        %3293 = sbr.rel (%p3291) target = $region92
      $region91: #{_lambda_.4} parent=5 // pred_region
        %s3294 = ssub.s32 %s29, 2
        // Predicated region
        $region93: #{_lambda_.4} parent=91 // pred_check
          %p3295 = pneg %p235
        $region94: #{_lambda_.4} parent=91 // pred_check_branch
          %3297 = sbr.rel (%p3295) target = $region96
        $region95: #{_lambda_.4} parent=91 // pred_region
          %s3298 = sand.u32 %s220, 1
          %s3299 = scalar_lea.sflag [#allocation6], %s3298
          %s3300 = sand.u32 %s220, 1
          %s3301 = smul.addr %s3300, 64
          %s3302 = scalar_lea.vmem [#allocation15], %s3301
          %3303 = dma.done %s3299, 1024
        $region96: #{_lambda_.4} parent=91 // pred_fallthru
          _
        // Predicated region
        $region97: #{_lambda_.4} parent=91 // pred_check
          %p3304 = pneg %p263
        $region98: #{_lambda_.4} parent=91 // pred_check_branch
          %3306 = sbr.rel (%p3304) target = $region100
        $region99: #{_lambda_.4} parent=91 // pred_region
          %s3307 = sand.u32 %s35, 1
          %s3308 = scalar_lea.sflag [#allocation17], %s3307
          %s3309 = sand.u32 %s248, 1
          %s3310 = scalar_lea.vmem [#allocation16], %s3309
          %3311 = dma.done %s3308, 16
        $region100: #{_lambda_.4} parent=91 // pred_fallthru
          _
        // Predicated region
        $region101: #{_lambda_.4} parent=91 // pred_check
          %p3312 = pneg %p291
        $region102: #{_lambda_.4} parent=91 // pred_check_branch
          %3314 = sbr.rel (%p3312) target = $region104
        $region103: #{_lambda_.4} parent=91 // pred_region
          %s3315 = sand.u32 %s35, 1
          %s3316 = scalar_lea.sflag [#allocation17], %s3315
          %s3317 = sand.u32 %s276, 1
          %s3318 = scalar_lea.vmem [#allocation18], %s3317
          %3319 = dma.done %s3316, 16
        $region104: #{_lambda_.4} parent=91 // pred_fallthru
          _
      $region92: #{_lambda_.4} parent=5 // pred_fallthru
        _
    $region6: #{_lambda_.4} parent=1 // loop_footer
      %s33 = sadd.s32 1, %s29
    $region7: #{_lambda_.4} parent=1 // loop_footer_branch
      %28 = sbr.rel target = $region3
    $region8: #{_lambda_.4} parent=1 // loop_exit
      _
    %3320 = vsyncpa [#allocation5], 1
    %s3321 = scalar_lea.sflag [#allocation5], 1
    %3322 = vsyncpa %s3321, 1
    %3323 = vsyncpa [#allocation8], 1
    %s3324 = scalar_lea.sflag [#allocation8], 1
    %3325 = vsyncpa %s3324, 1
    %3326 = vsyncpa [#allocation11], 1
    %3327 = vsyncpa [#allocation14], 1
    %3328 = vsyncpa [#allocation6], 1
    %s3329 = scalar_lea.sflag [#allocation6], 1
    %3330 = vsyncpa %s3329, 1
    %3331 = vsyncpa [#allocation17], 1
    %s3332 = scalar_lea.sflag [#allocation17], 1
    %3333 = vsyncpa %s3332, 1

</llo_original>
